<compile_context>
chip_gen: v5e
topology: v5e:2x2
jax: 0.10.0
libtpu: 0.0.40
codegen_flags: <defaults>
</compile_context>

<pallas_src>
import jax
import jax.numpy as jnp
from jax.experimental import pallas as pl
from jax.experimental.pallas import tpu as pltpu

# ---- static problem geometry (from the module definition) -------------------
CIN, COUT = 19, 48
KH, KW = 8, 6
PH, PW = 3, 2
OUT_PAD = 1
HIN, WIN = 17, 9

PT, PB = KH - 1 - PH, KH - 1 - PH + OUT_PAD      # 4, 5
PL_, PR = KW - 1 - PW, KW - 1 - PW + OUT_PAD     # 3, 4
HP = HIN + PT + PB                               # 26
WP = WIN + PL_ + PR                              # 16
HOUT = HP - KH + 1                               # 19
WOUT = WP - KW + 1                               # 11
POOL = 5

W2 = 16              # WOUT padded to a sublane-aligned width (multiple of 8/16)
KWC = KW * CIN       # 114  contraction depth per dy-tap
CPAD = 128           # COUT padded to a full lane tile
NPAIR = KH // 2      # 4 lane-packed dy-tap pairs -> 256-wide MXU passes
BATCH_TILE = 32      # batch elements per grid step (~28 MiB worst-case VMEM)


def _adaptive_bins(in_size, out_size):
    starts = [(i * in_size) // out_size for i in range(out_size)]
    ends = [-(-((i + 1) * in_size) // out_size) for i in range(out_size)]
    return starts, ends


HS, HE = _adaptive_bins(HOUT, POOL)   # [0,3,7,11,15] / [4,8,12,16,19]
WS, WE = _adaptive_bins(WOUT, POOL)   # [0,2,4,6,8]   / [3,5,7,9,11]
# padded W columns (11..15) / padded channels (48..127) must never be pooled:
assert HE[-1] <= HOUT and WE[-1] <= WOUT


def _model_kernel(x_ref, w_ref, b_ref, o_ref, acc_ref, hsum_ref):
    # x_ref   : (B, HP, W2, KWC)         bf16 KW-unfolded, zero-padded input
    # w_ref   : (NPAIR, KWC, 2*CPAD)     bf16; lanes [0:128]=tap 2p, [128:256]=tap 2p+1
    # b_ref   : (1, CPAD)                f32 bias (COUT zero-padded)
    # o_ref   : (B, POOL, POOL, CPAD)    f32 pooled output
    # acc_ref : (B, HOUT+1, W2, 2*CPAD)  f32 packed conv accumulator (VMEM)
    # hsum_ref: (B, W2, CPAD)            f32 per-H-bin row sums (VMEM)
    bsz = x_ref.shape[0]
    m2 = bsz * (HOUT + 1) * W2

    # --- transposed conv: NPAIR lane-packed matmuls accumulated in VMEM ------
    # acc[b, r, x, c]       = sum_p xw[b, 2p+r, x, :] . w[2p,   :, c]
    # acc[b, r, x, 128 + c] = sum_p xw[b, 2p+r, x, :] . w[2p+1, :, c]
    for p in range(NPAIR):
        patch = x_ref[:, 2 * p:2 * p + HOUT + 1, :, :].reshape(m2, KWC)
        contrib = jnp.dot(patch, w_ref[p], preferred_element_type=jnp.float32)
        contrib = contrib.reshape(bsz, HOUT + 1, W2, 2 * CPAD)
        if p == 0:
            acc_ref[...] = contrib
        else:
            acc_ref[...] += contrib

    bias = b_ref[...]                                    # (1, CPAD), broadcasts

    # --- epilogue: shift-combine packed halves + bias + relu, fused into the
    #     adaptive_avg_pool2d H bins; relu(leaky_relu_0.105(x)) == relu(x). ---
    for i in range(POOL):
        for idx, h in enumerate(range(HS[i], HE[i])):
            # conv row h = first half at row h + second half at row h+1
            row = jnp.maximum(
                acc_ref[:, h, :, :CPAD] + acc_ref[:, h + 1, :, CPAD:] + bias,
                0.0)                                     # (B, W2, CPAD)
            if idx == 0:
                hsum_ref[...] = row
            else:
                hsum_ref[...] += row
        for j in range(POOL):
            wsum = jnp.sum(hsum_ref[:, WS[j]:WE[j], :], axis=1)   # (B, CPAD)
            inv = 1.0 / float((HE[i] - HS[i]) * (WE[j] - WS[j]))
            o_ref[:, i, j, :] = wsum * inv               # lane-dense 128 store


@jax.jit
def my_model_forward(x_nchw, weight, bias):
    """x_nchw: (N, 19, 17, 9) f32; weight: (19, 48, 8, 6); bias: (48,).
    Returns (N, 48, 5, 5) f32 (PyTorch NCHW convention)."""
    n = x_nchw.shape[0]
    bsz = min(BATCH_TILE, n)
    npad = -(-n // bsz) * bsz

    # NHWC (bf16) + correlation padding; extra (KW-1) zero columns on the right
    # so the KW-unfold below can slice a full W2=16 window for every dx.
    x = jnp.transpose(x_nchw.astype(jnp.bfloat16), (0, 2, 3, 1))
    x = jnp.pad(x, ((0, npad - n), (PT, PB), (PL_, PR + KW - 1), (0, 0)))
    # KW-unfold: xw[n, h, x, dx*CIN + ci] = x_padded[n, h, x + dx, ci]
    xw = jnp.concatenate([x[:, :, dx:dx + W2, :] for dx in range(KW)], axis=-1)

    # ConvTranspose2d weight (CIN, COUT, KH, KW) -> flipped correlation kernel,
    # KW folded into the contraction axis, COUT zero-padded to 128 lanes, then
    # two dy taps packed side by side along the 256-wide lane dimension.
    w_corr = jnp.transpose(weight[:, :, ::-1, ::-1], (2, 3, 0, 1))  # (KH,KW,CIN,COUT)
    w_k = w_corr.reshape(KH, KWC, COUT).astype(jnp.float32)
    w_k = jnp.pad(w_k, ((0, 0), (0, 0), (0, CPAD - COUT)))          # (KH,114,128)
    w_pack = jnp.transpose(w_k.reshape(NPAIR, 2, KWC, CPAD),
                           (0, 2, 1, 3)).reshape(NPAIR, KWC, 2 * CPAD)
    w_pack = w_pack.astype(jnp.bfloat16)
    b2 = jnp.pad(bias.astype(jnp.float32).reshape(1, COUT),
                 ((0, 0), (0, CPAD - COUT)))

    flops = 2 * npad * (HOUT + 1) * W2 * KWC * (2 * CPAD) * NPAIR
    bytes_accessed = (xw.size * 2 + w_pack.size * 2 + b2.size * 4
                      + npad * POOL * POOL * CPAD * 4)

    out = pl.pallas_call(
        _model_kernel,
        out_shape=jax.ShapeDtypeStruct((npad, POOL, POOL, CPAD), jnp.float32),
        grid_spec=pltpu.PrefetchScalarGridSpec(
            num_scalar_prefetch=0,
            grid=(npad // bsz,),
            in_specs=[
                pl.BlockSpec((bsz, HP, W2, KWC), lambda b: (b, 0, 0, 0)),
                pl.BlockSpec((NPAIR, KWC, 2 * CPAD), lambda b: (0, 0, 0)),
                pl.BlockSpec((1, CPAD), lambda b: (0, 0)),
            ],
            out_specs=pl.BlockSpec((bsz, POOL, POOL, CPAD),
                                   lambda b: (b, 0, 0, 0)),
            scratch_shapes=[
                pltpu.VMEM((bsz, HOUT + 1, W2, 2 * CPAD), jnp.float32),
                pltpu.VMEM((bsz, W2, CPAD), jnp.float32),
            ],
        ),
        compiler_params=pltpu.CompilerParams(
            dimension_semantics=("parallel",),
            vmem_limit_bytes=48 * 1024 * 1024),
        cost_estimate=pl.CostEstimate(flops=flops, transcendentals=0,
                                      bytes_accessed=bytes_accessed),
    )(xw, w_pack, b2)

    out = out[:n, :, :, :COUT]
    return jnp.transpose(out, (0, 3, 1, 2))                        # -> NCHW


def _reference(x_nchw, weight, bias):
    """Pure-JAX reference of the same forward pass (independent structure)."""
    x = jnp.transpose(x_nchw, (0, 2, 3, 1))
    xp = jnp.pad(x, ((0, 0), (PT, PB), (PL_, PR), (0, 0)))
    wf = jnp.transpose(weight[:, :, ::-1, ::-1], (2, 3, 0, 1))
    conv = jnp.zeros((x.shape[0], HOUT, WOUT, COUT), jnp.float32)
    for dy in range(KH):
        for dx in range(KW):
            conv = conv + jnp.einsum(
                "nhwc,co->nhwo",
                xp[:, dy:dy + HOUT, dx:dx + WOUT, :], wf[dy, dx],
                precision=jax.lax.Precision.HIGHEST)
    conv = conv + bias
    act = jnp.maximum(jnp.where(conv > 0, conv, conv * 0.105), 0.0)
    pooled = jnp.stack([
        jnp.stack([act[:, HS[i]:HE[i], WS[j]:WE[j], :].mean(axis=(1, 2))
                   for j in range(POOL)], axis=1)
        for i in range(POOL)], axis=1)
    return jnp.transpose(pooled, (0, 3, 1, 2))


if __name__ == "__main__":
    key = jax.random.PRNGKey(0)
    kx, kwt, kb = jax.random.split(key, 3)

    N = 2  # small batch instead of 487
    x = jax.random.normal(kx, (N, CIN, HIN, WIN), dtype=jnp.float32)

    # deterministic synthetic parameters (shapes match nn.ConvTranspose2d(19,48,(8,6)))
    fan_in = CIN * KH * KW
    bound = 1.0 / (fan_in ** 0.5)
    weight = jax.random.uniform(kwt, (CIN, COUT, KH, KW),
                                minval=-bound, maxval=bound, dtype=jnp.float32)
    bias = jax.random.uniform(kb, (COUT,),
                              minval=-bound, maxval=bound, dtype=jnp.float32)

    out = jax.block_until_ready(my_model_forward(x, weight, bias))
    assert out.shape == (N, COUT, POOL, POOL), out.shape
    assert out.dtype == jnp.float32

    ref = jax.block_until_ready(_reference(x, weight, bias))
    assert bool(jnp.allclose(out, ref, rtol=2e-2, atol=2e-2)), \
        float(jnp.max(jnp.abs(out - ref)))

    print("KERNEL_OK")
</pallas_src>

<mosaic_0001>
module attributes {stable_mosaic.version = 11 : i64} {
  func.func @_model_kernel(%arg0: i32, %arg1: memref<2x26x16x114xbf16, #tpu.memory_space<vmem>>, %arg2: memref<4x114x256xbf16, #tpu.memory_space<vmem>>, %arg3: memref<1x128xf32, #tpu.memory_space<vmem>>, %arg4: memref<2x5x5x128xf32, #tpu.memory_space<vmem>>, %arg5: memref<2x20x16x256xf32, #tpu.memory_space<vmem>>, %arg6: memref<2x16x128xf32, #tpu.memory_space<vmem>>) attributes {dimension_semantics = [#tpu.dimension_semantics<parallel>], iteration_bounds = array<i64: 1>, scalar_prefetch = 0 : i64, scratch_operands = 2 : i64, tpu.core_type = #tpu.core_type<tc>, window_params = [{transform_indices = @transform_0, window_bounds = array<i64: 2, 26, 16, 114>}, {pipeline_mode = #tpu.pipeline_mode<synchronous>, transform_indices = @transform_1, window_bounds = array<i64: 4, 114, 256>}, {pipeline_mode = #tpu.pipeline_mode<synchronous>, transform_indices = @transform_2, window_bounds = array<i64: 1, 128>}, {transform_indices = @transform_3, window_bounds = array<i64: 2, 5, 5, 128>}]} {
    %c0 = arith.constant 0 : index
    %c0_0 = arith.constant 0 : index
    %c0_1 = arith.constant 0 : index
    %c0_2 = arith.constant 0 : index
    %0 = vector.load %arg1[%c0, %c0_0, %c0_1, %c0_2] : memref<2x26x16x114xbf16, #tpu.memory_space<vmem>>, vector<2x20x16x114xbf16>
    %1 = vector.shape_cast %0 : vector<2x20x16x114xbf16> to vector<640x114xbf16>
    %c0_3 = arith.constant 0 : index
    %c0_4 = arith.constant 0 : index
    %c0_5 = arith.constant 0 : index
    %2 = vector.load %arg2[%c0_3, %c0_4, %c0_5] : memref<4x114x256xbf16, #tpu.memory_space<vmem>>, vector<1x114x256xbf16>
    %3 = vector.shape_cast %2 : vector<1x114x256xbf16> to vector<114x256xbf16>
    %cst = arith.constant dense<0.000000e+00> : vector<640x256xf32>
    %4 = tpu.matmul %1, %3, %cst {dimension_numbers = #tpu.dot_dimension_numbers<[1], [0], [0], [1], [0, 0, 1, 1], [], []>} : vector<640x114xbf16>, vector<114x256xbf16>, vector<640x256xf32> -> vector<640x256xf32>
    %5 = vector.shape_cast %4 : vector<640x256xf32> to vector<2x20x16x256xf32>
    %c0_6 = arith.constant 0 : index
    %c0_7 = arith.constant 0 : index
    %c0_8 = arith.constant 0 : index
    %c0_9 = arith.constant 0 : index
    %6 = vector.load %arg5[%c0_6, %c0_7, %c0_8, %c0_9] : memref<2x20x16x256xf32, #tpu.memory_space<vmem>>, vector<2x20x16x256xf32>
    tpu.vector_store %arg5[%c0_6, %c0_7, %c0_8, %c0_9], %5 {strides = array<i32>} : memref<2x20x16x256xf32, #tpu.memory_space<vmem>>, vector<2x20x16x256xf32>,
    %c0_10 = arith.constant 0 : index
    %c2 = arith.constant 2 : index
    %c0_11 = arith.constant 0 : index
    %c0_12 = arith.constant 0 : index
    %7 = vector.load %arg1[%c0_10, %c2, %c0_11, %c0_12] : memref<2x26x16x114xbf16, #tpu.memory_space<vmem>>, vector<2x20x16x114xbf16>
    %8 = vector.shape_cast %7 : vector<2x20x16x114xbf16> to vector<640x114xbf16>
    %c1 = arith.constant 1 : index
    %c0_13 = arith.constant 0 : index
    %c0_14 = arith.constant 0 : index
    %9 = vector.load %arg2[%c1, %c0_13, %c0_14] : memref<4x114x256xbf16, #tpu.memory_space<vmem>>, vector<1x114x256xbf16>
    %10 = vector.shape_cast %9 : vector<1x114x256xbf16> to vector<114x256xbf16>
    %cst_15 = arith.constant dense<0.000000e+00> : vector<640x256xf32>
    %11 = tpu.matmul %8, %10, %cst_15 {dimension_numbers = #tpu.dot_dimension_numbers<[1], [0], [0], [1], [0, 0, 1, 1], [], []>} : vector<640x114xbf16>, vector<114x256xbf16>, vector<640x256xf32> -> vector<640x256xf32>
    %12 = vector.shape_cast %11 : vector<640x256xf32> to vector<2x20x16x256xf32>
    %c0_16 = arith.constant 0 : index
    %c0_17 = arith.constant 0 : index
    %c0_18 = arith.constant 0 : index
    %c0_19 = arith.constant 0 : index
    %13 = vector.load %arg5[%c0_16, %c0_17, %c0_18, %c0_19] : memref<2x20x16x256xf32, #tpu.memory_space<vmem>>, vector<2x20x16x256xf32>
    %14 = arith.addf %13, %12 : vector<2x20x16x256xf32>
    %c0_20 = arith.constant 0 : index
    %c0_21 = arith.constant 0 : index
    %c0_22 = arith.constant 0 : index
    %c0_23 = arith.constant 0 : index
    %15 = vector.load %arg5[%c0_20, %c0_21, %c0_22, %c0_23] : memref<2x20x16x256xf32, #tpu.memory_space<vmem>>, vector<2x20x16x256xf32>
    tpu.vector_store %arg5[%c0_20, %c0_21, %c0_22, %c0_23], %14 {strides = array<i32>} : memref<2x20x16x256xf32, #tpu.memory_space<vmem>>, vector<2x20x16x256xf32>,
    %c0_24 = arith.constant 0 : index
    %c4 = arith.constant 4 : index
    %c0_25 = arith.constant 0 : index
    %c0_26 = arith.constant 0 : index
    %16 = vector.load %arg1[%c0_24, %c4, %c0_25, %c0_26] : memref<2x26x16x114xbf16, #tpu.memory_space<vmem>>, vector<2x20x16x114xbf16>
    %17 = vector.shape_cast %16 : vector<2x20x16x114xbf16> to vector<640x114xbf16>
    %c2_27 = arith.constant 2 : index
    %c0_28 = arith.constant 0 : index
    %c0_29 = arith.constant 0 : index
    %18 = vector.load %arg2[%c2_27, %c0_28, %c0_29] : memref<4x114x256xbf16, #tpu.memory_space<vmem>>, vector<1x114x256xbf16>
    %19 = vector.shape_cast %18 : vector<1x114x256xbf16> to vector<114x256xbf16>
    %cst_30 = arith.constant dense<0.000000e+00> : vector<640x256xf32>
    %20 = tpu.matmul %17, %19, %cst_30 {dimension_numbers = #tpu.dot_dimension_numbers<[1], [0], [0], [1], [0, 0, 1, 1], [], []>} : vector<640x114xbf16>, vector<114x256xbf16>, vector<640x256xf32> -> vector<640x256xf32>
    %21 = vector.shape_cast %20 : vector<640x256xf32> to vector<2x20x16x256xf32>
    %c0_31 = arith.constant 0 : index
    %c0_32 = arith.constant 0 : index
    %c0_33 = arith.constant 0 : index
    %c0_34 = arith.constant 0 : index
    %22 = vector.load %arg5[%c0_31, %c0_32, %c0_33, %c0_34] : memref<2x20x16x256xf32, #tpu.memory_space<vmem>>, vector<2x20x16x256xf32>
    %23 = arith.addf %22, %21 : vector<2x20x16x256xf32>
    %c0_35 = arith.constant 0 : index
    %c0_36 = arith.constant 0 : index
    %c0_37 = arith.constant 0 : index
    %c0_38 = arith.constant 0 : index
    %24 = vector.load %arg5[%c0_35, %c0_36, %c0_37, %c0_38] : memref<2x20x16x256xf32, #tpu.memory_space<vmem>>, vector<2x20x16x256xf32>
    tpu.vector_store %arg5[%c0_35, %c0_36, %c0_37, %c0_38], %23 {strides = array<i32>} : memref<2x20x16x256xf32, #tpu.memory_space<vmem>>, vector<2x20x16x256xf32>,
    %c0_39 = arith.constant 0 : index
    %c6 = arith.constant 6 : index
    %c0_40 = arith.constant 0 : index
    %c0_41 = arith.constant 0 : index
    %25 = vector.load %arg1[%c0_39, %c6, %c0_40, %c0_41] : memref<2x26x16x114xbf16, #tpu.memory_space<vmem>>, vector<2x20x16x114xbf16>
    %26 = vector.shape_cast %25 : vector<2x20x16x114xbf16> to vector<640x114xbf16>
    %c3 = arith.constant 3 : index
    %c0_42 = arith.constant 0 : index
    %c0_43 = arith.constant 0 : index
    %27 = vector.load %arg2[%c3, %c0_42, %c0_43] : memref<4x114x256xbf16, #tpu.memory_space<vmem>>, vector<1x114x256xbf16>
    %28 = vector.shape_cast %27 : vector<1x114x256xbf16> to vector<114x256xbf16>
    %cst_44 = arith.constant dense<0.000000e+00> : vector<640x256xf32>
    %29 = tpu.matmul %26, %28, %cst_44 {dimension_numbers = #tpu.dot_dimension_numbers<[1], [0], [0], [1], [0, 0, 1, 1], [], []>} : vector<640x114xbf16>, vector<114x256xbf16>, vector<640x256xf32> -> vector<640x256xf32>
    %30 = vector.shape_cast %29 : vector<640x256xf32> to vector<2x20x16x256xf32>
    %c0_45 = arith.constant 0 : index
    %c0_46 = arith.constant 0 : index
    %c0_47 = arith.constant 0 : index
    %c0_48 = arith.constant 0 : index
    %31 = vector.load %arg5[%c0_45, %c0_46, %c0_47, %c0_48] : memref<2x20x16x256xf32, #tpu.memory_space<vmem>>, vector<2x20x16x256xf32>
    %32 = arith.addf %31, %30 : vector<2x20x16x256xf32>
    %c0_49 = arith.constant 0 : index
    %c0_50 = arith.constant 0 : index
    %c0_51 = arith.constant 0 : index
    %c0_52 = arith.constant 0 : index
    %33 = vector.load %arg5[%c0_49, %c0_50, %c0_51, %c0_52] : memref<2x20x16x256xf32, #tpu.memory_space<vmem>>, vector<2x20x16x256xf32>
    tpu.vector_store %arg5[%c0_49, %c0_50, %c0_51, %c0_52], %32 {strides = array<i32>} : memref<2x20x16x256xf32, #tpu.memory_space<vmem>>, vector<2x20x16x256xf32>,
    %c0_53 = arith.constant 0 : index
    %c0_54 = arith.constant 0 : index
    %34 = vector.load %arg3[%c0_53, %c0_54] : memref<1x128xf32, #tpu.memory_space<vmem>>, vector<1x128xf32>
    %c0_55 = arith.constant 0 : index
    %c0_56 = arith.constant 0 : index
    %c0_57 = arith.constant 0 : index
    %c0_58 = arith.constant 0 : index
    %35 = vector.load %arg5[%c0_55, %c0_56, %c0_57, %c0_58] : memref<2x20x16x256xf32, #tpu.memory_space<vmem>>, vector<2x1x16x128xf32>
    %36 = vector.shape_cast %35 : vector<2x1x16x128xf32> to vector<2x16x128xf32>
    %c0_59 = arith.constant 0 : index
    %c1_60 = arith.constant 1 : index
    %c0_61 = arith.constant 0 : index
    %c128 = arith.constant 128 : index
    %37 = vector.load %arg5[%c0_59, %c1_60, %c0_61, %c128] : memref<2x20x16x256xf32, #tpu.memory_space<vmem>>, vector<2x1x16x128xf32>
    %38 = vector.shape_cast %37 : vector<2x1x16x128xf32> to vector<2x16x128xf32>
    %39 = arith.addf %36, %38 : vector<2x16x128xf32>
    %40 = vector.shape_cast %34 : vector<1x128xf32> to vector<1x1x128xf32>
    %41 = vector.broadcast %40 : vector<1x1x128xf32> to vector<2x16x128xf32>
    %42 = arith.addf %39, %41 : vector<2x16x128xf32>
    %cst_62 = arith.constant 0.000000e+00 : f32
    %43 = vector.broadcast %cst_62 : f32 to vector<2x16x128xf32>
    %44 = arith.maximumf %42, %43 : vector<2x16x128xf32>
    %c0_63 = arith.constant 0 : index
    %c0_64 = arith.constant 0 : index
    %c0_65 = arith.constant 0 : index
    %45 = vector.load %arg6[%c0_63, %c0_64, %c0_65] : memref<2x16x128xf32, #tpu.memory_space<vmem>>, vector<2x16x128xf32>
    tpu.vector_store %arg6[%c0_63, %c0_64, %c0_65], %44 {strides = array<i32>} : memref<2x16x128xf32, #tpu.memory_space<vmem>>, vector<2x16x128xf32>,
    %c0_66 = arith.constant 0 : index
    %c1_67 = arith.constant 1 : index
    %c0_68 = arith.constant 0 : index
    %c0_69 = arith.constant 0 : index
    %46 = vector.load %arg5[%c0_66, %c1_67, %c0_68, %c0_69] : memref<2x20x16x256xf32, #tpu.memory_space<vmem>>, vector<2x1x16x128xf32>
    %47 = vector.shape_cast %46 : vector<2x1x16x128xf32> to vector<2x16x128xf32>
    %c0_70 = arith.constant 0 : index
    %c2_71 = arith.constant 2 : index
    %c0_72 = arith.constant 0 : index
    %c128_73 = arith.constant 128 : index
    %48 = vector.load %arg5[%c0_70, %c2_71, %c0_72, %c128_73] : memref<2x20x16x256xf32, #tpu.memory_space<vmem>>, vector<2x1x16x128xf32>
    %49 = vector.shape_cast %48 : vector<2x1x16x128xf32> to vector<2x16x128xf32>
    %50 = arith.addf %47, %49 : vector<2x16x128xf32>
    %51 = vector.shape_cast %34 : vector<1x128xf32> to vector<1x1x128xf32>
    %52 = vector.broadcast %51 : vector<1x1x128xf32> to vector<2x16x128xf32>
    %53 = arith.addf %50, %52 : vector<2x16x128xf32>
    %cst_74 = arith.constant 0.000000e+00 : f32
    %54 = vector.broadcast %cst_74 : f32 to vector<2x16x128xf32>
    %55 = arith.maximumf %53, %54 : vector<2x16x128xf32>
    %c0_75 = arith.constant 0 : index
    %c0_76 = arith.constant 0 : index
    %c0_77 = arith.constant 0 : index
    %56 = vector.load %arg6[%c0_75, %c0_76, %c0_77] : memref<2x16x128xf32, #tpu.memory_space<vmem>>, vector<2x16x128xf32>
    %57 = arith.addf %56, %55 : vector<2x16x128xf32>
    %c0_78 = arith.constant 0 : index
    %c0_79 = arith.constant 0 : index
    %c0_80 = arith.constant 0 : index
    %58 = vector.load %arg6[%c0_78, %c0_79, %c0_80] : memref<2x16x128xf32, #tpu.memory_space<vmem>>, vector<2x16x128xf32>
    tpu.vector_store %arg6[%c0_78, %c0_79, %c0_80], %57 {strides = array<i32>} : memref<2x16x128xf32, #tpu.memory_space<vmem>>, vector<2x16x128xf32>,
    %c0_81 = arith.constant 0 : index
    %c2_82 = arith.constant 2 : index
    %c0_83 = arith.constant 0 : index
    %c0_84 = arith.constant 0 : index
    %59 = vector.load %arg5[%c0_81, %c2_82, %c0_83, %c0_84] : memref<2x20x16x256xf32, #tpu.memory_space<vmem>>, vector<2x1x16x128xf32>
    %60 = vector.shape_cast %59 : vector<2x1x16x128xf32> to vector<2x16x128xf32>
    %c0_85 = arith.constant 0 : index
    %c3_86 = arith.constant 3 : index
    %c0_87 = arith.constant 0 : index
    %c128_88 = arith.constant 128 : index
    %61 = vector.load %arg5[%c0_85, %c3_86, %c0_87, %c128_88] : memref<2x20x16x256xf32, #tpu.memory_space<vmem>>, vector<2x1x16x128xf32>
    %62 = vector.shape_cast %61 : vector<2x1x16x128xf32> to vector<2x16x128xf32>
    %63 = arith.addf %60, %62 : vector<2x16x128xf32>
    %64 = vector.shape_cast %34 : vector<1x128xf32> to vector<1x1x128xf32>
    %65 = vector.broadcast %64 : vector<1x1x128xf32> to vector<2x16x128xf32>
    %66 = arith.addf %63, %65 : vector<2x16x128xf32>
    %cst_89 = arith.constant 0.000000e+00 : f32
    %67 = vector.broadcast %cst_89 : f32 to vector<2x16x128xf32>
    %68 = arith.maximumf %66, %67 : vector<2x16x128xf32>
    %c0_90 = arith.constant 0 : index
    %c0_91 = arith.constant 0 : index
    %c0_92 = arith.constant 0 : index
    %69 = vector.load %arg6[%c0_90, %c0_91, %c0_92] : memref<2x16x128xf32, #tpu.memory_space<vmem>>, vector<2x16x128xf32>
    %70 = arith.addf %69, %68 : vector<2x16x128xf32>
    %c0_93 = arith.constant 0 : index
    %c0_94 = arith.constant 0 : index
    %c0_95 = arith.constant 0 : index
    %71 = vector.load %arg6[%c0_93, %c0_94, %c0_95] : memref<2x16x128xf32, #tpu.memory_space<vmem>>, vector<2x16x128xf32>
    tpu.vector_store %arg6[%c0_93, %c0_94, %c0_95], %70 {strides = array<i32>} : memref<2x16x128xf32, #tpu.memory_space<vmem>>, vector<2x16x128xf32>,
    %c0_96 = arith.constant 0 : index
    %c3_97 = arith.constant 3 : index
    %c0_98 = arith.constant 0 : index
    %c0_99 = arith.constant 0 : index
    %72 = vector.load %arg5[%c0_96, %c3_97, %c0_98, %c0_99] : memref<2x20x16x256xf32, #tpu.memory_space<vmem>>, vector<2x1x16x128xf32>
    %73 = vector.shape_cast %72 : vector<2x1x16x128xf32> to vector<2x16x128xf32>
    %c0_100 = arith.constant 0 : index
    %c4_101 = arith.constant 4 : index
    %c0_102 = arith.constant 0 : index
    %c128_103 = arith.constant 128 : index
    %74 = vector.load %arg5[%c0_100, %c4_101, %c0_102, %c128_103] : memref<2x20x16x256xf32, #tpu.memory_space<vmem>>, vector<2x1x16x128xf32>
    %75 = vector.shape_cast %74 : vector<2x1x16x128xf32> to vector<2x16x128xf32>
    %76 = arith.addf %73, %75 : vector<2x16x128xf32>
    %77 = vector.shape_cast %34 : vector<1x128xf32> to vector<1x1x128xf32>
    %78 = vector.broadcast %77 : vector<1x1x128xf32> to vector<2x16x128xf32>
    %79 = arith.addf %76, %78 : vector<2x16x128xf32>
    %cst_104 = arith.constant 0.000000e+00 : f32
    %80 = vector.broadcast %cst_104 : f32 to vector<2x16x128xf32>
    %81 = arith.maximumf %79, %80 : vector<2x16x128xf32>
    %c0_105 = arith.constant 0 : index
    %c0_106 = arith.constant 0 : index
    %c0_107 = arith.constant 0 : index
    %82 = vector.load %arg6[%c0_105, %c0_106, %c0_107] : memref<2x16x128xf32, #tpu.memory_space<vmem>>, vector<2x16x128xf32>
    %83 = arith.addf %82, %81 : vector<2x16x128xf32>
    %c0_108 = arith.constant 0 : index
    %c0_109 = arith.constant 0 : index
    %c0_110 = arith.constant 0 : index
    %84 = vector.load %arg6[%c0_108, %c0_109, %c0_110] : memref<2x16x128xf32, #tpu.memory_space<vmem>>, vector<2x16x128xf32>
    tpu.vector_store %arg6[%c0_108, %c0_109, %c0_110], %83 {strides = array<i32>} : memref<2x16x128xf32, #tpu.memory_space<vmem>>, vector<2x16x128xf32>,
    %c0_111 = arith.constant 0 : index
    %c0_112 = arith.constant 0 : index
    %c0_113 = arith.constant 0 : index
    %85 = vector.load %arg6[%c0_111, %c0_112, %c0_113] : memref<2x16x128xf32, #tpu.memory_space<vmem>>, vector<2x3x128xf32>
    %cst_114 = arith.constant dense<0.000000e+00> : vector<2x128xf32>
    %86 = vector.multi_reduction <add>, %85, %cst_114 [1] : vector<2x3x128xf32> to vector<2x128xf32>
    %cst_115 = arith.constant 0.0833333358 : f32
    %87 = vector.broadcast %cst_115 : f32 to vector<2x128xf32>
    %88 = arith.mulf %86, %87 : vector<2x128xf32>
    %c0_116 = arith.constant 0 : index
    %c0_117 = arith.constant 0 : index
    %c0_118 = arith.constant 0 : index
    %c0_119 = arith.constant 0 : index
    %89 = vector.load %arg4[%c0_116, %c0_117, %c0_118, %c0_119] : memref<2x5x5x128xf32, #tpu.memory_space<vmem>>, vector<2x1x1x128xf32>
    %90 = vector.shape_cast %89 : vector<2x1x1x128xf32> to vector<2x128xf32>
    %91 = vector.shape_cast %88 : vector<2x128xf32> to vector<2x1x1x128xf32>
    tpu.vector_store %arg4[%c0_116, %c0_117, %c0_118, %c0_119], %91 {strides = array<i32>} : memref<2x5x5x128xf32, #tpu.memory_space<vmem>>, vector<2x1x1x128xf32>,
    %c0_120 = arith.constant 0 : index
    %c2_121 = arith.constant 2 : index
    %c0_122 = arith.constant 0 : index
    %92 = vector.load %arg6[%c0_120, %c2_121, %c0_122] : memref<2x16x128xf32, #tpu.memory_space<vmem>>, vector<2x3x128xf32>
    %cst_123 = arith.constant dense<0.000000e+00> : vector<2x128xf32>
    %93 = vector.multi_reduction <add>, %92, %cst_123 [1] : vector<2x3x128xf32> to vector<2x128xf32>
    %cst_124 = arith.constant 0.0833333358 : f32
    %94 = vector.broadcast %cst_124 : f32 to vector<2x128xf32>
    %95 = arith.mulf %93, %94 : vector<2x128xf32>
    %c0_125 = arith.constant 0 : index
    %c0_126 = arith.constant 0 : index
    %c1_127 = arith.constant 1 : index
    %c0_128 = arith.constant 0 : index
    %96 = vector.load %arg4[%c0_125, %c0_126, %c1_127, %c0_128] : memref<2x5x5x128xf32, #tpu.memory_space<vmem>>, vector<2x1x1x128xf32>
    %97 = vector.shape_cast %96 : vector<2x1x1x128xf32> to vector<2x128xf32>
    %98 = vector.shape_cast %95 : vector<2x128xf32> to vector<2x1x1x128xf32>
    tpu.vector_store %arg4[%c0_125, %c0_126, %c1_127, %c0_128], %98 {strides = array<i32>} : memref<2x5x5x128xf32, #tpu.memory_space<vmem>>, vector<2x1x1x128xf32>,
    %c0_129 = arith.constant 0 : index
    %c4_130 = arith.constant 4 : index
    %c0_131 = arith.constant 0 : index
    %99 = vector.load %arg6[%c0_129, %c4_130, %c0_131] : memref<2x16x128xf32, #tpu.memory_space<vmem>>, vector<2x3x128xf32>
    %cst_132 = arith.constant dense<0.000000e+00> : vector<2x128xf32>
    %100 = vector.multi_reduction <add>, %99, %cst_132 [1] : vector<2x3x128xf32> to vector<2x128xf32>
    %cst_133 = arith.constant 0.0833333358 : f32
    %101 = vector.broadcast %cst_133 : f32 to vector<2x128xf32>
    %102 = arith.mulf %100, %101 : vector<2x128xf32>
    %c0_134 = arith.constant 0 : index
    %c0_135 = arith.constant 0 : index
    %c2_136 = arith.constant 2 : index
    %c0_137 = arith.constant 0 : index
    %103 = vector.load %arg4[%c0_134, %c0_135, %c2_136, %c0_137] : memref<2x5x5x128xf32, #tpu.memory_space<vmem>>, vector<2x1x1x128xf32>
    %104 = vector.shape_cast %103 : vector<2x1x1x128xf32> to vector<2x128xf32>
    %105 = vector.shape_cast %102 : vector<2x128xf32> to vector<2x1x1x128xf32>
    tpu.vector_store %arg4[%c0_134, %c0_135, %c2_136, %c0_137], %105 {strides = array<i32>} : memref<2x5x5x128xf32, #tpu.memory_space<vmem>>, vector<2x1x1x128xf32>,
    %c0_138 = arith.constant 0 : index
    %c6_139 = arith.constant 6 : index
    %c0_140 = arith.constant 0 : index
    %106 = vector.load %arg6[%c0_138, %c6_139, %c0_140] : memref<2x16x128xf32, #tpu.memory_space<vmem>>, vector<2x3x128xf32>
    %cst_141 = arith.constant dense<0.000000e+00> : vector<2x128xf32>
    %107 = vector.multi_reduction <add>, %106, %cst_141 [1] : vector<2x3x128xf32> to vector<2x128xf32>
    %cst_142 = arith.constant 0.0833333358 : f32
    %108 = vector.broadcast %cst_142 : f32 to vector<2x128xf32>
    %109 = arith.mulf %107, %108 : vector<2x128xf32>
    %c0_143 = arith.constant 0 : index
    %c0_144 = arith.constant 0 : index
    %c3_145 = arith.constant 3 : index
    %c0_146 = arith.constant 0 : index
    %110 = vector.load %arg4[%c0_143, %c0_144, %c3_145, %c0_146] : memref<2x5x5x128xf32, #tpu.memory_space<vmem>>, vector<2x1x1x128xf32>
    %111 = vector.shape_cast %110 : vector<2x1x1x128xf32> to vector<2x128xf32>
    %112 = vector.shape_cast %109 : vector<2x128xf32> to vector<2x1x1x128xf32>
    tpu.vector_store %arg4[%c0_143, %c0_144, %c3_145, %c0_146], %112 {strides = array<i32>} : memref<2x5x5x128xf32, #tpu.memory_space<vmem>>, vector<2x1x1x128xf32>,
    %c0_147 = arith.constant 0 : index
    %c8 = arith.constant 8 : index
    %c0_148 = arith.constant 0 : index
    %113 = vector.load %arg6[%c0_147, %c8, %c0_148] : memref<2x16x128xf32, #tpu.memory_space<vmem>>, vector<2x3x128xf32>
    %cst_149 = arith.constant dense<0.000000e+00> : vector<2x128xf32>
    %114 = vector.multi_reduction <add>, %113, %cst_149 [1] : vector<2x3x128xf32> to vector<2x128xf32>
    %cst_150 = arith.constant 0.0833333358 : f32
    %115 = vector.broadcast %cst_150 : f32 to vector<2x128xf32>
    %116 = arith.mulf %114, %115 : vector<2x128xf32>
    %c0_151 = arith.constant 0 : index
    %c0_152 = arith.constant 0 : index
    %c4_153 = arith.constant 4 : index
    %c0_154 = arith.constant 0 : index
    %117 = vector.load %arg4[%c0_151, %c0_152, %c4_153, %c0_154] : memref<2x5x5x128xf32, #tpu.memory_space<vmem>>, vector<2x1x1x128xf32>
    %118 = vector.shape_cast %117 : vector<2x1x1x128xf32> to vector<2x128xf32>
    %119 = vector.shape_cast %116 : vector<2x128xf32> to vector<2x1x1x128xf32>
    tpu.vector_store %arg4[%c0_151, %c0_152, %c4_153, %c0_154], %119 {strides = array<i32>} : memref<2x5x5x128xf32, #tpu.memory_space<vmem>>, vector<2x1x1x128xf32>,
    %c0_155 = arith.constant 0 : index
    %c3_156 = arith.constant 3 : index
    %c0_157 = arith.constant 0 : index
    %c0_158 = arith.constant 0 : index
    %120 = vector.load %arg5[%c0_155, %c3_156, %c0_157, %c0_158] : memref<2x20x16x256xf32, #tpu.memory_space<vmem>>, vector<2x1x16x128xf32>
    %121 = vector.shape_cast %120 : vector<2x1x16x128xf32> to vector<2x16x128xf32>
    %c0_159 = arith.constant 0 : index
    %c4_160 = arith.constant 4 : index
    %c0_161 = arith.constant 0 : index
    %c128_162 = arith.constant 128 : index
    %122 = vector.load %arg5[%c0_159, %c4_160, %c0_161, %c128_162] : memref<2x20x16x256xf32, #tpu.memory_space<vmem>>, vector<2x1x16x128xf32>
    %123 = vector.shape_cast %122 : vector<2x1x16x128xf32> to vector<2x16x128xf32>
    %124 = arith.addf %121, %123 : vector<2x16x128xf32>
    %125 = vector.shape_cast %34 : vector<1x128xf32> to vector<1x1x128xf32>
    %126 = vector.broadcast %125 : vector<1x1x128xf32> to vector<2x16x128xf32>
    %127 = arith.addf %124, %126 : vector<2x16x128xf32>
    %cst_163 = arith.constant 0.000000e+00 : f32
    %128 = vector.broadcast %cst_163 : f32 to vector<2x16x128xf32>
    %129 = arith.maximumf %127, %128 : vector<2x16x128xf32>
    %c0_164 = arith.constant 0 : index
    %c0_165 = arith.constant 0 : index
    %c0_166 = arith.constant 0 : index
    %130 = vector.load %arg6[%c0_164, %c0_165, %c0_166] : memref<2x16x128xf32, #tpu.memory_space<vmem>>, vector<2x16x128xf32>
    tpu.vector_store %arg6[%c0_164, %c0_165, %c0_166], %129 {strides = array<i32>} : memref<2x16x128xf32, #tpu.memory_space<vmem>>, vector<2x16x128xf32>,
    %c0_167 = arith.constant 0 : index
    %c4_168 = arith.constant 4 : index
    %c0_169 = arith.constant 0 : index
    %c0_170 = arith.constant 0 : index
    %131 = vector.load %arg5[%c0_167, %c4_168, %c0_169, %c0_170] : memref<2x20x16x256xf32, #tpu.memory_space<vmem>>, vector<2x1x16x128xf32>
    %132 = vector.shape_cast %131 : vector<2x1x16x128xf32> to vector<2x16x128xf32>
    %c0_171 = arith.constant 0 : index
    %c5 = arith.constant 5 : index
    %c0_172 = arith.constant 0 : index
    %c128_173 = arith.constant 128 : index
    %133 = vector.load %arg5[%c0_171, %c5, %c0_172, %c128_173] : memref<2x20x16x256xf32, #tpu.memory_space<vmem>>, vector<2x1x16x128xf32>
    %134 = vector.shape_cast %133 : vector<2x1x16x128xf32> to vector<2x16x128xf32>
    %135 = arith.addf %132, %134 : vector<2x16x128xf32>
    %136 = vector.shape_cast %34 : vector<1x128xf32> to vector<1x1x128xf32>
    %137 = vector.broadcast %136 : vector<1x1x128xf32> to vector<2x16x128xf32>
    %138 = arith.addf %135, %137 : vector<2x16x128xf32>
    %cst_174 = arith.constant 0.000000e+00 : f32
    %139 = vector.broadcast %cst_174 : f32 to vector<2x16x128xf32>
    %140 = arith.maximumf %138, %139 : vector<2x16x128xf32>
    %c0_175 = arith.constant 0 : index
    %c0_176 = arith.constant 0 : index
    %c0_177 = arith.constant 0 : index
    %141 = vector.load %arg6[%c0_175, %c0_176, %c0_177] : memref<2x16x128xf32, #tpu.memory_space<vmem>>, vector<2x16x128xf32>
    %142 = arith.addf %141, %140 : vector<2x16x128xf32>
    %c0_178 = arith.constant 0 : index
    %c0_179 = arith.constant 0 : index
    %c0_180 = arith.constant 0 : index
    %143 = vector.load %arg6[%c0_178, %c0_179, %c0_180] : memref<2x16x128xf32, #tpu.memory_space<vmem>>, vector<2x16x128xf32>
    tpu.vector_store %arg6[%c0_178, %c0_179, %c0_180], %142 {strides = array<i32>} : memref<2x16x128xf32, #tpu.memory_space<vmem>>, vector<2x16x128xf32>,
    %c0_181 = arith.constant 0 : index
    %c5_182 = arith.constant 5 : index
    %c0_183 = arith.constant 0 : index
    %c0_184 = arith.constant 0 : index
    %144 = vector.load %arg5[%c0_181, %c5_182, %c0_183, %c0_184] : memref<2x20x16x256xf32, #tpu.memory_space<vmem>>, vector<2x1x16x128xf32>
    %145 = vector.shape_cast %144 : vector<2x1x16x128xf32> to vector<2x16x128xf32>
    %c0_185 = arith.constant 0 : index
    %c6_186 = arith.constant 6 : index
    %c0_187 = arith.constant 0 : index
    %c128_188 = arith.constant 128 : index
    %146 = vector.load %arg5[%c0_185, %c6_186, %c0_187, %c128_188] : memref<2x20x16x256xf32, #tpu.memory_space<vmem>>, vector<2x1x16x128xf32>
    %147 = vector.shape_cast %146 : vector<2x1x16x128xf32> to vector<2x16x128xf32>
    %148 = arith.addf %145, %147 : vector<2x16x128xf32>
    %149 = vector.shape_cast %34 : vector<1x128xf32> to vector<1x1x128xf32>
    %150 = vector.broadcast %149 : vector<1x1x128xf32> to vector<2x16x128xf32>
    %151 = arith.addf %148, %150 : vector<2x16x128xf32>
    %cst_189 = arith.constant 0.000000e+00 : f32
    %152 = vector.broadcast %cst_189 : f32 to vector<2x16x128xf32>
    %153 = arith.maximumf %151, %152 : vector<2x16x128xf32>
    %c0_190 = arith.constant 0 : index
    %c0_191 = arith.constant 0 : index
    %c0_192 = arith.constant 0 : index
    %154 = vector.load %arg6[%c0_190, %c0_191, %c0_192] : memref<2x16x128xf32, #tpu.memory_space<vmem>>, vector<2x16x128xf32>
    %155 = arith.addf %154, %153 : vector<2x16x128xf32>
    %c0_193 = arith.constant 0 : index
    %c0_194 = arith.constant 0 : index
    %c0_195 = arith.constant 0 : index
    %156 = vector.load %arg6[%c0_193, %c0_194, %c0_195] : memref<2x16x128xf32, #tpu.memory_space<vmem>>, vector<2x16x128xf32>
    tpu.vector_store %arg6[%c0_193, %c0_194, %c0_195], %155 {strides = array<i32>} : memref<2x16x128xf32, #tpu.memory_space<vmem>>, vector<2x16x128xf32>,
    %c0_196 = arith.constant 0 : index
    %c6_197 = arith.constant 6 : index
    %c0_198 = arith.constant 0 : index
    %c0_199 = arith.constant 0 : index
    %157 = vector.load %arg5[%c0_196, %c6_197, %c0_198, %c0_199] : memref<2x20x16x256xf32, #tpu.memory_space<vmem>>, vector<2x1x16x128xf32>
    %158 = vector.shape_cast %157 : vector<2x1x16x128xf32> to vector<2x16x128xf32>
    %c0_200 = arith.constant 0 : index
    %c7 = arith.constant 7 : index
    %c0_201 = arith.constant 0 : index
    %c128_202 = arith.constant 128 : index
    %159 = vector.load %arg5[%c0_200, %c7, %c0_201, %c128_202] : memref<2x20x16x256xf32, #tpu.memory_space<vmem>>, vector<2x1x16x128xf32>
    %160 = vector.shape_cast %159 : vector<2x1x16x128xf32> to vector<2x16x128xf32>
    %161 = arith.addf %158, %160 : vector<2x16x128xf32>
    %162 = vector.shape_cast %34 : vector<1x128xf32> to vector<1x1x128xf32>
    %163 = vector.broadcast %162 : vector<1x1x128xf32> to vector<2x16x128xf32>
    %164 = arith.addf %161, %163 : vector<2x16x128xf32>
    %cst_203 = arith.constant 0.000000e+00 : f32
    %165 = vector.broadcast %cst_203 : f32 to vector<2x16x128xf32>
    %166 = arith.maximumf %164, %165 : vector<2x16x128xf32>
    %c0_204 = arith.constant 0 : index
    %c0_205 = arith.constant 0 : index
    %c0_206 = arith.constant 0 : index
    %167 = vector.load %arg6[%c0_204, %c0_205, %c0_206] : memref<2x16x128xf32, #tpu.memory_space<vmem>>, vector<2x16x128xf32>
    %168 = arith.addf %167, %166 : vector<2x16x128xf32>
    %c0_207 = arith.constant 0 : index
    %c0_208 = arith.constant 0 : index
    %c0_209 = arith.constant 0 : index
    %169 = vector.load %arg6[%c0_207, %c0_208, %c0_209] : memref<2x16x128xf32, #tpu.memory_space<vmem>>, vector<2x16x128xf32>
    tpu.vector_store %arg6[%c0_207, %c0_208, %c0_209], %168 {strides = array<i32>} : memref<2x16x128xf32, #tpu.memory_space<vmem>>, vector<2x16x128xf32>,
    %c0_210 = arith.constant 0 : index
    %c7_211 = arith.constant 7 : index
    %c0_212 = arith.constant 0 : index
    %c0_213 = arith.constant 0 : index
    %170 = vector.load %arg5[%c0_210, %c7_211, %c0_212, %c0_213] : memref<2x20x16x256xf32, #tpu.memory_space<vmem>>, vector<2x1x16x128xf32>
    %171 = vector.shape_cast %170 : vector<2x1x16x128xf32> to vector<2x16x128xf32>
    %c0_214 = arith.constant 0 : index
    %c8_215 = arith.constant 8 : index
    %c0_216 = arith.constant 0 : index
    %c128_217 = arith.constant 128 : index
    %172 = vector.load %arg5[%c0_214, %c8_215, %c0_216, %c128_217] : memref<2x20x16x256xf32, #tpu.memory_space<vmem>>, vector<2x1x16x128xf32>
    %173 = vector.shape_cast %172 : vector<2x1x16x128xf32> to vector<2x16x128xf32>
    %174 = arith.addf %171, %173 : vector<2x16x128xf32>
    %175 = vector.shape_cast %34 : vector<1x128xf32> to vector<1x1x128xf32>
    %176 = vector.broadcast %175 : vector<1x1x128xf32> to vector<2x16x128xf32>
    %177 = arith.addf %174, %176 : vector<2x16x128xf32>
    %cst_218 = arith.constant 0.000000e+00 : f32
    %178 = vector.broadcast %cst_218 : f32 to vector<2x16x128xf32>
    %179 = arith.maximumf %177, %178 : vector<2x16x128xf32>
    %c0_219 = arith.constant 0 : index
    %c0_220 = arith.constant 0 : index
    %c0_221 = arith.constant 0 : index
    %180 = vector.load %arg6[%c0_219, %c0_220, %c0_221] : memref<2x16x128xf32, #tpu.memory_space<vmem>>, vector<2x16x128xf32>
    %181 = arith.addf %180, %179 : vector<2x16x128xf32>
    %c0_222 = arith.constant 0 : index
    %c0_223 = arith.constant 0 : index
    %c0_224 = arith.constant 0 : index
    %182 = vector.load %arg6[%c0_222, %c0_223, %c0_224] : memref<2x16x128xf32, #tpu.memory_space<vmem>>, vector<2x16x128xf32>
    tpu.vector_store %arg6[%c0_222, %c0_223, %c0_224], %181 {strides = array<i32>} : memref<2x16x128xf32, #tpu.memory_space<vmem>>, vector<2x16x128xf32>,
    %c0_225 = arith.constant 0 : index
    %c0_226 = arith.constant 0 : index
    %c0_227 = arith.constant 0 : index
    %183 = vector.load %arg6[%c0_225, %c0_226, %c0_227] : memref<2x16x128xf32, #tpu.memory_space<vmem>>, vector<2x3x128xf32>
    %cst_228 = arith.constant dense<0.000000e+00> : vector<2x128xf32>
    %184 = vector.multi_reduction <add>, %183, %cst_228 [1] : vector<2x3x128xf32> to vector<2x128xf32>
    %cst_229 = arith.constant 0.0666666701 : f32
    %185 = vector.broadcast %cst_229 : f32 to vector<2x128xf32>
    %186 = arith.mulf %184, %185 : vector<2x128xf32>
    %c0_230 = arith.constant 0 : index
    %c1_231 = arith.constant 1 : index
    %c0_232 = arith.constant 0 : index
    %c0_233 = arith.constant 0 : index
    %187 = vector.load %arg4[%c0_230, %c1_231, %c0_232, %c0_233] : memref<2x5x5x128xf32, #tpu.memory_space<vmem>>, vector<2x1x1x128xf32>
    %188 = vector.shape_cast %187 : vector<2x1x1x128xf32> to vector<2x128xf32>
    %189 = vector.shape_cast %186 : vector<2x128xf32> to vector<2x1x1x128xf32>
    tpu.vector_store %arg4[%c0_230, %c1_231, %c0_232, %c0_233], %189 {strides = array<i32>} : memref<2x5x5x128xf32, #tpu.memory_space<vmem>>, vector<2x1x1x128xf32>,
    %c0_234 = arith.constant 0 : index
    %c2_235 = arith.constant 2 : index
    %c0_236 = arith.constant 0 : index
    %190 = vector.load %arg6[%c0_234, %c2_235, %c0_236] : memref<2x16x128xf32, #tpu.memory_space<vmem>>, vector<2x3x128xf32>
    %cst_237 = arith.constant dense<0.000000e+00> : vector<2x128xf32>
    %191 = vector.multi_reduction <add>, %190, %cst_237 [1] : vector<2x3x128xf32> to vector<2x128xf32>
    %cst_238 = arith.constant 0.0666666701 : f32
    %192 = vector.broadcast %cst_238 : f32 to vector<2x128xf32>
    %193 = arith.mulf %191, %192 : vector<2x128xf32>
    %c0_239 = arith.constant 0 : index
    %c1_240 = arith.constant 1 : index
    %c1_241 = arith.constant 1 : index
    %c0_242 = arith.constant 0 : index
    %194 = vector.load %arg4[%c0_239, %c1_240, %c1_241, %c0_242] : memref<2x5x5x128xf32, #tpu.memory_space<vmem>>, vector<2x1x1x128xf32>
    %195 = vector.shape_cast %194 : vector<2x1x1x128xf32> to vector<2x128xf32>
    %196 = vector.shape_cast %193 : vector<2x128xf32> to vector<2x1x1x128xf32>
    tpu.vector_store %arg4[%c0_239, %c1_240, %c1_241, %c0_242], %196 {strides = array<i32>} : memref<2x5x5x128xf32, #tpu.memory_space<vmem>>, vector<2x1x1x128xf32>,
    %c0_243 = arith.constant 0 : index
    %c4_244 = arith.constant 4 : index
    %c0_245 = arith.constant 0 : index
    %197 = vector.load %arg6[%c0_243, %c4_244, %c0_245] : memref<2x16x128xf32, #tpu.memory_space<vmem>>, vector<2x3x128xf32>
    %cst_246 = arith.constant dense<0.000000e+00> : vector<2x128xf32>
    %198 = vector.multi_reduction <add>, %197, %cst_246 [1] : vector<2x3x128xf32> to vector<2x128xf32>
    %cst_247 = arith.constant 0.0666666701 : f32
    %199 = vector.broadcast %cst_247 : f32 to vector<2x128xf32>
    %200 = arith.mulf %198, %199 : vector<2x128xf32>
    %c0_248 = arith.constant 0 : index
    %c1_249 = arith.constant 1 : index
    %c2_250 = arith.constant 2 : index
    %c0_251 = arith.constant 0 : index
    %201 = vector.load %arg4[%c0_248, %c1_249, %c2_250, %c0_251] : memref<2x5x5x128xf32, #tpu.memory_space<vmem>>, vector<2x1x1x128xf32>
    %202 = vector.shape_cast %201 : vector<2x1x1x128xf32> to vector<2x128xf32>
    %203 = vector.shape_cast %200 : vector<2x128xf32> to vector<2x1x1x128xf32>
    tpu.vector_store %arg4[%c0_248, %c1_249, %c2_250, %c0_251], %203 {strides = array<i32>} : memref<2x5x5x128xf32, #tpu.memory_space<vmem>>, vector<2x1x1x128xf32>,
    %c0_252 = arith.constant 0 : index
    %c6_253 = arith.constant 6 : index
    %c0_254 = arith.constant 0 : index
    %204 = vector.load %arg6[%c0_252, %c6_253, %c0_254] : memref<2x16x128xf32, #tpu.memory_space<vmem>>, vector<2x3x128xf32>
    %cst_255 = arith.constant dense<0.000000e+00> : vector<2x128xf32>
    %205 = vector.multi_reduction <add>, %204, %cst_255 [1] : vector<2x3x128xf32> to vector<2x128xf32>
    %cst_256 = arith.constant 0.0666666701 : f32
    %206 = vector.broadcast %cst_256 : f32 to vector<2x128xf32>
    %207 = arith.mulf %205, %206 : vector<2x128xf32>
    %c0_257 = arith.constant 0 : index
    %c1_258 = arith.constant 1 : index
    %c3_259 = arith.constant 3 : index
    %c0_260 = arith.constant 0 : index
    %208 = vector.load %arg4[%c0_257, %c1_258, %c3_259, %c0_260] : memref<2x5x5x128xf32, #tpu.memory_space<vmem>>, vector<2x1x1x128xf32>
    %209 = vector.shape_cast %208 : vector<2x1x1x128xf32> to vector<2x128xf32>
    %210 = vector.shape_cast %207 : vector<2x128xf32> to vector<2x1x1x128xf32>
    tpu.vector_store %arg4[%c0_257, %c1_258, %c3_259, %c0_260], %210 {strides = array<i32>} : memref<2x5x5x128xf32, #tpu.memory_space<vmem>>, vector<2x1x1x128xf32>,
    %c0_261 = arith.constant 0 : index
    %c8_262 = arith.constant 8 : index
    %c0_263 = arith.constant 0 : index
    %211 = vector.load %arg6[%c0_261, %c8_262, %c0_263] : memref<2x16x128xf32, #tpu.memory_space<vmem>>, vector<2x3x128xf32>
    %cst_264 = arith.constant dense<0.000000e+00> : vector<2x128xf32>
    %212 = vector.multi_reduction <add>, %211, %cst_264 [1] : vector<2x3x128xf32> to vector<2x128xf32>
    %cst_265 = arith.constant 0.0666666701 : f32
    %213 = vector.broadcast %cst_265 : f32 to vector<2x128xf32>
    %214 = arith.mulf %212, %213 : vector<2x128xf32>
    %c0_266 = arith.constant 0 : index
    %c1_267 = arith.constant 1 : index
    %c4_268 = arith.constant 4 : index
    %c0_269 = arith.constant 0 : index
    %215 = vector.load %arg4[%c0_266, %c1_267, %c4_268, %c0_269] : memref<2x5x5x128xf32, #tpu.memory_space<vmem>>, vector<2x1x1x128xf32>
    %216 = vector.shape_cast %215 : vector<2x1x1x128xf32> to vector<2x128xf32>
    %217 = vector.shape_cast %214 : vector<2x128xf32> to vector<2x1x1x128xf32>
    tpu.vector_store %arg4[%c0_266, %c1_267, %c4_268, %c0_269], %217 {strides = array<i32>} : memref<2x5x5x128xf32, #tpu.memory_space<vmem>>, vector<2x1x1x128xf32>,
    %c0_270 = arith.constant 0 : index
    %c7_271 = arith.constant 7 : index
    %c0_272 = arith.constant 0 : index
    %c0_273 = arith.constant 0 : index
    %218 = vector.load %arg5[%c0_270, %c7_271, %c0_272, %c0_273] : memref<2x20x16x256xf32, #tpu.memory_space<vmem>>, vector<2x1x16x128xf32>
    %219 = vector.shape_cast %218 : vector<2x1x16x128xf32> to vector<2x16x128xf32>
    %c0_274 = arith.constant 0 : index
    %c8_275 = arith.constant 8 : index
    %c0_276 = arith.constant 0 : index
    %c128_277 = arith.constant 128 : index
    %220 = vector.load %arg5[%c0_274, %c8_275, %c0_276, %c128_277] : memref<2x20x16x256xf32, #tpu.memory_space<vmem>>, vector<2x1x16x128xf32>
    %221 = vector.shape_cast %220 : vector<2x1x16x128xf32> to vector<2x16x128xf32>
    %222 = arith.addf %219, %221 : vector<2x16x128xf32>
    %223 = vector.shape_cast %34 : vector<1x128xf32> to vector<1x1x128xf32>
    %224 = vector.broadcast %223 : vector<1x1x128xf32> to vector<2x16x128xf32>
    %225 = arith.addf %222, %224 : vector<2x16x128xf32>
    %cst_278 = arith.constant 0.000000e+00 : f32
    %226 = vector.broadcast %cst_278 : f32 to vector<2x16x128xf32>
    %227 = arith.maximumf %225, %226 : vector<2x16x128xf32>
    %c0_279 = arith.constant 0 : index
    %c0_280 = arith.constant 0 : index
    %c0_281 = arith.constant 0 : index
    %228 = vector.load %arg6[%c0_279, %c0_280, %c0_281] : memref<2x16x128xf32, #tpu.memory_space<vmem>>, vector<2x16x128xf32>
    tpu.vector_store %arg6[%c0_279, %c0_280, %c0_281], %227 {strides = array<i32>} : memref<2x16x128xf32, #tpu.memory_space<vmem>>, vector<2x16x128xf32>,
    %c0_282 = arith.constant 0 : index
    %c8_283 = arith.constant 8 : index
    %c0_284 = arith.constant 0 : index
    %c0_285 = arith.constant 0 : index
    %229 = vector.load %arg5[%c0_282, %c8_283, %c0_284, %c0_285] : memref<2x20x16x256xf32, #tpu.memory_space<vmem>>, vector<2x1x16x128xf32>
    %230 = vector.shape_cast %229 : vector<2x1x16x128xf32> to vector<2x16x128xf32>
    %c0_286 = arith.constant 0 : index
    %c9 = arith.constant 9 : index
    %c0_287 = arith.constant 0 : index
    %c128_288 = arith.constant 128 : index
    %231 = vector.load %arg5[%c0_286, %c9, %c0_287, %c128_288] : memref<2x20x16x256xf32, #tpu.memory_space<vmem>>, vector<2x1x16x128xf32>
    %232 = vector.shape_cast %231 : vector<2x1x16x128xf32> to vector<2x16x128xf32>
    %233 = arith.addf %230, %232 : vector<2x16x128xf32>
    %234 = vector.shape_cast %34 : vector<1x128xf32> to vector<1x1x128xf32>
    %235 = vector.broadcast %234 : vector<1x1x128xf32> to vector<2x16x128xf32>
    %236 = arith.addf %233, %235 : vector<2x16x128xf32>
    %cst_289 = arith.constant 0.000000e+00 : f32
    %237 = vector.broadcast %cst_289 : f32 to vector<2x16x128xf32>
    %238 = arith.maximumf %236, %237 : vector<2x16x128xf32>
    %c0_290 = arith.constant 0 : index
    %c0_291 = arith.constant 0 : index
    %c0_292 = arith.constant 0 : index
    %239 = vector.load %arg6[%c0_290, %c0_291, %c0_292] : memref<2x16x128xf32, #tpu.memory_space<vmem>>, vector<2x16x128xf32>
    %240 = arith.addf %239, %238 : vector<2x16x128xf32>
    %c0_293 = arith.constant 0 : index
    %c0_294 = arith.constant 0 : index
    %c0_295 = arith.constant 0 : index
    %241 = vector.load %arg6[%c0_293, %c0_294, %c0_295] : memref<2x16x128xf32, #tpu.memory_space<vmem>>, vector<2x16x128xf32>
    tpu.vector_store %arg6[%c0_293, %c0_294, %c0_295], %240 {strides = array<i32>} : memref<2x16x128xf32, #tpu.memory_space<vmem>>, vector<2x16x128xf32>,
    %c0_296 = arith.constant 0 : index
    %c9_297 = arith.constant 9 : index
    %c0_298 = arith.constant 0 : index
    %c0_299 = arith.constant 0 : index
    %242 = vector.load %arg5[%c0_296, %c9_297, %c0_298, %c0_299] : memref<2x20x16x256xf32, #tpu.memory_space<vmem>>, vector<2x1x16x128xf32>
    %243 = vector.shape_cast %242 : vector<2x1x16x128xf32> to vector<2x16x128xf32>
    %c0_300 = arith.constant 0 : index
    %c10 = arith.constant 10 : index
    %c0_301 = arith.constant 0 : index
    %c128_302 = arith.constant 128 : index
    %244 = vector.load %arg5[%c0_300, %c10, %c0_301, %c128_302] : memref<2x20x16x256xf32, #tpu.memory_space<vmem>>, vector<2x1x16x128xf32>
    %245 = vector.shape_cast %244 : vector<2x1x16x128xf32> to vector<2x16x128xf32>
    %246 = arith.addf %243, %245 : vector<2x16x128xf32>
    %247 = vector.shape_cast %34 : vector<1x128xf32> to vector<1x1x128xf32>
    %248 = vector.broadcast %247 : vector<1x1x128xf32> to vector<2x16x128xf32>
    %249 = arith.addf %246, %248 : vector<2x16x128xf32>
    %cst_303 = arith.constant 0.000000e+00 : f32
    %250 = vector.broadcast %cst_303 : f32 to vector<2x16x128xf32>
    %251 = arith.maximumf %249, %250 : vector<2x16x128xf32>
    %c0_304 = arith.constant 0 : index
    %c0_305 = arith.constant 0 : index
    %c0_306 = arith.constant 0 : index
    %252 = vector.load %arg6[%c0_304, %c0_305, %c0_306] : memref<2x16x128xf32, #tpu.memory_space<vmem>>, vector<2x16x128xf32>
    %253 = arith.addf %252, %251 : vector<2x16x128xf32>
    %c0_307 = arith.constant 0 : index
    %c0_308 = arith.constant 0 : index
    %c0_309 = arith.constant 0 : index
    %254 = vector.load %arg6[%c0_307, %c0_308, %c0_309] : memref<2x16x128xf32, #tpu.memory_space<vmem>>, vector<2x16x128xf32>
    tpu.vector_store %arg6[%c0_307, %c0_308, %c0_309], %253 {strides = array<i32>} : memref<2x16x128xf32, #tpu.memory_space<vmem>>, vector<2x16x128xf32>,
    %c0_310 = arith.constant 0 : index
    %c10_311 = arith.constant 10 : index
    %c0_312 = arith.constant 0 : index
    %c0_313 = arith.constant 0 : index
    %255 = vector.load %arg5[%c0_310, %c10_311, %c0_312, %c0_313] : memref<2x20x16x256xf32, #tpu.memory_space<vmem>>, vector<2x1x16x128xf32>
    %256 = vector.shape_cast %255 : vector<2x1x16x128xf32> to vector<2x16x128xf32>
    %c0_314 = arith.constant 0 : index
    %c11 = arith.constant 11 : index
    %c0_315 = arith.constant 0 : index
    %c128_316 = arith.constant 128 : index
    %257 = vector.load %arg5[%c0_314, %c11, %c0_315, %c128_316] : memref<2x20x16x256xf32, #tpu.memory_space<vmem>>, vector<2x1x16x128xf32>
    %258 = vector.shape_cast %257 : vector<2x1x16x128xf32> to vector<2x16x128xf32>
    %259 = arith.addf %256, %258 : vector<2x16x128xf32>
    %260 = vector.shape_cast %34 : vector<1x128xf32> to vector<1x1x128xf32>
    %261 = vector.broadcast %260 : vector<1x1x128xf32> to vector<2x16x128xf32>
    %262 = arith.addf %259, %261 : vector<2x16x128xf32>
    %cst_317 = arith.constant 0.000000e+00 : f32
    %263 = vector.broadcast %cst_317 : f32 to vector<2x16x128xf32>
    %264 = arith.maximumf %262, %263 : vector<2x16x128xf32>
    %c0_318 = arith.constant 0 : index
    %c0_319 = arith.constant 0 : index
    %c0_320 = arith.constant 0 : index
    %265 = vector.load %arg6[%c0_318, %c0_319, %c0_320] : memref<2x16x128xf32, #tpu.memory_space<vmem>>, vector<2x16x128xf32>
    %266 = arith.addf %265, %264 : vector<2x16x128xf32>
    %c0_321 = arith.constant 0 : index
    %c0_322 = arith.constant 0 : index
    %c0_323 = arith.constant 0 : index
    %267 = vector.load %arg6[%c0_321, %c0_322, %c0_323] : memref<2x16x128xf32, #tpu.memory_space<vmem>>, vector<2x16x128xf32>
    tpu.vector_store %arg6[%c0_321, %c0_322, %c0_323], %266 {strides = array<i32>} : memref<2x16x128xf32, #tpu.memory_space<vmem>>, vector<2x16x128xf32>,
    %c0_324 = arith.constant 0 : index
    %c11_325 = arith.constant 11 : index
    %c0_326 = arith.constant 0 : index
    %c0_327 = arith.constant 0 : index
    %268 = vector.load %arg5[%c0_324, %c11_325, %c0_326, %c0_327] : memref<2x20x16x256xf32, #tpu.memory_space<vmem>>, vector<2x1x16x128xf32>
    %269 = vector.shape_cast %268 : vector<2x1x16x128xf32> to vector<2x16x128xf32>
    %c0_328 = arith.constant 0 : index
    %c12 = arith.constant 12 : index
    %c0_329 = arith.constant 0 : index
    %c128_330 = arith.constant 128 : index
    %270 = vector.load %arg5[%c0_328, %c12, %c0_329, %c128_330] : memref<2x20x16x256xf32, #tpu.memory_space<vmem>>, vector<2x1x16x128xf32>
    %271 = vector.shape_cast %270 : vector<2x1x16x128xf32> to vector<2x16x128xf32>
    %272 = arith.addf %269, %271 : vector<2x16x128xf32>
    %273 = vector.shape_cast %34 : vector<1x128xf32> to vector<1x1x128xf32>
    %274 = vector.broadcast %273 : vector<1x1x128xf32> to vector<2x16x128xf32>
    %275 = arith.addf %272, %274 : vector<2x16x128xf32>
    %cst_331 = arith.constant 0.000000e+00 : f32
    %276 = vector.broadcast %cst_331 : f32 to vector<2x16x128xf32>
    %277 = arith.maximumf %275, %276 : vector<2x16x128xf32>
    %c0_332 = arith.constant 0 : index
    %c0_333 = arith.constant 0 : index
    %c0_334 = arith.constant 0 : index
    %278 = vector.load %arg6[%c0_332, %c0_333, %c0_334] : memref<2x16x128xf32, #tpu.memory_space<vmem>>, vector<2x16x128xf32>
    %279 = arith.addf %278, %277 : vector<2x16x128xf32>
    %c0_335 = arith.constant 0 : index
    %c0_336 = arith.constant 0 : index
    %c0_337 = arith.constant 0 : index
    %280 = vector.load %arg6[%c0_335, %c0_336, %c0_337] : memref<2x16x128xf32, #tpu.memory_space<vmem>>, vector<2x16x128xf32>
    tpu.vector_store %arg6[%c0_335, %c0_336, %c0_337], %279 {strides = array<i32>} : memref<2x16x128xf32, #tpu.memory_space<vmem>>, vector<2x16x128xf32>,
    %c0_338 = arith.constant 0 : index
    %c0_339 = arith.constant 0 : index
    %c0_340 = arith.constant 0 : index
    %281 = vector.load %arg6[%c0_338, %c0_339, %c0_340] : memref<2x16x128xf32, #tpu.memory_space<vmem>>, vector<2x3x128xf32>
    %cst_341 = arith.constant dense<0.000000e+00> : vector<2x128xf32>
    %282 = vector.multi_reduction <add>, %281, %cst_341 [1] : vector<2x3x128xf32> to vector<2x128xf32>
    %cst_342 = arith.constant 0.0666666701 : f32
    %283 = vector.broadcast %cst_342 : f32 to vector<2x128xf32>
    %284 = arith.mulf %282, %283 : vector<2x128xf32>
    %c0_343 = arith.constant 0 : index
    %c2_344 = arith.constant 2 : index
    %c0_345 = arith.constant 0 : index
    %c0_346 = arith.constant 0 : index
    %285 = vector.load %arg4[%c0_343, %c2_344, %c0_345, %c0_346] : memref<2x5x5x128xf32, #tpu.memory_space<vmem>>, vector<2x1x1x128xf32>
    %286 = vector.shape_cast %285 : vector<2x1x1x128xf32> to vector<2x128xf32>
    %287 = vector.shape_cast %284 : vector<2x128xf32> to vector<2x1x1x128xf32>
    tpu.vector_store %arg4[%c0_343, %c2_344, %c0_345, %c0_346], %287 {strides = array<i32>} : memref<2x5x5x128xf32, #tpu.memory_space<vmem>>, vector<2x1x1x128xf32>,
    %c0_347 = arith.constant 0 : index
    %c2_348 = arith.constant 2 : index
    %c0_349 = arith.constant 0 : index
    %288 = vector.load %arg6[%c0_347, %c2_348, %c0_349] : memref<2x16x128xf32, #tpu.memory_space<vmem>>, vector<2x3x128xf32>
    %cst_350 = arith.constant dense<0.000000e+00> : vector<2x128xf32>
    %289 = vector.multi_reduction <add>, %288, %cst_350 [1] : vector<2x3x128xf32> to vector<2x128xf32>
    %cst_351 = arith.constant 0.0666666701 : f32
    %290 = vector.broadcast %cst_351 : f32 to vector<2x128xf32>
    %291 = arith.mulf %289, %290 : vector<2x128xf32>
    %c0_352 = arith.constant 0 : index
    %c2_353 = arith.constant 2 : index
    %c1_354 = arith.constant 1 : index
    %c0_355 = arith.constant 0 : index
    %292 = vector.load %arg4[%c0_352, %c2_353, %c1_354, %c0_355] : memref<2x5x5x128xf32, #tpu.memory_space<vmem>>, vector<2x1x1x128xf32>
    %293 = vector.shape_cast %292 : vector<2x1x1x128xf32> to vector<2x128xf32>
    %294 = vector.shape_cast %291 : vector<2x128xf32> to vector<2x1x1x128xf32>
    tpu.vector_store %arg4[%c0_352, %c2_353, %c1_354, %c0_355], %294 {strides = array<i32>} : memref<2x5x5x128xf32, #tpu.memory_space<vmem>>, vector<2x1x1x128xf32>,
    %c0_356 = arith.constant 0 : index
    %c4_357 = arith.constant 4 : index
    %c0_358 = arith.constant 0 : index
    %295 = vector.load %arg6[%c0_356, %c4_357, %c0_358] : memref<2x16x128xf32, #tpu.memory_space<vmem>>, vector<2x3x128xf32>
    %cst_359 = arith.constant dense<0.000000e+00> : vector<2x128xf32>
    %296 = vector.multi_reduction <add>, %295, %cst_359 [1] : vector<2x3x128xf32> to vector<2x128xf32>
    %cst_360 = arith.constant 0.0666666701 : f32
    %297 = vector.broadcast %cst_360 : f32 to vector<2x128xf32>
    %298 = arith.mulf %296, %297 : vector<2x128xf32>
    %c0_361 = arith.constant 0 : index
    %c2_362 = arith.constant 2 : index
    %c2_363 = arith.constant 2 : index
    %c0_364 = arith.constant 0 : index
    %299 = vector.load %arg4[%c0_361, %c2_362, %c2_363, %c0_364] : memref<2x5x5x128xf32, #tpu.memory_space<vmem>>, vector<2x1x1x128xf32>
    %300 = vector.shape_cast %299 : vector<2x1x1x128xf32> to vector<2x128xf32>
    %301 = vector.shape_cast %298 : vector<2x128xf32> to vector<2x1x1x128xf32>
    tpu.vector_store %arg4[%c0_361, %c2_362, %c2_363, %c0_364], %301 {strides = array<i32>} : memref<2x5x5x128xf32, #tpu.memory_space<vmem>>, vector<2x1x1x128xf32>,
    %c0_365 = arith.constant 0 : index
    %c6_366 = arith.constant 6 : index
    %c0_367 = arith.constant 0 : index
    %302 = vector.load %arg6[%c0_365, %c6_366, %c0_367] : memref<2x16x128xf32, #tpu.memory_space<vmem>>, vector<2x3x128xf32>
    %cst_368 = arith.constant dense<0.000000e+00> : vector<2x128xf32>
    %303 = vector.multi_reduction <add>, %302, %cst_368 [1] : vector<2x3x128xf32> to vector<2x128xf32>
    %cst_369 = arith.constant 0.0666666701 : f32
    %304 = vector.broadcast %cst_369 : f32 to vector<2x128xf32>
    %305 = arith.mulf %303, %304 : vector<2x128xf32>
    %c0_370 = arith.constant 0 : index
    %c2_371 = arith.constant 2 : index
    %c3_372 = arith.constant 3 : index
    %c0_373 = arith.constant 0 : index
    %306 = vector.load %arg4[%c0_370, %c2_371, %c3_372, %c0_373] : memref<2x5x5x128xf32, #tpu.memory_space<vmem>>, vector<2x1x1x128xf32>
    %307 = vector.shape_cast %306 : vector<2x1x1x128xf32> to vector<2x128xf32>
    %308 = vector.shape_cast %305 : vector<2x128xf32> to vector<2x1x1x128xf32>
    tpu.vector_store %arg4[%c0_370, %c2_371, %c3_372, %c0_373], %308 {strides = array<i32>} : memref<2x5x5x128xf32, #tpu.memory_space<vmem>>, vector<2x1x1x128xf32>,
    %c0_374 = arith.constant 0 : index
    %c8_375 = arith.constant 8 : index
    %c0_376 = arith.constant 0 : index
    %309 = vector.load %arg6[%c0_374, %c8_375, %c0_376] : memref<2x16x128xf32, #tpu.memory_space<vmem>>, vector<2x3x128xf32>
    %cst_377 = arith.constant dense<0.000000e+00> : vector<2x128xf32>
    %310 = vector.multi_reduction <add>, %309, %cst_377 [1] : vector<2x3x128xf32> to vector<2x128xf32>
    %cst_378 = arith.constant 0.0666666701 : f32
    %311 = vector.broadcast %cst_378 : f32 to vector<2x128xf32>
    %312 = arith.mulf %310, %311 : vector<2x128xf32>
    %c0_379 = arith.constant 0 : index
    %c2_380 = arith.constant 2 : index
    %c4_381 = arith.constant 4 : index
    %c0_382 = arith.constant 0 : index
    %313 = vector.load %arg4[%c0_379, %c2_380, %c4_381, %c0_382] : memref<2x5x5x128xf32, #tpu.memory_space<vmem>>, vector<2x1x1x128xf32>
    %314 = vector.shape_cast %313 : vector<2x1x1x128xf32> to vector<2x128xf32>
    %315 = vector.shape_cast %312 : vector<2x128xf32> to vector<2x1x1x128xf32>
    tpu.vector_store %arg4[%c0_379, %c2_380, %c4_381, %c0_382], %315 {strides = array<i32>} : memref<2x5x5x128xf32, #tpu.memory_space<vmem>>, vector<2x1x1x128xf32>,
    %c0_383 = arith.constant 0 : index
    %c11_384 = arith.constant 11 : index
    %c0_385 = arith.constant 0 : index
    %c0_386 = arith.constant 0 : index
    %316 = vector.load %arg5[%c0_383, %c11_384, %c0_385, %c0_386] : memref<2x20x16x256xf32, #tpu.memory_space<vmem>>, vector<2x1x16x128xf32>
    %317 = vector.shape_cast %316 : vector<2x1x16x128xf32> to vector<2x16x128xf32>
    %c0_387 = arith.constant 0 : index
    %c12_388 = arith.constant 12 : index
    %c0_389 = arith.constant 0 : index
    %c128_390 = arith.constant 128 : index
    %318 = vector.load %arg5[%c0_387, %c12_388, %c0_389, %c128_390] : memref<2x20x16x256xf32, #tpu.memory_space<vmem>>, vector<2x1x16x128xf32>
    %319 = vector.shape_cast %318 : vector<2x1x16x128xf32> to vector<2x16x128xf32>
    %320 = arith.addf %317, %319 : vector<2x16x128xf32>
    %321 = vector.shape_cast %34 : vector<1x128xf32> to vector<1x1x128xf32>
    %322 = vector.broadcast %321 : vector<1x1x128xf32> to vector<2x16x128xf32>
    %323 = arith.addf %320, %322 : vector<2x16x128xf32>
    %cst_391 = arith.constant 0.000000e+00 : f32
    %324 = vector.broadcast %cst_391 : f32 to vector<2x16x128xf32>
    %325 = arith.maximumf %323, %324 : vector<2x16x128xf32>
    %c0_392 = arith.constant 0 : index
    %c0_393 = arith.constant 0 : index
    %c0_394 = arith.constant 0 : index
    %326 = vector.load %arg6[%c0_392, %c0_393, %c0_394] : memref<2x16x128xf32, #tpu.memory_space<vmem>>, vector<2x16x128xf32>
    tpu.vector_store %arg6[%c0_392, %c0_393, %c0_394], %325 {strides = array<i32>} : memref<2x16x128xf32, #tpu.memory_space<vmem>>, vector<2x16x128xf32>,
    %c0_395 = arith.constant 0 : index
    %c12_396 = arith.constant 12 : index
    %c0_397 = arith.constant 0 : index
    %c0_398 = arith.constant 0 : index
    %327 = vector.load %arg5[%c0_395, %c12_396, %c0_397, %c0_398] : memref<2x20x16x256xf32, #tpu.memory_space<vmem>>, vector<2x1x16x128xf32>
    %328 = vector.shape_cast %327 : vector<2x1x16x128xf32> to vector<2x16x128xf32>
    %c0_399 = arith.constant 0 : index
    %c13 = arith.constant 13 : index
    %c0_400 = arith.constant 0 : index
    %c128_401 = arith.constant 128 : index
    %329 = vector.load %arg5[%c0_399, %c13, %c0_400, %c128_401] : memref<2x20x16x256xf32, #tpu.memory_space<vmem>>, vector<2x1x16x128xf32>
    %330 = vector.shape_cast %329 : vector<2x1x16x128xf32> to vector<2x16x128xf32>
    %331 = arith.addf %328, %330 : vector<2x16x128xf32>
    %332 = vector.shape_cast %34 : vector<1x128xf32> to vector<1x1x128xf32>
    %333 = vector.broadcast %332 : vector<1x1x128xf32> to vector<2x16x128xf32>
    %334 = arith.addf %331, %333 : vector<2x16x128xf32>
    %cst_402 = arith.constant 0.000000e+00 : f32
    %335 = vector.broadcast %cst_402 : f32 to vector<2x16x128xf32>
    %336 = arith.maximumf %334, %335 : vector<2x16x128xf32>
    %c0_403 = arith.constant 0 : index
    %c0_404 = arith.constant 0 : index
    %c0_405 = arith.constant 0 : index
    %337 = vector.load %arg6[%c0_403, %c0_404, %c0_405] : memref<2x16x128xf32, #tpu.memory_space<vmem>>, vector<2x16x128xf32>
    %338 = arith.addf %337, %336 : vector<2x16x128xf32>
    %c0_406 = arith.constant 0 : index
    %c0_407 = arith.constant 0 : index
    %c0_408 = arith.constant 0 : index
    %339 = vector.load %arg6[%c0_406, %c0_407, %c0_408] : memref<2x16x128xf32, #tpu.memory_space<vmem>>, vector<2x16x128xf32>
    tpu.vector_store %arg6[%c0_406, %c0_407, %c0_408], %338 {strides = array<i32>} : memref<2x16x128xf32, #tpu.memory_space<vmem>>, vector<2x16x128xf32>,
    %c0_409 = arith.constant 0 : index
    %c13_410 = arith.constant 13 : index
    %c0_411 = arith.constant 0 : index
    %c0_412 = arith.constant 0 : index
    %340 = vector.load %arg5[%c0_409, %c13_410, %c0_411, %c0_412] : memref<2x20x16x256xf32, #tpu.memory_space<vmem>>, vector<2x1x16x128xf32>
    %341 = vector.shape_cast %340 : vector<2x1x16x128xf32> to vector<2x16x128xf32>
    %c0_413 = arith.constant 0 : index
    %c14 = arith.constant 14 : index
    %c0_414 = arith.constant 0 : index
    %c128_415 = arith.constant 128 : index
    %342 = vector.load %arg5[%c0_413, %c14, %c0_414, %c128_415] : memref<2x20x16x256xf32, #tpu.memory_space<vmem>>, vector<2x1x16x128xf32>
    %343 = vector.shape_cast %342 : vector<2x1x16x128xf32> to vector<2x16x128xf32>
    %344 = arith.addf %341, %343 : vector<2x16x128xf32>
    %345 = vector.shape_cast %34 : vector<1x128xf32> to vector<1x1x128xf32>
    %346 = vector.broadcast %345 : vector<1x1x128xf32> to vector<2x16x128xf32>
    %347 = arith.addf %344, %346 : vector<2x16x128xf32>
    %cst_416 = arith.constant 0.000000e+00 : f32
    %348 = vector.broadcast %cst_416 : f32 to vector<2x16x128xf32>
    %349 = arith.maximumf %347, %348 : vector<2x16x128xf32>
    %c0_417 = arith.constant 0 : index
    %c0_418 = arith.constant 0 : index
    %c0_419 = arith.constant 0 : index
    %350 = vector.load %arg6[%c0_417, %c0_418, %c0_419] : memref<2x16x128xf32, #tpu.memory_space<vmem>>, vector<2x16x128xf32>
    %351 = arith.addf %350, %349 : vector<2x16x128xf32>
    %c0_420 = arith.constant 0 : index
    %c0_421 = arith.constant 0 : index
    %c0_422 = arith.constant 0 : index
    %352 = vector.load %arg6[%c0_420, %c0_421, %c0_422] : memref<2x16x128xf32, #tpu.memory_space<vmem>>, vector<2x16x128xf32>
    tpu.vector_store %arg6[%c0_420, %c0_421, %c0_422], %351 {strides = array<i32>} : memref<2x16x128xf32, #tpu.memory_space<vmem>>, vector<2x16x128xf32>,
    %c0_423 = arith.constant 0 : index
    %c14_424 = arith.constant 14 : index
    %c0_425 = arith.constant 0 : index
    %c0_426 = arith.constant 0 : index
    %353 = vector.load %arg5[%c0_423, %c14_424, %c0_425, %c0_426] : memref<2x20x16x256xf32, #tpu.memory_space<vmem>>, vector<2x1x16x128xf32>
    %354 = vector.shape_cast %353 : vector<2x1x16x128xf32> to vector<2x16x128xf32>
    %c0_427 = arith.constant 0 : index
    %c15 = arith.constant 15 : index
    %c0_428 = arith.constant 0 : index
    %c128_429 = arith.constant 128 : index
    %355 = vector.load %arg5[%c0_427, %c15, %c0_428, %c128_429] : memref<2x20x16x256xf32, #tpu.memory_space<vmem>>, vector<2x1x16x128xf32>
    %356 = vector.shape_cast %355 : vector<2x1x16x128xf32> to vector<2x16x128xf32>
    %357 = arith.addf %354, %356 : vector<2x16x128xf32>
    %358 = vector.shape_cast %34 : vector<1x128xf32> to vector<1x1x128xf32>
    %359 = vector.broadcast %358 : vector<1x1x128xf32> to vector<2x16x128xf32>
    %360 = arith.addf %357, %359 : vector<2x16x128xf32>
    %cst_430 = arith.constant 0.000000e+00 : f32
    %361 = vector.broadcast %cst_430 : f32 to vector<2x16x128xf32>
    %362 = arith.maximumf %360, %361 : vector<2x16x128xf32>
    %c0_431 = arith.constant 0 : index
    %c0_432 = arith.constant 0 : index
    %c0_433 = arith.constant 0 : index
    %363 = vector.load %arg6[%c0_431, %c0_432, %c0_433] : memref<2x16x128xf32, #tpu.memory_space<vmem>>, vector<2x16x128xf32>
    %364 = arith.addf %363, %362 : vector<2x16x128xf32>
    %c0_434 = arith.constant 0 : index
    %c0_435 = arith.constant 0 : index
    %c0_436 = arith.constant 0 : index
    %365 = vector.load %arg6[%c0_434, %c0_435, %c0_436] : memref<2x16x128xf32, #tpu.memory_space<vmem>>, vector<2x16x128xf32>
    tpu.vector_store %arg6[%c0_434, %c0_435, %c0_436], %364 {strides = array<i32>} : memref<2x16x128xf32, #tpu.memory_space<vmem>>, vector<2x16x128xf32>,
    %c0_437 = arith.constant 0 : index
    %c15_438 = arith.constant 15 : index
    %c0_439 = arith.constant 0 : index
    %c0_440 = arith.constant 0 : index
    %366 = vector.load %arg5[%c0_437, %c15_438, %c0_439, %c0_440] : memref<2x20x16x256xf32, #tpu.memory_space<vmem>>, vector<2x1x16x128xf32>
    %367 = vector.shape_cast %366 : vector<2x1x16x128xf32> to vector<2x16x128xf32>
    %c0_441 = arith.constant 0 : index
    %c16 = arith.constant 16 : index
    %c0_442 = arith.constant 0 : index
    %c128_443 = arith.constant 128 : index
    %368 = vector.load %arg5[%c0_441, %c16, %c0_442, %c128_443] : memref<2x20x16x256xf32, #tpu.memory_space<vmem>>, vector<2x1x16x128xf32>
    %369 = vector.shape_cast %368 : vector<2x1x16x128xf32> to vector<2x16x128xf32>
    %370 = arith.addf %367, %369 : vector<2x16x128xf32>
    %371 = vector.shape_cast %34 : vector<1x128xf32> to vector<1x1x128xf32>
    %372 = vector.broadcast %371 : vector<1x1x128xf32> to vector<2x16x128xf32>
    %373 = arith.addf %370, %372 : vector<2x16x128xf32>
    %cst_444 = arith.constant 0.000000e+00 : f32
    %374 = vector.broadcast %cst_444 : f32 to vector<2x16x128xf32>
    %375 = arith.maximumf %373, %374 : vector<2x16x128xf32>
    %c0_445 = arith.constant 0 : index
    %c0_446 = arith.constant 0 : index
    %c0_447 = arith.constant 0 : index
    %376 = vector.load %arg6[%c0_445, %c0_446, %c0_447] : memref<2x16x128xf32, #tpu.memory_space<vmem>>, vector<2x16x128xf32>
    %377 = arith.addf %376, %375 : vector<2x16x128xf32>
    %c0_448 = arith.constant 0 : index
    %c0_449 = arith.constant 0 : index
    %c0_450 = arith.constant 0 : index
    %378 = vector.load %arg6[%c0_448, %c0_449, %c0_450] : memref<2x16x128xf32, #tpu.memory_space<vmem>>, vector<2x16x128xf32>
    tpu.vector_store %arg6[%c0_448, %c0_449, %c0_450], %377 {strides = array<i32>} : memref<2x16x128xf32, #tpu.memory_space<vmem>>, vector<2x16x128xf32>,
    %c0_451 = arith.constant 0 : index
    %c0_452 = arith.constant 0 : index
    %c0_453 = arith.constant 0 : index
    %379 = vector.load %arg6[%c0_451, %c0_452, %c0_453] : memref<2x16x128xf32, #tpu.memory_space<vmem>>, vector<2x3x128xf32>
    %cst_454 = arith.constant dense<0.000000e+00> : vector<2x128xf32>
    %380 = vector.multi_reduction <add>, %379, %cst_454 [1] : vector<2x3x128xf32> to vector<2x128xf32>
    %cst_455 = arith.constant 0.0666666701 : f32
    %381 = vector.broadcast %cst_455 : f32 to vector<2x128xf32>
    %382 = arith.mulf %380, %381 : vector<2x128xf32>
    %c0_456 = arith.constant 0 : index
    %c3_457 = arith.constant 3 : index
    %c0_458 = arith.constant 0 : index
    %c0_459 = arith.constant 0 : index
    %383 = vector.load %arg4[%c0_456, %c3_457, %c0_458, %c0_459] : memref<2x5x5x128xf32, #tpu.memory_space<vmem>>, vector<2x1x1x128xf32>
    %384 = vector.shape_cast %383 : vector<2x1x1x128xf32> to vector<2x128xf32>
    %385 = vector.shape_cast %382 : vector<2x128xf32> to vector<2x1x1x128xf32>
    tpu.vector_store %arg4[%c0_456, %c3_457, %c0_458, %c0_459], %385 {strides = array<i32>} : memref<2x5x5x128xf32, #tpu.memory_space<vmem>>, vector<2x1x1x128xf32>,
    %c0_460 = arith.constant 0 : index
    %c2_461 = arith.constant 2 : index
    %c0_462 = arith.constant 0 : index
    %386 = vector.load %arg6[%c0_460, %c2_461, %c0_462] : memref<2x16x128xf32, #tpu.memory_space<vmem>>, vector<2x3x128xf32>
    %cst_463 = arith.constant dense<0.000000e+00> : vector<2x128xf32>
    %387 = vector.multi_reduction <add>, %386, %cst_463 [1] : vector<2x3x128xf32> to vector<2x128xf32>
    %cst_464 = arith.constant 0.0666666701 : f32
    %388 = vector.broadcast %cst_464 : f32 to vector<2x128xf32>
    %389 = arith.mulf %387, %388 : vector<2x128xf32>
    %c0_465 = arith.constant 0 : index
    %c3_466 = arith.constant 3 : index
    %c1_467 = arith.constant 1 : index
    %c0_468 = arith.constant 0 : index
    %390 = vector.load %arg4[%c0_465, %c3_466, %c1_467, %c0_468] : memref<2x5x5x128xf32, #tpu.memory_space<vmem>>, vector<2x1x1x128xf32>
    %391 = vector.shape_cast %390 : vector<2x1x1x128xf32> to vector<2x128xf32>
    %392 = vector.shape_cast %389 : vector<2x128xf32> to vector<2x1x1x128xf32>
    tpu.vector_store %arg4[%c0_465, %c3_466, %c1_467, %c0_468], %392 {strides = array<i32>} : memref<2x5x5x128xf32, #tpu.memory_space<vmem>>, vector<2x1x1x128xf32>,
    %c0_469 = arith.constant 0 : index
    %c4_470 = arith.constant 4 : index
    %c0_471 = arith.constant 0 : index
    %393 = vector.load %arg6[%c0_469, %c4_470, %c0_471] : memref<2x16x128xf32, #tpu.memory_space<vmem>>, vector<2x3x128xf32>
    %cst_472 = arith.constant dense<0.000000e+00> : vector<2x128xf32>
    %394 = vector.multi_reduction <add>, %393, %cst_472 [1] : vector<2x3x128xf32> to vector<2x128xf32>
    %cst_473 = arith.constant 0.0666666701 : f32
    %395 = vector.broadcast %cst_473 : f32 to vector<2x128xf32>
    %396 = arith.mulf %394, %395 : vector<2x128xf32>
    %c0_474 = arith.constant 0 : index
    %c3_475 = arith.constant 3 : index
    %c2_476 = arith.constant 2 : index
    %c0_477 = arith.constant 0 : index
    %397 = vector.load %arg4[%c0_474, %c3_475, %c2_476, %c0_477] : memref<2x5x5x128xf32, #tpu.memory_space<vmem>>, vector<2x1x1x128xf32>
    %398 = vector.shape_cast %397 : vector<2x1x1x128xf32> to vector<2x128xf32>
    %399 = vector.shape_cast %396 : vector<2x128xf32> to vector<2x1x1x128xf32>
    tpu.vector_store %arg4[%c0_474, %c3_475, %c2_476, %c0_477], %399 {strides = array<i32>} : memref<2x5x5x128xf32, #tpu.memory_space<vmem>>, vector<2x1x1x128xf32>,
    %c0_478 = arith.constant 0 : index
    %c6_479 = arith.constant 6 : index
    %c0_480 = arith.constant 0 : index
    %400 = vector.load %arg6[%c0_478, %c6_479, %c0_480] : memref<2x16x128xf32, #tpu.memory_space<vmem>>, vector<2x3x128xf32>
    %cst_481 = arith.constant dense<0.000000e+00> : vector<2x128xf32>
    %401 = vector.multi_reduction <add>, %400, %cst_481 [1] : vector<2x3x128xf32> to vector<2x128xf32>
    %cst_482 = arith.constant 0.0666666701 : f32
    %402 = vector.broadcast %cst_482 : f32 to vector<2x128xf32>
    %403 = arith.mulf %401, %402 : vector<2x128xf32>
    %c0_483 = arith.constant 0 : index
    %c3_484 = arith.constant 3 : index
    %c3_485 = arith.constant 3 : index
    %c0_486 = arith.constant 0 : index
    %404 = vector.load %arg4[%c0_483, %c3_484, %c3_485, %c0_486] : memref<2x5x5x128xf32, #tpu.memory_space<vmem>>, vector<2x1x1x128xf32>
    %405 = vector.shape_cast %404 : vector<2x1x1x128xf32> to vector<2x128xf32>
    %406 = vector.shape_cast %403 : vector<2x128xf32> to vector<2x1x1x128xf32>
    tpu.vector_store %arg4[%c0_483, %c3_484, %c3_485, %c0_486], %406 {strides = array<i32>} : memref<2x5x5x128xf32, #tpu.memory_space<vmem>>, vector<2x1x1x128xf32>,
    %c0_487 = arith.constant 0 : index
    %c8_488 = arith.constant 8 : index
    %c0_489 = arith.constant 0 : index
    %407 = vector.load %arg6[%c0_487, %c8_488, %c0_489] : memref<2x16x128xf32, #tpu.memory_space<vmem>>, vector<2x3x128xf32>
    %cst_490 = arith.constant dense<0.000000e+00> : vector<2x128xf32>
    %408 = vector.multi_reduction <add>, %407, %cst_490 [1] : vector<2x3x128xf32> to vector<2x128xf32>
    %cst_491 = arith.constant 0.0666666701 : f32
    %409 = vector.broadcast %cst_491 : f32 to vector<2x128xf32>
    %410 = arith.mulf %408, %409 : vector<2x128xf32>
    %c0_492 = arith.constant 0 : index
    %c3_493 = arith.constant 3 : index
    %c4_494 = arith.constant 4 : index
    %c0_495 = arith.constant 0 : index
    %411 = vector.load %arg4[%c0_492, %c3_493, %c4_494, %c0_495] : memref<2x5x5x128xf32, #tpu.memory_space<vmem>>, vector<2x1x1x128xf32>
    %412 = vector.shape_cast %411 : vector<2x1x1x128xf32> to vector<2x128xf32>
    %413 = vector.shape_cast %410 : vector<2x128xf32> to vector<2x1x1x128xf32>
    tpu.vector_store %arg4[%c0_492, %c3_493, %c4_494, %c0_495], %413 {strides = array<i32>} : memref<2x5x5x128xf32, #tpu.memory_space<vmem>>, vector<2x1x1x128xf32>,
    %c0_496 = arith.constant 0 : index
    %c15_497 = arith.constant 15 : index
    %c0_498 = arith.constant 0 : index
    %c0_499 = arith.constant 0 : index
    %414 = vector.load %arg5[%c0_496, %c15_497, %c0_498, %c0_499] : memref<2x20x16x256xf32, #tpu.memory_space<vmem>>, vector<2x1x16x128xf32>
    %415 = vector.shape_cast %414 : vector<2x1x16x128xf32> to vector<2x16x128xf32>
    %c0_500 = arith.constant 0 : index
    %c16_501 = arith.constant 16 : index
    %c0_502 = arith.constant 0 : index
    %c128_503 = arith.constant 128 : index
    %416 = vector.load %arg5[%c0_500, %c16_501, %c0_502, %c128_503] : memref<2x20x16x256xf32, #tpu.memory_space<vmem>>, vector<2x1x16x128xf32>
    %417 = vector.shape_cast %416 : vector<2x1x16x128xf32> to vector<2x16x128xf32>
    %418 = arith.addf %415, %417 : vector<2x16x128xf32>
    %419 = vector.shape_cast %34 : vector<1x128xf32> to vector<1x1x128xf32>
    %420 = vector.broadcast %419 : vector<1x1x128xf32> to vector<2x16x128xf32>
    %421 = arith.addf %418, %420 : vector<2x16x128xf32>
    %cst_504 = arith.constant 0.000000e+00 : f32
    %422 = vector.broadcast %cst_504 : f32 to vector<2x16x128xf32>
    %423 = arith.maximumf %421, %422 : vector<2x16x128xf32>
    %c0_505 = arith.constant 0 : index
    %c0_506 = arith.constant 0 : index
    %c0_507 = arith.constant 0 : index
    %424 = vector.load %arg6[%c0_505, %c0_506, %c0_507] : memref<2x16x128xf32, #tpu.memory_space<vmem>>, vector<2x16x128xf32>
    tpu.vector_store %arg6[%c0_505, %c0_506, %c0_507], %423 {strides = array<i32>} : memref<2x16x128xf32, #tpu.memory_space<vmem>>, vector<2x16x128xf32>,
    %c0_508 = arith.constant 0 : index
    %c16_509 = arith.constant 16 : index
    %c0_510 = arith.constant 0 : index
    %c0_511 = arith.constant 0 : index
    %425 = vector.load %arg5[%c0_508, %c16_509, %c0_510, %c0_511] : memref<2x20x16x256xf32, #tpu.memory_space<vmem>>, vector<2x1x16x128xf32>
    %426 = vector.shape_cast %425 : vector<2x1x16x128xf32> to vector<2x16x128xf32>
    %c0_512 = arith.constant 0 : index
    %c17 = arith.constant 17 : index
    %c0_513 = arith.constant 0 : index
    %c128_514 = arith.constant 128 : index
    %427 = vector.load %arg5[%c0_512, %c17, %c0_513, %c128_514] : memref<2x20x16x256xf32, #tpu.memory_space<vmem>>, vector<2x1x16x128xf32>
    %428 = vector.shape_cast %427 : vector<2x1x16x128xf32> to vector<2x16x128xf32>
    %429 = arith.addf %426, %428 : vector<2x16x128xf32>
    %430 = vector.shape_cast %34 : vector<1x128xf32> to vector<1x1x128xf32>
    %431 = vector.broadcast %430 : vector<1x1x128xf32> to vector<2x16x128xf32>
    %432 = arith.addf %429, %431 : vector<2x16x128xf32>
    %cst_515 = arith.constant 0.000000e+00 : f32
    %433 = vector.broadcast %cst_515 : f32 to vector<2x16x128xf32>
    %434 = arith.maximumf %432, %433 : vector<2x16x128xf32>
    %c0_516 = arith.constant 0 : index
    %c0_517 = arith.constant 0 : index
    %c0_518 = arith.constant 0 : index
    %435 = vector.load %arg6[%c0_516, %c0_517, %c0_518] : memref<2x16x128xf32, #tpu.memory_space<vmem>>, vector<2x16x128xf32>
    %436 = arith.addf %435, %434 : vector<2x16x128xf32>
    %c0_519 = arith.constant 0 : index
    %c0_520 = arith.constant 0 : index
    %c0_521 = arith.constant 0 : index
    %437 = vector.load %arg6[%c0_519, %c0_520, %c0_521] : memref<2x16x128xf32, #tpu.memory_space<vmem>>, vector<2x16x128xf32>
    tpu.vector_store %arg6[%c0_519, %c0_520, %c0_521], %436 {strides = array<i32>} : memref<2x16x128xf32, #tpu.memory_space<vmem>>, vector<2x16x128xf32>,
    %c0_522 = arith.constant 0 : index
    %c17_523 = arith.constant 17 : index
    %c0_524 = arith.constant 0 : index
    %c0_525 = arith.constant 0 : index
    %438 = vector.load %arg5[%c0_522, %c17_523, %c0_524, %c0_525] : memref<2x20x16x256xf32, #tpu.memory_space<vmem>>, vector<2x1x16x128xf32>
    %439 = vector.shape_cast %438 : vector<2x1x16x128xf32> to vector<2x16x128xf32>
    %c0_526 = arith.constant 0 : index
    %c18 = arith.constant 18 : index
    %c0_527 = arith.constant 0 : index
    %c128_528 = arith.constant 128 : index
    %440 = vector.load %arg5[%c0_526, %c18, %c0_527, %c128_528] : memref<2x20x16x256xf32, #tpu.memory_space<vmem>>, vector<2x1x16x128xf32>
    %441 = vector.shape_cast %440 : vector<2x1x16x128xf32> to vector<2x16x128xf32>
    %442 = arith.addf %439, %441 : vector<2x16x128xf32>
    %443 = vector.shape_cast %34 : vector<1x128xf32> to vector<1x1x128xf32>
    %444 = vector.broadcast %443 : vector<1x1x128xf32> to vector<2x16x128xf32>
    %445 = arith.addf %442, %444 : vector<2x16x128xf32>
    %cst_529 = arith.constant 0.000000e+00 : f32
    %446 = vector.broadcast %cst_529 : f32 to vector<2x16x128xf32>
    %447 = arith.maximumf %445, %446 : vector<2x16x128xf32>
    %c0_530 = arith.constant 0 : index
    %c0_531 = arith.constant 0 : index
    %c0_532 = arith.constant 0 : index
    %448 = vector.load %arg6[%c0_530, %c0_531, %c0_532] : memref<2x16x128xf32, #tpu.memory_space<vmem>>, vector<2x16x128xf32>
    %449 = arith.addf %448, %447 : vector<2x16x128xf32>
    %c0_533 = arith.constant 0 : index
    %c0_534 = arith.constant 0 : index
    %c0_535 = arith.constant 0 : index
    %450 = vector.load %arg6[%c0_533, %c0_534, %c0_535] : memref<2x16x128xf32, #tpu.memory_space<vmem>>, vector<2x16x128xf32>
    tpu.vector_store %arg6[%c0_533, %c0_534, %c0_535], %449 {strides = array<i32>} : memref<2x16x128xf32, #tpu.memory_space<vmem>>, vector<2x16x128xf32>,
    %c0_536 = arith.constant 0 : index
    %c18_537 = arith.constant 18 : index
    %c0_538 = arith.constant 0 : index
    %c0_539 = arith.constant 0 : index
    %451 = vector.load %arg5[%c0_536, %c18_537, %c0_538, %c0_539] : memref<2x20x16x256xf32, #tpu.memory_space<vmem>>, vector<2x1x16x128xf32>
    %452 = vector.shape_cast %451 : vector<2x1x16x128xf32> to vector<2x16x128xf32>
    %c0_540 = arith.constant 0 : index
    %c19 = arith.constant 19 : index
    %c0_541 = arith.constant 0 : index
    %c128_542 = arith.constant 128 : index
    %453 = vector.load %arg5[%c0_540, %c19, %c0_541, %c128_542] : memref<2x20x16x256xf32, #tpu.memory_space<vmem>>, vector<2x1x16x128xf32>
    %454 = vector.shape_cast %453 : vector<2x1x16x128xf32> to vector<2x16x128xf32>
    %455 = arith.addf %452, %454 : vector<2x16x128xf32>
    %456 = vector.shape_cast %34 : vector<1x128xf32> to vector<1x1x128xf32>
    %457 = vector.broadcast %456 : vector<1x1x128xf32> to vector<2x16x128xf32>
    %458 = arith.addf %455, %457 : vector<2x16x128xf32>
    %cst_543 = arith.constant 0.000000e+00 : f32
    %459 = vector.broadcast %cst_543 : f32 to vector<2x16x128xf32>
    %460 = arith.maximumf %458, %459 : vector<2x16x128xf32>
    %c0_544 = arith.constant 0 : index
    %c0_545 = arith.constant 0 : index
    %c0_546 = arith.constant 0 : index
    %461 = vector.load %arg6[%c0_544, %c0_545, %c0_546] : memref<2x16x128xf32, #tpu.memory_space<vmem>>, vector<2x16x128xf32>
    %462 = arith.addf %461, %460 : vector<2x16x128xf32>
    %c0_547 = arith.constant 0 : index
    %c0_548 = arith.constant 0 : index
    %c0_549 = arith.constant 0 : index
    %463 = vector.load %arg6[%c0_547, %c0_548, %c0_549] : memref<2x16x128xf32, #tpu.memory_space<vmem>>, vector<2x16x128xf32>
    tpu.vector_store %arg6[%c0_547, %c0_548, %c0_549], %462 {strides = array<i32>} : memref<2x16x128xf32, #tpu.memory_space<vmem>>, vector<2x16x128xf32>,
    %c0_550 = arith.constant 0 : index
    %c0_551 = arith.constant 0 : index
    %c0_552 = arith.constant 0 : index
    %464 = vector.load %arg6[%c0_550, %c0_551, %c0_552] : memref<2x16x128xf32, #tpu.memory_space<vmem>>, vector<2x3x128xf32>
    %cst_553 = arith.constant dense<0.000000e+00> : vector<2x128xf32>
    %465 = vector.multi_reduction <add>, %464, %cst_553 [1] : vector<2x3x128xf32> to vector<2x128xf32>
    %cst_554 = arith.constant 0.0833333358 : f32
    %466 = vector.broadcast %cst_554 : f32 to vector<2x128xf32>
    %467 = arith.mulf %465, %466 : vector<2x128xf32>
    %c0_555 = arith.constant 0 : index
    %c4_556 = arith.constant 4 : index
    %c0_557 = arith.constant 0 : index
    %c0_558 = arith.constant 0 : index
    %468 = vector.load %arg4[%c0_555, %c4_556, %c0_557, %c0_558] : memref<2x5x5x128xf32, #tpu.memory_space<vmem>>, vector<2x1x1x128xf32>
    %469 = vector.shape_cast %468 : vector<2x1x1x128xf32> to vector<2x128xf32>
    %470 = vector.shape_cast %467 : vector<2x128xf32> to vector<2x1x1x128xf32>
    tpu.vector_store %arg4[%c0_555, %c4_556, %c0_557, %c0_558], %470 {strides = array<i32>} : memref<2x5x5x128xf32, #tpu.memory_space<vmem>>, vector<2x1x1x128xf32>,
    %c0_559 = arith.constant 0 : index
    %c2_560 = arith.constant 2 : index
    %c0_561 = arith.constant 0 : index
    %471 = vector.load %arg6[%c0_559, %c2_560, %c0_561] : memref<2x16x128xf32, #tpu.memory_space<vmem>>, vector<2x3x128xf32>
    %cst_562 = arith.constant dense<0.000000e+00> : vector<2x128xf32>
    %472 = vector.multi_reduction <add>, %471, %cst_562 [1] : vector<2x3x128xf32> to vector<2x128xf32>
    %cst_563 = arith.constant 0.0833333358 : f32
    %473 = vector.broadcast %cst_563 : f32 to vector<2x128xf32>
    %474 = arith.mulf %472, %473 : vector<2x128xf32>
    %c0_564 = arith.constant 0 : index
    %c4_565 = arith.constant 4 : index
    %c1_566 = arith.constant 1 : index
    %c0_567 = arith.constant 0 : index
    %475 = vector.load %arg4[%c0_564, %c4_565, %c1_566, %c0_567] : memref<2x5x5x128xf32, #tpu.memory_space<vmem>>, vector<2x1x1x128xf32>
    %476 = vector.shape_cast %475 : vector<2x1x1x128xf32> to vector<2x128xf32>
    %477 = vector.shape_cast %474 : vector<2x128xf32> to vector<2x1x1x128xf32>
    tpu.vector_store %arg4[%c0_564, %c4_565, %c1_566, %c0_567], %477 {strides = array<i32>} : memref<2x5x5x128xf32, #tpu.memory_space<vmem>>, vector<2x1x1x128xf32>,
    %c0_568 = arith.constant 0 : index
    %c4_569 = arith.constant 4 : index
    %c0_570 = arith.constant 0 : index
    %478 = vector.load %arg6[%c0_568, %c4_569, %c0_570] : memref<2x16x128xf32, #tpu.memory_space<vmem>>, vector<2x3x128xf32>
    %cst_571 = arith.constant dense<0.000000e+00> : vector<2x128xf32>
    %479 = vector.multi_reduction <add>, %478, %cst_571 [1] : vector<2x3x128xf32> to vector<2x128xf32>
    %cst_572 = arith.constant 0.0833333358 : f32
    %480 = vector.broadcast %cst_572 : f32 to vector<2x128xf32>
    %481 = arith.mulf %479, %480 : vector<2x128xf32>
    %c0_573 = arith.constant 0 : index
    %c4_574 = arith.constant 4 : index
    %c2_575 = arith.constant 2 : index
    %c0_576 = arith.constant 0 : index
    %482 = vector.load %arg4[%c0_573, %c4_574, %c2_575, %c0_576] : memref<2x5x5x128xf32, #tpu.memory_space<vmem>>, vector<2x1x1x128xf32>
    %483 = vector.shape_cast %482 : vector<2x1x1x128xf32> to vector<2x128xf32>
    %484 = vector.shape_cast %481 : vector<2x128xf32> to vector<2x1x1x128xf32>
    tpu.vector_store %arg4[%c0_573, %c4_574, %c2_575, %c0_576], %484 {strides = array<i32>} : memref<2x5x5x128xf32, #tpu.memory_space<vmem>>, vector<2x1x1x128xf32>,
    %c0_577 = arith.constant 0 : index
    %c6_578 = arith.constant 6 : index
    %c0_579 = arith.constant 0 : index
    %485 = vector.load %arg6[%c0_577, %c6_578, %c0_579] : memref<2x16x128xf32, #tpu.memory_space<vmem>>, vector<2x3x128xf32>
    %cst_580 = arith.constant dense<0.000000e+00> : vector<2x128xf32>
    %486 = vector.multi_reduction <add>, %485, %cst_580 [1] : vector<2x3x128xf32> to vector<2x128xf32>
    %cst_581 = arith.constant 0.0833333358 : f32
    %487 = vector.broadcast %cst_581 : f32 to vector<2x128xf32>
    %488 = arith.mulf %486, %487 : vector<2x128xf32>
    %c0_582 = arith.constant 0 : index
    %c4_583 = arith.constant 4 : index
    %c3_584 = arith.constant 3 : index
    %c0_585 = arith.constant 0 : index
    %489 = vector.load %arg4[%c0_582, %c4_583, %c3_584, %c0_585] : memref<2x5x5x128xf32, #tpu.memory_space<vmem>>, vector<2x1x1x128xf32>
    %490 = vector.shape_cast %489 : vector<2x1x1x128xf32> to vector<2x128xf32>
    %491 = vector.shape_cast %488 : vector<2x128xf32> to vector<2x1x1x128xf32>
    tpu.vector_store %arg4[%c0_582, %c4_583, %c3_584, %c0_585], %491 {strides = array<i32>} : memref<2x5x5x128xf32, #tpu.memory_space<vmem>>, vector<2x1x1x128xf32>,
    %c0_586 = arith.constant 0 : index
    %c8_587 = arith.constant 8 : index
    %c0_588 = arith.constant 0 : index
    %492 = vector.load %arg6[%c0_586, %c8_587, %c0_588] : memref<2x16x128xf32, #tpu.memory_space<vmem>>, vector<2x3x128xf32>
    %cst_589 = arith.constant dense<0.000000e+00> : vector<2x128xf32>
    %493 = vector.multi_reduction <add>, %492, %cst_589 [1] : vector<2x3x128xf32> to vector<2x128xf32>
    %cst_590 = arith.constant 0.0833333358 : f32
    %494 = vector.broadcast %cst_590 : f32 to vector<2x128xf32>
    %495 = arith.mulf %493, %494 : vector<2x128xf32>
    %c0_591 = arith.constant 0 : index
    %c4_592 = arith.constant 4 : index
    %c4_593 = arith.constant 4 : index
    %c0_594 = arith.constant 0 : index
    %496 = vector.load %arg4[%c0_591, %c4_592, %c4_593, %c0_594] : memref<2x5x5x128xf32, #tpu.memory_space<vmem>>, vector<2x1x1x128xf32>
    %497 = vector.shape_cast %496 : vector<2x1x1x128xf32> to vector<2x128xf32>
    %498 = vector.shape_cast %495 : vector<2x128xf32> to vector<2x1x1x128xf32>
    tpu.vector_store %arg4[%c0_591, %c4_592, %c4_593, %c0_594], %498 {strides = array<i32>} : memref<2x5x5x128xf32, #tpu.memory_space<vmem>>, vector<2x1x1x128xf32>,
    return
  }
  func.func @transform_0(%arg0: i32) -> (i32, i32, i32, i32) {
    %c0_i32 = arith.constant 0 : i32
    %c0_i32_0 = arith.constant 0 : i32
    %c0_i32_1 = arith.constant 0 : i32
    %c0_i32_2 = arith.constant 0 : i32
    return %arg0, %c0_i32, %c0_i32_0, %c0_i32_1 : i32, i32, i32, i32
  }
  func.func @transform_1(%arg0: i32) -> (i32, i32, i32) {
    %c0_i32 = arith.constant 0 : i32
    %c0_i32_0 = arith.constant 0 : i32
    %c0_i32_1 = arith.constant 0 : i32
    %c0_i32_2 = arith.constant 0 : i32
    return %c0_i32, %c0_i32_0, %c0_i32_1 : i32, i32, i32
  }
  func.func @transform_2(%arg0: i32) -> (i32, i32) {
    %c0_i32 = arith.constant 0 : i32
    %c0_i32_0 = arith.constant 0 : i32
    %c0_i32_1 = arith.constant 0 : i32
    return %c0_i32, %c0_i32_0 : i32, i32
  }
  func.func @transform_3(%arg0: i32) -> (i32, i32, i32, i32) {
    %c0_i32 = arith.constant 0 : i32
    %c0_i32_0 = arith.constant 0 : i32
    %c0_i32_1 = arith.constant 0 : i32
    %c0_i32_2 = arith.constant 0 : i32
    return %arg0, %c0_i32, %c0_i32_0, %c0_i32_1 : i32, i32, i32, i32
  }
}

</mosaic_0001>

<llo_original>
// kernel: my_model_forward.1
$region0: #{my_model_forward.1}
  #allocation0 [shape = 'u32[]', space=smem, size = 0x4, offset = 0x4, fixed_abs, tag = 'smem constant byte address 0x4 - core index']
  #allocation1 [shape = 'u32[72,128]{1,0:T(1,128)}', space=vmem, size = 0x9000, scoped, tag = 'internal scratch']
  #allocation2 [shape = 'f32[2,20,16,256]{3,2,1,0:T(8,128)}', space=vmem, size = 0xa0000, scoped, tag = 'scratch operand']
  #allocation3 [shape = 'f32[2,16,128]{2,1,0:T(8,128)}', space=vmem, size = 0x4000, scoped, tag = 'scratch operand']
  %s0 = inlined_call_operand.vmem [shape: bf16[2,26,16,114], index: 0, kind: input, shape index: {}]
  %s1 = inlined_call_operand.vmem [shape: bf16[4,114,256], index: 1, kind: input, shape index: {}]
  %s2 = inlined_call_operand.vmem [shape: f32[1,128], index: 2, kind: input, shape index: {}]
  %s3 = inlined_call_operand.vmem [shape: f32[2,5,5,128], index: 3, kind: output, shape index: {}]
  %s4 = sld [smem:[#allocation0]]
  $region22: #{my_model_forward.1} parent=0
    _
  %s6 = ssub.s32 1, %s4
  %s7 = scalar_select 0, %s6, %s4
  // Predicated region
  $region2: #{my_model_forward.1} parent=0 // pred_check
    _
  $region3: #{my_model_forward.1} parent=0 // pred_check_branch
    %9 = sbr.rel (0) target = $region5
  $region4: #{my_model_forward.1} parent=0 // pred_region
    _
  $region5: #{my_model_forward.1} parent=0 // pred_fallthru
    _
  // Predicated region
  $region6: #{my_model_forward.1} parent=0 // pred_check
    _
  $region7: #{my_model_forward.1} parent=0 // pred_check_branch
    %11 = sbr.rel (0) target = $region9
  $region8: #{my_model_forward.1} parent=0 // pred_region
    _
  $region9: #{my_model_forward.1} parent=0 // pred_fallthru
    _
  // Predicated region
  $region10: #{my_model_forward.1} parent=0 // pred_check
    _
  $region11: #{my_model_forward.1} parent=0 // pred_check_branch
    %13 = sbr.rel (0) target = $region13
  $region12: #{my_model_forward.1} parent=0 // pred_region
    _
  $region13: #{my_model_forward.1} parent=0 // pred_fallthru
    _
  %v14 = vld [vmem:[%s0] sm:$0xf]
  %v15 = vld [vmem:[%s0 + $0x4] sm:$0xf]
  %v16 = vld [vmem:[%s0 + $0x8] sm:$0xf]
  %v17 = vld [vmem:[%s0 + $0xc] sm:$0xf]
  %v18 = vld [vmem:[%s0 + $0x10] sm:$0xf]
  %v19 = vld [vmem:[%s0 + $0x14] sm:$0xf]
  %v20 = vld [vmem:[%s0 + $0x18] sm:$0xf]
  %v21 = vld [vmem:[%s0 + $0x1c] sm:$0xf]
  %v22 = vld [vmem:[%s0 + $0x20] sm:$0xf]
  %v23 = vld [vmem:[%s0 + $0x24] sm:$0xf]
  %v24 = vld [vmem:[%s0 + $0x28] sm:$0xf]
  %v25 = vld [vmem:[%s0 + $0x2c] sm:$0xf]
  %v26 = vld [vmem:[%s0 + $0x30] sm:$0xf]
  %v27 = vld [vmem:[%s0 + $0x34] sm:$0xf]
  %v28 = vld [vmem:[%s0 + $0x38] sm:$0xf]
  %v29 = vld [vmem:[%s0 + $0x3c] sm:$0xf]
  %v30 = vld [vmem:[%s0 + $0x40] sm:$0xf]
  %v31 = vld [vmem:[%s0 + $0x44] sm:$0xf]
  %v32 = vld [vmem:[%s0 + $0x48] sm:$0xf]
  %v33 = vld [vmem:[%s0 + $0x4c] sm:$0xf]
  %v34 = vld [vmem:[%s0 + $0x50] sm:$0xf]
  %v35 = vld [vmem:[%s0 + $0x54] sm:$0xf]
  %v36 = vld [vmem:[%s0 + $0x58] sm:$0xf]
  %v37 = vld [vmem:[%s0 + $0x5c] sm:$0xf]
  %v38 = vld [vmem:[%s0 + $0x60] sm:$0xf]
  %v39 = vld [vmem:[%s0 + $0x64] sm:$0xf]
  %v40 = vld [vmem:[%s0 + $0x68] sm:$0xf]
  %v41 = vld [vmem:[%s0 + $0x6c] sm:$0xf]
  %v42 = vld [vmem:[%s0 + $0x70] sm:$0xf]
  %v43 = vld [vmem:[%s0 + $0x74] sm:$0xf]
  %v44 = vld [vmem:[%s0 + $0x78] sm:$0xf]
  %v45 = vld [vmem:[%s0 + $0x7c] sm:$0xf]
  %v46 = vld [vmem:[%s0 + $0x80] sm:$0xf]
  %v47 = vld [vmem:[%s0 + $0x84] sm:$0xf]
  %v48 = vld [vmem:[%s0 + $0x88] sm:$0xf]
  %v49 = vld [vmem:[%s0 + $0x8c] sm:$0xf]
  %v50 = vld [vmem:[%s0 + $0x90] sm:$0xf]
  %v51 = vld [vmem:[%s0 + $0x94] sm:$0xf]
  %v52 = vld [vmem:[%s0 + $0x98] sm:$0xf]
  %v53 = vld [vmem:[%s0 + $0x9c] sm:$0xf]
  %v54 = vld [vmem:[%s0 + $0xd0] sm:$0xf]
  %v55 = vld [vmem:[%s0 + $0xd4] sm:$0xf]
  %v56 = vld [vmem:[%s0 + $0xd8] sm:$0xf]
  %v57 = vld [vmem:[%s0 + $0xdc] sm:$0xf]
  %v58 = vld [vmem:[%s0 + $0xe0] sm:$0xf]
  %v59 = vld [vmem:[%s0 + $0xe4] sm:$0xf]
  %v60 = vld [vmem:[%s0 + $0xe8] sm:$0xf]
  %v61 = vld [vmem:[%s0 + $0xec] sm:$0xf]
  %v62 = vld [vmem:[%s0 + $0xf0] sm:$0xf]
  %v63 = vld [vmem:[%s0 + $0xf4] sm:$0xf]
  %v64 = vld [vmem:[%s0 + $0xf8] sm:$0xf]
  %v65 = vld [vmem:[%s0 + $0xfc] sm:$0xf]
  %v66 = vld [vmem:[%s0 + $0x100] sm:$0xf]
  %v67 = vld [vmem:[%s0 + $0x104] sm:$0xf]
  %v68 = vld [vmem:[%s0 + $0x108] sm:$0xf]
  %v69 = vld [vmem:[%s0 + $0x10c] sm:$0xf]
  %v70 = vld [vmem:[%s0 + $0x110] sm:$0xf]
  %v71 = vld [vmem:[%s0 + $0x114] sm:$0xf]
  %v72 = vld [vmem:[%s0 + $0x118] sm:$0xf]
  %v73 = vld [vmem:[%s0 + $0x11c] sm:$0xf]
  %v74 = vld [vmem:[%s0 + $0x120] sm:$0xf]
  %v75 = vld [vmem:[%s0 + $0x124] sm:$0xf]
  %v76 = vld [vmem:[%s0 + $0x128] sm:$0xf]
  %v77 = vld [vmem:[%s0 + $0x12c] sm:$0xf]
  %v78 = vld [vmem:[%s0 + $0x130] sm:$0xf]
  %v79 = vld [vmem:[%s0 + $0x134] sm:$0xf]
  %v80 = vld [vmem:[%s0 + $0x138] sm:$0xf]
  %v81 = vld [vmem:[%s0 + $0x13c] sm:$0xf]
  %v82 = vld [vmem:[%s0 + $0x140] sm:$0xf]
  %v83 = vld [vmem:[%s0 + $0x144] sm:$0xf]
  %v84 = vld [vmem:[%s0 + $0x148] sm:$0xf]
  %v85 = vld [vmem:[%s0 + $0x14c] sm:$0xf]
  %v86 = vld [vmem:[%s0 + $0x150] sm:$0xf]
  %v87 = vld [vmem:[%s0 + $0x154] sm:$0xf]
  %v88 = vld [vmem:[%s0 + $0x158] sm:$0xf]
  %v89 = vld [vmem:[%s0 + $0x15c] sm:$0xf]
  %v90 = vld [vmem:[%s0 + $0x160] sm:$0xf]
  %v91 = vld [vmem:[%s0 + $0x164] sm:$0xf]
  %v92 = vld [vmem:[%s0 + $0x168] sm:$0xf]
  %v93 = vld [vmem:[%s0 + $0x16c] sm:$0xf]
  %v94 = vld [vmem:[%s1] sm:$0xff]
  %v95 = vld [vmem:[%s1 + $0x8] sm:$0xff]
  %v96 = vld [vmem:[%s1 + $0x10] sm:$0xff]
  %v97 = vld [vmem:[%s1 + $0x18] sm:$0xff]
  %v98 = vld [vmem:[%s1 + $0x20] sm:$0xff]
  %v99 = vld [vmem:[%s1 + $0x28] sm:$0xff]
  %v100 = vld [vmem:[%s1 + $0x30] sm:$0xff]
  %v101 = vld [vmem:[%s1 + $0x38] sm:$0xff]
  %v102 = vld [vmem:[%s1 + $0x40] sm:$0xff]
  %v103 = vld [vmem:[%s1 + $0x48] sm:$0xff]
  %v104 = vld [vmem:[%s1 + $0x50] sm:$0xff]
  %v105 = vld [vmem:[%s1 + $0x58] sm:$0xff]
  %v106 = vld [vmem:[%s1 + $0x60] sm:$0xff]
  %v107 = vld [vmem:[%s1 + $0x68] sm:$0xff]
  %v108 = vld [vmem:[%s1 + $0x70] sm:$0x11]
  %v189 = vunpack.c.l.b16 %v14
  %v190 = vunpack.c.l.b16 %v15
  %v191 = vunpack.c.l.b16 %v16
  %v192 = vunpack.c.l.b16 %v17
  %v193 = vunpack.c.l.b16 %v18
  %v194 = vunpack.c.l.b16 %v19
  %v195 = vunpack.c.l.b16 %v20
  %v196 = vunpack.c.l.b16 %v21
  %v197 = vunpack.c.l.b16 %v22
  %v198 = vunpack.c.l.b16 %v23
  %v199 = vunpack.c.l.b16 %v24
  %v200 = vunpack.c.l.b16 %v25
  %v201 = vunpack.c.l.b16 %v26
  %v202 = vunpack.c.l.b16 %v27
  %v203 = vunpack.c.l.b16 %v28
  %v204 = vunpack.c.l.b16 %v29
  %v205 = vunpack.c.l.b16 %v30
  %v206 = vunpack.c.l.b16 %v31
  %v207 = vunpack.c.l.b16 %v32
  %v208 = vunpack.c.l.b16 %v33
  %v209 = vunpack.c.l.b16 %v34
  %v210 = vunpack.c.l.b16 %v35
  %v211 = vunpack.c.l.b16 %v36
  %v212 = vunpack.c.l.b16 %v37
  %v213 = vunpack.c.l.b16 %v38
  %v214 = vunpack.c.l.b16 %v39
  %v215 = vunpack.c.l.b16 %v40
  %v216 = vunpack.c.l.b16 %v41
  %v217 = vunpack.c.l.b16 %v42
  %v218 = vunpack.c.l.b16 %v43
  %v219 = vunpack.c.l.b16 %v44
  %v220 = vunpack.c.l.b16 %v45
  %v221 = vunpack.c.l.b16 %v46
  %v222 = vunpack.c.l.b16 %v47
  %v223 = vunpack.c.l.b16 %v48
  %v224 = vunpack.c.l.b16 %v49
  %v225 = vunpack.c.l.b16 %v50
  %v226 = vunpack.c.l.b16 %v51
  %v227 = vunpack.c.l.b16 %v52
  %v228 = vunpack.c.l.b16 %v53
  %v229 = vunpack.c.l.b16 %v54
  %v230 = vunpack.c.l.b16 %v55
  %v231 = vunpack.c.l.b16 %v56
  %v232 = vunpack.c.l.b16 %v57
  %v233 = vunpack.c.l.b16 %v58
  %v234 = vunpack.c.l.b16 %v59
  %v235 = vunpack.c.l.b16 %v60
  %v236 = vunpack.c.l.b16 %v61
  %v237 = vunpack.c.l.b16 %v62
  %v238 = vunpack.c.l.b16 %v63
  %v239 = vunpack.c.l.b16 %v64
  %v240 = vunpack.c.l.b16 %v65
  %v241 = vunpack.c.l.b16 %v66
  %v242 = vunpack.c.l.b16 %v67
  %v243 = vunpack.c.l.b16 %v68
  %v244 = vunpack.c.l.b16 %v69
  %v245 = vunpack.c.l.b16 %v70
  %v246 = vunpack.c.l.b16 %v71
  %v247 = vunpack.c.l.b16 %v72
  %v248 = vunpack.c.l.b16 %v73
  %v249 = vunpack.c.l.b16 %v74
  %v250 = vunpack.c.l.b16 %v75
  %v251 = vunpack.c.l.b16 %v76
  %v252 = vunpack.c.l.b16 %v77
  %v253 = vunpack.c.l.b16 %v78
  %v254 = vunpack.c.l.b16 %v79
  %v255 = vunpack.c.l.b16 %v80
  %v256 = vunpack.c.l.b16 %v81
  %v257 = vunpack.c.l.b16 %v82
  %v258 = vunpack.c.l.b16 %v83
  %v259 = vunpack.c.l.b16 %v84
  %v260 = vunpack.c.l.b16 %v85
  %v261 = vunpack.c.l.b16 %v86
  %v262 = vunpack.c.l.b16 %v87
  %v263 = vunpack.c.l.b16 %v88
  %v264 = vunpack.c.l.b16 %v89
  %v265 = vunpack.c.l.b16 %v90
  %v266 = vunpack.c.l.b16 %v91
  %v267 = vunpack.c.l.b16 %v92
  %v268 = vunpack.c.l.b16 %v93
  %v269 = vpack.c.b16 %v190, %v189
  %v270 = vpack.c.b16 %v192, %v191
  %v271 = vpack.c.b16 %v194, %v193
  %v272 = vpack.c.b16 %v196, %v195
  %v273 = vpack.c.b16 %v198, %v197
  %v274 = vpack.c.b16 %v200, %v199
  %v275 = vpack.c.b16 %v202, %v201
  %v276 = vpack.c.b16 %v204, %v203
  %v277 = vpack.c.b16 %v206, %v205
  %v278 = vpack.c.b16 %v208, %v207
  %v279 = vpack.c.b16 %v210, %v209
  %v280 = vpack.c.b16 %v212, %v211
  %v281 = vpack.c.b16 %v214, %v213
  %v282 = vpack.c.b16 %v216, %v215
  %v283 = vpack.c.b16 %v218, %v217
  %v284 = vpack.c.b16 %v220, %v219
  %v285 = vpack.c.b16 %v222, %v221
  %v286 = vpack.c.b16 %v224, %v223
  %v287 = vpack.c.b16 %v226, %v225
  %v288 = vpack.c.b16 %v228, %v227
  %v289 = vpack.c.b16 %v230, %v229
  %v290 = vpack.c.b16 %v232, %v231
  %v291 = vpack.c.b16 %v234, %v233
  %v292 = vpack.c.b16 %v236, %v235
  %v293 = vpack.c.b16 %v238, %v237
  %v294 = vpack.c.b16 %v240, %v239
  %v295 = vpack.c.b16 %v242, %v241
  %v296 = vpack.c.b16 %v244, %v243
  %v297 = vpack.c.b16 %v246, %v245
  %v298 = vpack.c.b16 %v248, %v247
  %v299 = vpack.c.b16 %v250, %v249
  %v300 = vpack.c.b16 %v252, %v251
  %v301 = vpack.c.b16 %v254, %v253
  %v302 = vpack.c.b16 %v256, %v255
  %v303 = vpack.c.b16 %v258, %v257
  %v304 = vpack.c.b16 %v260, %v259
  %v305 = vpack.c.b16 %v262, %v261
  %v306 = vpack.c.b16 %v264, %v263
  %v307 = vpack.c.b16 %v266, %v265
  %v308 = vpack.c.b16 %v268, %v267
  %v324 = vunpack.c.l.b16 %v94
  %v325 = vunpack.c.h.b16 %v94
  %v326 = vunpack.c.l.b16 %v95
  %v327 = vunpack.c.h.b16 %v95
  %v328 = vunpack.c.l.b16 %v96
  %v329 = vunpack.c.h.b16 %v96
  %v330 = vunpack.c.l.b16 %v97
  %v331 = vunpack.c.h.b16 %v97
  %v332 = vunpack.c.l.b16 %v98
  %v333 = vunpack.c.h.b16 %v98
  %v334 = vunpack.c.l.b16 %v99
  %v335 = vunpack.c.h.b16 %v99
  %v336 = vunpack.c.l.b16 %v100
  %v337 = vunpack.c.h.b16 %v100
  %v338 = vunpack.c.l.b16 %v101
  %v339 = vunpack.c.h.b16 %v101
  %v340 = vunpack.c.l.b16 %v102
  %v341 = vunpack.c.h.b16 %v102
  %v342 = vunpack.c.l.b16 %v103
  %v343 = vunpack.c.h.b16 %v103
  %v344 = vunpack.c.l.b16 %v104
  %v345 = vunpack.c.h.b16 %v104
  %v346 = vunpack.c.l.b16 %v105
  %v347 = vunpack.c.h.b16 %v105
  %v348 = vunpack.c.l.b16 %v106
  %v349 = vunpack.c.h.b16 %v106
  %v350 = vunpack.c.l.b16 %v107
  %v351 = vunpack.c.h.b16 %v107
  %v352 = vunpack.c.l.b16 %v108
  %v353 = vunpack.c.h.b16 %v108
  %v354 = vpack.c.b16 %v326, %v324
  %v355 = vpack.c.b16 %v327, %v325
  %v356 = vpack.c.b16 %v330, %v328
  %v357 = vpack.c.b16 %v331, %v329
  %v358 = vpack.c.b16 %v334, %v332
  %v359 = vpack.c.b16 %v335, %v333
  %v360 = vpack.c.b16 %v338, %v336
  %v361 = vpack.c.b16 %v339, %v337
  %v362 = vpack.c.b16 %v342, %v340
  %v363 = vpack.c.b16 %v343, %v341
  %v364 = vpack.c.b16 %v346, %v344
  %v365 = vpack.c.b16 %v347, %v345
  %v366 = vpack.c.b16 %v350, %v348
  %v367 = vpack.c.b16 %v351, %v349
  %v368 = vpack.c.b16 %v352, %v352
  %v369 = vpack.c.b16 %v353, %v353
  %vm384 = vcmask 932864
  %v386 = vsel %vm384, %v269, 0
  %v389 = vsel %vm384, %v270, 0
  %v392 = vsel %vm384, %v271, 0
  %v395 = vsel %vm384, %v272, 0
  %v398 = vsel %vm384, %v273, 0
  %v401 = vsel %vm384, %v274, 0
  %v404 = vsel %vm384, %v275, 0
  %v407 = vsel %vm384, %v276, 0
  %v410 = vsel %vm384, %v277, 0
  %v413 = vsel %vm384, %v278, 0
  %v416 = vsel %vm384, %v279, 0
  %v419 = vsel %vm384, %v280, 0
  %v422 = vsel %vm384, %v281, 0
  %v425 = vsel %vm384, %v282, 0
  %v428 = vsel %vm384, %v283, 0
  %v431 = vsel %vm384, %v284, 0
  %v434 = vsel %vm384, %v285, 0
  %v437 = vsel %vm384, %v286, 0
  %v440 = vsel %vm384, %v287, 0
  %v443 = vsel %vm384, %v288, 0
  %v446 = vsel %vm384, %v289, 0
  %v449 = vsel %vm384, %v290, 0
  %v452 = vsel %vm384, %v291, 0
  %v455 = vsel %vm384, %v292, 0
  %v458 = vsel %vm384, %v293, 0
  %v461 = vsel %vm384, %v294, 0
  %v464 = vsel %vm384, %v295, 0
  %v467 = vsel %vm384, %v296, 0
  %v470 = vsel %vm384, %v297, 0
  %v473 = vsel %vm384, %v298, 0
  %v476 = vsel %vm384, %v299, 0
  %v479 = vsel %vm384, %v300, 0
  %v482 = vsel %vm384, %v301, 0
  %v485 = vsel %vm384, %v302, 0
  %v488 = vsel %vm384, %v303, 0
  %v491 = vsel %vm384, %v304, 0
  %v494 = vsel %vm384, %v305, 0
  %v497 = vsel %vm384, %v306, 0
  %v500 = vsel %vm384, %v307, 0
  %v503 = vsel %vm384, %v308, 0
  %vm505 = vcmask 1040384
  %v507 = vsel %vm505, %v368, 0
  %v510 = vsel %vm505, %v369, 0
  %512 = vmatpush.bf16.msra.mxu0 %v507
  %513 = vmatpush.bf16.msra.mxu0 %v366
  %514 = vmatpush.bf16.msra.mxu0 %v364
  %515 = vmatpush.bf16.msra.mxu0 %v362
  %516 = vmatpush.bf16.msra.mxu0 %v360
  %517 = vmatpush.bf16.msra.mxu0 %v358
  %518 = vmatpush.bf16.msra.mxu0 %v356
  %519 = vmatpush.bf16.msra.mxu0 %v354
  %520 = vmatmul.bf16.gmra.mxu0 %v386
  %v521 = vpop.f32.mrf.mxu0
  %v522 = vadd.f32 0.0, %v521
  %v523 = vpop.f32.mrf.mxu0
  %v524 = vadd.f32 0.0, %v523
  %525 = vmatmul.bf16.gmra.mxu0 %v389
  %v526 = vpop.f32.mrf.mxu0
  %v527 = vadd.f32 0.0, %v526
  %v528 = vpop.f32.mrf.mxu0
  %v529 = vadd.f32 0.0, %v528
  %530 = vmatmul.bf16.gmra.mxu0 %v392
  %v531 = vpop.f32.mrf.mxu0
  %v532 = vadd.f32 0.0, %v531
  %v533 = vpop.f32.mrf.mxu0
  %v534 = vadd.f32 0.0, %v533
  %535 = vmatmul.bf16.gmra.mxu0 %v395
  %v536 = vpop.f32.mrf.mxu0
  %v537 = vadd.f32 0.0, %v536
  %v538 = vpop.f32.mrf.mxu0
  %v539 = vadd.f32 0.0, %v538
  %540 = vmatmul.bf16.gmra.mxu0 %v398
  %v541 = vpop.f32.mrf.mxu0
  %v542 = vadd.f32 0.0, %v541
  %v543 = vpop.f32.mrf.mxu0
  %v544 = vadd.f32 0.0, %v543
  %545 = vmatmul.bf16.gmra.mxu0 %v401
  %v546 = vpop.f32.mrf.mxu0
  %v547 = vadd.f32 0.0, %v546
  %v548 = vpop.f32.mrf.mxu0
  %v549 = vadd.f32 0.0, %v548
  %550 = vmatmul.bf16.gmra.mxu0 %v404
  %v551 = vpop.f32.mrf.mxu0
  %v552 = vadd.f32 0.0, %v551
  %v553 = vpop.f32.mrf.mxu0
  %v554 = vadd.f32 0.0, %v553
  %555 = vmatmul.bf16.gmra.mxu0 %v407
  %v556 = vpop.f32.mrf.mxu0
  %v557 = vadd.f32 0.0, %v556
  %v558 = vpop.f32.mrf.mxu0
  %v559 = vadd.f32 0.0, %v558
  %560 = vmatmul.bf16.gmra.mxu0 %v410
  %v561 = vpop.f32.mrf.mxu0
  %v562 = vadd.f32 0.0, %v561
  %v563 = vpop.f32.mrf.mxu0
  %v564 = vadd.f32 0.0, %v563
  %565 = vmatmul.bf16.gmra.mxu0 %v413
  %v566 = vpop.f32.mrf.mxu0
  %v567 = vadd.f32 0.0, %v566
  %v568 = vpop.f32.mrf.mxu0
  %v569 = vadd.f32 0.0, %v568
  %570 = vmatmul.bf16.gmra.mxu0 %v416
  %v571 = vpop.f32.mrf.mxu0
  %v572 = vadd.f32 0.0, %v571
  %v573 = vpop.f32.mrf.mxu0
  %v574 = vadd.f32 0.0, %v573
  %575 = vmatmul.bf16.gmra.mxu0 %v419
  %v576 = vpop.f32.mrf.mxu0
  %v577 = vadd.f32 0.0, %v576
  %v578 = vpop.f32.mrf.mxu0
  %v579 = vadd.f32 0.0, %v578
  %580 = vmatmul.bf16.gmra.mxu0 %v422
  %v581 = vpop.f32.mrf.mxu0
  %v582 = vadd.f32 0.0, %v581
  %v583 = vpop.f32.mrf.mxu0
  %v584 = vadd.f32 0.0, %v583
  %585 = vmatmul.bf16.gmra.mxu0 %v425
  %v586 = vpop.f32.mrf.mxu0
  %v587 = vadd.f32 0.0, %v586
  %v588 = vpop.f32.mrf.mxu0
  %v589 = vadd.f32 0.0, %v588
  %590 = vmatmul.bf16.gmra.mxu0 %v428
  %v591 = vpop.f32.mrf.mxu0
  %v592 = vadd.f32 0.0, %v591
  %v593 = vpop.f32.mrf.mxu0
  %v594 = vadd.f32 0.0, %v593
  %595 = vmatmul.bf16.gmra.mxu0 %v431
  %v596 = vpop.f32.mrf.mxu0
  %v597 = vadd.f32 0.0, %v596
  %v598 = vpop.f32.mrf.mxu0
  %v599 = vadd.f32 0.0, %v598
  %600 = vmatmul.bf16.gmra.mxu0 %v434
  %v601 = vpop.f32.mrf.mxu0
  %v602 = vadd.f32 0.0, %v601
  %v603 = vpop.f32.mrf.mxu0
  %v604 = vadd.f32 0.0, %v603
  %605 = vmatmul.bf16.gmra.mxu0 %v437
  %v606 = vpop.f32.mrf.mxu0
  %v607 = vadd.f32 0.0, %v606
  %v608 = vpop.f32.mrf.mxu0
  %v609 = vadd.f32 0.0, %v608
  %610 = vmatmul.bf16.gmra.mxu0 %v440
  %v611 = vpop.f32.mrf.mxu0
  %v612 = vadd.f32 0.0, %v611
  %v613 = vpop.f32.mrf.mxu0
  %v614 = vadd.f32 0.0, %v613
  %615 = vmatmul.bf16.gmra.mxu0 %v443
  %v616 = vpop.f32.mrf.mxu0
  %v617 = vadd.f32 0.0, %v616
  %v618 = vpop.f32.mrf.mxu0
  %v619 = vadd.f32 0.0, %v618
  %620 = vmatmul.bf16.gmra.mxu0 %v446
  %v621 = vpop.f32.mrf.mxu0
  %v622 = vadd.f32 0.0, %v621
  %v623 = vpop.f32.mrf.mxu0
  %v624 = vadd.f32 0.0, %v623
  %625 = vmatmul.bf16.gmra.mxu0 %v449
  %v626 = vpop.f32.mrf.mxu0
  %v627 = vadd.f32 0.0, %v626
  %v628 = vpop.f32.mrf.mxu0
  %v629 = vadd.f32 0.0, %v628
  %630 = vmatmul.bf16.gmra.mxu0 %v452
  %v631 = vpop.f32.mrf.mxu0
  %v632 = vadd.f32 0.0, %v631
  %v633 = vpop.f32.mrf.mxu0
  %v634 = vadd.f32 0.0, %v633
  %635 = vmatmul.bf16.gmra.mxu0 %v455
  %v636 = vpop.f32.mrf.mxu0
  %v637 = vadd.f32 0.0, %v636
  %v638 = vpop.f32.mrf.mxu0
  %v639 = vadd.f32 0.0, %v638
  %640 = vmatmul.bf16.gmra.mxu0 %v458
  %v641 = vpop.f32.mrf.mxu0
  %v642 = vadd.f32 0.0, %v641
  %v643 = vpop.f32.mrf.mxu0
  %v644 = vadd.f32 0.0, %v643
  %645 = vmatmul.bf16.gmra.mxu0 %v461
  %v646 = vpop.f32.mrf.mxu0
  %v647 = vadd.f32 0.0, %v646
  %v648 = vpop.f32.mrf.mxu0
  %v649 = vadd.f32 0.0, %v648
  %650 = vmatmul.bf16.gmra.mxu0 %v464
  %v651 = vpop.f32.mrf.mxu0
  %v652 = vadd.f32 0.0, %v651
  %v653 = vpop.f32.mrf.mxu0
  %v654 = vadd.f32 0.0, %v653
  %655 = vmatmul.bf16.gmra.mxu0 %v467
  %v656 = vpop.f32.mrf.mxu0
  %v657 = vadd.f32 0.0, %v656
  %v658 = vpop.f32.mrf.mxu0
  %v659 = vadd.f32 0.0, %v658
  %660 = vmatmul.bf16.gmra.mxu0 %v470
  %v661 = vpop.f32.mrf.mxu0
  %v662 = vadd.f32 0.0, %v661
  %v663 = vpop.f32.mrf.mxu0
  %v664 = vadd.f32 0.0, %v663
  %665 = vmatmul.bf16.gmra.mxu0 %v473
  %v666 = vpop.f32.mrf.mxu0
  %v667 = vadd.f32 0.0, %v666
  %v668 = vpop.f32.mrf.mxu0
  %v669 = vadd.f32 0.0, %v668
  %670 = vmatmul.bf16.gmra.mxu0 %v476
  %v671 = vpop.f32.mrf.mxu0
  %v672 = vadd.f32 0.0, %v671
  %v673 = vpop.f32.mrf.mxu0
  %v674 = vadd.f32 0.0, %v673
  %675 = vmatmul.bf16.gmra.mxu0 %v479
  %v676 = vpop.f32.mrf.mxu0
  %v677 = vadd.f32 0.0, %v676
  %v678 = vpop.f32.mrf.mxu0
  %v679 = vadd.f32 0.0, %v678
  %680 = vmatmul.bf16.gmra.mxu0 %v482
  %v681 = vpop.f32.mrf.mxu0
  %v682 = vadd.f32 0.0, %v681
  %v683 = vpop.f32.mrf.mxu0
  %v684 = vadd.f32 0.0, %v683
  %685 = vmatmul.bf16.gmra.mxu0 %v485
  %v686 = vpop.f32.mrf.mxu0
  %v687 = vadd.f32 0.0, %v686
  %v688 = vpop.f32.mrf.mxu0
  %v689 = vadd.f32 0.0, %v688
  %690 = vmatmul.bf16.gmra.mxu0 %v488
  %v691 = vpop.f32.mrf.mxu0
  %v692 = vadd.f32 0.0, %v691
  %v693 = vpop.f32.mrf.mxu0
  %v694 = vadd.f32 0.0, %v693
  %695 = vmatmul.bf16.gmra.mxu0 %v491
  %v696 = vpop.f32.mrf.mxu0
  %v697 = vadd.f32 0.0, %v696
  %v698 = vpop.f32.mrf.mxu0
  %v699 = vadd.f32 0.0, %v698
  %700 = vmatmul.bf16.gmra.mxu0 %v494
  %v701 = vpop.f32.mrf.mxu0
  %v702 = vadd.f32 0.0, %v701
  %v703 = vpop.f32.mrf.mxu0
  %v704 = vadd.f32 0.0, %v703
  %705 = vmatmul.bf16.gmra.mxu0 %v497
  %v706 = vpop.f32.mrf.mxu0
  %v707 = vadd.f32 0.0, %v706
  %v708 = vpop.f32.mrf.mxu0
  %v709 = vadd.f32 0.0, %v708
  %710 = vmatmul.bf16.gmra.mxu0 %v500
  %v711 = vpop.f32.mrf.mxu0
  %v712 = vadd.f32 0.0, %v711
  %v713 = vpop.f32.mrf.mxu0
  %v714 = vadd.f32 0.0, %v713
  %715 = vmatmul.bf16.gmra.mxu0 %v503
  %v716 = vpop.f32.mrf.mxu0
  %v717 = vadd.f32 0.0, %v716
  %v718 = vpop.f32.mrf.mxu0
  %v719 = vadd.f32 0.0, %v718
  %720 = vdwg.mxu0
  %721 = vmatpush.bf16.msra.mxu0 %v510
  %722 = vmatpush.bf16.msra.mxu0 %v367
  %723 = vmatpush.bf16.msra.mxu0 %v365
  %724 = vmatpush.bf16.msra.mxu0 %v363
  %725 = vmatpush.bf16.msra.mxu0 %v361
  %726 = vmatpush.bf16.msra.mxu0 %v359
  %727 = vmatpush.bf16.msra.mxu0 %v357
  %728 = vmatpush.bf16.msra.mxu0 %v355
  %729 = vmatmul.bf16.gmra.mxu0 %v386
  %v730 = vpop.f32.mrf.mxu0
  %v731 = vadd.f32 0.0, %v730
  %v732 = vpop.f32.mrf.mxu0
  %v733 = vadd.f32 0.0, %v732
  %734 = vmatmul.bf16.gmra.mxu0 %v389
  %v735 = vpop.f32.mrf.mxu0
  %v736 = vadd.f32 0.0, %v735
  %v737 = vpop.f32.mrf.mxu0
  %v738 = vadd.f32 0.0, %v737
  %739 = vmatmul.bf16.gmra.mxu0 %v392
  %v740 = vpop.f32.mrf.mxu0
  %v741 = vadd.f32 0.0, %v740
  %v742 = vpop.f32.mrf.mxu0
  %v743 = vadd.f32 0.0, %v742
  %744 = vmatmul.bf16.gmra.mxu0 %v395
  %v745 = vpop.f32.mrf.mxu0
  %v746 = vadd.f32 0.0, %v745
  %v747 = vpop.f32.mrf.mxu0
  %v748 = vadd.f32 0.0, %v747
  %749 = vmatmul.bf16.gmra.mxu0 %v398
  %v750 = vpop.f32.mrf.mxu0
  %v751 = vadd.f32 0.0, %v750
  %v752 = vpop.f32.mrf.mxu0
  %v753 = vadd.f32 0.0, %v752
  %754 = vmatmul.bf16.gmra.mxu0 %v401
  %v755 = vpop.f32.mrf.mxu0
  %v756 = vadd.f32 0.0, %v755
  %v757 = vpop.f32.mrf.mxu0
  %v758 = vadd.f32 0.0, %v757
  %759 = vmatmul.bf16.gmra.mxu0 %v404
  %v760 = vpop.f32.mrf.mxu0
  %v761 = vadd.f32 0.0, %v760
  %v762 = vpop.f32.mrf.mxu0
  %v763 = vadd.f32 0.0, %v762
  %764 = vmatmul.bf16.gmra.mxu0 %v407
  %v765 = vpop.f32.mrf.mxu0
  %v766 = vadd.f32 0.0, %v765
  %v767 = vpop.f32.mrf.mxu0
  %v768 = vadd.f32 0.0, %v767
  %769 = vmatmul.bf16.gmra.mxu0 %v410
  %v770 = vpop.f32.mrf.mxu0
  %v771 = vadd.f32 0.0, %v770
  %v772 = vpop.f32.mrf.mxu0
  %v773 = vadd.f32 0.0, %v772
  %774 = vmatmul.bf16.gmra.mxu0 %v413
  %v775 = vpop.f32.mrf.mxu0
  %v776 = vadd.f32 0.0, %v775
  %v777 = vpop.f32.mrf.mxu0
  %v778 = vadd.f32 0.0, %v777
  %779 = vmatmul.bf16.gmra.mxu0 %v416
  %v780 = vpop.f32.mrf.mxu0
  %v781 = vadd.f32 0.0, %v780
  %v782 = vpop.f32.mrf.mxu0
  %v783 = vadd.f32 0.0, %v782
  %784 = vmatmul.bf16.gmra.mxu0 %v419
  %v785 = vpop.f32.mrf.mxu0
  %v786 = vadd.f32 0.0, %v785
  %v787 = vpop.f32.mrf.mxu0
  %v788 = vadd.f32 0.0, %v787
  %789 = vmatmul.bf16.gmra.mxu0 %v422
  %v790 = vpop.f32.mrf.mxu0
  %v791 = vadd.f32 0.0, %v790
  %v792 = vpop.f32.mrf.mxu0
  %v793 = vadd.f32 0.0, %v792
  %794 = vmatmul.bf16.gmra.mxu0 %v425
  %v795 = vpop.f32.mrf.mxu0
  %v796 = vadd.f32 0.0, %v795
  %v797 = vpop.f32.mrf.mxu0
  %v798 = vadd.f32 0.0, %v797
  %799 = vmatmul.bf16.gmra.mxu0 %v428
  %v800 = vpop.f32.mrf.mxu0
  %v801 = vadd.f32 0.0, %v800
  %v802 = vpop.f32.mrf.mxu0
  %v803 = vadd.f32 0.0, %v802
  %804 = vmatmul.bf16.gmra.mxu0 %v431
  %v805 = vpop.f32.mrf.mxu0
  %v806 = vadd.f32 0.0, %v805
  %v807 = vpop.f32.mrf.mxu0
  %v808 = vadd.f32 0.0, %v807
  %809 = vmatmul.bf16.gmra.mxu0 %v434
  %v810 = vpop.f32.mrf.mxu0
  %v811 = vadd.f32 0.0, %v810
  %v812 = vpop.f32.mrf.mxu0
  %v813 = vadd.f32 0.0, %v812
  %814 = vmatmul.bf16.gmra.mxu0 %v437
  %v815 = vpop.f32.mrf.mxu0
  %v816 = vadd.f32 0.0, %v815
  %v817 = vpop.f32.mrf.mxu0
  %v818 = vadd.f32 0.0, %v817
  %819 = vmatmul.bf16.gmra.mxu0 %v440
  %v820 = vpop.f32.mrf.mxu0
  %v821 = vadd.f32 0.0, %v820
  %v822 = vpop.f32.mrf.mxu0
  %v823 = vadd.f32 0.0, %v822
  %824 = vmatmul.bf16.gmra.mxu0 %v443
  %v825 = vpop.f32.mrf.mxu0
  %v826 = vadd.f32 0.0, %v825
  %v827 = vpop.f32.mrf.mxu0
  %v828 = vadd.f32 0.0, %v827
  %829 = vmatmul.bf16.gmra.mxu0 %v446
  %v830 = vpop.f32.mrf.mxu0
  %v831 = vadd.f32 0.0, %v830
  %v832 = vpop.f32.mrf.mxu0
  %v833 = vadd.f32 0.0, %v832
  %834 = vmatmul.bf16.gmra.mxu0 %v449
  %v835 = vpop.f32.mrf.mxu0
  %v836 = vadd.f32 0.0, %v835
  %v837 = vpop.f32.mrf.mxu0
  %v838 = vadd.f32 0.0, %v837
  %839 = vmatmul.bf16.gmra.mxu0 %v452
  %v840 = vpop.f32.mrf.mxu0
  %v841 = vadd.f32 0.0, %v840
  %v842 = vpop.f32.mrf.mxu0
  %v843 = vadd.f32 0.0, %v842
  %844 = vmatmul.bf16.gmra.mxu0 %v455
  %v845 = vpop.f32.mrf.mxu0
  %v846 = vadd.f32 0.0, %v845
  %v847 = vpop.f32.mrf.mxu0
  %v848 = vadd.f32 0.0, %v847
  %849 = vmatmul.bf16.gmra.mxu0 %v458
  %v850 = vpop.f32.mrf.mxu0
  %v851 = vadd.f32 0.0, %v850
  %v852 = vpop.f32.mrf.mxu0
  %v853 = vadd.f32 0.0, %v852
  %854 = vmatmul.bf16.gmra.mxu0 %v461
  %v855 = vpop.f32.mrf.mxu0
  %v856 = vadd.f32 0.0, %v855
  %v857 = vpop.f32.mrf.mxu0
  %v858 = vadd.f32 0.0, %v857
  %859 = vmatmul.bf16.gmra.mxu0 %v464
  %v860 = vpop.f32.mrf.mxu0
  %v861 = vadd.f32 0.0, %v860
  %v862 = vpop.f32.mrf.mxu0
  %v863 = vadd.f32 0.0, %v862
  %864 = vmatmul.bf16.gmra.mxu0 %v467
  %v865 = vpop.f32.mrf.mxu0
  %v866 = vadd.f32 0.0, %v865
  %v867 = vpop.f32.mrf.mxu0
  %v868 = vadd.f32 0.0, %v867
  %869 = vmatmul.bf16.gmra.mxu0 %v470
  %v870 = vpop.f32.mrf.mxu0
  %v871 = vadd.f32 0.0, %v870
  %v872 = vpop.f32.mrf.mxu0
  %v873 = vadd.f32 0.0, %v872
  %874 = vmatmul.bf16.gmra.mxu0 %v473
  %v875 = vpop.f32.mrf.mxu0
  %v876 = vadd.f32 0.0, %v875
  %v877 = vpop.f32.mrf.mxu0
  %v878 = vadd.f32 0.0, %v877
  %879 = vmatmul.bf16.gmra.mxu0 %v476
  %v880 = vpop.f32.mrf.mxu0
  %v881 = vadd.f32 0.0, %v880
  %v882 = vpop.f32.mrf.mxu0
  %v883 = vadd.f32 0.0, %v882
  %884 = vmatmul.bf16.gmra.mxu0 %v479
  %v885 = vpop.f32.mrf.mxu0
  %v886 = vadd.f32 0.0, %v885
  %v887 = vpop.f32.mrf.mxu0
  %v888 = vadd.f32 0.0, %v887
  %889 = vmatmul.bf16.gmra.mxu0 %v482
  %v890 = vpop.f32.mrf.mxu0
  %v891 = vadd.f32 0.0, %v890
  %v892 = vpop.f32.mrf.mxu0
  %v893 = vadd.f32 0.0, %v892
  %894 = vmatmul.bf16.gmra.mxu0 %v485
  %v895 = vpop.f32.mrf.mxu0
  %v896 = vadd.f32 0.0, %v895
  %v897 = vpop.f32.mrf.mxu0
  %v898 = vadd.f32 0.0, %v897
  %899 = vmatmul.bf16.gmra.mxu0 %v488
  %v900 = vpop.f32.mrf.mxu0
  %v901 = vadd.f32 0.0, %v900
  %v902 = vpop.f32.mrf.mxu0
  %v903 = vadd.f32 0.0, %v902
  %904 = vmatmul.bf16.gmra.mxu0 %v491
  %v905 = vpop.f32.mrf.mxu0
  %v906 = vadd.f32 0.0, %v905
  %v907 = vpop.f32.mrf.mxu0
  %v908 = vadd.f32 0.0, %v907
  %909 = vmatmul.bf16.gmra.mxu0 %v494
  %v910 = vpop.f32.mrf.mxu0
  %v911 = vadd.f32 0.0, %v910
  %v912 = vpop.f32.mrf.mxu0
  %v913 = vadd.f32 0.0, %v912
  %914 = vmatmul.bf16.gmra.mxu0 %v497
  %v915 = vpop.f32.mrf.mxu0
  %v916 = vadd.f32 0.0, %v915
  %v917 = vpop.f32.mrf.mxu0
  %v918 = vadd.f32 0.0, %v917
  %919 = vmatmul.bf16.gmra.mxu0 %v500
  %v920 = vpop.f32.mrf.mxu0
  %v921 = vadd.f32 0.0, %v920
  %v922 = vpop.f32.mrf.mxu0
  %v923 = vadd.f32 0.0, %v922
  %924 = vmatmul.bf16.gmra.mxu0 %v503
  %v925 = vpop.f32.mrf.mxu0
  %v926 = vadd.f32 0.0, %v925
  %v927 = vpop.f32.mrf.mxu0
  %v928 = vadd.f32 0.0, %v927
  %929 = vdwg.mxu0
  %930 = vst [vmem:[#allocation2] sm:$0xff] %v522
  %931 = vst [vmem:[#allocation2 + $0x8] sm:$0xff] %v731
  %932 = vst [vmem:[#allocation2 + $0x10] sm:$0xff] %v524
  %933 = vst [vmem:[#allocation2 + $0x18] sm:$0xff] %v733
  %934 = vst [vmem:[#allocation2 + $0x20] sm:$0xff] %v527
  %935 = vst [vmem:[#allocation2 + $0x28] sm:$0xff] %v736
  %936 = vst [vmem:[#allocation2 + $0x30] sm:$0xff] %v529
  %937 = vst [vmem:[#allocation2 + $0x38] sm:$0xff] %v738
  %938 = vst [vmem:[#allocation2 + $0x40] sm:$0xff] %v532
  %939 = vst [vmem:[#allocation2 + $0x48] sm:$0xff] %v741
  %940 = vst [vmem:[#allocation2 + $0x50] sm:$0xff] %v534
  %941 = vst [vmem:[#allocation2 + $0x58] sm:$0xff] %v743
  %942 = vst [vmem:[#allocation2 + $0x60] sm:$0xff] %v537
  %943 = vst [vmem:[#allocation2 + $0x68] sm:$0xff] %v746
  %944 = vst [vmem:[#allocation2 + $0x70] sm:$0xff] %v539
  %945 = vst [vmem:[#allocation2 + $0x78] sm:$0xff] %v748
  %946 = vst [vmem:[#allocation2 + $0x80] sm:$0xff] %v542
  %947 = vst [vmem:[#allocation2 + $0x88] sm:$0xff] %v751
  %948 = vst [vmem:[#allocation2 + $0x90] sm:$0xff] %v544
  %949 = vst [vmem:[#allocation2 + $0x98] sm:$0xff] %v753
  %950 = vst [vmem:[#allocation2 + $0xa0] sm:$0xff] %v547
  %951 = vst [vmem:[#allocation2 + $0xa8] sm:$0xff] %v756
  %952 = vst [vmem:[#allocation2 + $0xb0] sm:$0xff] %v549
  %953 = vst [vmem:[#allocation2 + $0xb8] sm:$0xff] %v758
  %954 = vst [vmem:[#allocation2 + $0xc0] sm:$0xff] %v552
  %955 = vst [vmem:[#allocation2 + $0xc8] sm:$0xff] %v761
  %956 = vst [vmem:[#allocation2 + $0xd0] sm:$0xff] %v554
  %957 = vst [vmem:[#allocation2 + $0xd8] sm:$0xff] %v763
  %958 = vst [vmem:[#allocation2 + $0xe0] sm:$0xff] %v557
  %959 = vst [vmem:[#allocation2 + $0xe8] sm:$0xff] %v766
  %960 = vst [vmem:[#allocation2 + $0xf0] sm:$0xff] %v559
  %961 = vst [vmem:[#allocation2 + $0xf8] sm:$0xff] %v768
  %962 = vst [vmem:[#allocation2 + $0x100] sm:$0xff] %v562
  %963 = vst [vmem:[#allocation2 + $0x108] sm:$0xff] %v771
  %964 = vst [vmem:[#allocation2 + $0x110] sm:$0xff] %v564
  %965 = vst [vmem:[#allocation2 + $0x118] sm:$0xff] %v773
  %966 = vst [vmem:[#allocation2 + $0x120] sm:$0xff] %v567
  %967 = vst [vmem:[#allocation2 + $0x128] sm:$0xff] %v776
  %968 = vst [vmem:[#allocation2 + $0x130] sm:$0xff] %v569
  %969 = vst [vmem:[#allocation2 + $0x138] sm:$0xff] %v778
  %970 = vst [vmem:[#allocation2 + $0x140] sm:$0xff] %v572
  %971 = vst [vmem:[#allocation2 + $0x148] sm:$0xff] %v781
  %972 = vst [vmem:[#allocation2 + $0x150] sm:$0xff] %v574
  %973 = vst [vmem:[#allocation2 + $0x158] sm:$0xff] %v783
  %974 = vst [vmem:[#allocation2 + $0x160] sm:$0xff] %v577
  %975 = vst [vmem:[#allocation2 + $0x168] sm:$0xff] %v786
  %976 = vst [vmem:[#allocation2 + $0x170] sm:$0xff] %v579
  %977 = vst [vmem:[#allocation2 + $0x178] sm:$0xff] %v788
  %978 = vst [vmem:[#allocation2 + $0x180] sm:$0xff] %v582
  %979 = vst [vmem:[#allocation2 + $0x188] sm:$0xff] %v791
  %980 = vst [vmem:[#allocation2 + $0x190] sm:$0xff] %v584
  %981 = vst [vmem:[#allocation2 + $0x198] sm:$0xff] %v793
  %982 = vst [vmem:[#allocation2 + $0x1a0] sm:$0xff] %v587
  %983 = vst [vmem:[#allocation2 + $0x1a8] sm:$0xff] %v796
  %984 = vst [vmem:[#allocation2 + $0x1b0] sm:$0xff] %v589
  %985 = vst [vmem:[#allocation2 + $0x1b8] sm:$0xff] %v798
  %986 = vst [vmem:[#allocation2 + $0x1c0] sm:$0xff] %v592
  %987 = vst [vmem:[#allocation2 + $0x1c8] sm:$0xff] %v801
  %988 = vst [vmem:[#allocation2 + $0x1d0] sm:$0xff] %v594
  %989 = vst [vmem:[#allocation2 + $0x1d8] sm:$0xff] %v803
  %990 = vst [vmem:[#allocation2 + $0x1e0] sm:$0xff] %v597
  %991 = vst [vmem:[#allocation2 + $0x1e8] sm:$0xff] %v806
  %992 = vst [vmem:[#allocation2 + $0x1f0] sm:$0xff] %v599
  %993 = vst [vmem:[#allocation2 + $0x1f8] sm:$0xff] %v808
  %994 = vst [vmem:[#allocation2 + $0x200] sm:$0xff] %v602
  %995 = vst [vmem:[#allocation2 + $0x208] sm:$0xff] %v811
  %996 = vst [vmem:[#allocation2 + $0x210] sm:$0xff] %v604
  %997 = vst [vmem:[#allocation2 + $0x218] sm:$0xff] %v813
  %998 = vst [vmem:[#allocation2 + $0x220] sm:$0xff] %v607
  %999 = vst [vmem:[#allocation2 + $0x228] sm:$0xff] %v816
  %1000 = vst [vmem:[#allocation2 + $0x230] sm:$0xff] %v609
  %1001 = vst [vmem:[#allocation2 + $0x238] sm:$0xff] %v818
  %1002 = vst [vmem:[#allocation2 + $0x240] sm:$0xff] %v612
  %1003 = vst [vmem:[#allocation2 + $0x248] sm:$0xff] %v821
  %1004 = vst [vmem:[#allocation2 + $0x250] sm:$0xff] %v614
  %1005 = vst [vmem:[#allocation2 + $0x258] sm:$0xff] %v823
  %1006 = vst [vmem:[#allocation2 + $0x260] sm:$0xff] %v617
  %1007 = vst [vmem:[#allocation2 + $0x268] sm:$0xff] %v826
  %1008 = vst [vmem:[#allocation2 + $0x270] sm:$0xff] %v619
  %1009 = vst [vmem:[#allocation2 + $0x278] sm:$0xff] %v828
  %1010 = vst [vmem:[#allocation2 + $0x280] sm:$0xff] %v622
  %1011 = vst [vmem:[#allocation2 + $0x288] sm:$0xff] %v831
  %1012 = vst [vmem:[#allocation2 + $0x290] sm:$0xff] %v624
  %1013 = vst [vmem:[#allocation2 + $0x298] sm:$0xff] %v833
  %1014 = vst [vmem:[#allocation2 + $0x2a0] sm:$0xff] %v627
  %1015 = vst [vmem:[#allocation2 + $0x2a8] sm:$0xff] %v836
  %1016 = vst [vmem:[#allocation2 + $0x2b0] sm:$0xff] %v629
  %1017 = vst [vmem:[#allocation2 + $0x2b8] sm:$0xff] %v838
  %1018 = vst [vmem:[#allocation2 + $0x2c0] sm:$0xff] %v632
  %1019 = vst [vmem:[#allocation2 + $0x2c8] sm:$0xff] %v841
  %1020 = vst [vmem:[#allocation2 + $0x2d0] sm:$0xff] %v634
  %1021 = vst [vmem:[#allocation2 + $0x2d8] sm:$0xff] %v843
  %1022 = vst [vmem:[#allocation2 + $0x2e0] sm:$0xff] %v637
  %1023 = vst [vmem:[#allocation2 + $0x2e8] sm:$0xff] %v846
  %1024 = vst [vmem:[#allocation2 + $0x2f0] sm:$0xff] %v639
  %1025 = vst [vmem:[#allocation2 + $0x2f8] sm:$0xff] %v848
  %1026 = vst [vmem:[#allocation2 + $0x300] sm:$0xff] %v642
  %1027 = vst [vmem:[#allocation2 + $0x308] sm:$0xff] %v851
  %1028 = vst [vmem:[#allocation2 + $0x310] sm:$0xff] %v644
  %1029 = vst [vmem:[#allocation2 + $0x318] sm:$0xff] %v853
  %1030 = vst [vmem:[#allocation2 + $0x320] sm:$0xff] %v647
  %1031 = vst [vmem:[#allocation2 + $0x328] sm:$0xff] %v856
  %1032 = vst [vmem:[#allocation2 + $0x330] sm:$0xff] %v649
  %1033 = vst [vmem:[#allocation2 + $0x338] sm:$0xff] %v858
  %1034 = vst [vmem:[#allocation2 + $0x340] sm:$0xff] %v652
  %1035 = vst [vmem:[#allocation2 + $0x348] sm:$0xff] %v861
  %1036 = vst [vmem:[#allocation2 + $0x350] sm:$0xff] %v654
  %1037 = vst [vmem:[#allocation2 + $0x358] sm:$0xff] %v863
  %1038 = vst [vmem:[#allocation2 + $0x360] sm:$0xff] %v657
  %1039 = vst [vmem:[#allocation2 + $0x368] sm:$0xff] %v866
  %1040 = vst [vmem:[#allocation2 + $0x370] sm:$0xff] %v659
  %1041 = vst [vmem:[#allocation2 + $0x378] sm:$0xff] %v868
  %1042 = vst [vmem:[#allocation2 + $0x380] sm:$0xff] %v662
  %1043 = vst [vmem:[#allocation2 + $0x388] sm:$0xff] %v871
  %1044 = vst [vmem:[#allocation2 + $0x390] sm:$0xff] %v664
  %1045 = vst [vmem:[#allocation2 + $0x398] sm:$0xff] %v873
  %1046 = vst [vmem:[#allocation2 + $0x3a0] sm:$0xff] %v667
  %1047 = vst [vmem:[#allocation2 + $0x3a8] sm:$0xff] %v876
  %1048 = vst [vmem:[#allocation2 + $0x3b0] sm:$0xff] %v669
  %1049 = vst [vmem:[#allocation2 + $0x3b8] sm:$0xff] %v878
  %1050 = vst [vmem:[#allocation2 + $0x3c0] sm:$0xff] %v672
  %1051 = vst [vmem:[#allocation2 + $0x3c8] sm:$0xff] %v881
  %1052 = vst [vmem:[#allocation2 + $0x3d0] sm:$0xff] %v674
  %1053 = vst [vmem:[#allocation2 + $0x3d8] sm:$0xff] %v883
  %1054 = vst [vmem:[#allocation2 + $0x3e0] sm:$0xff] %v677
  %1055 = vst [vmem:[#allocation2 + $0x3e8] sm:$0xff] %v886
  %1056 = vst [vmem:[#allocation2 + $0x3f0] sm:$0xff] %v679
  %1057 = vst [vmem:[#allocation2 + $0x3f8] sm:$0xff] %v888
  %1058 = vst [vmem:[#allocation2 + $0x400] sm:$0xff] %v682
  %1059 = vst [vmem:[#allocation2 + $0x408] sm:$0xff] %v891
  %1060 = vst [vmem:[#allocation2 + $0x410] sm:$0xff] %v684
  %1061 = vst [vmem:[#allocation2 + $0x418] sm:$0xff] %v893
  %1062 = vst [vmem:[#allocation2 + $0x420] sm:$0xff] %v687
  %1063 = vst [vmem:[#allocation2 + $0x428] sm:$0xff] %v896
  %1064 = vst [vmem:[#allocation2 + $0x430] sm:$0xff] %v689
  %1065 = vst [vmem:[#allocation2 + $0x438] sm:$0xff] %v898
  %1066 = vst [vmem:[#allocation2 + $0x440] sm:$0xff] %v692
  %1067 = vst [vmem:[#allocation2 + $0x448] sm:$0xff] %v901
  %1068 = vst [vmem:[#allocation2 + $0x450] sm:$0xff] %v694
  %1069 = vst [vmem:[#allocation2 + $0x458] sm:$0xff] %v903
  %1070 = vst [vmem:[#allocation2 + $0x460] sm:$0xff] %v697
  %1071 = vst [vmem:[#allocation2 + $0x468] sm:$0xff] %v906
  %1072 = vst [vmem:[#allocation2 + $0x470] sm:$0xff] %v699
  %1073 = vst [vmem:[#allocation2 + $0x478] sm:$0xff] %v908
  %1074 = vst [vmem:[#allocation2 + $0x480] sm:$0xff] %v702
  %1075 = vst [vmem:[#allocation2 + $0x488] sm:$0xff] %v911
  %1076 = vst [vmem:[#allocation2 + $0x490] sm:$0xff] %v704
  %1077 = vst [vmem:[#allocation2 + $0x498] sm:$0xff] %v913
  %1078 = vst [vmem:[#allocation2 + $0x4a0] sm:$0xff] %v707
  %1079 = vst [vmem:[#allocation2 + $0x4a8] sm:$0xff] %v916
  %1080 = vst [vmem:[#allocation2 + $0x4b0] sm:$0xff] %v709
  %1081 = vst [vmem:[#allocation2 + $0x4b8] sm:$0xff] %v918
  %1082 = vst [vmem:[#allocation2 + $0x4c0] sm:$0xff] %v712
  %1083 = vst [vmem:[#allocation2 + $0x4c8] sm:$0xff] %v921
  %1084 = vst [vmem:[#allocation2 + $0x4d0] sm:$0xff] %v714
  %1085 = vst [vmem:[#allocation2 + $0x4d8] sm:$0xff] %v923
  %1086 = vst [vmem:[#allocation2 + $0x4e0] sm:$0xff] %v717
  %1087 = vst [vmem:[#allocation2 + $0x4e8] sm:$0xff] %v926
  %1088 = vst [vmem:[#allocation2 + $0x4f0] sm:$0xff] %v719
  %1089 = vst [vmem:[#allocation2 + $0x4f8] sm:$0xff] %v928
  %s1090 = scalar_lea.vmem %s0, 16
  %v1091 = vld [vmem:[%s1090] sm:$0xf]
  %v1092 = vld [vmem:[%s1090 + $0x4] sm:$0xf]
  %v1093 = vld [vmem:[%s1090 + $0x8] sm:$0xf]
  %v1094 = vld [vmem:[%s1090 + $0xc] sm:$0xf]
  %v1095 = vld [vmem:[%s1090 + $0x10] sm:$0xf]
  %v1096 = vld [vmem:[%s1090 + $0x14] sm:$0xf]
  %v1097 = vld [vmem:[%s1090 + $0x18] sm:$0xf]
  %v1098 = vld [vmem:[%s1090 + $0x1c] sm:$0xf]
  %v1099 = vld [vmem:[%s1090 + $0x20] sm:$0xf]
  %v1100 = vld [vmem:[%s1090 + $0x24] sm:$0xf]
  %v1101 = vld [vmem:[%s1090 + $0x28] sm:$0xf]
  %v1102 = vld [vmem:[%s1090 + $0x2c] sm:$0xf]
  %v1103 = vld [vmem:[%s1090 + $0x30] sm:$0xf]
  %v1104 = vld [vmem:[%s1090 + $0x34] sm:$0xf]
  %v1105 = vld [vmem:[%s1090 + $0x38] sm:$0xf]
  %v1106 = vld [vmem:[%s1090 + $0x3c] sm:$0xf]
  %v1107 = vld [vmem:[%s1090 + $0x40] sm:$0xf]
  %v1108 = vld [vmem:[%s1090 + $0x44] sm:$0xf]
  %v1109 = vld [vmem:[%s1090 + $0x48] sm:$0xf]
  %v1110 = vld [vmem:[%s1090 + $0x4c] sm:$0xf]
  %v1111 = vld [vmem:[%s1090 + $0x50] sm:$0xf]
  %v1112 = vld [vmem:[%s1090 + $0x54] sm:$0xf]
  %v1113 = vld [vmem:[%s1090 + $0x58] sm:$0xf]
  %v1114 = vld [vmem:[%s1090 + $0x5c] sm:$0xf]
  %v1115 = vld [vmem:[%s1090 + $0x60] sm:$0xf]
  %v1116 = vld [vmem:[%s1090 + $0x64] sm:$0xf]
  %v1117 = vld [vmem:[%s1090 + $0x68] sm:$0xf]
  %v1118 = vld [vmem:[%s1090 + $0x6c] sm:$0xf]
  %v1119 = vld [vmem:[%s1090 + $0x70] sm:$0xf]
  %v1120 = vld [vmem:[%s1090 + $0x74] sm:$0xf]
  %v1121 = vld [vmem:[%s1090 + $0x78] sm:$0xf]
  %v1122 = vld [vmem:[%s1090 + $0x7c] sm:$0xf]
  %v1123 = vld [vmem:[%s1090 + $0x80] sm:$0xf]
  %v1124 = vld [vmem:[%s1090 + $0x84] sm:$0xf]
  %v1125 = vld [vmem:[%s1090 + $0x88] sm:$0xf]
  %v1126 = vld [vmem:[%s1090 + $0x8c] sm:$0xf]
  %v1127 = vld [vmem:[%s1090 + $0x90] sm:$0xf]
  %v1128 = vld [vmem:[%s1090 + $0x94] sm:$0xf]
  %v1129 = vld [vmem:[%s1090 + $0x98] sm:$0xf]
  %v1130 = vld [vmem:[%s1090 + $0x9c] sm:$0xf]
  %v1131 = vld [vmem:[%s1090 + $0xd0] sm:$0xf]
  %v1132 = vld [vmem:[%s1090 + $0xd4] sm:$0xf]
  %v1133 = vld [vmem:[%s1090 + $0xd8] sm:$0xf]
  %v1134 = vld [vmem:[%s1090 + $0xdc] sm:$0xf]
  %v1135 = vld [vmem:[%s1090 + $0xe0] sm:$0xf]
  %v1136 = vld [vmem:[%s1090 + $0xe4] sm:$0xf]
  %v1137 = vld [vmem:[%s1090 + $0xe8] sm:$0xf]
  %v1138 = vld [vmem:[%s1090 + $0xec] sm:$0xf]
  %v1139 = vld [vmem:[%s1090 + $0xf0] sm:$0xf]
  %v1140 = vld [vmem:[%s1090 + $0xf4] sm:$0xf]
  %v1141 = vld [vmem:[%s1090 + $0xf8] sm:$0xf]
  %v1142 = vld [vmem:[%s1090 + $0xfc] sm:$0xf]
  %v1143 = vld [vmem:[%s1090 + $0x100] sm:$0xf]
  %v1144 = vld [vmem:[%s1090 + $0x104] sm:$0xf]
  %v1145 = vld [vmem:[%s1090 + $0x108] sm:$0xf]
  %v1146 = vld [vmem:[%s1090 + $0x10c] sm:$0xf]
  %v1147 = vld [vmem:[%s1090 + $0x110] sm:$0xf]
  %v1148 = vld [vmem:[%s1090 + $0x114] sm:$0xf]
  %v1149 = vld [vmem:[%s1090 + $0x118] sm:$0xf]
  %v1150 = vld [vmem:[%s1090 + $0x11c] sm:$0xf]
  %v1151 = vld [vmem:[%s1090 + $0x120] sm:$0xf]
  %v1152 = vld [vmem:[%s1090 + $0x124] sm:$0xf]
  %v1153 = vld [vmem:[%s1090 + $0x128] sm:$0xf]
  %v1154 = vld [vmem:[%s1090 + $0x12c] sm:$0xf]
  %v1155 = vld [vmem:[%s1090 + $0x130] sm:$0xf]
  %v1156 = vld [vmem:[%s1090 + $0x134] sm:$0xf]
  %v1157 = vld [vmem:[%s1090 + $0x138] sm:$0xf]
  %v1158 = vld [vmem:[%s1090 + $0x13c] sm:$0xf]
  %v1159 = vld [vmem:[%s1090 + $0x140] sm:$0xf]
  %v1160 = vld [vmem:[%s1090 + $0x144] sm:$0xf]
  %v1161 = vld [vmem:[%s1090 + $0x148] sm:$0xf]
  %v1162 = vld [vmem:[%s1090 + $0x14c] sm:$0xf]
  %v1163 = vld [vmem:[%s1090 + $0x150] sm:$0xf]
  %v1164 = vld [vmem:[%s1090 + $0x154] sm:$0xf]
  %v1165 = vld [vmem:[%s1090 + $0x158] sm:$0xf]
  %v1166 = vld [vmem:[%s1090 + $0x15c] sm:$0xf]
  %v1167 = vld [vmem:[%s1090 + $0x160] sm:$0xf]
  %v1168 = vld [vmem:[%s1090 + $0x164] sm:$0xf]
  %v1169 = vld [vmem:[%s1090 + $0x168] sm:$0xf]
  %v1170 = vld [vmem:[%s1090 + $0x16c] sm:$0xf]
  %s1171 = scalar_lea.vmem %s1, 120
  %v1172 = vld [vmem:[%s1171] sm:$0xff]
  %v1173 = vld [vmem:[%s1171 + $0x8] sm:$0xff]
  %v1174 = vld [vmem:[%s1171 + $0x10] sm:$0xff]
  %v1175 = vld [vmem:[%s1171 + $0x18] sm:$0xff]
  %v1176 = vld [vmem:[%s1171 + $0x20] sm:$0xff]
  %v1177 = vld [vmem:[%s1171 + $0x28] sm:$0xff]
  %v1178 = vld [vmem:[%s1171 + $0x30] sm:$0xff]
  %v1179 = vld [vmem:[%s1171 + $0x38] sm:$0xff]
  %v1180 = vld [vmem:[%s1171 + $0x40] sm:$0xff]
  %v1181 = vld [vmem:[%s1171 + $0x48] sm:$0xff]
  %v1182 = vld [vmem:[%s1171 + $0x50] sm:$0xff]
  %v1183 = vld [vmem:[%s1171 + $0x58] sm:$0xff]
  %v1184 = vld [vmem:[%s1171 + $0x60] sm:$0xff]
  %v1185 = vld [vmem:[%s1171 + $0x68] sm:$0xff]
  %v1186 = vld [vmem:[%s1171 + $0x70] sm:$0x11]
  %v1267 = vunpack.c.l.b16 %v1091
  %v1268 = vunpack.c.l.b16 %v1092
  %v1269 = vunpack.c.l.b16 %v1093
  %v1270 = vunpack.c.l.b16 %v1094
  %v1271 = vunpack.c.l.b16 %v1095
  %v1272 = vunpack.c.l.b16 %v1096
  %v1273 = vunpack.c.l.b16 %v1097
  %v1274 = vunpack.c.l.b16 %v1098
  %v1275 = vunpack.c.l.b16 %v1099
  %v1276 = vunpack.c.l.b16 %v1100
  %v1277 = vunpack.c.l.b16 %v1101
  %v1278 = vunpack.c.l.b16 %v1102
  %v1279 = vunpack.c.l.b16 %v1103
  %v1280 = vunpack.c.l.b16 %v1104
  %v1281 = vunpack.c.l.b16 %v1105
  %v1282 = vunpack.c.l.b16 %v1106
  %v1283 = vunpack.c.l.b16 %v1107
  %v1284 = vunpack.c.l.b16 %v1108
  %v1285 = vunpack.c.l.b16 %v1109
  %v1286 = vunpack.c.l.b16 %v1110
  %v1287 = vunpack.c.l.b16 %v1111
  %v1288 = vunpack.c.l.b16 %v1112
  %v1289 = vunpack.c.l.b16 %v1113
  %v1290 = vunpack.c.l.b16 %v1114
  %v1291 = vunpack.c.l.b16 %v1115
  %v1292 = vunpack.c.l.b16 %v1116
  %v1293 = vunpack.c.l.b16 %v1117
  %v1294 = vunpack.c.l.b16 %v1118
  %v1295 = vunpack.c.l.b16 %v1119
  %v1296 = vunpack.c.l.b16 %v1120
  %v1297 = vunpack.c.l.b16 %v1121
  %v1298 = vunpack.c.l.b16 %v1122
  %v1299 = vunpack.c.l.b16 %v1123
  %v1300 = vunpack.c.l.b16 %v1124
  %v1301 = vunpack.c.l.b16 %v1125
  %v1302 = vunpack.c.l.b16 %v1126
  %v1303 = vunpack.c.l.b16 %v1127
  %v1304 = vunpack.c.l.b16 %v1128
  %v1305 = vunpack.c.l.b16 %v1129
  %v1306 = vunpack.c.l.b16 %v1130
  %v1307 = vunpack.c.l.b16 %v1131
  %v1308 = vunpack.c.l.b16 %v1132
  %v1309 = vunpack.c.l.b16 %v1133
  %v1310 = vunpack.c.l.b16 %v1134
  %v1311 = vunpack.c.l.b16 %v1135
  %v1312 = vunpack.c.l.b16 %v1136
  %v1313 = vunpack.c.l.b16 %v1137
  %v1314 = vunpack.c.l.b16 %v1138
  %v1315 = vunpack.c.l.b16 %v1139
  %v1316 = vunpack.c.l.b16 %v1140
  %v1317 = vunpack.c.l.b16 %v1141
  %v1318 = vunpack.c.l.b16 %v1142
  %v1319 = vunpack.c.l.b16 %v1143
  %v1320 = vunpack.c.l.b16 %v1144
  %v1321 = vunpack.c.l.b16 %v1145
  %v1322 = vunpack.c.l.b16 %v1146
  %v1323 = vunpack.c.l.b16 %v1147
  %v1324 = vunpack.c.l.b16 %v1148
  %v1325 = vunpack.c.l.b16 %v1149
  %v1326 = vunpack.c.l.b16 %v1150
  %v1327 = vunpack.c.l.b16 %v1151
  %v1328 = vunpack.c.l.b16 %v1152
  %v1329 = vunpack.c.l.b16 %v1153
  %v1330 = vunpack.c.l.b16 %v1154
  %v1331 = vunpack.c.l.b16 %v1155
  %v1332 = vunpack.c.l.b16 %v1156
  %v1333 = vunpack.c.l.b16 %v1157
  %v1334 = vunpack.c.l.b16 %v1158
  %v1335 = vunpack.c.l.b16 %v1159
  %v1336 = vunpack.c.l.b16 %v1160
  %v1337 = vunpack.c.l.b16 %v1161
  %v1338 = vunpack.c.l.b16 %v1162
  %v1339 = vunpack.c.l.b16 %v1163
  %v1340 = vunpack.c.l.b16 %v1164
  %v1341 = vunpack.c.l.b16 %v1165
  %v1342 = vunpack.c.l.b16 %v1166
  %v1343 = vunpack.c.l.b16 %v1167
  %v1344 = vunpack.c.l.b16 %v1168
  %v1345 = vunpack.c.l.b16 %v1169
  %v1346 = vunpack.c.l.b16 %v1170
  %v1347 = vpack.c.b16 %v1268, %v1267
  %v1348 = vpack.c.b16 %v1270, %v1269
  %v1349 = vpack.c.b16 %v1272, %v1271
  %v1350 = vpack.c.b16 %v1274, %v1273
  %v1351 = vpack.c.b16 %v1276, %v1275
  %v1352 = vpack.c.b16 %v1278, %v1277
  %v1353 = vpack.c.b16 %v1280, %v1279
  %v1354 = vpack.c.b16 %v1282, %v1281
  %v1355 = vpack.c.b16 %v1284, %v1283
  %v1356 = vpack.c.b16 %v1286, %v1285
  %v1357 = vpack.c.b16 %v1288, %v1287
  %v1358 = vpack.c.b16 %v1290, %v1289
  %v1359 = vpack.c.b16 %v1292, %v1291
  %v1360 = vpack.c.b16 %v1294, %v1293
  %v1361 = vpack.c.b16 %v1296, %v1295
  %v1362 = vpack.c.b16 %v1298, %v1297
  %v1363 = vpack.c.b16 %v1300, %v1299
  %v1364 = vpack.c.b16 %v1302, %v1301
  %v1365 = vpack.c.b16 %v1304, %v1303
  %v1366 = vpack.c.b16 %v1306, %v1305
  %v1367 = vpack.c.b16 %v1308, %v1307
  %v1368 = vpack.c.b16 %v1310, %v1309
  %v1369 = vpack.c.b16 %v1312, %v1311
  %v1370 = vpack.c.b16 %v1314, %v1313
  %v1371 = vpack.c.b16 %v1316, %v1315
  %v1372 = vpack.c.b16 %v1318, %v1317
  %v1373 = vpack.c.b16 %v1320, %v1319
  %v1374 = vpack.c.b16 %v1322, %v1321
  %v1375 = vpack.c.b16 %v1324, %v1323
  %v1376 = vpack.c.b16 %v1326, %v1325
  %v1377 = vpack.c.b16 %v1328, %v1327
  %v1378 = vpack.c.b16 %v1330, %v1329
  %v1379 = vpack.c.b16 %v1332, %v1331
  %v1380 = vpack.c.b16 %v1334, %v1333
  %v1381 = vpack.c.b16 %v1336, %v1335
  %v1382 = vpack.c.b16 %v1338, %v1337
  %v1383 = vpack.c.b16 %v1340, %v1339
  %v1384 = vpack.c.b16 %v1342, %v1341
  %v1385 = vpack.c.b16 %v1344, %v1343
  %v1386 = vpack.c.b16 %v1346, %v1345
  %v1402 = vunpack.c.l.b16 %v1172
  %v1403 = vunpack.c.h.b16 %v1172
  %v1404 = vunpack.c.l.b16 %v1173
  %v1405 = vunpack.c.h.b16 %v1173
  %v1406 = vunpack.c.l.b16 %v1174
  %v1407 = vunpack.c.h.b16 %v1174
  %v1408 = vunpack.c.l.b16 %v1175
  %v1409 = vunpack.c.h.b16 %v1175
  %v1410 = vunpack.c.l.b16 %v1176
  %v1411 = vunpack.c.h.b16 %v1176
  %v1412 = vunpack.c.l.b16 %v1177
  %v1413 = vunpack.c.h.b16 %v1177
  %v1414 = vunpack.c.l.b16 %v1178
  %v1415 = vunpack.c.h.b16 %v1178
  %v1416 = vunpack.c.l.b16 %v1179
  %v1417 = vunpack.c.h.b16 %v1179
  %v1418 = vunpack.c.l.b16 %v1180
  %v1419 = vunpack.c.h.b16 %v1180
  %v1420 = vunpack.c.l.b16 %v1181
  %v1421 = vunpack.c.h.b16 %v1181
  %v1422 = vunpack.c.l.b16 %v1182
  %v1423 = vunpack.c.h.b16 %v1182
  %v1424 = vunpack.c.l.b16 %v1183
  %v1425 = vunpack.c.h.b16 %v1183
  %v1426 = vunpack.c.l.b16 %v1184
  %v1427 = vunpack.c.h.b16 %v1184
  %v1428 = vunpack.c.l.b16 %v1185
  %v1429 = vunpack.c.h.b16 %v1185
  %v1430 = vunpack.c.l.b16 %v1186
  %v1431 = vunpack.c.h.b16 %v1186
  %v1432 = vpack.c.b16 %v1404, %v1402
  %v1433 = vpack.c.b16 %v1405, %v1403
  %v1434 = vpack.c.b16 %v1408, %v1406
  %v1435 = vpack.c.b16 %v1409, %v1407
  %v1436 = vpack.c.b16 %v1412, %v1410
  %v1437 = vpack.c.b16 %v1413, %v1411
  %v1438 = vpack.c.b16 %v1416, %v1414
  %v1439 = vpack.c.b16 %v1417, %v1415
  %v1440 = vpack.c.b16 %v1420, %v1418
  %v1441 = vpack.c.b16 %v1421, %v1419
  %v1442 = vpack.c.b16 %v1424, %v1422
  %v1443 = vpack.c.b16 %v1425, %v1423
  %v1444 = vpack.c.b16 %v1428, %v1426
  %v1445 = vpack.c.b16 %v1429, %v1427
  %v1446 = vpack.c.b16 %v1430, %v1430
  %v1447 = vpack.c.b16 %v1431, %v1431
  %v1463 = vsel %vm384, %v1347, 0
  %v1466 = vsel %vm384, %v1348, 0
  %v1469 = vsel %vm384, %v1349, 0
  %v1472 = vsel %vm384, %v1350, 0
  %v1475 = vsel %vm384, %v1351, 0
  %v1478 = vsel %vm384, %v1352, 0
  %v1481 = vsel %vm384, %v1353, 0
  %v1484 = vsel %vm384, %v1354, 0
  %v1487 = vsel %vm384, %v1355, 0
  %v1490 = vsel %vm384, %v1356, 0
  %v1493 = vsel %vm384, %v1357, 0
  %v1496 = vsel %vm384, %v1358, 0
  %v1499 = vsel %vm384, %v1359, 0
  %v1502 = vsel %vm384, %v1360, 0
  %v1505 = vsel %vm384, %v1361, 0
  %v1508 = vsel %vm384, %v1362, 0
  %v1511 = vsel %vm384, %v1363, 0
  %v1514 = vsel %vm384, %v1364, 0
  %v1517 = vsel %vm384, %v1365, 0
  %v1520 = vsel %vm384, %v1366, 0
  %v1523 = vsel %vm384, %v1367, 0
  %v1526 = vsel %vm384, %v1368, 0
  %v1529 = vsel %vm384, %v1369, 0
  %v1532 = vsel %vm384, %v1370, 0
  %v1535 = vsel %vm384, %v1371, 0
  %v1538 = vsel %vm384, %v1372, 0
  %v1541 = vsel %vm384, %v1373, 0
  %v1544 = vsel %vm384, %v1374, 0
  %v1547 = vsel %vm384, %v1375, 0
  %v1550 = vsel %vm384, %v1376, 0
  %v1553 = vsel %vm384, %v1377, 0
  %v1556 = vsel %vm384, %v1378, 0
  %v1559 = vsel %vm384, %v1379, 0
  %v1562 = vsel %vm384, %v1380, 0
  %v1565 = vsel %vm384, %v1381, 0
  %v1568 = vsel %vm384, %v1382, 0
  %v1571 = vsel %vm384, %v1383, 0
  %v1574 = vsel %vm384, %v1384, 0
  %v1577 = vsel %vm384, %v1385, 0
  %v1580 = vsel %vm384, %v1386, 0
  %v1583 = vsel %vm505, %v1446, 0
  %v1586 = vsel %vm505, %v1447, 0
  %1588 = vmatpush.bf16.msra.mxu0 %v1583
  %1589 = vmatpush.bf16.msra.mxu0 %v1444
  %1590 = vmatpush.bf16.msra.mxu0 %v1442
  %1591 = vmatpush.bf16.msra.mxu0 %v1440
  %1592 = vmatpush.bf16.msra.mxu0 %v1438
  %1593 = vmatpush.bf16.msra.mxu0 %v1436
  %1594 = vmatpush.bf16.msra.mxu0 %v1434
  %1595 = vmatpush.bf16.msra.mxu0 %v1432
  %1596 = vmatmul.bf16.gmra.mxu0 %v1463
  %v1597 = vpop.f32.mrf.mxu0
  %v1598 = vadd.f32 0.0, %v1597
  %v1599 = vpop.f32.mrf.mxu0
  %v1600 = vadd.f32 0.0, %v1599
  %1601 = vmatmul.bf16.gmra.mxu0 %v1466
  %v1602 = vpop.f32.mrf.mxu0
  %v1603 = vadd.f32 0.0, %v1602
  %v1604 = vpop.f32.mrf.mxu0
  %v1605 = vadd.f32 0.0, %v1604
  %1606 = vmatmul.bf16.gmra.mxu0 %v1469
  %v1607 = vpop.f32.mrf.mxu0
  %v1608 = vadd.f32 0.0, %v1607
  %v1609 = vpop.f32.mrf.mxu0
  %v1610 = vadd.f32 0.0, %v1609
  %1611 = vmatmul.bf16.gmra.mxu0 %v1472
  %v1612 = vpop.f32.mrf.mxu0
  %v1613 = vadd.f32 0.0, %v1612
  %v1614 = vpop.f32.mrf.mxu0
  %v1615 = vadd.f32 0.0, %v1614
  %1616 = vmatmul.bf16.gmra.mxu0 %v1475
  %v1617 = vpop.f32.mrf.mxu0
  %v1618 = vadd.f32 0.0, %v1617
  %v1619 = vpop.f32.mrf.mxu0
  %v1620 = vadd.f32 0.0, %v1619
  %1621 = vmatmul.bf16.gmra.mxu0 %v1478
  %v1622 = vpop.f32.mrf.mxu0
  %v1623 = vadd.f32 0.0, %v1622
  %v1624 = vpop.f32.mrf.mxu0
  %v1625 = vadd.f32 0.0, %v1624
  %1626 = vmatmul.bf16.gmra.mxu0 %v1481
  %v1627 = vpop.f32.mrf.mxu0
  %v1628 = vadd.f32 0.0, %v1627
  %v1629 = vpop.f32.mrf.mxu0
  %v1630 = vadd.f32 0.0, %v1629
  %1631 = vmatmul.bf16.gmra.mxu0 %v1484
  %v1632 = vpop.f32.mrf.mxu0
  %v1633 = vadd.f32 0.0, %v1632
  %v1634 = vpop.f32.mrf.mxu0
  %v1635 = vadd.f32 0.0, %v1634
  %1636 = vmatmul.bf16.gmra.mxu0 %v1487
  %v1637 = vpop.f32.mrf.mxu0
  %v1638 = vadd.f32 0.0, %v1637
  %v1639 = vpop.f32.mrf.mxu0
  %v1640 = vadd.f32 0.0, %v1639
  %1641 = vmatmul.bf16.gmra.mxu0 %v1490
  %v1642 = vpop.f32.mrf.mxu0
  %v1643 = vadd.f32 0.0, %v1642
  %v1644 = vpop.f32.mrf.mxu0
  %v1645 = vadd.f32 0.0, %v1644
  %1646 = vmatmul.bf16.gmra.mxu0 %v1493
  %v1647 = vpop.f32.mrf.mxu0
  %v1648 = vadd.f32 0.0, %v1647
  %v1649 = vpop.f32.mrf.mxu0
  %v1650 = vadd.f32 0.0, %v1649
  %1651 = vmatmul.bf16.gmra.mxu0 %v1496
  %v1652 = vpop.f32.mrf.mxu0
  %v1653 = vadd.f32 0.0, %v1652
  %v1654 = vpop.f32.mrf.mxu0
  %v1655 = vadd.f32 0.0, %v1654
  %1656 = vmatmul.bf16.gmra.mxu0 %v1499
  %v1657 = vpop.f32.mrf.mxu0
  %v1658 = vadd.f32 0.0, %v1657
  %v1659 = vpop.f32.mrf.mxu0
  %v1660 = vadd.f32 0.0, %v1659
  %1661 = vmatmul.bf16.gmra.mxu0 %v1502
  %v1662 = vpop.f32.mrf.mxu0
  %v1663 = vadd.f32 0.0, %v1662
  %v1664 = vpop.f32.mrf.mxu0
  %v1665 = vadd.f32 0.0, %v1664
  %1666 = vmatmul.bf16.gmra.mxu0 %v1505
  %v1667 = vpop.f32.mrf.mxu0
  %v1668 = vadd.f32 0.0, %v1667
  %v1669 = vpop.f32.mrf.mxu0
  %v1670 = vadd.f32 0.0, %v1669
  %1671 = vmatmul.bf16.gmra.mxu0 %v1508
  %v1672 = vpop.f32.mrf.mxu0
  %v1673 = vadd.f32 0.0, %v1672
  %v1674 = vpop.f32.mrf.mxu0
  %v1675 = vadd.f32 0.0, %v1674
  %1676 = vmatmul.bf16.gmra.mxu0 %v1511
  %v1677 = vpop.f32.mrf.mxu0
  %v1678 = vadd.f32 0.0, %v1677
  %v1679 = vpop.f32.mrf.mxu0
  %v1680 = vadd.f32 0.0, %v1679
  %1681 = vmatmul.bf16.gmra.mxu0 %v1514
  %v1682 = vpop.f32.mrf.mxu0
  %v1683 = vadd.f32 0.0, %v1682
  %v1684 = vpop.f32.mrf.mxu0
  %v1685 = vadd.f32 0.0, %v1684
  %1686 = vmatmul.bf16.gmra.mxu0 %v1517
  %v1687 = vpop.f32.mrf.mxu0
  %v1688 = vadd.f32 0.0, %v1687
  %v1689 = vpop.f32.mrf.mxu0
  %v1690 = vadd.f32 0.0, %v1689
  %1691 = vmatmul.bf16.gmra.mxu0 %v1520
  %v1692 = vpop.f32.mrf.mxu0
  %v1693 = vadd.f32 0.0, %v1692
  %v1694 = vpop.f32.mrf.mxu0
  %v1695 = vadd.f32 0.0, %v1694
  %1696 = vmatmul.bf16.gmra.mxu0 %v1523
  %v1697 = vpop.f32.mrf.mxu0
  %v1698 = vadd.f32 0.0, %v1697
  %v1699 = vpop.f32.mrf.mxu0
  %v1700 = vadd.f32 0.0, %v1699
  %1701 = vmatmul.bf16.gmra.mxu0 %v1526
  %v1702 = vpop.f32.mrf.mxu0
  %v1703 = vadd.f32 0.0, %v1702
  %v1704 = vpop.f32.mrf.mxu0
  %v1705 = vadd.f32 0.0, %v1704
  %1706 = vmatmul.bf16.gmra.mxu0 %v1529
  %v1707 = vpop.f32.mrf.mxu0
  %v1708 = vadd.f32 0.0, %v1707
  %v1709 = vpop.f32.mrf.mxu0
  %v1710 = vadd.f32 0.0, %v1709
  %1711 = vmatmul.bf16.gmra.mxu0 %v1532
  %v1712 = vpop.f32.mrf.mxu0
  %v1713 = vadd.f32 0.0, %v1712
  %v1714 = vpop.f32.mrf.mxu0
  %v1715 = vadd.f32 0.0, %v1714
  %1716 = vmatmul.bf16.gmra.mxu0 %v1535
  %v1717 = vpop.f32.mrf.mxu0
  %v1718 = vadd.f32 0.0, %v1717
  %v1719 = vpop.f32.mrf.mxu0
  %v1720 = vadd.f32 0.0, %v1719
  %1721 = vmatmul.bf16.gmra.mxu0 %v1538
  %v1722 = vpop.f32.mrf.mxu0
  %v1723 = vadd.f32 0.0, %v1722
  %v1724 = vpop.f32.mrf.mxu0
  %v1725 = vadd.f32 0.0, %v1724
  %1726 = vmatmul.bf16.gmra.mxu0 %v1541
  %v1727 = vpop.f32.mrf.mxu0
  %v1728 = vadd.f32 0.0, %v1727
  %v1729 = vpop.f32.mrf.mxu0
  %v1730 = vadd.f32 0.0, %v1729
  %1731 = vmatmul.bf16.gmra.mxu0 %v1544
  %v1732 = vpop.f32.mrf.mxu0
  %v1733 = vadd.f32 0.0, %v1732
  %v1734 = vpop.f32.mrf.mxu0
  %v1735 = vadd.f32 0.0, %v1734
  %1736 = vmatmul.bf16.gmra.mxu0 %v1547
  %v1737 = vpop.f32.mrf.mxu0
  %v1738 = vadd.f32 0.0, %v1737
  %v1739 = vpop.f32.mrf.mxu0
  %v1740 = vadd.f32 0.0, %v1739
  %1741 = vmatmul.bf16.gmra.mxu0 %v1550
  %v1742 = vpop.f32.mrf.mxu0
  %v1743 = vadd.f32 0.0, %v1742
  %v1744 = vpop.f32.mrf.mxu0
  %v1745 = vadd.f32 0.0, %v1744
  %1746 = vmatmul.bf16.gmra.mxu0 %v1553
  %v1747 = vpop.f32.mrf.mxu0
  %v1748 = vadd.f32 0.0, %v1747
  %v1749 = vpop.f32.mrf.mxu0
  %v1750 = vadd.f32 0.0, %v1749
  %1751 = vmatmul.bf16.gmra.mxu0 %v1556
  %v1752 = vpop.f32.mrf.mxu0
  %v1753 = vadd.f32 0.0, %v1752
  %v1754 = vpop.f32.mrf.mxu0
  %v1755 = vadd.f32 0.0, %v1754
  %1756 = vmatmul.bf16.gmra.mxu0 %v1559
  %v1757 = vpop.f32.mrf.mxu0
  %v1758 = vadd.f32 0.0, %v1757
  %v1759 = vpop.f32.mrf.mxu0
  %v1760 = vadd.f32 0.0, %v1759
  %1761 = vmatmul.bf16.gmra.mxu0 %v1562
  %v1762 = vpop.f32.mrf.mxu0
  %v1763 = vadd.f32 0.0, %v1762
  %v1764 = vpop.f32.mrf.mxu0
  %v1765 = vadd.f32 0.0, %v1764
  %1766 = vmatmul.bf16.gmra.mxu0 %v1565
  %v1767 = vpop.f32.mrf.mxu0
  %v1768 = vadd.f32 0.0, %v1767
  %v1769 = vpop.f32.mrf.mxu0
  %v1770 = vadd.f32 0.0, %v1769
  %1771 = vmatmul.bf16.gmra.mxu0 %v1568
  %v1772 = vpop.f32.mrf.mxu0
  %v1773 = vadd.f32 0.0, %v1772
  %v1774 = vpop.f32.mrf.mxu0
  %v1775 = vadd.f32 0.0, %v1774
  %1776 = vmatmul.bf16.gmra.mxu0 %v1571
  %v1777 = vpop.f32.mrf.mxu0
  %v1778 = vadd.f32 0.0, %v1777
  %v1779 = vpop.f32.mrf.mxu0
  %v1780 = vadd.f32 0.0, %v1779
  %1781 = vmatmul.bf16.gmra.mxu0 %v1574
  %v1782 = vpop.f32.mrf.mxu0
  %v1783 = vadd.f32 0.0, %v1782
  %v1784 = vpop.f32.mrf.mxu0
  %v1785 = vadd.f32 0.0, %v1784
  %1786 = vmatmul.bf16.gmra.mxu0 %v1577
  %v1787 = vpop.f32.mrf.mxu0
  %v1788 = vadd.f32 0.0, %v1787
  %v1789 = vpop.f32.mrf.mxu0
  %v1790 = vadd.f32 0.0, %v1789
  %1791 = vmatmul.bf16.gmra.mxu0 %v1580
  %v1792 = vpop.f32.mrf.mxu0
  %v1793 = vadd.f32 0.0, %v1792
  %v1794 = vpop.f32.mrf.mxu0
  %v1795 = vadd.f32 0.0, %v1794
  %1796 = vdwg.mxu0
  %1797 = vmatpush.bf16.msra.mxu0 %v1586
  %1798 = vmatpush.bf16.msra.mxu0 %v1445
  %1799 = vmatpush.bf16.msra.mxu0 %v1443
  %1800 = vmatpush.bf16.msra.mxu0 %v1441
  %1801 = vmatpush.bf16.msra.mxu0 %v1439
  %1802 = vmatpush.bf16.msra.mxu0 %v1437
  %1803 = vmatpush.bf16.msra.mxu0 %v1435
  %1804 = vmatpush.bf16.msra.mxu0 %v1433
  %1805 = vmatmul.bf16.gmra.mxu0 %v1463
  %v1806 = vpop.f32.mrf.mxu0
  %v1807 = vadd.f32 0.0, %v1806
  %v1808 = vpop.f32.mrf.mxu0
  %v1809 = vadd.f32 0.0, %v1808
  %1810 = vmatmul.bf16.gmra.mxu0 %v1466
  %v1811 = vpop.f32.mrf.mxu0
  %v1812 = vadd.f32 0.0, %v1811
  %v1813 = vpop.f32.mrf.mxu0
  %v1814 = vadd.f32 0.0, %v1813
  %1815 = vmatmul.bf16.gmra.mxu0 %v1469
  %v1816 = vpop.f32.mrf.mxu0
  %v1817 = vadd.f32 0.0, %v1816
  %v1818 = vpop.f32.mrf.mxu0
  %v1819 = vadd.f32 0.0, %v1818
  %1820 = vmatmul.bf16.gmra.mxu0 %v1472
  %v1821 = vpop.f32.mrf.mxu0
  %v1822 = vadd.f32 0.0, %v1821
  %v1823 = vpop.f32.mrf.mxu0
  %v1824 = vadd.f32 0.0, %v1823
  %1825 = vmatmul.bf16.gmra.mxu0 %v1475
  %v1826 = vpop.f32.mrf.mxu0
  %v1827 = vadd.f32 0.0, %v1826
  %v1828 = vpop.f32.mrf.mxu0
  %v1829 = vadd.f32 0.0, %v1828
  %1830 = vmatmul.bf16.gmra.mxu0 %v1478
  %v1831 = vpop.f32.mrf.mxu0
  %v1832 = vadd.f32 0.0, %v1831
  %v1833 = vpop.f32.mrf.mxu0
  %v1834 = vadd.f32 0.0, %v1833
  %1835 = vmatmul.bf16.gmra.mxu0 %v1481
  %v1836 = vpop.f32.mrf.mxu0
  %v1837 = vadd.f32 0.0, %v1836
  %v1838 = vpop.f32.mrf.mxu0
  %v1839 = vadd.f32 0.0, %v1838
  %1840 = vmatmul.bf16.gmra.mxu0 %v1484
  %v1841 = vpop.f32.mrf.mxu0
  %v1842 = vadd.f32 0.0, %v1841
  %v1843 = vpop.f32.mrf.mxu0
  %v1844 = vadd.f32 0.0, %v1843
  %1845 = vmatmul.bf16.gmra.mxu0 %v1487
  %v1846 = vpop.f32.mrf.mxu0
  %v1847 = vadd.f32 0.0, %v1846
  %v1848 = vpop.f32.mrf.mxu0
  %v1849 = vadd.f32 0.0, %v1848
  %1850 = vmatmul.bf16.gmra.mxu0 %v1490
  %v1851 = vpop.f32.mrf.mxu0
  %v1852 = vadd.f32 0.0, %v1851
  %v1853 = vpop.f32.mrf.mxu0
  %v1854 = vadd.f32 0.0, %v1853
  %1855 = vmatmul.bf16.gmra.mxu0 %v1493
  %v1856 = vpop.f32.mrf.mxu0
  %v1857 = vadd.f32 0.0, %v1856
  %v1858 = vpop.f32.mrf.mxu0
  %v1859 = vadd.f32 0.0, %v1858
  %1860 = vmatmul.bf16.gmra.mxu0 %v1496
  %v1861 = vpop.f32.mrf.mxu0
  %v1862 = vadd.f32 0.0, %v1861
  %v1863 = vpop.f32.mrf.mxu0
  %v1864 = vadd.f32 0.0, %v1863
  %1865 = vmatmul.bf16.gmra.mxu0 %v1499
  %v1866 = vpop.f32.mrf.mxu0
  %v1867 = vadd.f32 0.0, %v1866
  %v1868 = vpop.f32.mrf.mxu0
  %v1869 = vadd.f32 0.0, %v1868
  %1870 = vmatmul.bf16.gmra.mxu0 %v1502
  %v1871 = vpop.f32.mrf.mxu0
  %v1872 = vadd.f32 0.0, %v1871
  %v1873 = vpop.f32.mrf.mxu0
  %v1874 = vadd.f32 0.0, %v1873
  %1875 = vmatmul.bf16.gmra.mxu0 %v1505
  %v1876 = vpop.f32.mrf.mxu0
  %v1877 = vadd.f32 0.0, %v1876
  %v1878 = vpop.f32.mrf.mxu0
  %v1879 = vadd.f32 0.0, %v1878
  %1880 = vmatmul.bf16.gmra.mxu0 %v1508
  %v1881 = vpop.f32.mrf.mxu0
  %v1882 = vadd.f32 0.0, %v1881
  %v1883 = vpop.f32.mrf.mxu0
  %v1884 = vadd.f32 0.0, %v1883
  %1885 = vmatmul.bf16.gmra.mxu0 %v1511
  %v1886 = vpop.f32.mrf.mxu0
  %v1887 = vadd.f32 0.0, %v1886
  %v1888 = vpop.f32.mrf.mxu0
  %v1889 = vadd.f32 0.0, %v1888
  %1890 = vmatmul.bf16.gmra.mxu0 %v1514
  %v1891 = vpop.f32.mrf.mxu0
  %v1892 = vadd.f32 0.0, %v1891
  %v1893 = vpop.f32.mrf.mxu0
  %v1894 = vadd.f32 0.0, %v1893
  %1895 = vmatmul.bf16.gmra.mxu0 %v1517
  %v1896 = vpop.f32.mrf.mxu0
  %v1897 = vadd.f32 0.0, %v1896
  %v1898 = vpop.f32.mrf.mxu0
  %v1899 = vadd.f32 0.0, %v1898
  %1900 = vmatmul.bf16.gmra.mxu0 %v1520
  %v1901 = vpop.f32.mrf.mxu0
  %v1902 = vadd.f32 0.0, %v1901
  %v1903 = vpop.f32.mrf.mxu0
  %v1904 = vadd.f32 0.0, %v1903
  %1905 = vmatmul.bf16.gmra.mxu0 %v1523
  %v1906 = vpop.f32.mrf.mxu0
  %v1907 = vadd.f32 0.0, %v1906
  %v1908 = vpop.f32.mrf.mxu0
  %v1909 = vadd.f32 0.0, %v1908
  %1910 = vmatmul.bf16.gmra.mxu0 %v1526
  %v1911 = vpop.f32.mrf.mxu0
  %v1912 = vadd.f32 0.0, %v1911
  %v1913 = vpop.f32.mrf.mxu0
  %v1914 = vadd.f32 0.0, %v1913
  %1915 = vmatmul.bf16.gmra.mxu0 %v1529
  %v1916 = vpop.f32.mrf.mxu0
  %v1917 = vadd.f32 0.0, %v1916
  %v1918 = vpop.f32.mrf.mxu0
  %v1919 = vadd.f32 0.0, %v1918
  %1920 = vmatmul.bf16.gmra.mxu0 %v1532
  %v1921 = vpop.f32.mrf.mxu0
  %v1922 = vadd.f32 0.0, %v1921
  %v1923 = vpop.f32.mrf.mxu0
  %v1924 = vadd.f32 0.0, %v1923
  %1925 = vmatmul.bf16.gmra.mxu0 %v1535
  %v1926 = vpop.f32.mrf.mxu0
  %v1927 = vadd.f32 0.0, %v1926
  %v1928 = vpop.f32.mrf.mxu0
  %v1929 = vadd.f32 0.0, %v1928
  %1930 = vmatmul.bf16.gmra.mxu0 %v1538
  %v1931 = vpop.f32.mrf.mxu0
  %v1932 = vadd.f32 0.0, %v1931
  %v1933 = vpop.f32.mrf.mxu0
  %v1934 = vadd.f32 0.0, %v1933
  %1935 = vmatmul.bf16.gmra.mxu0 %v1541
  %v1936 = vpop.f32.mrf.mxu0
  %v1937 = vadd.f32 0.0, %v1936
  %v1938 = vpop.f32.mrf.mxu0
  %v1939 = vadd.f32 0.0, %v1938
  %1940 = vmatmul.bf16.gmra.mxu0 %v1544
  %v1941 = vpop.f32.mrf.mxu0
  %v1942 = vadd.f32 0.0, %v1941
  %v1943 = vpop.f32.mrf.mxu0
  %v1944 = vadd.f32 0.0, %v1943
  %1945 = vmatmul.bf16.gmra.mxu0 %v1547
  %v1946 = vpop.f32.mrf.mxu0
  %v1947 = vadd.f32 0.0, %v1946
  %v1948 = vpop.f32.mrf.mxu0
  %v1949 = vadd.f32 0.0, %v1948
  %1950 = vmatmul.bf16.gmra.mxu0 %v1550
  %v1951 = vpop.f32.mrf.mxu0
  %v1952 = vadd.f32 0.0, %v1951
  %v1953 = vpop.f32.mrf.mxu0
  %v1954 = vadd.f32 0.0, %v1953
  %1955 = vmatmul.bf16.gmra.mxu0 %v1553
  %v1956 = vpop.f32.mrf.mxu0
  %v1957 = vadd.f32 0.0, %v1956
  %v1958 = vpop.f32.mrf.mxu0
  %v1959 = vadd.f32 0.0, %v1958
  %1960 = vmatmul.bf16.gmra.mxu0 %v1556
  %v1961 = vpop.f32.mrf.mxu0
  %v1962 = vadd.f32 0.0, %v1961
  %v1963 = vpop.f32.mrf.mxu0
  %v1964 = vadd.f32 0.0, %v1963
  %1965 = vmatmul.bf16.gmra.mxu0 %v1559
  %v1966 = vpop.f32.mrf.mxu0
  %v1967 = vadd.f32 0.0, %v1966
  %v1968 = vpop.f32.mrf.mxu0
  %v1969 = vadd.f32 0.0, %v1968
  %1970 = vmatmul.bf16.gmra.mxu0 %v1562
  %v1971 = vpop.f32.mrf.mxu0
  %v1972 = vadd.f32 0.0, %v1971
  %v1973 = vpop.f32.mrf.mxu0
  %v1974 = vadd.f32 0.0, %v1973
  %1975 = vmatmul.bf16.gmra.mxu0 %v1565
  %v1976 = vpop.f32.mrf.mxu0
  %v1977 = vadd.f32 0.0, %v1976
  %v1978 = vpop.f32.mrf.mxu0
  %v1979 = vadd.f32 0.0, %v1978
  %1980 = vmatmul.bf16.gmra.mxu0 %v1568
  %v1981 = vpop.f32.mrf.mxu0
  %v1982 = vadd.f32 0.0, %v1981
  %v1983 = vpop.f32.mrf.mxu0
  %v1984 = vadd.f32 0.0, %v1983
  %1985 = vmatmul.bf16.gmra.mxu0 %v1571
  %v1986 = vpop.f32.mrf.mxu0
  %v1987 = vadd.f32 0.0, %v1986
  %v1988 = vpop.f32.mrf.mxu0
  %v1989 = vadd.f32 0.0, %v1988
  %1990 = vmatmul.bf16.gmra.mxu0 %v1574
  %v1991 = vpop.f32.mrf.mxu0
  %v1992 = vadd.f32 0.0, %v1991
  %v1993 = vpop.f32.mrf.mxu0
  %v1994 = vadd.f32 0.0, %v1993
  %1995 = vmatmul.bf16.gmra.mxu0 %v1577
  %v1996 = vpop.f32.mrf.mxu0
  %v1997 = vadd.f32 0.0, %v1996
  %v1998 = vpop.f32.mrf.mxu0
  %v1999 = vadd.f32 0.0, %v1998
  %2000 = vmatmul.bf16.gmra.mxu0 %v1580
  %v2001 = vpop.f32.mrf.mxu0
  %v2002 = vadd.f32 0.0, %v2001
  %v2003 = vpop.f32.mrf.mxu0
  %v2004 = vadd.f32 0.0, %v2003
  %2005 = vdwg.mxu0
  %v2006 = vld [vmem:[#allocation2] sm:$0xff]
  %v2007 = vld [vmem:[#allocation2 + $0x8] sm:$0xff]
  %v2008 = vld [vmem:[#allocation2 + $0x10] sm:$0xff]
  %v2009 = vld [vmem:[#allocation2 + $0x18] sm:$0xff]
  %v2010 = vld [vmem:[#allocation2 + $0x20] sm:$0xff]
  %v2011 = vld [vmem:[#allocation2 + $0x28] sm:$0xff]
  %v2012 = vld [vmem:[#allocation2 + $0x30] sm:$0xff]
  %v2013 = vld [vmem:[#allocation2 + $0x38] sm:$0xff]
  %v2014 = vld [vmem:[#allocation2 + $0x40] sm:$0xff]
  %v2015 = vld [vmem:[#allocation2 + $0x48] sm:$0xff]
  %v2016 = vld [vmem:[#allocation2 + $0x50] sm:$0xff]
  %v2017 = vld [vmem:[#allocation2 + $0x58] sm:$0xff]
  %v2018 = vld [vmem:[#allocation2 + $0x60] sm:$0xff]
  %v2019 = vld [vmem:[#allocation2 + $0x68] sm:$0xff]
  %v2020 = vld [vmem:[#allocation2 + $0x70] sm:$0xff]
  %v2021 = vld [vmem:[#allocation2 + $0x78] sm:$0xff]
  %v2022 = vld [vmem:[#allocation2 + $0x80] sm:$0xff]
  %v2023 = vld [vmem:[#allocation2 + $0x88] sm:$0xff]
  %v2024 = vld [vmem:[#allocation2 + $0x90] sm:$0xff]
  %v2025 = vld [vmem:[#allocation2 + $0x98] sm:$0xff]
  %v2026 = vld [vmem:[#allocation2 + $0xa0] sm:$0xff]
  %v2027 = vld [vmem:[#allocation2 + $0xa8] sm:$0xff]
  %v2028 = vld [vmem:[#allocation2 + $0xb0] sm:$0xff]
  %v2029 = vld [vmem:[#allocation2 + $0xb8] sm:$0xff]
  %v2030 = vld [vmem:[#allocation2 + $0xc0] sm:$0xff]
  %v2031 = vld [vmem:[#allocation2 + $0xc8] sm:$0xff]
  %v2032 = vld [vmem:[#allocation2 + $0xd0] sm:$0xff]
  %v2033 = vld [vmem:[#allocation2 + $0xd8] sm:$0xff]
  %v2034 = vld [vmem:[#allocation2 + $0xe0] sm:$0xff]
  %v2035 = vld [vmem:[#allocation2 + $0xe8] sm:$0xff]
  %v2036 = vld [vmem:[#allocation2 + $0xf0] sm:$0xff]
  %v2037 = vld [vmem:[#allocation2 + $0xf8] sm:$0xff]
  %v2038 = vld [vmem:[#allocation2 + $0x100] sm:$0xff]
  %v2039 = vld [vmem:[#allocation2 + $0x108] sm:$0xff]
  %v2040 = vld [vmem:[#allocation2 + $0x110] sm:$0xff]
  %v2041 = vld [vmem:[#allocation2 + $0x118] sm:$0xff]
  %v2042 = vld [vmem:[#allocation2 + $0x120] sm:$0xff]
  %v2043 = vld [vmem:[#allocation2 + $0x128] sm:$0xff]
  %v2044 = vld [vmem:[#allocation2 + $0x130] sm:$0xff]
  %v2045 = vld [vmem:[#allocation2 + $0x138] sm:$0xff]
  %v2046 = vld [vmem:[#allocation2 + $0x140] sm:$0xff]
  %v2047 = vld [vmem:[#allocation2 + $0x148] sm:$0xff]
  %v2048 = vld [vmem:[#allocation2 + $0x150] sm:$0xff]
  %v2049 = vld [vmem:[#allocation2 + $0x158] sm:$0xff]
  %v2050 = vld [vmem:[#allocation2 + $0x160] sm:$0xff]
  %v2051 = vld [vmem:[#allocation2 + $0x168] sm:$0xff]
  %v2052 = vld [vmem:[#allocation2 + $0x170] sm:$0xff]
  %v2053 = vld [vmem:[#allocation2 + $0x178] sm:$0xff]
  %v2054 = vld [vmem:[#allocation2 + $0x180] sm:$0xff]
  %v2055 = vld [vmem:[#allocation2 + $0x188] sm:$0xff]
  %v2056 = vld [vmem:[#allocation2 + $0x190] sm:$0xff]
  %v2057 = vld [vmem:[#allocation2 + $0x198] sm:$0xff]
  %v2058 = vld [vmem:[#allocation2 + $0x1a0] sm:$0xff]
  %v2059 = vld [vmem:[#allocation2 + $0x1a8] sm:$0xff]
  %v2060 = vld [vmem:[#allocation2 + $0x1b0] sm:$0xff]
  %v2061 = vld [vmem:[#allocation2 + $0x1b8] sm:$0xff]
  %v2062 = vld [vmem:[#allocation2 + $0x1c0] sm:$0xff]
  %v2063 = vld [vmem:[#allocation2 + $0x1c8] sm:$0xff]
  %v2064 = vld [vmem:[#allocation2 + $0x1d0] sm:$0xff]
  %v2065 = vld [vmem:[#allocation2 + $0x1d8] sm:$0xff]
  %v2066 = vld [vmem:[#allocation2 + $0x1e0] sm:$0xff]
  %v2067 = vld [vmem:[#allocation2 + $0x1e8] sm:$0xff]
  %v2068 = vld [vmem:[#allocation2 + $0x1f0] sm:$0xff]
  %v2069 = vld [vmem:[#allocation2 + $0x1f8] sm:$0xff]
  %v2070 = vld [vmem:[#allocation2 + $0x200] sm:$0xff]
  %v2071 = vld [vmem:[#allocation2 + $0x208] sm:$0xff]
  %v2072 = vld [vmem:[#allocation2 + $0x210] sm:$0xff]
  %v2073 = vld [vmem:[#allocation2 + $0x218] sm:$0xff]
  %v2074 = vld [vmem:[#allocation2 + $0x220] sm:$0xff]
  %v2075 = vld [vmem:[#allocation2 + $0x228] sm:$0xff]
  %v2076 = vld [vmem:[#allocation2 + $0x230] sm:$0xff]
  %v2077 = vld [vmem:[#allocation2 + $0x238] sm:$0xff]
  %v2078 = vld [vmem:[#allocation2 + $0x240] sm:$0xff]
  %v2079 = vld [vmem:[#allocation2 + $0x248] sm:$0xff]
  %v2080 = vld [vmem:[#allocation2 + $0x250] sm:$0xff]
  %v2081 = vld [vmem:[#allocation2 + $0x258] sm:$0xff]
  %v2082 = vld [vmem:[#allocation2 + $0x260] sm:$0xff]
  %v2083 = vld [vmem:[#allocation2 + $0x268] sm:$0xff]
  %v2084 = vld [vmem:[#allocation2 + $0x270] sm:$0xff]
  %v2085 = vld [vmem:[#allocation2 + $0x278] sm:$0xff]
  %v2086 = vld [vmem:[#allocation2 + $0x280] sm:$0xff]
  %v2087 = vld [vmem:[#allocation2 + $0x288] sm:$0xff]
  %v2088 = vld [vmem:[#allocation2 + $0x290] sm:$0xff]
  %v2089 = vld [vmem:[#allocation2 + $0x298] sm:$0xff]
  %v2090 = vld [vmem:[#allocation2 + $0x2a0] sm:$0xff]
  %v2091 = vld [vmem:[#allocation2 + $0x2a8] sm:$0xff]
  %v2092 = vld [vmem:[#allocation2 + $0x2b0] sm:$0xff]
  %v2093 = vld [vmem:[#allocation2 + $0x2b8] sm:$0xff]
  %v2094 = vld [vmem:[#allocation2 + $0x2c0] sm:$0xff]
  %v2095 = vld [vmem:[#allocation2 + $0x2c8] sm:$0xff]
  %v2096 = vld [vmem:[#allocation2 + $0x2d0] sm:$0xff]
  %v2097 = vld [vmem:[#allocation2 + $0x2d8] sm:$0xff]
  %v2098 = vld [vmem:[#allocation2 + $0x2e0] sm:$0xff]
  %v2099 = vld [vmem:[#allocation2 + $0x2e8] sm:$0xff]
  %v2100 = vld [vmem:[#allocation2 + $0x2f0] sm:$0xff]
  %v2101 = vld [vmem:[#allocation2 + $0x2f8] sm:$0xff]
  %v2102 = vld [vmem:[#allocation2 + $0x300] sm:$0xff]
  %v2103 = vld [vmem:[#allocation2 + $0x308] sm:$0xff]
  %v2104 = vld [vmem:[#allocation2 + $0x310] sm:$0xff]
  %v2105 = vld [vmem:[#allocation2 + $0x318] sm:$0xff]
  %v2106 = vld [vmem:[#allocation2 + $0x320] sm:$0xff]
  %v2107 = vld [vmem:[#allocation2 + $0x328] sm:$0xff]
  %v2108 = vld [vmem:[#allocation2 + $0x330] sm:$0xff]
  %v2109 = vld [vmem:[#allocation2 + $0x338] sm:$0xff]
  %v2110 = vld [vmem:[#allocation2 + $0x340] sm:$0xff]
  %v2111 = vld [vmem:[#allocation2 + $0x348] sm:$0xff]
  %v2112 = vld [vmem:[#allocation2 + $0x350] sm:$0xff]
  %v2113 = vld [vmem:[#allocation2 + $0x358] sm:$0xff]
  %v2114 = vld [vmem:[#allocation2 + $0x360] sm:$0xff]
  %v2115 = vld [vmem:[#allocation2 + $0x368] sm:$0xff]
  %v2116 = vld [vmem:[#allocation2 + $0x370] sm:$0xff]
  %v2117 = vld [vmem:[#allocation2 + $0x378] sm:$0xff]
  %v2118 = vld [vmem:[#allocation2 + $0x380] sm:$0xff]
  %v2119 = vld [vmem:[#allocation2 + $0x388] sm:$0xff]
  %v2120 = vld [vmem:[#allocation2 + $0x390] sm:$0xff]
  %v2121 = vld [vmem:[#allocation2 + $0x398] sm:$0xff]
  %v2122 = vld [vmem:[#allocation2 + $0x3a0] sm:$0xff]
  %v2123 = vld [vmem:[#allocation2 + $0x3a8] sm:$0xff]
  %v2124 = vld [vmem:[#allocation2 + $0x3b0] sm:$0xff]
  %v2125 = vld [vmem:[#allocation2 + $0x3b8] sm:$0xff]
  %v2126 = vld [vmem:[#allocation2 + $0x3c0] sm:$0xff]
  %v2127 = vld [vmem:[#allocation2 + $0x3c8] sm:$0xff]
  %v2128 = vld [vmem:[#allocation2 + $0x3d0] sm:$0xff]
  %v2129 = vld [vmem:[#allocation2 + $0x3d8] sm:$0xff]
  %v2130 = vld [vmem:[#allocation2 + $0x3e0] sm:$0xff]
  %v2131 = vld [vmem:[#allocation2 + $0x3e8] sm:$0xff]
  %v2132 = vld [vmem:[#allocation2 + $0x3f0] sm:$0xff]
  %v2133 = vld [vmem:[#allocation2 + $0x3f8] sm:$0xff]
  %v2134 = vld [vmem:[#allocation2 + $0x400] sm:$0xff]
  %v2135 = vld [vmem:[#allocation2 + $0x408] sm:$0xff]
  %v2136 = vld [vmem:[#allocation2 + $0x410] sm:$0xff]
  %v2137 = vld [vmem:[#allocation2 + $0x418] sm:$0xff]
  %v2138 = vld [vmem:[#allocation2 + $0x420] sm:$0xff]
  %v2139 = vld [vmem:[#allocation2 + $0x428] sm:$0xff]
  %v2140 = vld [vmem:[#allocation2 + $0x430] sm:$0xff]
  %v2141 = vld [vmem:[#allocation2 + $0x438] sm:$0xff]
  %v2142 = vld [vmem:[#allocation2 + $0x440] sm:$0xff]
  %v2143 = vld [vmem:[#allocation2 + $0x448] sm:$0xff]
  %v2144 = vld [vmem:[#allocation2 + $0x450] sm:$0xff]
  %v2145 = vld [vmem:[#allocation2 + $0x458] sm:$0xff]
  %v2146 = vld [vmem:[#allocation2 + $0x460] sm:$0xff]
  %v2147 = vld [vmem:[#allocation2 + $0x468] sm:$0xff]
  %v2148 = vld [vmem:[#allocation2 + $0x470] sm:$0xff]
  %v2149 = vld [vmem:[#allocation2 + $0x478] sm:$0xff]
  %v2150 = vld [vmem:[#allocation2 + $0x480] sm:$0xff]
  %v2151 = vld [vmem:[#allocation2 + $0x488] sm:$0xff]
  %v2152 = vld [vmem:[#allocation2 + $0x490] sm:$0xff]
  %v2153 = vld [vmem:[#allocation2 + $0x498] sm:$0xff]
  %v2154 = vld [vmem:[#allocation2 + $0x4a0] sm:$0xff]
  %v2155 = vld [vmem:[#allocation2 + $0x4a8] sm:$0xff]
  %v2156 = vld [vmem:[#allocation2 + $0x4b0] sm:$0xff]
  %v2157 = vld [vmem:[#allocation2 + $0x4b8] sm:$0xff]
  %v2158 = vld [vmem:[#allocation2 + $0x4c0] sm:$0xff]
  %v2159 = vld [vmem:[#allocation2 + $0x4c8] sm:$0xff]
  %v2160 = vld [vmem:[#allocation2 + $0x4d0] sm:$0xff]
  %v2161 = vld [vmem:[#allocation2 + $0x4d8] sm:$0xff]
  %v2162 = vld [vmem:[#allocation2 + $0x4e0] sm:$0xff]
  %v2163 = vld [vmem:[#allocation2 + $0x4e8] sm:$0xff]
  %v2164 = vld [vmem:[#allocation2 + $0x4f0] sm:$0xff]
  %v2165 = vld [vmem:[#allocation2 + $0x4f8] sm:$0xff]
  %v2166 = vadd.f32 %v2006, %v1598
  %v2167 = vadd.f32 %v2007, %v1807
  %v2168 = vadd.f32 %v2008, %v1600
  %v2169 = vadd.f32 %v2009, %v1809
  %v2170 = vadd.f32 %v2010, %v1603
  %v2171 = vadd.f32 %v2011, %v1812
  %v2172 = vadd.f32 %v2012, %v1605
  %v2173 = vadd.f32 %v2013, %v1814
  %v2174 = vadd.f32 %v2014, %v1608
  %v2175 = vadd.f32 %v2015, %v1817
  %v2176 = vadd.f32 %v2016, %v1610
  %v2177 = vadd.f32 %v2017, %v1819
  %v2178 = vadd.f32 %v2018, %v1613
  %v2179 = vadd.f32 %v2019, %v1822
  %v2180 = vadd.f32 %v2020, %v1615
  %v2181 = vadd.f32 %v2021, %v1824
  %v2182 = vadd.f32 %v2022, %v1618
  %v2183 = vadd.f32 %v2023, %v1827
  %v2184 = vadd.f32 %v2024, %v1620
  %v2185 = vadd.f32 %v2025, %v1829
  %v2186 = vadd.f32 %v2026, %v1623
  %v2187 = vadd.f32 %v2027, %v1832
  %v2188 = vadd.f32 %v2028, %v1625
  %v2189 = vadd.f32 %v2029, %v1834
  %v2190 = vadd.f32 %v2030, %v1628
  %v2191 = vadd.f32 %v2031, %v1837
  %v2192 = vadd.f32 %v2032, %v1630
  %v2193 = vadd.f32 %v2033, %v1839
  %v2194 = vadd.f32 %v2034, %v1633
  %v2195 = vadd.f32 %v2035, %v1842
  %v2196 = vadd.f32 %v2036, %v1635
  %v2197 = vadd.f32 %v2037, %v1844
  %v2198 = vadd.f32 %v2038, %v1638
  %v2199 = vadd.f32 %v2039, %v1847
  %v2200 = vadd.f32 %v2040, %v1640
  %v2201 = vadd.f32 %v2041, %v1849
  %v2202 = vadd.f32 %v2042, %v1643
  %v2203 = vadd.f32 %v2043, %v1852
  %v2204 = vadd.f32 %v2044, %v1645
  %v2205 = vadd.f32 %v2045, %v1854
  %v2206 = vadd.f32 %v2046, %v1648
  %v2207 = vadd.f32 %v2047, %v1857
  %v2208 = vadd.f32 %v2048, %v1650
  %v2209 = vadd.f32 %v2049, %v1859
  %v2210 = vadd.f32 %v2050, %v1653
  %v2211 = vadd.f32 %v2051, %v1862
  %v2212 = vadd.f32 %v2052, %v1655
  %v2213 = vadd.f32 %v2053, %v1864
  %v2214 = vadd.f32 %v2054, %v1658
  %v2215 = vadd.f32 %v2055, %v1867
  %v2216 = vadd.f32 %v2056, %v1660
  %v2217 = vadd.f32 %v2057, %v1869
  %v2218 = vadd.f32 %v2058, %v1663
  %v2219 = vadd.f32 %v2059, %v1872
  %v2220 = vadd.f32 %v2060, %v1665
  %v2221 = vadd.f32 %v2061, %v1874
  %v2222 = vadd.f32 %v2062, %v1668
  %v2223 = vadd.f32 %v2063, %v1877
  %v2224 = vadd.f32 %v2064, %v1670
  %v2225 = vadd.f32 %v2065, %v1879
  %v2226 = vadd.f32 %v2066, %v1673
  %v2227 = vadd.f32 %v2067, %v1882
  %v2228 = vadd.f32 %v2068, %v1675
  %v2229 = vadd.f32 %v2069, %v1884
  %v2230 = vadd.f32 %v2070, %v1678
  %v2231 = vadd.f32 %v2071, %v1887
  %v2232 = vadd.f32 %v2072, %v1680
  %v2233 = vadd.f32 %v2073, %v1889
  %v2234 = vadd.f32 %v2074, %v1683
  %v2235 = vadd.f32 %v2075, %v1892
  %v2236 = vadd.f32 %v2076, %v1685
  %v2237 = vadd.f32 %v2077, %v1894
  %v2238 = vadd.f32 %v2078, %v1688
  %v2239 = vadd.f32 %v2079, %v1897
  %v2240 = vadd.f32 %v2080, %v1690
  %v2241 = vadd.f32 %v2081, %v1899
  %v2242 = vadd.f32 %v2082, %v1693
  %v2243 = vadd.f32 %v2083, %v1902
  %v2244 = vadd.f32 %v2084, %v1695
  %v2245 = vadd.f32 %v2085, %v1904
  %v2246 = vadd.f32 %v2086, %v1698
  %v2247 = vadd.f32 %v2087, %v1907
  %v2248 = vadd.f32 %v2088, %v1700
  %v2249 = vadd.f32 %v2089, %v1909
  %v2250 = vadd.f32 %v2090, %v1703
  %v2251 = vadd.f32 %v2091, %v1912
  %v2252 = vadd.f32 %v2092, %v1705
  %v2253 = vadd.f32 %v2093, %v1914
  %v2254 = vadd.f32 %v2094, %v1708
  %v2255 = vadd.f32 %v2095, %v1917
  %v2256 = vadd.f32 %v2096, %v1710
  %v2257 = vadd.f32 %v2097, %v1919
  %v2258 = vadd.f32 %v2098, %v1713
  %v2259 = vadd.f32 %v2099, %v1922
  %v2260 = vadd.f32 %v2100, %v1715
  %v2261 = vadd.f32 %v2101, %v1924
  %v2262 = vadd.f32 %v2102, %v1718
  %v2263 = vadd.f32 %v2103, %v1927
  %v2264 = vadd.f32 %v2104, %v1720
  %v2265 = vadd.f32 %v2105, %v1929
  %v2266 = vadd.f32 %v2106, %v1723
  %v2267 = vadd.f32 %v2107, %v1932
  %v2268 = vadd.f32 %v2108, %v1725
  %v2269 = vadd.f32 %v2109, %v1934
  %v2270 = vadd.f32 %v2110, %v1728
  %v2271 = vadd.f32 %v2111, %v1937
  %v2272 = vadd.f32 %v2112, %v1730
  %v2273 = vadd.f32 %v2113, %v1939
  %v2274 = vadd.f32 %v2114, %v1733
  %v2275 = vadd.f32 %v2115, %v1942
  %v2276 = vadd.f32 %v2116, %v1735
  %v2277 = vadd.f32 %v2117, %v1944
  %v2278 = vadd.f32 %v2118, %v1738
  %v2279 = vadd.f32 %v2119, %v1947
  %v2280 = vadd.f32 %v2120, %v1740
  %v2281 = vadd.f32 %v2121, %v1949
  %v2282 = vadd.f32 %v2122, %v1743
  %v2283 = vadd.f32 %v2123, %v1952
  %v2284 = vadd.f32 %v2124, %v1745
  %v2285 = vadd.f32 %v2125, %v1954
  %v2286 = vadd.f32 %v2126, %v1748
  %v2287 = vadd.f32 %v2127, %v1957
  %v2288 = vadd.f32 %v2128, %v1750
  %v2289 = vadd.f32 %v2129, %v1959
  %v2290 = vadd.f32 %v2130, %v1753
  %v2291 = vadd.f32 %v2131, %v1962
  %v2292 = vadd.f32 %v2132, %v1755
  %v2293 = vadd.f32 %v2133, %v1964
  %v2294 = vadd.f32 %v2134, %v1758
  %v2295 = vadd.f32 %v2135, %v1967
  %v2296 = vadd.f32 %v2136, %v1760
  %v2297 = vadd.f32 %v2137, %v1969
  %v2298 = vadd.f32 %v2138, %v1763
  %v2299 = vadd.f32 %v2139, %v1972
  %v2300 = vadd.f32 %v2140, %v1765
  %v2301 = vadd.f32 %v2141, %v1974
  %v2302 = vadd.f32 %v2142, %v1768
  %v2303 = vadd.f32 %v2143, %v1977
  %v2304 = vadd.f32 %v2144, %v1770
  %v2305 = vadd.f32 %v2145, %v1979
  %v2306 = vadd.f32 %v2146, %v1773
  %v2307 = vadd.f32 %v2147, %v1982
  %v2308 = vadd.f32 %v2148, %v1775
  %v2309 = vadd.f32 %v2149, %v1984
  %v2310 = vadd.f32 %v2150, %v1778
  %v2311 = vadd.f32 %v2151, %v1987
  %v2312 = vadd.f32 %v2152, %v1780
  %v2313 = vadd.f32 %v2153, %v1989
  %v2314 = vadd.f32 %v2154, %v1783
  %v2315 = vadd.f32 %v2155, %v1992
  %v2316 = vadd.f32 %v2156, %v1785
  %v2317 = vadd.f32 %v2157, %v1994
  %v2318 = vadd.f32 %v2158, %v1788
  %v2319 = vadd.f32 %v2159, %v1997
  %v2320 = vadd.f32 %v2160, %v1790
  %v2321 = vadd.f32 %v2161, %v1999
  %v2322 = vadd.f32 %v2162, %v1793
  %v2323 = vadd.f32 %v2163, %v2002
  %v2324 = vadd.f32 %v2164, %v1795
  %v2325 = vadd.f32 %v2165, %v2004
  %2326 = vst [vmem:[#allocation2] sm:$0xff] %v2166
  %2327 = vst [vmem:[#allocation2 + $0x8] sm:$0xff] %v2167
  %2328 = vst [vmem:[#allocation2 + $0x10] sm:$0xff] %v2168
  %2329 = vst [vmem:[#allocation2 + $0x18] sm:$0xff] %v2169
  %2330 = vst [vmem:[#allocation2 + $0x20] sm:$0xff] %v2170
  %2331 = vst [vmem:[#allocation2 + $0x28] sm:$0xff] %v2171
  %2332 = vst [vmem:[#allocation2 + $0x30] sm:$0xff] %v2172
  %2333 = vst [vmem:[#allocation2 + $0x38] sm:$0xff] %v2173
  %2334 = vst [vmem:[#allocation2 + $0x40] sm:$0xff] %v2174
  %2335 = vst [vmem:[#allocation2 + $0x48] sm:$0xff] %v2175
  %2336 = vst [vmem:[#allocation2 + $0x50] sm:$0xff] %v2176
  %2337 = vst [vmem:[#allocation2 + $0x58] sm:$0xff] %v2177
  %2338 = vst [vmem:[#allocation2 + $0x60] sm:$0xff] %v2178
  %2339 = vst [vmem:[#allocation2 + $0x68] sm:$0xff] %v2179
  %2340 = vst [vmem:[#allocation2 + $0x70] sm:$0xff] %v2180
  %2341 = vst [vmem:[#allocation2 + $0x78] sm:$0xff] %v2181
  %2342 = vst [vmem:[#allocation2 + $0x80] sm:$0xff] %v2182
  %2343 = vst [vmem:[#allocation2 + $0x88] sm:$0xff] %v2183
  %2344 = vst [vmem:[#allocation2 + $0x90] sm:$0xff] %v2184
  %2345 = vst [vmem:[#allocation2 + $0x98] sm:$0xff] %v2185
  %2346 = vst [vmem:[#allocation2 + $0xa0] sm:$0xff] %v2186
  %2347 = vst [vmem:[#allocation2 + $0xa8] sm:$0xff] %v2187
  %2348 = vst [vmem:[#allocation2 + $0xb0] sm:$0xff] %v2188
  %2349 = vst [vmem:[#allocation2 + $0xb8] sm:$0xff] %v2189
  %2350 = vst [vmem:[#allocation2 + $0xc0] sm:$0xff] %v2190
  %2351 = vst [vmem:[#allocation2 + $0xc8] sm:$0xff] %v2191
  %2352 = vst [vmem:[#allocation2 + $0xd0] sm:$0xff] %v2192
  %2353 = vst [vmem:[#allocation2 + $0xd8] sm:$0xff] %v2193
  %2354 = vst [vmem:[#allocation2 + $0xe0] sm:$0xff] %v2194
  %2355 = vst [vmem:[#allocation2 + $0xe8] sm:$0xff] %v2195
  %2356 = vst [vmem:[#allocation2 + $0xf0] sm:$0xff] %v2196
  %2357 = vst [vmem:[#allocation2 + $0xf8] sm:$0xff] %v2197
  %2358 = vst [vmem:[#allocation2 + $0x100] sm:$0xff] %v2198
  %2359 = vst [vmem:[#allocation2 + $0x108] sm:$0xff] %v2199
  %2360 = vst [vmem:[#allocation2 + $0x110] sm:$0xff] %v2200
  %2361 = vst [vmem:[#allocation2 + $0x118] sm:$0xff] %v2201
  %2362 = vst [vmem:[#allocation2 + $0x120] sm:$0xff] %v2202
  %2363 = vst [vmem:[#allocation2 + $0x128] sm:$0xff] %v2203
  %2364 = vst [vmem:[#allocation2 + $0x130] sm:$0xff] %v2204
  %2365 = vst [vmem:[#allocation2 + $0x138] sm:$0xff] %v2205
  %2366 = vst [vmem:[#allocation2 + $0x140] sm:$0xff] %v2206
  %2367 = vst [vmem:[#allocation2 + $0x148] sm:$0xff] %v2207
  %2368 = vst [vmem:[#allocation2 + $0x150] sm:$0xff] %v2208
  %2369 = vst [vmem:[#allocation2 + $0x158] sm:$0xff] %v2209
  %2370 = vst [vmem:[#allocation2 + $0x160] sm:$0xff] %v2210
  %2371 = vst [vmem:[#allocation2 + $0x168] sm:$0xff] %v2211
  %2372 = vst [vmem:[#allocation2 + $0x170] sm:$0xff] %v2212
  %2373 = vst [vmem:[#allocation2 + $0x178] sm:$0xff] %v2213
  %2374 = vst [vmem:[#allocation2 + $0x180] sm:$0xff] %v2214
  %2375 = vst [vmem:[#allocation2 + $0x188] sm:$0xff] %v2215
  %2376 = vst [vmem:[#allocation2 + $0x190] sm:$0xff] %v2216
  %2377 = vst [vmem:[#allocation2 + $0x198] sm:$0xff] %v2217
  %2378 = vst [vmem:[#allocation2 + $0x1a0] sm:$0xff] %v2218
  %2379 = vst [vmem:[#allocation2 + $0x1a8] sm:$0xff] %v2219
  %2380 = vst [vmem:[#allocation2 + $0x1b0] sm:$0xff] %v2220
  %2381 = vst [vmem:[#allocation2 + $0x1b8] sm:$0xff] %v2221
  %2382 = vst [vmem:[#allocation2 + $0x1c0] sm:$0xff] %v2222
  %2383 = vst [vmem:[#allocation2 + $0x1c8] sm:$0xff] %v2223
  %2384 = vst [vmem:[#allocation2 + $0x1d0] sm:$0xff] %v2224
  %2385 = vst [vmem:[#allocation2 + $0x1d8] sm:$0xff] %v2225
  %2386 = vst [vmem:[#allocation2 + $0x1e0] sm:$0xff] %v2226
  %2387 = vst [vmem:[#allocation2 + $0x1e8] sm:$0xff] %v2227
  %2388 = vst [vmem:[#allocation2 + $0x1f0] sm:$0xff] %v2228
  %2389 = vst [vmem:[#allocation2 + $0x1f8] sm:$0xff] %v2229
  %2390 = vst [vmem:[#allocation2 + $0x200] sm:$0xff] %v2230
  %2391 = vst [vmem:[#allocation2 + $0x208] sm:$0xff] %v2231
  %2392 = vst [vmem:[#allocation2 + $0x210] sm:$0xff] %v2232
  %2393 = vst [vmem:[#allocation2 + $0x218] sm:$0xff] %v2233
  %2394 = vst [vmem:[#allocation2 + $0x220] sm:$0xff] %v2234
  %2395 = vst [vmem:[#allocation2 + $0x228] sm:$0xff] %v2235
  %2396 = vst [vmem:[#allocation2 + $0x230] sm:$0xff] %v2236
  %2397 = vst [vmem:[#allocation2 + $0x238] sm:$0xff] %v2237
  %2398 = vst [vmem:[#allocation2 + $0x240] sm:$0xff] %v2238
  %2399 = vst [vmem:[#allocation2 + $0x248] sm:$0xff] %v2239
  %2400 = vst [vmem:[#allocation2 + $0x250] sm:$0xff] %v2240
  %2401 = vst [vmem:[#allocation2 + $0x258] sm:$0xff] %v2241
  %2402 = vst [vmem:[#allocation2 + $0x260] sm:$0xff] %v2242
  %2403 = vst [vmem:[#allocation2 + $0x268] sm:$0xff] %v2243
  %2404 = vst [vmem:[#allocation2 + $0x270] sm:$0xff] %v2244
  %2405 = vst [vmem:[#allocation2 + $0x278] sm:$0xff] %v2245
  %2406 = vst [vmem:[#allocation2 + $0x280] sm:$0xff] %v2246
  %2407 = vst [vmem:[#allocation2 + $0x288] sm:$0xff] %v2247
  %2408 = vst [vmem:[#allocation2 + $0x290] sm:$0xff] %v2248
  %2409 = vst [vmem:[#allocation2 + $0x298] sm:$0xff] %v2249
  %2410 = vst [vmem:[#allocation2 + $0x2a0] sm:$0xff] %v2250
  %2411 = vst [vmem:[#allocation2 + $0x2a8] sm:$0xff] %v2251
  %2412 = vst [vmem:[#allocation2 + $0x2b0] sm:$0xff] %v2252
  %2413 = vst [vmem:[#allocation2 + $0x2b8] sm:$0xff] %v2253
  %2414 = vst [vmem:[#allocation2 + $0x2c0] sm:$0xff] %v2254
  %2415 = vst [vmem:[#allocation2 + $0x2c8] sm:$0xff] %v2255
  %2416 = vst [vmem:[#allocation2 + $0x2d0] sm:$0xff] %v2256
  %2417 = vst [vmem:[#allocation2 + $0x2d8] sm:$0xff] %v2257
  %2418 = vst [vmem:[#allocation2 + $0x2e0] sm:$0xff] %v2258
  %2419 = vst [vmem:[#allocation2 + $0x2e8] sm:$0xff] %v2259
  %2420 = vst [vmem:[#allocation2 + $0x2f0] sm:$0xff] %v2260
  %2421 = vst [vmem:[#allocation2 + $0x2f8] sm:$0xff] %v2261
  %2422 = vst [vmem:[#allocation2 + $0x300] sm:$0xff] %v2262
  %2423 = vst [vmem:[#allocation2 + $0x308] sm:$0xff] %v2263
  %2424 = vst [vmem:[#allocation2 + $0x310] sm:$0xff] %v2264
  %2425 = vst [vmem:[#allocation2 + $0x318] sm:$0xff] %v2265
  %2426 = vst [vmem:[#allocation2 + $0x320] sm:$0xff] %v2266
  %2427 = vst [vmem:[#allocation2 + $0x328] sm:$0xff] %v2267
  %2428 = vst [vmem:[#allocation2 + $0x330] sm:$0xff] %v2268
  %2429 = vst [vmem:[#allocation2 + $0x338] sm:$0xff] %v2269
  %2430 = vst [vmem:[#allocation2 + $0x340] sm:$0xff] %v2270
  %2431 = vst [vmem:[#allocation2 + $0x348] sm:$0xff] %v2271
  %2432 = vst [vmem:[#allocation2 + $0x350] sm:$0xff] %v2272
  %2433 = vst [vmem:[#allocation2 + $0x358] sm:$0xff] %v2273
  %2434 = vst [vmem:[#allocation2 + $0x360] sm:$0xff] %v2274
  %2435 = vst [vmem:[#allocation2 + $0x368] sm:$0xff] %v2275
  %2436 = vst [vmem:[#allocation2 + $0x370] sm:$0xff] %v2276
  %2437 = vst [vmem:[#allocation2 + $0x378] sm:$0xff] %v2277
  %2438 = vst [vmem:[#allocation2 + $0x380] sm:$0xff] %v2278
  %2439 = vst [vmem:[#allocation2 + $0x388] sm:$0xff] %v2279
  %2440 = vst [vmem:[#allocation2 + $0x390] sm:$0xff] %v2280
  %2441 = vst [vmem:[#allocation2 + $0x398] sm:$0xff] %v2281
  %2442 = vst [vmem:[#allocation2 + $0x3a0] sm:$0xff] %v2282
  %2443 = vst [vmem:[#allocation2 + $0x3a8] sm:$0xff] %v2283
  %2444 = vst [vmem:[#allocation2 + $0x3b0] sm:$0xff] %v2284
  %2445 = vst [vmem:[#allocation2 + $0x3b8] sm:$0xff] %v2285
  %2446 = vst [vmem:[#allocation2 + $0x3c0] sm:$0xff] %v2286
  %2447 = vst [vmem:[#allocation2 + $0x3c8] sm:$0xff] %v2287
  %2448 = vst [vmem:[#allocation2 + $0x3d0] sm:$0xff] %v2288
  %2449 = vst [vmem:[#allocation2 + $0x3d8] sm:$0xff] %v2289
  %2450 = vst [vmem:[#allocation2 + $0x3e0] sm:$0xff] %v2290
  %2451 = vst [vmem:[#allocation2 + $0x3e8] sm:$0xff] %v2291
  %2452 = vst [vmem:[#allocation2 + $0x3f0] sm:$0xff] %v2292
  %2453 = vst [vmem:[#allocation2 + $0x3f8] sm:$0xff] %v2293
  %2454 = vst [vmem:[#allocation2 + $0x400] sm:$0xff] %v2294
  %2455 = vst [vmem:[#allocation2 + $0x408] sm:$0xff] %v2295
  %2456 = vst [vmem:[#allocation2 + $0x410] sm:$0xff] %v2296
  %2457 = vst [vmem:[#allocation2 + $0x418] sm:$0xff] %v2297
  %2458 = vst [vmem:[#allocation2 + $0x420] sm:$0xff] %v2298
  %2459 = vst [vmem:[#allocation2 + $0x428] sm:$0xff] %v2299
  %2460 = vst [vmem:[#allocation2 + $0x430] sm:$0xff] %v2300
  %2461 = vst [vmem:[#allocation2 + $0x438] sm:$0xff] %v2301
  %2462 = vst [vmem:[#allocation2 + $0x440] sm:$0xff] %v2302
  %2463 = vst [vmem:[#allocation2 + $0x448] sm:$0xff] %v2303
  %2464 = vst [vmem:[#allocation2 + $0x450] sm:$0xff] %v2304
  %2465 = vst [vmem:[#allocation2 + $0x458] sm:$0xff] %v2305
  %2466 = vst [vmem:[#allocation2 + $0x460] sm:$0xff] %v2306
  %2467 = vst [vmem:[#allocation2 + $0x468] sm:$0xff] %v2307
  %2468 = vst [vmem:[#allocation2 + $0x470] sm:$0xff] %v2308
  %2469 = vst [vmem:[#allocation2 + $0x478] sm:$0xff] %v2309
  %2470 = vst [vmem:[#allocation2 + $0x480] sm:$0xff] %v2310
  %2471 = vst [vmem:[#allocation2 + $0x488] sm:$0xff] %v2311
  %2472 = vst [vmem:[#allocation2 + $0x490] sm:$0xff] %v2312
  %2473 = vst [vmem:[#allocation2 + $0x498] sm:$0xff] %v2313
  %2474 = vst [vmem:[#allocation2 + $0x4a0] sm:$0xff] %v2314
  %2475 = vst [vmem:[#allocation2 + $0x4a8] sm:$0xff] %v2315
  %2476 = vst [vmem:[#allocation2 + $0x4b0] sm:$0xff] %v2316
  %2477 = vst [vmem:[#allocation2 + $0x4b8] sm:$0xff] %v2317
  %2478 = vst [vmem:[#allocation2 + $0x4c0] sm:$0xff] %v2318
  %2479 = vst [vmem:[#allocation2 + $0x4c8] sm:$0xff] %v2319
  %2480 = vst [vmem:[#allocation2 + $0x4d0] sm:$0xff] %v2320
  %2481 = vst [vmem:[#allocation2 + $0x4d8] sm:$0xff] %v2321
  %2482 = vst [vmem:[#allocation2 + $0x4e0] sm:$0xff] %v2322
  %2483 = vst [vmem:[#allocation2 + $0x4e8] sm:$0xff] %v2323
  %2484 = vst [vmem:[#allocation2 + $0x4f0] sm:$0xff] %v2324
  %2485 = vst [vmem:[#allocation2 + $0x4f8] sm:$0xff] %v2325
  %s2486 = scalar_lea.vmem %s0, 32
  %v2487 = vld [vmem:[%s2486] sm:$0xf]
  %v2488 = vld [vmem:[%s2486 + $0x4] sm:$0xf]
  %v2489 = vld [vmem:[%s2486 + $0x8] sm:$0xf]
  %v2490 = vld [vmem:[%s2486 + $0xc] sm:$0xf]
  %v2491 = vld [vmem:[%s2486 + $0x10] sm:$0xf]
  %v2492 = vld [vmem:[%s2486 + $0x14] sm:$0xf]
  %v2493 = vld [vmem:[%s2486 + $0x18] sm:$0xf]
  %v2494 = vld [vmem:[%s2486 + $0x1c] sm:$0xf]
  %v2495 = vld [vmem:[%s2486 + $0x20] sm:$0xf]
  %v2496 = vld [vmem:[%s2486 + $0x24] sm:$0xf]
  %v2497 = vld [vmem:[%s2486 + $0x28] sm:$0xf]
  %v2498 = vld [vmem:[%s2486 + $0x2c] sm:$0xf]
  %v2499 = vld [vmem:[%s2486 + $0x30] sm:$0xf]
  %v2500 = vld [vmem:[%s2486 + $0x34] sm:$0xf]
  %v2501 = vld [vmem:[%s2486 + $0x38] sm:$0xf]
  %v2502 = vld [vmem:[%s2486 + $0x3c] sm:$0xf]
  %v2503 = vld [vmem:[%s2486 + $0x40] sm:$0xf]
  %v2504 = vld [vmem:[%s2486 + $0x44] sm:$0xf]
  %v2505 = vld [vmem:[%s2486 + $0x48] sm:$0xf]
  %v2506 = vld [vmem:[%s2486 + $0x4c] sm:$0xf]
  %v2507 = vld [vmem:[%s2486 + $0x50] sm:$0xf]
  %v2508 = vld [vmem:[%s2486 + $0x54] sm:$0xf]
  %v2509 = vld [vmem:[%s2486 + $0x58] sm:$0xf]
  %v2510 = vld [vmem:[%s2486 + $0x5c] sm:$0xf]
  %v2511 = vld [vmem:[%s2486 + $0x60] sm:$0xf]
  %v2512 = vld [vmem:[%s2486 + $0x64] sm:$0xf]
  %v2513 = vld [vmem:[%s2486 + $0x68] sm:$0xf]
  %v2514 = vld [vmem:[%s2486 + $0x6c] sm:$0xf]
  %v2515 = vld [vmem:[%s2486 + $0x70] sm:$0xf]
  %v2516 = vld [vmem:[%s2486 + $0x74] sm:$0xf]
  %v2517 = vld [vmem:[%s2486 + $0x78] sm:$0xf]
  %v2518 = vld [vmem:[%s2486 + $0x7c] sm:$0xf]
  %v2519 = vld [vmem:[%s2486 + $0x80] sm:$0xf]
  %v2520 = vld [vmem:[%s2486 + $0x84] sm:$0xf]
  %v2521 = vld [vmem:[%s2486 + $0x88] sm:$0xf]
  %v2522 = vld [vmem:[%s2486 + $0x8c] sm:$0xf]
  %v2523 = vld [vmem:[%s2486 + $0x90] sm:$0xf]
  %v2524 = vld [vmem:[%s2486 + $0x94] sm:$0xf]
  %v2525 = vld [vmem:[%s2486 + $0x98] sm:$0xf]
  %v2526 = vld [vmem:[%s2486 + $0x9c] sm:$0xf]
  %v2527 = vld [vmem:[%s2486 + $0xd0] sm:$0xf]
  %v2528 = vld [vmem:[%s2486 + $0xd4] sm:$0xf]
  %v2529 = vld [vmem:[%s2486 + $0xd8] sm:$0xf]
  %v2530 = vld [vmem:[%s2486 + $0xdc] sm:$0xf]
  %v2531 = vld [vmem:[%s2486 + $0xe0] sm:$0xf]
  %v2532 = vld [vmem:[%s2486 + $0xe4] sm:$0xf]
  %v2533 = vld [vmem:[%s2486 + $0xe8] sm:$0xf]
  %v2534 = vld [vmem:[%s2486 + $0xec] sm:$0xf]
  %v2535 = vld [vmem:[%s2486 + $0xf0] sm:$0xf]
  %v2536 = vld [vmem:[%s2486 + $0xf4] sm:$0xf]
  %v2537 = vld [vmem:[%s2486 + $0xf8] sm:$0xf]
  %v2538 = vld [vmem:[%s2486 + $0xfc] sm:$0xf]
  %v2539 = vld [vmem:[%s2486 + $0x100] sm:$0xf]
  %v2540 = vld [vmem:[%s2486 + $0x104] sm:$0xf]
  %v2541 = vld [vmem:[%s2486 + $0x108] sm:$0xf]
  %v2542 = vld [vmem:[%s2486 + $0x10c] sm:$0xf]
  %v2543 = vld [vmem:[%s2486 + $0x110] sm:$0xf]
  %v2544 = vld [vmem:[%s2486 + $0x114] sm:$0xf]
  %v2545 = vld [vmem:[%s2486 + $0x118] sm:$0xf]
  %v2546 = vld [vmem:[%s2486 + $0x11c] sm:$0xf]
  %v2547 = vld [vmem:[%s2486 + $0x120] sm:$0xf]
  %v2548 = vld [vmem:[%s2486 + $0x124] sm:$0xf]
  %v2549 = vld [vmem:[%s2486 + $0x128] sm:$0xf]
  %v2550 = vld [vmem:[%s2486 + $0x12c] sm:$0xf]
  %v2551 = vld [vmem:[%s2486 + $0x130] sm:$0xf]
  %v2552 = vld [vmem:[%s2486 + $0x134] sm:$0xf]
  %v2553 = vld [vmem:[%s2486 + $0x138] sm:$0xf]
  %v2554 = vld [vmem:[%s2486 + $0x13c] sm:$0xf]
  %v2555 = vld [vmem:[%s2486 + $0x140] sm:$0xf]
  %v2556 = vld [vmem:[%s2486 + $0x144] sm:$0xf]
  %v2557 = vld [vmem:[%s2486 + $0x148] sm:$0xf]
  %v2558 = vld [vmem:[%s2486 + $0x14c] sm:$0xf]
  %v2559 = vld [vmem:[%s2486 + $0x150] sm:$0xf]
  %v2560 = vld [vmem:[%s2486 + $0x154] sm:$0xf]
  %v2561 = vld [vmem:[%s2486 + $0x158] sm:$0xf]
  %v2562 = vld [vmem:[%s2486 + $0x15c] sm:$0xf]
  %v2563 = vld [vmem:[%s2486 + $0x160] sm:$0xf]
  %v2564 = vld [vmem:[%s2486 + $0x164] sm:$0xf]
  %v2565 = vld [vmem:[%s2486 + $0x168] sm:$0xf]
  %v2566 = vld [vmem:[%s2486 + $0x16c] sm:$0xf]
  %s2567 = scalar_lea.vmem %s1, 240
  %v2568 = vld [vmem:[%s2567] sm:$0xff]
  %v2569 = vld [vmem:[%s2567 + $0x8] sm:$0xff]
  %v2570 = vld [vmem:[%s2567 + $0x10] sm:$0xff]
  %v2571 = vld [vmem:[%s2567 + $0x18] sm:$0xff]
  %v2572 = vld [vmem:[%s2567 + $0x20] sm:$0xff]
  %v2573 = vld [vmem:[%s2567 + $0x28] sm:$0xff]
  %v2574 = vld [vmem:[%s2567 + $0x30] sm:$0xff]
  %v2575 = vld [vmem:[%s2567 + $0x38] sm:$0xff]
  %v2576 = vld [vmem:[%s2567 + $0x40] sm:$0xff]
  %v2577 = vld [vmem:[%s2567 + $0x48] sm:$0xff]
  %v2578 = vld [vmem:[%s2567 + $0x50] sm:$0xff]
  %v2579 = vld [vmem:[%s2567 + $0x58] sm:$0xff]
  %v2580 = vld [vmem:[%s2567 + $0x60] sm:$0xff]
  %v2581 = vld [vmem:[%s2567 + $0x68] sm:$0xff]
  %v2582 = vld [vmem:[%s2567 + $0x70] sm:$0x11]
  %v2663 = vunpack.c.l.b16 %v2487
  %v2664 = vunpack.c.l.b16 %v2488
  %v2665 = vunpack.c.l.b16 %v2489
  %v2666 = vunpack.c.l.b16 %v2490
  %v2667 = vunpack.c.l.b16 %v2491
  %v2668 = vunpack.c.l.b16 %v2492
  %v2669 = vunpack.c.l.b16 %v2493
  %v2670 = vunpack.c.l.b16 %v2494
  %v2671 = vunpack.c.l.b16 %v2495
  %v2672 = vunpack.c.l.b16 %v2496
  %v2673 = vunpack.c.l.b16 %v2497
  %v2674 = vunpack.c.l.b16 %v2498
  %v2675 = vunpack.c.l.b16 %v2499
  %v2676 = vunpack.c.l.b16 %v2500
  %v2677 = vunpack.c.l.b16 %v2501
  %v2678 = vunpack.c.l.b16 %v2502
  %v2679 = vunpack.c.l.b16 %v2503
  %v2680 = vunpack.c.l.b16 %v2504
  %v2681 = vunpack.c.l.b16 %v2505
  %v2682 = vunpack.c.l.b16 %v2506
  %v2683 = vunpack.c.l.b16 %v2507
  %v2684 = vunpack.c.l.b16 %v2508
  %v2685 = vunpack.c.l.b16 %v2509
  %v2686 = vunpack.c.l.b16 %v2510
  %v2687 = vunpack.c.l.b16 %v2511
  %v2688 = vunpack.c.l.b16 %v2512
  %v2689 = vunpack.c.l.b16 %v2513
  %v2690 = vunpack.c.l.b16 %v2514
  %v2691 = vunpack.c.l.b16 %v2515
  %v2692 = vunpack.c.l.b16 %v2516
  %v2693 = vunpack.c.l.b16 %v2517
  %v2694 = vunpack.c.l.b16 %v2518
  %v2695 = vunpack.c.l.b16 %v2519
  %v2696 = vunpack.c.l.b16 %v2520
  %v2697 = vunpack.c.l.b16 %v2521
  %v2698 = vunpack.c.l.b16 %v2522
  %v2699 = vunpack.c.l.b16 %v2523
  %v2700 = vunpack.c.l.b16 %v2524
  %v2701 = vunpack.c.l.b16 %v2525
  %v2702 = vunpack.c.l.b16 %v2526
  %v2703 = vunpack.c.l.b16 %v2527
  %v2704 = vunpack.c.l.b16 %v2528
  %v2705 = vunpack.c.l.b16 %v2529
  %v2706 = vunpack.c.l.b16 %v2530
  %v2707 = vunpack.c.l.b16 %v2531
  %v2708 = vunpack.c.l.b16 %v2532
  %v2709 = vunpack.c.l.b16 %v2533
  %v2710 = vunpack.c.l.b16 %v2534
  %v2711 = vunpack.c.l.b16 %v2535
  %v2712 = vunpack.c.l.b16 %v2536
  %v2713 = vunpack.c.l.b16 %v2537
  %v2714 = vunpack.c.l.b16 %v2538
  %v2715 = vunpack.c.l.b16 %v2539
  %v2716 = vunpack.c.l.b16 %v2540
  %v2717 = vunpack.c.l.b16 %v2541
  %v2718 = vunpack.c.l.b16 %v2542
  %v2719 = vunpack.c.l.b16 %v2543
  %v2720 = vunpack.c.l.b16 %v2544
  %v2721 = vunpack.c.l.b16 %v2545
  %v2722 = vunpack.c.l.b16 %v2546
  %v2723 = vunpack.c.l.b16 %v2547
  %v2724 = vunpack.c.l.b16 %v2548
  %v2725 = vunpack.c.l.b16 %v2549
  %v2726 = vunpack.c.l.b16 %v2550
  %v2727 = vunpack.c.l.b16 %v2551
  %v2728 = vunpack.c.l.b16 %v2552
  %v2729 = vunpack.c.l.b16 %v2553
  %v2730 = vunpack.c.l.b16 %v2554
  %v2731 = vunpack.c.l.b16 %v2555
  %v2732 = vunpack.c.l.b16 %v2556
  %v2733 = vunpack.c.l.b16 %v2557
  %v2734 = vunpack.c.l.b16 %v2558
  %v2735 = vunpack.c.l.b16 %v2559
  %v2736 = vunpack.c.l.b16 %v2560
  %v2737 = vunpack.c.l.b16 %v2561
  %v2738 = vunpack.c.l.b16 %v2562
  %v2739 = vunpack.c.l.b16 %v2563
  %v2740 = vunpack.c.l.b16 %v2564
  %v2741 = vunpack.c.l.b16 %v2565
  %v2742 = vunpack.c.l.b16 %v2566
  %v2743 = vpack.c.b16 %v2664, %v2663
  %v2744 = vpack.c.b16 %v2666, %v2665
  %v2745 = vpack.c.b16 %v2668, %v2667
  %v2746 = vpack.c.b16 %v2670, %v2669
  %v2747 = vpack.c.b16 %v2672, %v2671
  %v2748 = vpack.c.b16 %v2674, %v2673
  %v2749 = vpack.c.b16 %v2676, %v2675
  %v2750 = vpack.c.b16 %v2678, %v2677
  %v2751 = vpack.c.b16 %v2680, %v2679
  %v2752 = vpack.c.b16 %v2682, %v2681
  %v2753 = vpack.c.b16 %v2684, %v2683
  %v2754 = vpack.c.b16 %v2686, %v2685
  %v2755 = vpack.c.b16 %v2688, %v2687
  %v2756 = vpack.c.b16 %v2690, %v2689
  %v2757 = vpack.c.b16 %v2692, %v2691
  %v2758 = vpack.c.b16 %v2694, %v2693
  %v2759 = vpack.c.b16 %v2696, %v2695
  %v2760 = vpack.c.b16 %v2698, %v2697
  %v2761 = vpack.c.b16 %v2700, %v2699
  %v2762 = vpack.c.b16 %v2702, %v2701
  %v2763 = vpack.c.b16 %v2704, %v2703
  %v2764 = vpack.c.b16 %v2706, %v2705
  %v2765 = vpack.c.b16 %v2708, %v2707
  %v2766 = vpack.c.b16 %v2710, %v2709
  %v2767 = vpack.c.b16 %v2712, %v2711
  %v2768 = vpack.c.b16 %v2714, %v2713
  %v2769 = vpack.c.b16 %v2716, %v2715
  %v2770 = vpack.c.b16 %v2718, %v2717
  %v2771 = vpack.c.b16 %v2720, %v2719
  %v2772 = vpack.c.b16 %v2722, %v2721
  %v2773 = vpack.c.b16 %v2724, %v2723
  %v2774 = vpack.c.b16 %v2726, %v2725
  %v2775 = vpack.c.b16 %v2728, %v2727
  %v2776 = vpack.c.b16 %v2730, %v2729
  %v2777 = vpack.c.b16 %v2732, %v2731
  %v2778 = vpack.c.b16 %v2734, %v2733
  %v2779 = vpack.c.b16 %v2736, %v2735
  %v2780 = vpack.c.b16 %v2738, %v2737
  %v2781 = vpack.c.b16 %v2740, %v2739
  %v2782 = vpack.c.b16 %v2742, %v2741
  %v2798 = vunpack.c.l.b16 %v2568
  %v2799 = vunpack.c.h.b16 %v2568
  %v2800 = vunpack.c.l.b16 %v2569
  %v2801 = vunpack.c.h.b16 %v2569
  %v2802 = vunpack.c.l.b16 %v2570
  %v2803 = vunpack.c.h.b16 %v2570
  %v2804 = vunpack.c.l.b16 %v2571
  %v2805 = vunpack.c.h.b16 %v2571
  %v2806 = vunpack.c.l.b16 %v2572
  %v2807 = vunpack.c.h.b16 %v2572
  %v2808 = vunpack.c.l.b16 %v2573
  %v2809 = vunpack.c.h.b16 %v2573
  %v2810 = vunpack.c.l.b16 %v2574
  %v2811 = vunpack.c.h.b16 %v2574
  %v2812 = vunpack.c.l.b16 %v2575
  %v2813 = vunpack.c.h.b16 %v2575
  %v2814 = vunpack.c.l.b16 %v2576
  %v2815 = vunpack.c.h.b16 %v2576
  %v2816 = vunpack.c.l.b16 %v2577
  %v2817 = vunpack.c.h.b16 %v2577
  %v2818 = vunpack.c.l.b16 %v2578
  %v2819 = vunpack.c.h.b16 %v2578
  %v2820 = vunpack.c.l.b16 %v2579
  %v2821 = vunpack.c.h.b16 %v2579
  %v2822 = vunpack.c.l.b16 %v2580
  %v2823 = vunpack.c.h.b16 %v2580
  %v2824 = vunpack.c.l.b16 %v2581
  %v2825 = vunpack.c.h.b16 %v2581
  %v2826 = vunpack.c.l.b16 %v2582
  %v2827 = vunpack.c.h.b16 %v2582
  %v2828 = vpack.c.b16 %v2800, %v2798
  %v2829 = vpack.c.b16 %v2801, %v2799
  %v2830 = vpack.c.b16 %v2804, %v2802
  %v2831 = vpack.c.b16 %v2805, %v2803
  %v2832 = vpack.c.b16 %v2808, %v2806
  %v2833 = vpack.c.b16 %v2809, %v2807
  %v2834 = vpack.c.b16 %v2812, %v2810
  %v2835 = vpack.c.b16 %v2813, %v2811
  %v2836 = vpack.c.b16 %v2816, %v2814
  %v2837 = vpack.c.b16 %v2817, %v2815
  %v2838 = vpack.c.b16 %v2820, %v2818
  %v2839 = vpack.c.b16 %v2821, %v2819
  %v2840 = vpack.c.b16 %v2824, %v2822
  %v2841 = vpack.c.b16 %v2825, %v2823
  %v2842 = vpack.c.b16 %v2826, %v2826
  %v2843 = vpack.c.b16 %v2827, %v2827
  %v2859 = vsel %vm384, %v2743, 0
  %v2862 = vsel %vm384, %v2744, 0
  %v2865 = vsel %vm384, %v2745, 0
  %v2868 = vsel %vm384, %v2746, 0
  %v2871 = vsel %vm384, %v2747, 0
  %v2874 = vsel %vm384, %v2748, 0
  %v2877 = vsel %vm384, %v2749, 0
  %v2880 = vsel %vm384, %v2750, 0
  %v2883 = vsel %vm384, %v2751, 0
  %v2886 = vsel %vm384, %v2752, 0
  %v2889 = vsel %vm384, %v2753, 0
  %v2892 = vsel %vm384, %v2754, 0
  %v2895 = vsel %vm384, %v2755, 0
  %v2898 = vsel %vm384, %v2756, 0
  %v2901 = vsel %vm384, %v2757, 0
  %v2904 = vsel %vm384, %v2758, 0
  %v2907 = vsel %vm384, %v2759, 0
  %v2910 = vsel %vm384, %v2760, 0
  %v2913 = vsel %vm384, %v2761, 0
  %v2916 = vsel %vm384, %v2762, 0
  %v2919 = vsel %vm384, %v2763, 0
  %v2922 = vsel %vm384, %v2764, 0
  %v2925 = vsel %vm384, %v2765, 0
  %v2928 = vsel %vm384, %v2766, 0
  %v2931 = vsel %vm384, %v2767, 0
  %v2934 = vsel %vm384, %v2768, 0
  %v2937 = vsel %vm384, %v2769, 0
  %v2940 = vsel %vm384, %v2770, 0
  %v2943 = vsel %vm384, %v2771, 0
  %v2946 = vsel %vm384, %v2772, 0
  %v2949 = vsel %vm384, %v2773, 0
  %v2952 = vsel %vm384, %v2774, 0
  %v2955 = vsel %vm384, %v2775, 0
  %v2958 = vsel %vm384, %v2776, 0
  %v2961 = vsel %vm384, %v2777, 0
  %v2964 = vsel %vm384, %v2778, 0
  %v2967 = vsel %vm384, %v2779, 0
  %v2970 = vsel %vm384, %v2780, 0
  %v2973 = vsel %vm384, %v2781, 0
  %v2976 = vsel %vm384, %v2782, 0
  %v2979 = vsel %vm505, %v2842, 0
  %v2982 = vsel %vm505, %v2843, 0
  %2984 = vmatpush.bf16.msra.mxu0 %v2979
  %2985 = vmatpush.bf16.msra.mxu0 %v2840
  %2986 = vmatpush.bf16.msra.mxu0 %v2838
  %2987 = vmatpush.bf16.msra.mxu0 %v2836
  %2988 = vmatpush.bf16.msra.mxu0 %v2834
  %2989 = vmatpush.bf16.msra.mxu0 %v2832
  %2990 = vmatpush.bf16.msra.mxu0 %v2830
  %2991 = vmatpush.bf16.msra.mxu0 %v2828
  %2992 = vmatmul.bf16.gmra.mxu0 %v2859
  %v2993 = vpop.f32.mrf.mxu0
  %v2994 = vadd.f32 0.0, %v2993
  %v2995 = vpop.f32.mrf.mxu0
  %v2996 = vadd.f32 0.0, %v2995
  %2997 = vmatmul.bf16.gmra.mxu0 %v2862
  %v2998 = vpop.f32.mrf.mxu0
  %v2999 = vadd.f32 0.0, %v2998
  %v3000 = vpop.f32.mrf.mxu0
  %v3001 = vadd.f32 0.0, %v3000
  %3002 = vmatmul.bf16.gmra.mxu0 %v2865
  %v3003 = vpop.f32.mrf.mxu0
  %v3004 = vadd.f32 0.0, %v3003
  %v3005 = vpop.f32.mrf.mxu0
  %v3006 = vadd.f32 0.0, %v3005
  %3007 = vmatmul.bf16.gmra.mxu0 %v2868
  %v3008 = vpop.f32.mrf.mxu0
  %v3009 = vadd.f32 0.0, %v3008
  %v3010 = vpop.f32.mrf.mxu0
  %v3011 = vadd.f32 0.0, %v3010
  %3012 = vmatmul.bf16.gmra.mxu0 %v2871
  %v3013 = vpop.f32.mrf.mxu0
  %v3014 = vadd.f32 0.0, %v3013
  %v3015 = vpop.f32.mrf.mxu0
  %v3016 = vadd.f32 0.0, %v3015
  %3017 = vmatmul.bf16.gmra.mxu0 %v2874
  %v3018 = vpop.f32.mrf.mxu0
  %v3019 = vadd.f32 0.0, %v3018
  %v3020 = vpop.f32.mrf.mxu0
  %v3021 = vadd.f32 0.0, %v3020
  %3022 = vmatmul.bf16.gmra.mxu0 %v2877
  %v3023 = vpop.f32.mrf.mxu0
  %v3024 = vadd.f32 0.0, %v3023
  %v3025 = vpop.f32.mrf.mxu0
  %v3026 = vadd.f32 0.0, %v3025
  %3027 = vmatmul.bf16.gmra.mxu0 %v2880
  %v3028 = vpop.f32.mrf.mxu0
  %v3029 = vadd.f32 0.0, %v3028
  %v3030 = vpop.f32.mrf.mxu0
  %v3031 = vadd.f32 0.0, %v3030
  %3032 = vmatmul.bf16.gmra.mxu0 %v2883
  %v3033 = vpop.f32.mrf.mxu0
  %v3034 = vadd.f32 0.0, %v3033
  %v3035 = vpop.f32.mrf.mxu0
  %v3036 = vadd.f32 0.0, %v3035
  %3037 = vmatmul.bf16.gmra.mxu0 %v2886
  %v3038 = vpop.f32.mrf.mxu0
  %v3039 = vadd.f32 0.0, %v3038
  %v3040 = vpop.f32.mrf.mxu0
  %v3041 = vadd.f32 0.0, %v3040
  %3042 = vmatmul.bf16.gmra.mxu0 %v2889
  %v3043 = vpop.f32.mrf.mxu0
  %v3044 = vadd.f32 0.0, %v3043
  %v3045 = vpop.f32.mrf.mxu0
  %v3046 = vadd.f32 0.0, %v3045
  %3047 = vmatmul.bf16.gmra.mxu0 %v2892
  %v3048 = vpop.f32.mrf.mxu0
  %v3049 = vadd.f32 0.0, %v3048
  %v3050 = vpop.f32.mrf.mxu0
  %v3051 = vadd.f32 0.0, %v3050
  %3052 = vmatmul.bf16.gmra.mxu0 %v2895
  %v3053 = vpop.f32.mrf.mxu0
  %v3054 = vadd.f32 0.0, %v3053
  %v3055 = vpop.f32.mrf.mxu0
  %v3056 = vadd.f32 0.0, %v3055
  %3057 = vmatmul.bf16.gmra.mxu0 %v2898
  %v3058 = vpop.f32.mrf.mxu0
  %v3059 = vadd.f32 0.0, %v3058
  %v3060 = vpop.f32.mrf.mxu0
  %v3061 = vadd.f32 0.0, %v3060
  %3062 = vmatmul.bf16.gmra.mxu0 %v2901
  %v3063 = vpop.f32.mrf.mxu0
  %v3064 = vadd.f32 0.0, %v3063
  %v3065 = vpop.f32.mrf.mxu0
  %v3066 = vadd.f32 0.0, %v3065
  %3067 = vmatmul.bf16.gmra.mxu0 %v2904
  %v3068 = vpop.f32.mrf.mxu0
  %v3069 = vadd.f32 0.0, %v3068
  %v3070 = vpop.f32.mrf.mxu0
  %v3071 = vadd.f32 0.0, %v3070
  %3072 = vmatmul.bf16.gmra.mxu0 %v2907
  %v3073 = vpop.f32.mrf.mxu0
  %v3074 = vadd.f32 0.0, %v3073
  %v3075 = vpop.f32.mrf.mxu0
  %v3076 = vadd.f32 0.0, %v3075
  %3077 = vmatmul.bf16.gmra.mxu0 %v2910
  %v3078 = vpop.f32.mrf.mxu0
  %v3079 = vadd.f32 0.0, %v3078
  %v3080 = vpop.f32.mrf.mxu0
  %v3081 = vadd.f32 0.0, %v3080
  %3082 = vmatmul.bf16.gmra.mxu0 %v2913
  %v3083 = vpop.f32.mrf.mxu0
  %v3084 = vadd.f32 0.0, %v3083
  %v3085 = vpop.f32.mrf.mxu0
  %v3086 = vadd.f32 0.0, %v3085
  %3087 = vmatmul.bf16.gmra.mxu0 %v2916
  %v3088 = vpop.f32.mrf.mxu0
  %v3089 = vadd.f32 0.0, %v3088
  %v3090 = vpop.f32.mrf.mxu0
  %v3091 = vadd.f32 0.0, %v3090
  %3092 = vmatmul.bf16.gmra.mxu0 %v2919
  %v3093 = vpop.f32.mrf.mxu0
  %v3094 = vadd.f32 0.0, %v3093
  %v3095 = vpop.f32.mrf.mxu0
  %v3096 = vadd.f32 0.0, %v3095
  %3097 = vmatmul.bf16.gmra.mxu0 %v2922
  %v3098 = vpop.f32.mrf.mxu0
  %v3099 = vadd.f32 0.0, %v3098
  %v3100 = vpop.f32.mrf.mxu0
  %v3101 = vadd.f32 0.0, %v3100
  %3102 = vmatmul.bf16.gmra.mxu0 %v2925
  %v3103 = vpop.f32.mrf.mxu0
  %v3104 = vadd.f32 0.0, %v3103
  %v3105 = vpop.f32.mrf.mxu0
  %v3106 = vadd.f32 0.0, %v3105
  %3107 = vmatmul.bf16.gmra.mxu0 %v2928
  %v3108 = vpop.f32.mrf.mxu0
  %v3109 = vadd.f32 0.0, %v3108
  %v3110 = vpop.f32.mrf.mxu0
  %v3111 = vadd.f32 0.0, %v3110
  %3112 = vmatmul.bf16.gmra.mxu0 %v2931
  %v3113 = vpop.f32.mrf.mxu0
  %v3114 = vadd.f32 0.0, %v3113
  %v3115 = vpop.f32.mrf.mxu0
  %v3116 = vadd.f32 0.0, %v3115
  %3117 = vmatmul.bf16.gmra.mxu0 %v2934
  %v3118 = vpop.f32.mrf.mxu0
  %v3119 = vadd.f32 0.0, %v3118
  %v3120 = vpop.f32.mrf.mxu0
  %v3121 = vadd.f32 0.0, %v3120
  %3122 = vmatmul.bf16.gmra.mxu0 %v2937
  %v3123 = vpop.f32.mrf.mxu0
  %v3124 = vadd.f32 0.0, %v3123
  %v3125 = vpop.f32.mrf.mxu0
  %v3126 = vadd.f32 0.0, %v3125
  %3127 = vmatmul.bf16.gmra.mxu0 %v2940
  %v3128 = vpop.f32.mrf.mxu0
  %v3129 = vadd.f32 0.0, %v3128
  %v3130 = vpop.f32.mrf.mxu0
  %v3131 = vadd.f32 0.0, %v3130
  %3132 = vmatmul.bf16.gmra.mxu0 %v2943
  %v3133 = vpop.f32.mrf.mxu0
  %v3134 = vadd.f32 0.0, %v3133
  %v3135 = vpop.f32.mrf.mxu0
  %v3136 = vadd.f32 0.0, %v3135
  %3137 = vmatmul.bf16.gmra.mxu0 %v2946
  %v3138 = vpop.f32.mrf.mxu0
  %v3139 = vadd.f32 0.0, %v3138
  %v3140 = vpop.f32.mrf.mxu0
  %v3141 = vadd.f32 0.0, %v3140
  %3142 = vmatmul.bf16.gmra.mxu0 %v2949
  %v3143 = vpop.f32.mrf.mxu0
  %v3144 = vadd.f32 0.0, %v3143
  %v3145 = vpop.f32.mrf.mxu0
  %v3146 = vadd.f32 0.0, %v3145
  %3147 = vmatmul.bf16.gmra.mxu0 %v2952
  %v3148 = vpop.f32.mrf.mxu0
  %v3149 = vadd.f32 0.0, %v3148
  %v3150 = vpop.f32.mrf.mxu0
  %v3151 = vadd.f32 0.0, %v3150
  %3152 = vmatmul.bf16.gmra.mxu0 %v2955
  %v3153 = vpop.f32.mrf.mxu0
  %v3154 = vadd.f32 0.0, %v3153
  %v3155 = vpop.f32.mrf.mxu0
  %v3156 = vadd.f32 0.0, %v3155
  %3157 = vmatmul.bf16.gmra.mxu0 %v2958
  %v3158 = vpop.f32.mrf.mxu0
  %v3159 = vadd.f32 0.0, %v3158
  %v3160 = vpop.f32.mrf.mxu0
  %v3161 = vadd.f32 0.0, %v3160
  %3162 = vmatmul.bf16.gmra.mxu0 %v2961
  %v3163 = vpop.f32.mrf.mxu0
  %v3164 = vadd.f32 0.0, %v3163
  %v3165 = vpop.f32.mrf.mxu0
  %v3166 = vadd.f32 0.0, %v3165
  %3167 = vmatmul.bf16.gmra.mxu0 %v2964
  %v3168 = vpop.f32.mrf.mxu0
  %v3169 = vadd.f32 0.0, %v3168
  %v3170 = vpop.f32.mrf.mxu0
  %v3171 = vadd.f32 0.0, %v3170
  %3172 = vmatmul.bf16.gmra.mxu0 %v2967
  %v3173 = vpop.f32.mrf.mxu0
  %v3174 = vadd.f32 0.0, %v3173
  %v3175 = vpop.f32.mrf.mxu0
  %v3176 = vadd.f32 0.0, %v3175
  %3177 = vmatmul.bf16.gmra.mxu0 %v2970
  %v3178 = vpop.f32.mrf.mxu0
  %v3179 = vadd.f32 0.0, %v3178
  %v3180 = vpop.f32.mrf.mxu0
  %v3181 = vadd.f32 0.0, %v3180
  %3182 = vmatmul.bf16.gmra.mxu0 %v2973
  %v3183 = vpop.f32.mrf.mxu0
  %v3184 = vadd.f32 0.0, %v3183
  %v3185 = vpop.f32.mrf.mxu0
  %v3186 = vadd.f32 0.0, %v3185
  %3187 = vmatmul.bf16.gmra.mxu0 %v2976
  %v3188 = vpop.f32.mrf.mxu0
  %v3189 = vadd.f32 0.0, %v3188
  %v3190 = vpop.f32.mrf.mxu0
  %v3191 = vadd.f32 0.0, %v3190
  %3192 = vdwg.mxu0
  %3193 = vmatpush.bf16.msra.mxu0 %v2982
  %3194 = vmatpush.bf16.msra.mxu0 %v2841
  %3195 = vmatpush.bf16.msra.mxu0 %v2839
  %3196 = vmatpush.bf16.msra.mxu0 %v2837
  %3197 = vmatpush.bf16.msra.mxu0 %v2835
  %3198 = vmatpush.bf16.msra.mxu0 %v2833
  %3199 = vmatpush.bf16.msra.mxu0 %v2831
  %3200 = vmatpush.bf16.msra.mxu0 %v2829
  %3201 = vmatmul.bf16.gmra.mxu0 %v2859
  %v3202 = vpop.f32.mrf.mxu0
  %v3203 = vadd.f32 0.0, %v3202
  %v3204 = vpop.f32.mrf.mxu0
  %v3205 = vadd.f32 0.0, %v3204
  %3206 = vmatmul.bf16.gmra.mxu0 %v2862
  %v3207 = vpop.f32.mrf.mxu0
  %v3208 = vadd.f32 0.0, %v3207
  %v3209 = vpop.f32.mrf.mxu0
  %v3210 = vadd.f32 0.0, %v3209
  %3211 = vmatmul.bf16.gmra.mxu0 %v2865
  %v3212 = vpop.f32.mrf.mxu0
  %v3213 = vadd.f32 0.0, %v3212
  %v3214 = vpop.f32.mrf.mxu0
  %v3215 = vadd.f32 0.0, %v3214
  %3216 = vmatmul.bf16.gmra.mxu0 %v2868
  %v3217 = vpop.f32.mrf.mxu0
  %v3218 = vadd.f32 0.0, %v3217
  %v3219 = vpop.f32.mrf.mxu0
  %v3220 = vadd.f32 0.0, %v3219
  %3221 = vmatmul.bf16.gmra.mxu0 %v2871
  %v3222 = vpop.f32.mrf.mxu0
  %v3223 = vadd.f32 0.0, %v3222
  %v3224 = vpop.f32.mrf.mxu0
  %v3225 = vadd.f32 0.0, %v3224
  %3226 = vmatmul.bf16.gmra.mxu0 %v2874
  %v3227 = vpop.f32.mrf.mxu0
  %v3228 = vadd.f32 0.0, %v3227
  %v3229 = vpop.f32.mrf.mxu0
  %v3230 = vadd.f32 0.0, %v3229
  %3231 = vmatmul.bf16.gmra.mxu0 %v2877
  %v3232 = vpop.f32.mrf.mxu0
  %v3233 = vadd.f32 0.0, %v3232
  %v3234 = vpop.f32.mrf.mxu0
  %v3235 = vadd.f32 0.0, %v3234
  %3236 = vmatmul.bf16.gmra.mxu0 %v2880
  %v3237 = vpop.f32.mrf.mxu0
  %v3238 = vadd.f32 0.0, %v3237
  %v3239 = vpop.f32.mrf.mxu0
  %v3240 = vadd.f32 0.0, %v3239
  %3241 = vmatmul.bf16.gmra.mxu0 %v2883
  %v3242 = vpop.f32.mrf.mxu0
  %v3243 = vadd.f32 0.0, %v3242
  %v3244 = vpop.f32.mrf.mxu0
  %v3245 = vadd.f32 0.0, %v3244
  %3246 = vmatmul.bf16.gmra.mxu0 %v2886
  %v3247 = vpop.f32.mrf.mxu0
  %v3248 = vadd.f32 0.0, %v3247
  %v3249 = vpop.f32.mrf.mxu0
  %v3250 = vadd.f32 0.0, %v3249
  %3251 = vmatmul.bf16.gmra.mxu0 %v2889
  %v3252 = vpop.f32.mrf.mxu0
  %v3253 = vadd.f32 0.0, %v3252
  %v3254 = vpop.f32.mrf.mxu0
  %v3255 = vadd.f32 0.0, %v3254
  %3256 = vmatmul.bf16.gmra.mxu0 %v2892
  %v3257 = vpop.f32.mrf.mxu0
  %v3258 = vadd.f32 0.0, %v3257
  %v3259 = vpop.f32.mrf.mxu0
  %v3260 = vadd.f32 0.0, %v3259
  %3261 = vmatmul.bf16.gmra.mxu0 %v2895
  %v3262 = vpop.f32.mrf.mxu0
  %v3263 = vadd.f32 0.0, %v3262
  %v3264 = vpop.f32.mrf.mxu0
  %v3265 = vadd.f32 0.0, %v3264
  %3266 = vmatmul.bf16.gmra.mxu0 %v2898
  %v3267 = vpop.f32.mrf.mxu0
  %v3268 = vadd.f32 0.0, %v3267
  %v3269 = vpop.f32.mrf.mxu0
  %v3270 = vadd.f32 0.0, %v3269
  %3271 = vmatmul.bf16.gmra.mxu0 %v2901
  %v3272 = vpop.f32.mrf.mxu0
  %v3273 = vadd.f32 0.0, %v3272
  %v3274 = vpop.f32.mrf.mxu0
  %v3275 = vadd.f32 0.0, %v3274
  %3276 = vmatmul.bf16.gmra.mxu0 %v2904
  %v3277 = vpop.f32.mrf.mxu0
  %v3278 = vadd.f32 0.0, %v3277
  %v3279 = vpop.f32.mrf.mxu0
  %v3280 = vadd.f32 0.0, %v3279
  %3281 = vmatmul.bf16.gmra.mxu0 %v2907
  %v3282 = vpop.f32.mrf.mxu0
  %v3283 = vadd.f32 0.0, %v3282
  %v3284 = vpop.f32.mrf.mxu0
  %v3285 = vadd.f32 0.0, %v3284
  %3286 = vmatmul.bf16.gmra.mxu0 %v2910
  %v3287 = vpop.f32.mrf.mxu0
  %v3288 = vadd.f32 0.0, %v3287
  %v3289 = vpop.f32.mrf.mxu0
  %v3290 = vadd.f32 0.0, %v3289
  %3291 = vmatmul.bf16.gmra.mxu0 %v2913
  %v3292 = vpop.f32.mrf.mxu0
  %v3293 = vadd.f32 0.0, %v3292
  %v3294 = vpop.f32.mrf.mxu0
  %v3295 = vadd.f32 0.0, %v3294
  %3296 = vmatmul.bf16.gmra.mxu0 %v2916
  %v3297 = vpop.f32.mrf.mxu0
  %v3298 = vadd.f32 0.0, %v3297
  %v3299 = vpop.f32.mrf.mxu0
  %v3300 = vadd.f32 0.0, %v3299
  %3301 = vmatmul.bf16.gmra.mxu0 %v2919
  %v3302 = vpop.f32.mrf.mxu0
  %v3303 = vadd.f32 0.0, %v3302
  %v3304 = vpop.f32.mrf.mxu0
  %v3305 = vadd.f32 0.0, %v3304
  %3306 = vmatmul.bf16.gmra.mxu0 %v2922
  %v3307 = vpop.f32.mrf.mxu0
  %v3308 = vadd.f32 0.0, %v3307
  %v3309 = vpop.f32.mrf.mxu0
  %v3310 = vadd.f32 0.0, %v3309
  %3311 = vmatmul.bf16.gmra.mxu0 %v2925
  %v3312 = vpop.f32.mrf.mxu0
  %v3313 = vadd.f32 0.0, %v3312
  %v3314 = vpop.f32.mrf.mxu0
  %v3315 = vadd.f32 0.0, %v3314
  %3316 = vmatmul.bf16.gmra.mxu0 %v2928
  %v3317 = vpop.f32.mrf.mxu0
  %v3318 = vadd.f32 0.0, %v3317
  %v3319 = vpop.f32.mrf.mxu0
  %v3320 = vadd.f32 0.0, %v3319
  %3321 = vmatmul.bf16.gmra.mxu0 %v2931
  %v3322 = vpop.f32.mrf.mxu0
  %v3323 = vadd.f32 0.0, %v3322
  %v3324 = vpop.f32.mrf.mxu0
  %v3325 = vadd.f32 0.0, %v3324
  %3326 = vmatmul.bf16.gmra.mxu0 %v2934
  %v3327 = vpop.f32.mrf.mxu0
  %v3328 = vadd.f32 0.0, %v3327
  %v3329 = vpop.f32.mrf.mxu0
  %v3330 = vadd.f32 0.0, %v3329
  %3331 = vmatmul.bf16.gmra.mxu0 %v2937
  %v3332 = vpop.f32.mrf.mxu0
  %v3333 = vadd.f32 0.0, %v3332
  %v3334 = vpop.f32.mrf.mxu0
  %v3335 = vadd.f32 0.0, %v3334
  %3336 = vmatmul.bf16.gmra.mxu0 %v2940
  %v3337 = vpop.f32.mrf.mxu0
  %v3338 = vadd.f32 0.0, %v3337
  %v3339 = vpop.f32.mrf.mxu0
  %v3340 = vadd.f32 0.0, %v3339
  %3341 = vmatmul.bf16.gmra.mxu0 %v2943
  %v3342 = vpop.f32.mrf.mxu0
  %v3343 = vadd.f32 0.0, %v3342
  %v3344 = vpop.f32.mrf.mxu0
  %v3345 = vadd.f32 0.0, %v3344
  %3346 = vmatmul.bf16.gmra.mxu0 %v2946
  %v3347 = vpop.f32.mrf.mxu0
  %v3348 = vadd.f32 0.0, %v3347
  %v3349 = vpop.f32.mrf.mxu0
  %v3350 = vadd.f32 0.0, %v3349
  %3351 = vmatmul.bf16.gmra.mxu0 %v2949
  %v3352 = vpop.f32.mrf.mxu0
  %v3353 = vadd.f32 0.0, %v3352
  %v3354 = vpop.f32.mrf.mxu0
  %v3355 = vadd.f32 0.0, %v3354
  %3356 = vmatmul.bf16.gmra.mxu0 %v2952
  %v3357 = vpop.f32.mrf.mxu0
  %v3358 = vadd.f32 0.0, %v3357
  %v3359 = vpop.f32.mrf.mxu0
  %v3360 = vadd.f32 0.0, %v3359
  %3361 = vmatmul.bf16.gmra.mxu0 %v2955
  %v3362 = vpop.f32.mrf.mxu0
  %v3363 = vadd.f32 0.0, %v3362
  %v3364 = vpop.f32.mrf.mxu0
  %v3365 = vadd.f32 0.0, %v3364
  %3366 = vmatmul.bf16.gmra.mxu0 %v2958
  %v3367 = vpop.f32.mrf.mxu0
  %v3368 = vadd.f32 0.0, %v3367
  %v3369 = vpop.f32.mrf.mxu0
  %v3370 = vadd.f32 0.0, %v3369
  %3371 = vmatmul.bf16.gmra.mxu0 %v2961
  %v3372 = vpop.f32.mrf.mxu0
  %v3373 = vadd.f32 0.0, %v3372
  %v3374 = vpop.f32.mrf.mxu0
  %v3375 = vadd.f32 0.0, %v3374
  %3376 = vmatmul.bf16.gmra.mxu0 %v2964
  %v3377 = vpop.f32.mrf.mxu0
  %v3378 = vadd.f32 0.0, %v3377
  %v3379 = vpop.f32.mrf.mxu0
  %v3380 = vadd.f32 0.0, %v3379
  %3381 = vmatmul.bf16.gmra.mxu0 %v2967
  %v3382 = vpop.f32.mrf.mxu0
  %v3383 = vadd.f32 0.0, %v3382
  %v3384 = vpop.f32.mrf.mxu0
  %v3385 = vadd.f32 0.0, %v3384
  %3386 = vmatmul.bf16.gmra.mxu0 %v2970
  %v3387 = vpop.f32.mrf.mxu0
  %v3388 = vadd.f32 0.0, %v3387
  %v3389 = vpop.f32.mrf.mxu0
  %v3390 = vadd.f32 0.0, %v3389
  %3391 = vmatmul.bf16.gmra.mxu0 %v2973
  %v3392 = vpop.f32.mrf.mxu0
  %v3393 = vadd.f32 0.0, %v3392
  %v3394 = vpop.f32.mrf.mxu0
  %v3395 = vadd.f32 0.0, %v3394
  %3396 = vmatmul.bf16.gmra.mxu0 %v2976
  %v3397 = vpop.f32.mrf.mxu0
  %v3398 = vadd.f32 0.0, %v3397
  %v3399 = vpop.f32.mrf.mxu0
  %v3400 = vadd.f32 0.0, %v3399
  %3401 = vdwg.mxu0
  %v3402 = vld [vmem:[#allocation2] sm:$0xff]
  %v3403 = vld [vmem:[#allocation2 + $0x8] sm:$0xff]
  %v3404 = vld [vmem:[#allocation2 + $0x10] sm:$0xff]
  %v3405 = vld [vmem:[#allocation2 + $0x18] sm:$0xff]
  %v3406 = vld [vmem:[#allocation2 + $0x20] sm:$0xff]
  %v3407 = vld [vmem:[#allocation2 + $0x28] sm:$0xff]
  %v3408 = vld [vmem:[#allocation2 + $0x30] sm:$0xff]
  %v3409 = vld [vmem:[#allocation2 + $0x38] sm:$0xff]
  %v3410 = vld [vmem:[#allocation2 + $0x40] sm:$0xff]
  %v3411 = vld [vmem:[#allocation2 + $0x48] sm:$0xff]
  %v3412 = vld [vmem:[#allocation2 + $0x50] sm:$0xff]
  %v3413 = vld [vmem:[#allocation2 + $0x58] sm:$0xff]
  %v3414 = vld [vmem:[#allocation2 + $0x60] sm:$0xff]
  %v3415 = vld [vmem:[#allocation2 + $0x68] sm:$0xff]
  %v3416 = vld [vmem:[#allocation2 + $0x70] sm:$0xff]
  %v3417 = vld [vmem:[#allocation2 + $0x78] sm:$0xff]
  %v3418 = vld [vmem:[#allocation2 + $0x80] sm:$0xff]
  %v3419 = vld [vmem:[#allocation2 + $0x88] sm:$0xff]
  %v3420 = vld [vmem:[#allocation2 + $0x90] sm:$0xff]
  %v3421 = vld [vmem:[#allocation2 + $0x98] sm:$0xff]
  %v3422 = vld [vmem:[#allocation2 + $0xa0] sm:$0xff]
  %v3423 = vld [vmem:[#allocation2 + $0xa8] sm:$0xff]
  %v3424 = vld [vmem:[#allocation2 + $0xb0] sm:$0xff]
  %v3425 = vld [vmem:[#allocation2 + $0xb8] sm:$0xff]
  %v3426 = vld [vmem:[#allocation2 + $0xc0] sm:$0xff]
  %v3427 = vld [vmem:[#allocation2 + $0xc8] sm:$0xff]
  %v3428 = vld [vmem:[#allocation2 + $0xd0] sm:$0xff]
  %v3429 = vld [vmem:[#allocation2 + $0xd8] sm:$0xff]
  %v3430 = vld [vmem:[#allocation2 + $0xe0] sm:$0xff]
  %v3431 = vld [vmem:[#allocation2 + $0xe8] sm:$0xff]
  %v3432 = vld [vmem:[#allocation2 + $0xf0] sm:$0xff]
  %v3433 = vld [vmem:[#allocation2 + $0xf8] sm:$0xff]
  %v3434 = vld [vmem:[#allocation2 + $0x100] sm:$0xff]
  %v3435 = vld [vmem:[#allocation2 + $0x108] sm:$0xff]
  %v3436 = vld [vmem:[#allocation2 + $0x110] sm:$0xff]
  %v3437 = vld [vmem:[#allocation2 + $0x118] sm:$0xff]
  %v3438 = vld [vmem:[#allocation2 + $0x120] sm:$0xff]
  %v3439 = vld [vmem:[#allocation2 + $0x128] sm:$0xff]
  %v3440 = vld [vmem:[#allocation2 + $0x130] sm:$0xff]
  %v3441 = vld [vmem:[#allocation2 + $0x138] sm:$0xff]
  %v3442 = vld [vmem:[#allocation2 + $0x140] sm:$0xff]
  %v3443 = vld [vmem:[#allocation2 + $0x148] sm:$0xff]
  %v3444 = vld [vmem:[#allocation2 + $0x150] sm:$0xff]
  %v3445 = vld [vmem:[#allocation2 + $0x158] sm:$0xff]
  %v3446 = vld [vmem:[#allocation2 + $0x160] sm:$0xff]
  %v3447 = vld [vmem:[#allocation2 + $0x168] sm:$0xff]
  %v3448 = vld [vmem:[#allocation2 + $0x170] sm:$0xff]
  %v3449 = vld [vmem:[#allocation2 + $0x178] sm:$0xff]
  %v3450 = vld [vmem:[#allocation2 + $0x180] sm:$0xff]
  %v3451 = vld [vmem:[#allocation2 + $0x188] sm:$0xff]
  %v3452 = vld [vmem:[#allocation2 + $0x190] sm:$0xff]
  %v3453 = vld [vmem:[#allocation2 + $0x198] sm:$0xff]
  %v3454 = vld [vmem:[#allocation2 + $0x1a0] sm:$0xff]
  %v3455 = vld [vmem:[#allocation2 + $0x1a8] sm:$0xff]
  %v3456 = vld [vmem:[#allocation2 + $0x1b0] sm:$0xff]
  %v3457 = vld [vmem:[#allocation2 + $0x1b8] sm:$0xff]
  %v3458 = vld [vmem:[#allocation2 + $0x1c0] sm:$0xff]
  %v3459 = vld [vmem:[#allocation2 + $0x1c8] sm:$0xff]
  %v3460 = vld [vmem:[#allocation2 + $0x1d0] sm:$0xff]
  %v3461 = vld [vmem:[#allocation2 + $0x1d8] sm:$0xff]
  %v3462 = vld [vmem:[#allocation2 + $0x1e0] sm:$0xff]
  %v3463 = vld [vmem:[#allocation2 + $0x1e8] sm:$0xff]
  %v3464 = vld [vmem:[#allocation2 + $0x1f0] sm:$0xff]
  %v3465 = vld [vmem:[#allocation2 + $0x1f8] sm:$0xff]
  %v3466 = vld [vmem:[#allocation2 + $0x200] sm:$0xff]
  %v3467 = vld [vmem:[#allocation2 + $0x208] sm:$0xff]
  %v3468 = vld [vmem:[#allocation2 + $0x210] sm:$0xff]
  %v3469 = vld [vmem:[#allocation2 + $0x218] sm:$0xff]
  %v3470 = vld [vmem:[#allocation2 + $0x220] sm:$0xff]
  %v3471 = vld [vmem:[#allocation2 + $0x228] sm:$0xff]
  %v3472 = vld [vmem:[#allocation2 + $0x230] sm:$0xff]
  %v3473 = vld [vmem:[#allocation2 + $0x238] sm:$0xff]
  %v3474 = vld [vmem:[#allocation2 + $0x240] sm:$0xff]
  %v3475 = vld [vmem:[#allocation2 + $0x248] sm:$0xff]
  %v3476 = vld [vmem:[#allocation2 + $0x250] sm:$0xff]
  %v3477 = vld [vmem:[#allocation2 + $0x258] sm:$0xff]
  %v3478 = vld [vmem:[#allocation2 + $0x260] sm:$0xff]
  %v3479 = vld [vmem:[#allocation2 + $0x268] sm:$0xff]
  %v3480 = vld [vmem:[#allocation2 + $0x270] sm:$0xff]
  %v3481 = vld [vmem:[#allocation2 + $0x278] sm:$0xff]
  %v3482 = vld [vmem:[#allocation2 + $0x280] sm:$0xff]
  %v3483 = vld [vmem:[#allocation2 + $0x288] sm:$0xff]
  %v3484 = vld [vmem:[#allocation2 + $0x290] sm:$0xff]
  %v3485 = vld [vmem:[#allocation2 + $0x298] sm:$0xff]
  %v3486 = vld [vmem:[#allocation2 + $0x2a0] sm:$0xff]
  %v3487 = vld [vmem:[#allocation2 + $0x2a8] sm:$0xff]
  %v3488 = vld [vmem:[#allocation2 + $0x2b0] sm:$0xff]
  %v3489 = vld [vmem:[#allocation2 + $0x2b8] sm:$0xff]
  %v3490 = vld [vmem:[#allocation2 + $0x2c0] sm:$0xff]
  %v3491 = vld [vmem:[#allocation2 + $0x2c8] sm:$0xff]
  %v3492 = vld [vmem:[#allocation2 + $0x2d0] sm:$0xff]
  %v3493 = vld [vmem:[#allocation2 + $0x2d8] sm:$0xff]
  %v3494 = vld [vmem:[#allocation2 + $0x2e0] sm:$0xff]
  %v3495 = vld [vmem:[#allocation2 + $0x2e8] sm:$0xff]
  %v3496 = vld [vmem:[#allocation2 + $0x2f0] sm:$0xff]
  %v3497 = vld [vmem:[#allocation2 + $0x2f8] sm:$0xff]
  %v3498 = vld [vmem:[#allocation2 + $0x300] sm:$0xff]
  %v3499 = vld [vmem:[#allocation2 + $0x308] sm:$0xff]
  %v3500 = vld [vmem:[#allocation2 + $0x310] sm:$0xff]
  %v3501 = vld [vmem:[#allocation2 + $0x318] sm:$0xff]
  %v3502 = vld [vmem:[#allocation2 + $0x320] sm:$0xff]
  %v3503 = vld [vmem:[#allocation2 + $0x328] sm:$0xff]
  %v3504 = vld [vmem:[#allocation2 + $0x330] sm:$0xff]
  %v3505 = vld [vmem:[#allocation2 + $0x338] sm:$0xff]
  %v3506 = vld [vmem:[#allocation2 + $0x340] sm:$0xff]
  %v3507 = vld [vmem:[#allocation2 + $0x348] sm:$0xff]
  %v3508 = vld [vmem:[#allocation2 + $0x350] sm:$0xff]
  %v3509 = vld [vmem:[#allocation2 + $0x358] sm:$0xff]
  %v3510 = vld [vmem:[#allocation2 + $0x360] sm:$0xff]
  %v3511 = vld [vmem:[#allocation2 + $0x368] sm:$0xff]
  %v3512 = vld [vmem:[#allocation2 + $0x370] sm:$0xff]
  %v3513 = vld [vmem:[#allocation2 + $0x378] sm:$0xff]
  %v3514 = vld [vmem:[#allocation2 + $0x380] sm:$0xff]
  %v3515 = vld [vmem:[#allocation2 + $0x388] sm:$0xff]
  %v3516 = vld [vmem:[#allocation2 + $0x390] sm:$0xff]
  %v3517 = vld [vmem:[#allocation2 + $0x398] sm:$0xff]
  %v3518 = vld [vmem:[#allocation2 + $0x3a0] sm:$0xff]
  %v3519 = vld [vmem:[#allocation2 + $0x3a8] sm:$0xff]
  %v3520 = vld [vmem:[#allocation2 + $0x3b0] sm:$0xff]
  %v3521 = vld [vmem:[#allocation2 + $0x3b8] sm:$0xff]
  %v3522 = vld [vmem:[#allocation2 + $0x3c0] sm:$0xff]
  %v3523 = vld [vmem:[#allocation2 + $0x3c8] sm:$0xff]
  %v3524 = vld [vmem:[#allocation2 + $0x3d0] sm:$0xff]
  %v3525 = vld [vmem:[#allocation2 + $0x3d8] sm:$0xff]
  %v3526 = vld [vmem:[#allocation2 + $0x3e0] sm:$0xff]
  %v3527 = vld [vmem:[#allocation2 + $0x3e8] sm:$0xff]
  %v3528 = vld [vmem:[#allocation2 + $0x3f0] sm:$0xff]
  %v3529 = vld [vmem:[#allocation2 + $0x3f8] sm:$0xff]
  %v3530 = vld [vmem:[#allocation2 + $0x400] sm:$0xff]
  %v3531 = vld [vmem:[#allocation2 + $0x408] sm:$0xff]
  %v3532 = vld [vmem:[#allocation2 + $0x410] sm:$0xff]
  %v3533 = vld [vmem:[#allocation2 + $0x418] sm:$0xff]
  %v3534 = vld [vmem:[#allocation2 + $0x420] sm:$0xff]
  %v3535 = vld [vmem:[#allocation2 + $0x428] sm:$0xff]
  %v3536 = vld [vmem:[#allocation2 + $0x430] sm:$0xff]
  %v3537 = vld [vmem:[#allocation2 + $0x438] sm:$0xff]
  %v3538 = vld [vmem:[#allocation2 + $0x440] sm:$0xff]
  %v3539 = vld [vmem:[#allocation2 + $0x448] sm:$0xff]
  %v3540 = vld [vmem:[#allocation2 + $0x450] sm:$0xff]
  %v3541 = vld [vmem:[#allocation2 + $0x458] sm:$0xff]
  %v3542 = vld [vmem:[#allocation2 + $0x460] sm:$0xff]
  %v3543 = vld [vmem:[#allocation2 + $0x468] sm:$0xff]
  %v3544 = vld [vmem:[#allocation2 + $0x470] sm:$0xff]
  %v3545 = vld [vmem:[#allocation2 + $0x478] sm:$0xff]
  %v3546 = vld [vmem:[#allocation2 + $0x480] sm:$0xff]
  %v3547 = vld [vmem:[#allocation2 + $0x488] sm:$0xff]
  %v3548 = vld [vmem:[#allocation2 + $0x490] sm:$0xff]
  %v3549 = vld [vmem:[#allocation2 + $0x498] sm:$0xff]
  %v3550 = vld [vmem:[#allocation2 + $0x4a0] sm:$0xff]
  %v3551 = vld [vmem:[#allocation2 + $0x4a8] sm:$0xff]
  %v3552 = vld [vmem:[#allocation2 + $0x4b0] sm:$0xff]
  %v3553 = vld [vmem:[#allocation2 + $0x4b8] sm:$0xff]
  %v3554 = vld [vmem:[#allocation2 + $0x4c0] sm:$0xff]
  %v3555 = vld [vmem:[#allocation2 + $0x4c8] sm:$0xff]
  %v3556 = vld [vmem:[#allocation2 + $0x4d0] sm:$0xff]
  %v3557 = vld [vmem:[#allocation2 + $0x4d8] sm:$0xff]
  %v3558 = vld [vmem:[#allocation2 + $0x4e0] sm:$0xff]
  %v3559 = vld [vmem:[#allocation2 + $0x4e8] sm:$0xff]
  %v3560 = vld [vmem:[#allocation2 + $0x4f0] sm:$0xff]
  %v3561 = vld [vmem:[#allocation2 + $0x4f8] sm:$0xff]
  %v3562 = vadd.f32 %v3402, %v2994
  %v3563 = vadd.f32 %v3403, %v3203
  %v3564 = vadd.f32 %v3404, %v2996
  %v3565 = vadd.f32 %v3405, %v3205
  %v3566 = vadd.f32 %v3406, %v2999
  %v3567 = vadd.f32 %v3407, %v3208
  %v3568 = vadd.f32 %v3408, %v3001
  %v3569 = vadd.f32 %v3409, %v3210
  %v3570 = vadd.f32 %v3410, %v3004
  %v3571 = vadd.f32 %v3411, %v3213
  %v3572 = vadd.f32 %v3412, %v3006
  %v3573 = vadd.f32 %v3413, %v3215
  %v3574 = vadd.f32 %v3414, %v3009
  %v3575 = vadd.f32 %v3415, %v3218
  %v3576 = vadd.f32 %v3416, %v3011
  %v3577 = vadd.f32 %v3417, %v3220
  %v3578 = vadd.f32 %v3418, %v3014
  %v3579 = vadd.f32 %v3419, %v3223
  %v3580 = vadd.f32 %v3420, %v3016
  %v3581 = vadd.f32 %v3421, %v3225
  %v3582 = vadd.f32 %v3422, %v3019
  %v3583 = vadd.f32 %v3423, %v3228
  %v3584 = vadd.f32 %v3424, %v3021
  %v3585 = vadd.f32 %v3425, %v3230
  %v3586 = vadd.f32 %v3426, %v3024
  %v3587 = vadd.f32 %v3427, %v3233
  %v3588 = vadd.f32 %v3428, %v3026
  %v3589 = vadd.f32 %v3429, %v3235
  %v3590 = vadd.f32 %v3430, %v3029
  %v3591 = vadd.f32 %v3431, %v3238
  %v3592 = vadd.f32 %v3432, %v3031
  %v3593 = vadd.f32 %v3433, %v3240
  %v3594 = vadd.f32 %v3434, %v3034
  %v3595 = vadd.f32 %v3435, %v3243
  %v3596 = vadd.f32 %v3436, %v3036
  %v3597 = vadd.f32 %v3437, %v3245
  %v3598 = vadd.f32 %v3438, %v3039
  %v3599 = vadd.f32 %v3439, %v3248
  %v3600 = vadd.f32 %v3440, %v3041
  %v3601 = vadd.f32 %v3441, %v3250
  %v3602 = vadd.f32 %v3442, %v3044
  %v3603 = vadd.f32 %v3443, %v3253
  %v3604 = vadd.f32 %v3444, %v3046
  %v3605 = vadd.f32 %v3445, %v3255
  %v3606 = vadd.f32 %v3446, %v3049
  %v3607 = vadd.f32 %v3447, %v3258
  %v3608 = vadd.f32 %v3448, %v3051
  %v3609 = vadd.f32 %v3449, %v3260
  %v3610 = vadd.f32 %v3450, %v3054
  %v3611 = vadd.f32 %v3451, %v3263
  %v3612 = vadd.f32 %v3452, %v3056
  %v3613 = vadd.f32 %v3453, %v3265
  %v3614 = vadd.f32 %v3454, %v3059
  %v3615 = vadd.f32 %v3455, %v3268
  %v3616 = vadd.f32 %v3456, %v3061
  %v3617 = vadd.f32 %v3457, %v3270
  %v3618 = vadd.f32 %v3458, %v3064
  %v3619 = vadd.f32 %v3459, %v3273
  %v3620 = vadd.f32 %v3460, %v3066
  %v3621 = vadd.f32 %v3461, %v3275
  %v3622 = vadd.f32 %v3462, %v3069
  %v3623 = vadd.f32 %v3463, %v3278
  %v3624 = vadd.f32 %v3464, %v3071
  %v3625 = vadd.f32 %v3465, %v3280
  %v3626 = vadd.f32 %v3466, %v3074
  %v3627 = vadd.f32 %v3467, %v3283
  %v3628 = vadd.f32 %v3468, %v3076
  %v3629 = vadd.f32 %v3469, %v3285
  %v3630 = vadd.f32 %v3470, %v3079
  %v3631 = vadd.f32 %v3471, %v3288
  %v3632 = vadd.f32 %v3472, %v3081
  %v3633 = vadd.f32 %v3473, %v3290
  %v3634 = vadd.f32 %v3474, %v3084
  %v3635 = vadd.f32 %v3475, %v3293
  %v3636 = vadd.f32 %v3476, %v3086
  %v3637 = vadd.f32 %v3477, %v3295
  %v3638 = vadd.f32 %v3478, %v3089
  %v3639 = vadd.f32 %v3479, %v3298
  %v3640 = vadd.f32 %v3480, %v3091
  %v3641 = vadd.f32 %v3481, %v3300
  %v3642 = vadd.f32 %v3482, %v3094
  %v3643 = vadd.f32 %v3483, %v3303
  %v3644 = vadd.f32 %v3484, %v3096
  %v3645 = vadd.f32 %v3485, %v3305
  %v3646 = vadd.f32 %v3486, %v3099
  %v3647 = vadd.f32 %v3487, %v3308
  %v3648 = vadd.f32 %v3488, %v3101
  %v3649 = vadd.f32 %v3489, %v3310
  %v3650 = vadd.f32 %v3490, %v3104
  %v3651 = vadd.f32 %v3491, %v3313
  %v3652 = vadd.f32 %v3492, %v3106
  %v3653 = vadd.f32 %v3493, %v3315
  %v3654 = vadd.f32 %v3494, %v3109
  %v3655 = vadd.f32 %v3495, %v3318
  %v3656 = vadd.f32 %v3496, %v3111
  %v3657 = vadd.f32 %v3497, %v3320
  %v3658 = vadd.f32 %v3498, %v3114
  %v3659 = vadd.f32 %v3499, %v3323
  %v3660 = vadd.f32 %v3500, %v3116
  %v3661 = vadd.f32 %v3501, %v3325
  %v3662 = vadd.f32 %v3502, %v3119
  %v3663 = vadd.f32 %v3503, %v3328
  %v3664 = vadd.f32 %v3504, %v3121
  %v3665 = vadd.f32 %v3505, %v3330
  %v3666 = vadd.f32 %v3506, %v3124
  %v3667 = vadd.f32 %v3507, %v3333
  %v3668 = vadd.f32 %v3508, %v3126
  %v3669 = vadd.f32 %v3509, %v3335
  %v3670 = vadd.f32 %v3510, %v3129
  %v3671 = vadd.f32 %v3511, %v3338
  %v3672 = vadd.f32 %v3512, %v3131
  %v3673 = vadd.f32 %v3513, %v3340
  %v3674 = vadd.f32 %v3514, %v3134
  %v3675 = vadd.f32 %v3515, %v3343
  %v3676 = vadd.f32 %v3516, %v3136
  %v3677 = vadd.f32 %v3517, %v3345
  %v3678 = vadd.f32 %v3518, %v3139
  %v3679 = vadd.f32 %v3519, %v3348
  %v3680 = vadd.f32 %v3520, %v3141
  %v3681 = vadd.f32 %v3521, %v3350
  %v3682 = vadd.f32 %v3522, %v3144
  %v3683 = vadd.f32 %v3523, %v3353
  %v3684 = vadd.f32 %v3524, %v3146
  %v3685 = vadd.f32 %v3525, %v3355
  %v3686 = vadd.f32 %v3526, %v3149
  %v3687 = vadd.f32 %v3527, %v3358
  %v3688 = vadd.f32 %v3528, %v3151
  %v3689 = vadd.f32 %v3529, %v3360
  %v3690 = vadd.f32 %v3530, %v3154
  %v3691 = vadd.f32 %v3531, %v3363
  %v3692 = vadd.f32 %v3532, %v3156
  %v3693 = vadd.f32 %v3533, %v3365
  %v3694 = vadd.f32 %v3534, %v3159
  %v3695 = vadd.f32 %v3535, %v3368
  %v3696 = vadd.f32 %v3536, %v3161
  %v3697 = vadd.f32 %v3537, %v3370
  %v3698 = vadd.f32 %v3538, %v3164
  %v3699 = vadd.f32 %v3539, %v3373
  %v3700 = vadd.f32 %v3540, %v3166
  %v3701 = vadd.f32 %v3541, %v3375
  %v3702 = vadd.f32 %v3542, %v3169
  %v3703 = vadd.f32 %v3543, %v3378
  %v3704 = vadd.f32 %v3544, %v3171
  %v3705 = vadd.f32 %v3545, %v3380
  %v3706 = vadd.f32 %v3546, %v3174
  %v3707 = vadd.f32 %v3547, %v3383
  %v3708 = vadd.f32 %v3548, %v3176
  %v3709 = vadd.f32 %v3549, %v3385
  %v3710 = vadd.f32 %v3550, %v3179
  %v3711 = vadd.f32 %v3551, %v3388
  %v3712 = vadd.f32 %v3552, %v3181
  %v3713 = vadd.f32 %v3553, %v3390
  %v3714 = vadd.f32 %v3554, %v3184
  %v3715 = vadd.f32 %v3555, %v3393
  %v3716 = vadd.f32 %v3556, %v3186
  %v3717 = vadd.f32 %v3557, %v3395
  %v3718 = vadd.f32 %v3558, %v3189
  %v3719 = vadd.f32 %v3559, %v3398
  %v3720 = vadd.f32 %v3560, %v3191
  %v3721 = vadd.f32 %v3561, %v3400
  %3722 = vst [vmem:[#allocation2] sm:$0xff] %v3562
  %3723 = vst [vmem:[#allocation2 + $0x8] sm:$0xff] %v3563
  %3724 = vst [vmem:[#allocation2 + $0x10] sm:$0xff] %v3564
  %3725 = vst [vmem:[#allocation2 + $0x18] sm:$0xff] %v3565
  %3726 = vst [vmem:[#allocation2 + $0x20] sm:$0xff] %v3566
  %3727 = vst [vmem:[#allocation2 + $0x28] sm:$0xff] %v3567
  %3728 = vst [vmem:[#allocation2 + $0x30] sm:$0xff] %v3568
  %3729 = vst [vmem:[#allocation2 + $0x38] sm:$0xff] %v3569
  %3730 = vst [vmem:[#allocation2 + $0x40] sm:$0xff] %v3570
  %3731 = vst [vmem:[#allocation2 + $0x48] sm:$0xff] %v3571
  %3732 = vst [vmem:[#allocation2 + $0x50] sm:$0xff] %v3572
  %3733 = vst [vmem:[#allocation2 + $0x58] sm:$0xff] %v3573
  %3734 = vst [vmem:[#allocation2 + $0x60] sm:$0xff] %v3574
  %3735 = vst [vmem:[#allocation2 + $0x68] sm:$0xff] %v3575
  %3736 = vst [vmem:[#allocation2 + $0x70] sm:$0xff] %v3576
  %3737 = vst [vmem:[#allocation2 + $0x78] sm:$0xff] %v3577
  %3738 = vst [vmem:[#allocation2 + $0x80] sm:$0xff] %v3578
  %3739 = vst [vmem:[#allocation2 + $0x88] sm:$0xff] %v3579
  %3740 = vst [vmem:[#allocation2 + $0x90] sm:$0xff] %v3580
  %3741 = vst [vmem:[#allocation2 + $0x98] sm:$0xff] %v3581
  %3742 = vst [vmem:[#allocation2 + $0xa0] sm:$0xff] %v3582
  %3743 = vst [vmem:[#allocation2 + $0xa8] sm:$0xff] %v3583
  %3744 = vst [vmem:[#allocation2 + $0xb0] sm:$0xff] %v3584
  %3745 = vst [vmem:[#allocation2 + $0xb8] sm:$0xff] %v3585
  %3746 = vst [vmem:[#allocation2 + $0xc0] sm:$0xff] %v3586
  %3747 = vst [vmem:[#allocation2 + $0xc8] sm:$0xff] %v3587
  %3748 = vst [vmem:[#allocation2 + $0xd0] sm:$0xff] %v3588
  %3749 = vst [vmem:[#allocation2 + $0xd8] sm:$0xff] %v3589
  %3750 = vst [vmem:[#allocation2 + $0xe0] sm:$0xff] %v3590
  %3751 = vst [vmem:[#allocation2 + $0xe8] sm:$0xff] %v3591
  %3752 = vst [vmem:[#allocation2 + $0xf0] sm:$0xff] %v3592
  %3753 = vst [vmem:[#allocation2 + $0xf8] sm:$0xff] %v3593
  %3754 = vst [vmem:[#allocation2 + $0x100] sm:$0xff] %v3594
  %3755 = vst [vmem:[#allocation2 + $0x108] sm:$0xff] %v3595
  %3756 = vst [vmem:[#allocation2 + $0x110] sm:$0xff] %v3596
  %3757 = vst [vmem:[#allocation2 + $0x118] sm:$0xff] %v3597
  %3758 = vst [vmem:[#allocation2 + $0x120] sm:$0xff] %v3598
  %3759 = vst [vmem:[#allocation2 + $0x128] sm:$0xff] %v3599
  %3760 = vst [vmem:[#allocation2 + $0x130] sm:$0xff] %v3600
  %3761 = vst [vmem:[#allocation2 + $0x138] sm:$0xff] %v3601
  %3762 = vst [vmem:[#allocation2 + $0x140] sm:$0xff] %v3602
  %3763 = vst [vmem:[#allocation2 + $0x148] sm:$0xff] %v3603
  %3764 = vst [vmem:[#allocation2 + $0x150] sm:$0xff] %v3604
  %3765 = vst [vmem:[#allocation2 + $0x158] sm:$0xff] %v3605
  %3766 = vst [vmem:[#allocation2 + $0x160] sm:$0xff] %v3606
  %3767 = vst [vmem:[#allocation2 + $0x168] sm:$0xff] %v3607
  %3768 = vst [vmem:[#allocation2 + $0x170] sm:$0xff] %v3608
  %3769 = vst [vmem:[#allocation2 + $0x178] sm:$0xff] %v3609
  %3770 = vst [vmem:[#allocation2 + $0x180] sm:$0xff] %v3610
  %3771 = vst [vmem:[#allocation2 + $0x188] sm:$0xff] %v3611
  %3772 = vst [vmem:[#allocation2 + $0x190] sm:$0xff] %v3612
  %3773 = vst [vmem:[#allocation2 + $0x198] sm:$0xff] %v3613
  %3774 = vst [vmem:[#allocation2 + $0x1a0] sm:$0xff] %v3614
  %3775 = vst [vmem:[#allocation2 + $0x1a8] sm:$0xff] %v3615
  %3776 = vst [vmem:[#allocation2 + $0x1b0] sm:$0xff] %v3616
  %3777 = vst [vmem:[#allocation2 + $0x1b8] sm:$0xff] %v3617
  %3778 = vst [vmem:[#allocation2 + $0x1c0] sm:$0xff] %v3618
  %3779 = vst [vmem:[#allocation2 + $0x1c8] sm:$0xff] %v3619
  %3780 = vst [vmem:[#allocation2 + $0x1d0] sm:$0xff] %v3620
  %3781 = vst [vmem:[#allocation2 + $0x1d8] sm:$0xff] %v3621
  %3782 = vst [vmem:[#allocation2 + $0x1e0] sm:$0xff] %v3622
  %3783 = vst [vmem:[#allocation2 + $0x1e8] sm:$0xff] %v3623
  %3784 = vst [vmem:[#allocation2 + $0x1f0] sm:$0xff] %v3624
  %3785 = vst [vmem:[#allocation2 + $0x1f8] sm:$0xff] %v3625
  %3786 = vst [vmem:[#allocation2 + $0x200] sm:$0xff] %v3626
  %3787 = vst [vmem:[#allocation2 + $0x208] sm:$0xff] %v3627
  %3788 = vst [vmem:[#allocation2 + $0x210] sm:$0xff] %v3628
  %3789 = vst [vmem:[#allocation2 + $0x218] sm:$0xff] %v3629
  %3790 = vst [vmem:[#allocation2 + $0x220] sm:$0xff] %v3630
  %3791 = vst [vmem:[#allocation2 + $0x228] sm:$0xff] %v3631
  %3792 = vst [vmem:[#allocation2 + $0x230] sm:$0xff] %v3632
  %3793 = vst [vmem:[#allocation2 + $0x238] sm:$0xff] %v3633
  %3794 = vst [vmem:[#allocation2 + $0x240] sm:$0xff] %v3634
  %3795 = vst [vmem:[#allocation2 + $0x248] sm:$0xff] %v3635
  %3796 = vst [vmem:[#allocation2 + $0x250] sm:$0xff] %v3636
  %3797 = vst [vmem:[#allocation2 + $0x258] sm:$0xff] %v3637
  %3798 = vst [vmem:[#allocation2 + $0x260] sm:$0xff] %v3638
  %3799 = vst [vmem:[#allocation2 + $0x268] sm:$0xff] %v3639
  %3800 = vst [vmem:[#allocation2 + $0x270] sm:$0xff] %v3640
  %3801 = vst [vmem:[#allocation2 + $0x278] sm:$0xff] %v3641
  %3802 = vst [vmem:[#allocation2 + $0x280] sm:$0xff] %v3642
  %3803 = vst [vmem:[#allocation2 + $0x288] sm:$0xff] %v3643
  %3804 = vst [vmem:[#allocation2 + $0x290] sm:$0xff] %v3644
  %3805 = vst [vmem:[#allocation2 + $0x298] sm:$0xff] %v3645
  %3806 = vst [vmem:[#allocation2 + $0x2a0] sm:$0xff] %v3646
  %3807 = vst [vmem:[#allocation2 + $0x2a8] sm:$0xff] %v3647
  %3808 = vst [vmem:[#allocation2 + $0x2b0] sm:$0xff] %v3648
  %3809 = vst [vmem:[#allocation2 + $0x2b8] sm:$0xff] %v3649
  %3810 = vst [vmem:[#allocation2 + $0x2c0] sm:$0xff] %v3650
  %3811 = vst [vmem:[#allocation2 + $0x2c8] sm:$0xff] %v3651
  %3812 = vst [vmem:[#allocation2 + $0x2d0] sm:$0xff] %v3652
  %3813 = vst [vmem:[#allocation2 + $0x2d8] sm:$0xff] %v3653
  %3814 = vst [vmem:[#allocation2 + $0x2e0] sm:$0xff] %v3654
  %3815 = vst [vmem:[#allocation2 + $0x2e8] sm:$0xff] %v3655
  %3816 = vst [vmem:[#allocation2 + $0x2f0] sm:$0xff] %v3656
  %3817 = vst [vmem:[#allocation2 + $0x2f8] sm:$0xff] %v3657
  %3818 = vst [vmem:[#allocation2 + $0x300] sm:$0xff] %v3658
  %3819 = vst [vmem:[#allocation2 + $0x308] sm:$0xff] %v3659
  %3820 = vst [vmem:[#allocation2 + $0x310] sm:$0xff] %v3660
  %3821 = vst [vmem:[#allocation2 + $0x318] sm:$0xff] %v3661
  %3822 = vst [vmem:[#allocation2 + $0x320] sm:$0xff] %v3662
  %3823 = vst [vmem:[#allocation2 + $0x328] sm:$0xff] %v3663
  %3824 = vst [vmem:[#allocation2 + $0x330] sm:$0xff] %v3664
  %3825 = vst [vmem:[#allocation2 + $0x338] sm:$0xff] %v3665
  %3826 = vst [vmem:[#allocation2 + $0x340] sm:$0xff] %v3666
  %3827 = vst [vmem:[#allocation2 + $0x348] sm:$0xff] %v3667
  %3828 = vst [vmem:[#allocation2 + $0x350] sm:$0xff] %v3668
  %3829 = vst [vmem:[#allocation2 + $0x358] sm:$0xff] %v3669
  %3830 = vst [vmem:[#allocation2 + $0x360] sm:$0xff] %v3670
  %3831 = vst [vmem:[#allocation2 + $0x368] sm:$0xff] %v3671
  %3832 = vst [vmem:[#allocation2 + $0x370] sm:$0xff] %v3672
  %3833 = vst [vmem:[#allocation2 + $0x378] sm:$0xff] %v3673
  %3834 = vst [vmem:[#allocation2 + $0x380] sm:$0xff] %v3674
  %3835 = vst [vmem:[#allocation2 + $0x388] sm:$0xff] %v3675
  %3836 = vst [vmem:[#allocation2 + $0x390] sm:$0xff] %v3676
  %3837 = vst [vmem:[#allocation2 + $0x398] sm:$0xff] %v3677
  %3838 = vst [vmem:[#allocation2 + $0x3a0] sm:$0xff] %v3678
  %3839 = vst [vmem:[#allocation2 + $0x3a8] sm:$0xff] %v3679
  %3840 = vst [vmem:[#allocation2 + $0x3b0] sm:$0xff] %v3680
  %3841 = vst [vmem:[#allocation2 + $0x3b8] sm:$0xff] %v3681
  %3842 = vst [vmem:[#allocation2 + $0x3c0] sm:$0xff] %v3682
  %3843 = vst [vmem:[#allocation2 + $0x3c8] sm:$0xff] %v3683
  %3844 = vst [vmem:[#allocation2 + $0x3d0] sm:$0xff] %v3684
  %3845 = vst [vmem:[#allocation2 + $0x3d8] sm:$0xff] %v3685
  %3846 = vst [vmem:[#allocation2 + $0x3e0] sm:$0xff] %v3686
  %3847 = vst [vmem:[#allocation2 + $0x3e8] sm:$0xff] %v3687
  %3848 = vst [vmem:[#allocation2 + $0x3f0] sm:$0xff] %v3688
  %3849 = vst [vmem:[#allocation2 + $0x3f8] sm:$0xff] %v3689
  %3850 = vst [vmem:[#allocation2 + $0x400] sm:$0xff] %v3690
  %3851 = vst [vmem:[#allocation2 + $0x408] sm:$0xff] %v3691
  %3852 = vst [vmem:[#allocation2 + $0x410] sm:$0xff] %v3692
  %3853 = vst [vmem:[#allocation2 + $0x418] sm:$0xff] %v3693
  %3854 = vst [vmem:[#allocation2 + $0x420] sm:$0xff] %v3694
  %3855 = vst [vmem:[#allocation2 + $0x428] sm:$0xff] %v3695
  %3856 = vst [vmem:[#allocation2 + $0x430] sm:$0xff] %v3696
  %3857 = vst [vmem:[#allocation2 + $0x438] sm:$0xff] %v3697
  %3858 = vst [vmem:[#allocation2 + $0x440] sm:$0xff] %v3698
  %3859 = vst [vmem:[#allocation2 + $0x448] sm:$0xff] %v3699
  %3860 = vst [vmem:[#allocation2 + $0x450] sm:$0xff] %v3700
  %3861 = vst [vmem:[#allocation2 + $0x458] sm:$0xff] %v3701
  %3862 = vst [vmem:[#allocation2 + $0x460] sm:$0xff] %v3702
  %3863 = vst [vmem:[#allocation2 + $0x468] sm:$0xff] %v3703
  %3864 = vst [vmem:[#allocation2 + $0x470] sm:$0xff] %v3704
  %3865 = vst [vmem:[#allocation2 + $0x478] sm:$0xff] %v3705
  %3866 = vst [vmem:[#allocation2 + $0x480] sm:$0xff] %v3706
  %3867 = vst [vmem:[#allocation2 + $0x488] sm:$0xff] %v3707
  %3868 = vst [vmem:[#allocation2 + $0x490] sm:$0xff] %v3708
  %3869 = vst [vmem:[#allocation2 + $0x498] sm:$0xff] %v3709
  %3870 = vst [vmem:[#allocation2 + $0x4a0] sm:$0xff] %v3710
  %3871 = vst [vmem:[#allocation2 + $0x4a8] sm:$0xff] %v3711
  %3872 = vst [vmem:[#allocation2 + $0x4b0] sm:$0xff] %v3712
  %3873 = vst [vmem:[#allocation2 + $0x4b8] sm:$0xff] %v3713
  %3874 = vst [vmem:[#allocation2 + $0x4c0] sm:$0xff] %v3714
  %3875 = vst [vmem:[#allocation2 + $0x4c8] sm:$0xff] %v3715
  %3876 = vst [vmem:[#allocation2 + $0x4d0] sm:$0xff] %v3716
  %3877 = vst [vmem:[#allocation2 + $0x4d8] sm:$0xff] %v3717
  %3878 = vst [vmem:[#allocation2 + $0x4e0] sm:$0xff] %v3718
  %3879 = vst [vmem:[#allocation2 + $0x4e8] sm:$0xff] %v3719
  %3880 = vst [vmem:[#allocation2 + $0x4f0] sm:$0xff] %v3720
  %3881 = vst [vmem:[#allocation2 + $0x4f8] sm:$0xff] %v3721
  %s3882 = scalar_lea.vmem %s0, 48
  %v3883 = vld [vmem:[%s3882] sm:$0xf]
  %v3884 = vld [vmem:[%s3882 + $0x4] sm:$0xf]
  %v3885 = vld [vmem:[%s3882 + $0x8] sm:$0xf]
  %v3886 = vld [vmem:[%s3882 + $0xc] sm:$0xf]
  %v3887 = vld [vmem:[%s3882 + $0x10] sm:$0xf]
  %v3888 = vld [vmem:[%s3882 + $0x14] sm:$0xf]
  %v3889 = vld [vmem:[%s3882 + $0x18] sm:$0xf]
  %v3890 = vld [vmem:[%s3882 + $0x1c] sm:$0xf]
  %v3891 = vld [vmem:[%s3882 + $0x20] sm:$0xf]
  %v3892 = vld [vmem:[%s3882 + $0x24] sm:$0xf]
  %v3893 = vld [vmem:[%s3882 + $0x28] sm:$0xf]
  %v3894 = vld [vmem:[%s3882 + $0x2c] sm:$0xf]
  %v3895 = vld [vmem:[%s3882 + $0x30] sm:$0xf]
  %v3896 = vld [vmem:[%s3882 + $0x34] sm:$0xf]
  %v3897 = vld [vmem:[%s3882 + $0x38] sm:$0xf]
  %v3898 = vld [vmem:[%s3882 + $0x3c] sm:$0xf]
  %v3899 = vld [vmem:[%s3882 + $0x40] sm:$0xf]
  %v3900 = vld [vmem:[%s3882 + $0x44] sm:$0xf]
  %v3901 = vld [vmem:[%s3882 + $0x48] sm:$0xf]
  %v3902 = vld [vmem:[%s3882 + $0x4c] sm:$0xf]
  %v3903 = vld [vmem:[%s3882 + $0x50] sm:$0xf]
  %v3904 = vld [vmem:[%s3882 + $0x54] sm:$0xf]
  %v3905 = vld [vmem:[%s3882 + $0x58] sm:$0xf]
  %v3906 = vld [vmem:[%s3882 + $0x5c] sm:$0xf]
  %v3907 = vld [vmem:[%s3882 + $0x60] sm:$0xf]
  %v3908 = vld [vmem:[%s3882 + $0x64] sm:$0xf]
  %v3909 = vld [vmem:[%s3882 + $0x68] sm:$0xf]
  %v3910 = vld [vmem:[%s3882 + $0x6c] sm:$0xf]
  %v3911 = vld [vmem:[%s3882 + $0x70] sm:$0xf]
  %v3912 = vld [vmem:[%s3882 + $0x74] sm:$0xf]
  %v3913 = vld [vmem:[%s3882 + $0x78] sm:$0xf]
  %v3914 = vld [vmem:[%s3882 + $0x7c] sm:$0xf]
  %v3915 = vld [vmem:[%s3882 + $0x80] sm:$0xf]
  %v3916 = vld [vmem:[%s3882 + $0x84] sm:$0xf]
  %v3917 = vld [vmem:[%s3882 + $0x88] sm:$0xf]
  %v3918 = vld [vmem:[%s3882 + $0x8c] sm:$0xf]
  %v3919 = vld [vmem:[%s3882 + $0x90] sm:$0xf]
  %v3920 = vld [vmem:[%s3882 + $0x94] sm:$0xf]
  %v3921 = vld [vmem:[%s3882 + $0x98] sm:$0xf]
  %v3922 = vld [vmem:[%s3882 + $0x9c] sm:$0xf]
  %v3923 = vld [vmem:[%s3882 + $0xd0] sm:$0xf]
  %v3924 = vld [vmem:[%s3882 + $0xd4] sm:$0xf]
  %v3925 = vld [vmem:[%s3882 + $0xd8] sm:$0xf]
  %v3926 = vld [vmem:[%s3882 + $0xdc] sm:$0xf]
  %v3927 = vld [vmem:[%s3882 + $0xe0] sm:$0xf]
  %v3928 = vld [vmem:[%s3882 + $0xe4] sm:$0xf]
  %v3929 = vld [vmem:[%s3882 + $0xe8] sm:$0xf]
  %v3930 = vld [vmem:[%s3882 + $0xec] sm:$0xf]
  %v3931 = vld [vmem:[%s3882 + $0xf0] sm:$0xf]
  %v3932 = vld [vmem:[%s3882 + $0xf4] sm:$0xf]
  %v3933 = vld [vmem:[%s3882 + $0xf8] sm:$0xf]
  %v3934 = vld [vmem:[%s3882 + $0xfc] sm:$0xf]
  %v3935 = vld [vmem:[%s3882 + $0x100] sm:$0xf]
  %v3936 = vld [vmem:[%s3882 + $0x104] sm:$0xf]
  %v3937 = vld [vmem:[%s3882 + $0x108] sm:$0xf]
  %v3938 = vld [vmem:[%s3882 + $0x10c] sm:$0xf]
  %v3939 = vld [vmem:[%s3882 + $0x110] sm:$0xf]
  %v3940 = vld [vmem:[%s3882 + $0x114] sm:$0xf]
  %v3941 = vld [vmem:[%s3882 + $0x118] sm:$0xf]
  %v3942 = vld [vmem:[%s3882 + $0x11c] sm:$0xf]
  %v3943 = vld [vmem:[%s3882 + $0x120] sm:$0xf]
  %v3944 = vld [vmem:[%s3882 + $0x124] sm:$0xf]
  %v3945 = vld [vmem:[%s3882 + $0x128] sm:$0xf]
  %v3946 = vld [vmem:[%s3882 + $0x12c] sm:$0xf]
  %v3947 = vld [vmem:[%s3882 + $0x130] sm:$0xf]
  %v3948 = vld [vmem:[%s3882 + $0x134] sm:$0xf]
  %v3949 = vld [vmem:[%s3882 + $0x138] sm:$0xf]
  %v3950 = vld [vmem:[%s3882 + $0x13c] sm:$0xf]
  %v3951 = vld [vmem:[%s3882 + $0x140] sm:$0xf]
  %v3952 = vld [vmem:[%s3882 + $0x144] sm:$0xf]
  %v3953 = vld [vmem:[%s3882 + $0x148] sm:$0xf]
  %v3954 = vld [vmem:[%s3882 + $0x14c] sm:$0xf]
  %v3955 = vld [vmem:[%s3882 + $0x150] sm:$0xf]
  %v3956 = vld [vmem:[%s3882 + $0x154] sm:$0xf]
  %v3957 = vld [vmem:[%s3882 + $0x158] sm:$0xf]
  %v3958 = vld [vmem:[%s3882 + $0x15c] sm:$0xf]
  %v3959 = vld [vmem:[%s3882 + $0x160] sm:$0xf]
  %v3960 = vld [vmem:[%s3882 + $0x164] sm:$0xf]
  %v3961 = vld [vmem:[%s3882 + $0x168] sm:$0xf]
  %v3962 = vld [vmem:[%s3882 + $0x16c] sm:$0xf]
  %s3963 = scalar_lea.vmem %s1, 360
  %v3964 = vld [vmem:[%s3963] sm:$0xff]
  %v3965 = vld [vmem:[%s3963 + $0x8] sm:$0xff]
  %v3966 = vld [vmem:[%s3963 + $0x10] sm:$0xff]
  %v3967 = vld [vmem:[%s3963 + $0x18] sm:$0xff]
  %v3968 = vld [vmem:[%s3963 + $0x20] sm:$0xff]
  %v3969 = vld [vmem:[%s3963 + $0x28] sm:$0xff]
  %v3970 = vld [vmem:[%s3963 + $0x30] sm:$0xff]
  %v3971 = vld [vmem:[%s3963 + $0x38] sm:$0xff]
  %v3972 = vld [vmem:[%s3963 + $0x40] sm:$0xff]
  %v3973 = vld [vmem:[%s3963 + $0x48] sm:$0xff]
  %v3974 = vld [vmem:[%s3963 + $0x50] sm:$0xff]
  %v3975 = vld [vmem:[%s3963 + $0x58] sm:$0xff]
  %v3976 = vld [vmem:[%s3963 + $0x60] sm:$0xff]
  %v3977 = vld [vmem:[%s3963 + $0x68] sm:$0xff]
  %v3978 = vld [vmem:[%s3963 + $0x70] sm:$0x11]
  %v4059 = vunpack.c.l.b16 %v3883
  %v4060 = vunpack.c.l.b16 %v3884
  %v4061 = vunpack.c.l.b16 %v3885
  %v4062 = vunpack.c.l.b16 %v3886
  %v4063 = vunpack.c.l.b16 %v3887
  %v4064 = vunpack.c.l.b16 %v3888
  %v4065 = vunpack.c.l.b16 %v3889
  %v4066 = vunpack.c.l.b16 %v3890
  %v4067 = vunpack.c.l.b16 %v3891
  %v4068 = vunpack.c.l.b16 %v3892
  %v4069 = vunpack.c.l.b16 %v3893
  %v4070 = vunpack.c.l.b16 %v3894
  %v4071 = vunpack.c.l.b16 %v3895
  %v4072 = vunpack.c.l.b16 %v3896
  %v4073 = vunpack.c.l.b16 %v3897
  %v4074 = vunpack.c.l.b16 %v3898
  %v4075 = vunpack.c.l.b16 %v3899
  %v4076 = vunpack.c.l.b16 %v3900
  %v4077 = vunpack.c.l.b16 %v3901
  %v4078 = vunpack.c.l.b16 %v3902
  %v4079 = vunpack.c.l.b16 %v3903
  %v4080 = vunpack.c.l.b16 %v3904
  %v4081 = vunpack.c.l.b16 %v3905
  %v4082 = vunpack.c.l.b16 %v3906
  %v4083 = vunpack.c.l.b16 %v3907
  %v4084 = vunpack.c.l.b16 %v3908
  %v4085 = vunpack.c.l.b16 %v3909
  %v4086 = vunpack.c.l.b16 %v3910
  %v4087 = vunpack.c.l.b16 %v3911
  %v4088 = vunpack.c.l.b16 %v3912
  %v4089 = vunpack.c.l.b16 %v3913
  %v4090 = vunpack.c.l.b16 %v3914
  %v4091 = vunpack.c.l.b16 %v3915
  %v4092 = vunpack.c.l.b16 %v3916
  %v4093 = vunpack.c.l.b16 %v3917
  %v4094 = vunpack.c.l.b16 %v3918
  %v4095 = vunpack.c.l.b16 %v3919
  %v4096 = vunpack.c.l.b16 %v3920
  %v4097 = vunpack.c.l.b16 %v3921
  %v4098 = vunpack.c.l.b16 %v3922
  %v4099 = vunpack.c.l.b16 %v3923
  %v4100 = vunpack.c.l.b16 %v3924
  %v4101 = vunpack.c.l.b16 %v3925
  %v4102 = vunpack.c.l.b16 %v3926
  %v4103 = vunpack.c.l.b16 %v3927
  %v4104 = vunpack.c.l.b16 %v3928
  %v4105 = vunpack.c.l.b16 %v3929
  %v4106 = vunpack.c.l.b16 %v3930
  %v4107 = vunpack.c.l.b16 %v3931
  %v4108 = vunpack.c.l.b16 %v3932
  %v4109 = vunpack.c.l.b16 %v3933
  %v4110 = vunpack.c.l.b16 %v3934
  %v4111 = vunpack.c.l.b16 %v3935
  %v4112 = vunpack.c.l.b16 %v3936
  %v4113 = vunpack.c.l.b16 %v3937
  %v4114 = vunpack.c.l.b16 %v3938
  %v4115 = vunpack.c.l.b16 %v3939
  %v4116 = vunpack.c.l.b16 %v3940
  %v4117 = vunpack.c.l.b16 %v3941
  %v4118 = vunpack.c.l.b16 %v3942
  %v4119 = vunpack.c.l.b16 %v3943
  %v4120 = vunpack.c.l.b16 %v3944
  %v4121 = vunpack.c.l.b16 %v3945
  %v4122 = vunpack.c.l.b16 %v3946
  %v4123 = vunpack.c.l.b16 %v3947
  %v4124 = vunpack.c.l.b16 %v3948
  %v4125 = vunpack.c.l.b16 %v3949
  %v4126 = vunpack.c.l.b16 %v3950
  %v4127 = vunpack.c.l.b16 %v3951
  %v4128 = vunpack.c.l.b16 %v3952
  %v4129 = vunpack.c.l.b16 %v3953
  %v4130 = vunpack.c.l.b16 %v3954
  %v4131 = vunpack.c.l.b16 %v3955
  %v4132 = vunpack.c.l.b16 %v3956
  %v4133 = vunpack.c.l.b16 %v3957
  %v4134 = vunpack.c.l.b16 %v3958
  %v4135 = vunpack.c.l.b16 %v3959
  %v4136 = vunpack.c.l.b16 %v3960
  %v4137 = vunpack.c.l.b16 %v3961
  %v4138 = vunpack.c.l.b16 %v3962
  %v4139 = vpack.c.b16 %v4060, %v4059
  %v4140 = vpack.c.b16 %v4062, %v4061
  %v4141 = vpack.c.b16 %v4064, %v4063
  %v4142 = vpack.c.b16 %v4066, %v4065
  %v4143 = vpack.c.b16 %v4068, %v4067
  %v4144 = vpack.c.b16 %v4070, %v4069
  %v4145 = vpack.c.b16 %v4072, %v4071
  %v4146 = vpack.c.b16 %v4074, %v4073
  %v4147 = vpack.c.b16 %v4076, %v4075
  %v4148 = vpack.c.b16 %v4078, %v4077
  %v4149 = vpack.c.b16 %v4080, %v4079
  %v4150 = vpack.c.b16 %v4082, %v4081
  %v4151 = vpack.c.b16 %v4084, %v4083
  %v4152 = vpack.c.b16 %v4086, %v4085
  %v4153 = vpack.c.b16 %v4088, %v4087
  %v4154 = vpack.c.b16 %v4090, %v4089
  %v4155 = vpack.c.b16 %v4092, %v4091
  %v4156 = vpack.c.b16 %v4094, %v4093
  %v4157 = vpack.c.b16 %v4096, %v4095
  %v4158 = vpack.c.b16 %v4098, %v4097
  %v4159 = vpack.c.b16 %v4100, %v4099
  %v4160 = vpack.c.b16 %v4102, %v4101
  %v4161 = vpack.c.b16 %v4104, %v4103
  %v4162 = vpack.c.b16 %v4106, %v4105
  %v4163 = vpack.c.b16 %v4108, %v4107
  %v4164 = vpack.c.b16 %v4110, %v4109
  %v4165 = vpack.c.b16 %v4112, %v4111
  %v4166 = vpack.c.b16 %v4114, %v4113
  %v4167 = vpack.c.b16 %v4116, %v4115
  %v4168 = vpack.c.b16 %v4118, %v4117
  %v4169 = vpack.c.b16 %v4120, %v4119
  %v4170 = vpack.c.b16 %v4122, %v4121
  %v4171 = vpack.c.b16 %v4124, %v4123
  %v4172 = vpack.c.b16 %v4126, %v4125
  %v4173 = vpack.c.b16 %v4128, %v4127
  %v4174 = vpack.c.b16 %v4130, %v4129
  %v4175 = vpack.c.b16 %v4132, %v4131
  %v4176 = vpack.c.b16 %v4134, %v4133
  %v4177 = vpack.c.b16 %v4136, %v4135
  %v4178 = vpack.c.b16 %v4138, %v4137
  %v4194 = vunpack.c.l.b16 %v3964
  %v4195 = vunpack.c.h.b16 %v3964
  %v4196 = vunpack.c.l.b16 %v3965
  %v4197 = vunpack.c.h.b16 %v3965
  %v4198 = vunpack.c.l.b16 %v3966
  %v4199 = vunpack.c.h.b16 %v3966
  %v4200 = vunpack.c.l.b16 %v3967
  %v4201 = vunpack.c.h.b16 %v3967
  %v4202 = vunpack.c.l.b16 %v3968
  %v4203 = vunpack.c.h.b16 %v3968
  %v4204 = vunpack.c.l.b16 %v3969
  %v4205 = vunpack.c.h.b16 %v3969
  %v4206 = vunpack.c.l.b16 %v3970
  %v4207 = vunpack.c.h.b16 %v3970
  %v4208 = vunpack.c.l.b16 %v3971
  %v4209 = vunpack.c.h.b16 %v3971
  %v4210 = vunpack.c.l.b16 %v3972
  %v4211 = vunpack.c.h.b16 %v3972
  %v4212 = vunpack.c.l.b16 %v3973
  %v4213 = vunpack.c.h.b16 %v3973
  %v4214 = vunpack.c.l.b16 %v3974
  %v4215 = vunpack.c.h.b16 %v3974
  %v4216 = vunpack.c.l.b16 %v3975
  %v4217 = vunpack.c.h.b16 %v3975
  %v4218 = vunpack.c.l.b16 %v3976
  %v4219 = vunpack.c.h.b16 %v3976
  %v4220 = vunpack.c.l.b16 %v3977
  %v4221 = vunpack.c.h.b16 %v3977
  %v4222 = vunpack.c.l.b16 %v3978
  %v4223 = vunpack.c.h.b16 %v3978
  %v4224 = vpack.c.b16 %v4196, %v4194
  %v4225 = vpack.c.b16 %v4197, %v4195
  %v4226 = vpack.c.b16 %v4200, %v4198
  %v4227 = vpack.c.b16 %v4201, %v4199
  %v4228 = vpack.c.b16 %v4204, %v4202
  %v4229 = vpack.c.b16 %v4205, %v4203
  %v4230 = vpack.c.b16 %v4208, %v4206
  %v4231 = vpack.c.b16 %v4209, %v4207
  %v4232 = vpack.c.b16 %v4212, %v4210
  %v4233 = vpack.c.b16 %v4213, %v4211
  %v4234 = vpack.c.b16 %v4216, %v4214
  %v4235 = vpack.c.b16 %v4217, %v4215
  %v4236 = vpack.c.b16 %v4220, %v4218
  %v4237 = vpack.c.b16 %v4221, %v4219
  %v4238 = vpack.c.b16 %v4222, %v4222
  %v4239 = vpack.c.b16 %v4223, %v4223
  %v4255 = vsel %vm384, %v4139, 0
  %v4258 = vsel %vm384, %v4140, 0
  %v4261 = vsel %vm384, %v4141, 0
  %v4264 = vsel %vm384, %v4142, 0
  %v4267 = vsel %vm384, %v4143, 0
  %v4270 = vsel %vm384, %v4144, 0
  %v4273 = vsel %vm384, %v4145, 0
  %v4276 = vsel %vm384, %v4146, 0
  %v4279 = vsel %vm384, %v4147, 0
  %v4282 = vsel %vm384, %v4148, 0
  %v4285 = vsel %vm384, %v4149, 0
  %v4288 = vsel %vm384, %v4150, 0
  %v4291 = vsel %vm384, %v4151, 0
  %v4294 = vsel %vm384, %v4152, 0
  %v4297 = vsel %vm384, %v4153, 0
  %v4300 = vsel %vm384, %v4154, 0
  %v4303 = vsel %vm384, %v4155, 0
  %v4306 = vsel %vm384, %v4156, 0
  %v4309 = vsel %vm384, %v4157, 0
  %v4312 = vsel %vm384, %v4158, 0
  %v4315 = vsel %vm384, %v4159, 0
  %v4318 = vsel %vm384, %v4160, 0
  %v4321 = vsel %vm384, %v4161, 0
  %v4324 = vsel %vm384, %v4162, 0
  %v4327 = vsel %vm384, %v4163, 0
  %v4330 = vsel %vm384, %v4164, 0
  %v4333 = vsel %vm384, %v4165, 0
  %v4336 = vsel %vm384, %v4166, 0
  %v4339 = vsel %vm384, %v4167, 0
  %v4342 = vsel %vm384, %v4168, 0
  %v4345 = vsel %vm384, %v4169, 0
  %v4348 = vsel %vm384, %v4170, 0
  %v4351 = vsel %vm384, %v4171, 0
  %v4354 = vsel %vm384, %v4172, 0
  %v4357 = vsel %vm384, %v4173, 0
  %v4360 = vsel %vm384, %v4174, 0
  %v4363 = vsel %vm384, %v4175, 0
  %v4366 = vsel %vm384, %v4176, 0
  %v4369 = vsel %vm384, %v4177, 0
  %v4372 = vsel %vm384, %v4178, 0
  %v4375 = vsel %vm505, %v4238, 0
  %v4378 = vsel %vm505, %v4239, 0
  %4380 = vmatpush.bf16.msra.mxu0 %v4375
  %4381 = vmatpush.bf16.msra.mxu0 %v4236
  %4382 = vmatpush.bf16.msra.mxu0 %v4234
  %4383 = vmatpush.bf16.msra.mxu0 %v4232
  %4384 = vmatpush.bf16.msra.mxu0 %v4230
  %4385 = vmatpush.bf16.msra.mxu0 %v4228
  %4386 = vmatpush.bf16.msra.mxu0 %v4226
  %4387 = vmatpush.bf16.msra.mxu0 %v4224
  %4388 = vmatmul.bf16.gmra.mxu0 %v4255
  %v4389 = vpop.f32.mrf.mxu0
  %v4390 = vadd.f32 0.0, %v4389
  %v4391 = vpop.f32.mrf.mxu0
  %v4392 = vadd.f32 0.0, %v4391
  %4393 = vmatmul.bf16.gmra.mxu0 %v4258
  %v4394 = vpop.f32.mrf.mxu0
  %v4395 = vadd.f32 0.0, %v4394
  %v4396 = vpop.f32.mrf.mxu0
  %v4397 = vadd.f32 0.0, %v4396
  %4398 = vmatmul.bf16.gmra.mxu0 %v4261
  %v4399 = vpop.f32.mrf.mxu0
  %v4400 = vadd.f32 0.0, %v4399
  %v4401 = vpop.f32.mrf.mxu0
  %v4402 = vadd.f32 0.0, %v4401
  %4403 = vmatmul.bf16.gmra.mxu0 %v4264
  %v4404 = vpop.f32.mrf.mxu0
  %v4405 = vadd.f32 0.0, %v4404
  %v4406 = vpop.f32.mrf.mxu0
  %v4407 = vadd.f32 0.0, %v4406
  %4408 = vmatmul.bf16.gmra.mxu0 %v4267
  %v4409 = vpop.f32.mrf.mxu0
  %v4410 = vadd.f32 0.0, %v4409
  %v4411 = vpop.f32.mrf.mxu0
  %v4412 = vadd.f32 0.0, %v4411
  %4413 = vmatmul.bf16.gmra.mxu0 %v4270
  %v4414 = vpop.f32.mrf.mxu0
  %v4415 = vadd.f32 0.0, %v4414
  %v4416 = vpop.f32.mrf.mxu0
  %v4417 = vadd.f32 0.0, %v4416
  %4418 = vmatmul.bf16.gmra.mxu0 %v4273
  %v4419 = vpop.f32.mrf.mxu0
  %v4420 = vadd.f32 0.0, %v4419
  %v4421 = vpop.f32.mrf.mxu0
  %v4422 = vadd.f32 0.0, %v4421
  %4423 = vmatmul.bf16.gmra.mxu0 %v4276
  %v4424 = vpop.f32.mrf.mxu0
  %v4425 = vadd.f32 0.0, %v4424
  %v4426 = vpop.f32.mrf.mxu0
  %v4427 = vadd.f32 0.0, %v4426
  %4428 = vmatmul.bf16.gmra.mxu0 %v4279
  %v4429 = vpop.f32.mrf.mxu0
  %v4430 = vadd.f32 0.0, %v4429
  %v4431 = vpop.f32.mrf.mxu0
  %v4432 = vadd.f32 0.0, %v4431
  %4433 = vmatmul.bf16.gmra.mxu0 %v4282
  %v4434 = vpop.f32.mrf.mxu0
  %v4435 = vadd.f32 0.0, %v4434
  %v4436 = vpop.f32.mrf.mxu0
  %v4437 = vadd.f32 0.0, %v4436
  %4438 = vmatmul.bf16.gmra.mxu0 %v4285
  %v4439 = vpop.f32.mrf.mxu0
  %v4440 = vadd.f32 0.0, %v4439
  %v4441 = vpop.f32.mrf.mxu0
  %v4442 = vadd.f32 0.0, %v4441
  %4443 = vmatmul.bf16.gmra.mxu0 %v4288
  %v4444 = vpop.f32.mrf.mxu0
  %v4445 = vadd.f32 0.0, %v4444
  %v4446 = vpop.f32.mrf.mxu0
  %v4447 = vadd.f32 0.0, %v4446
  %4448 = vmatmul.bf16.gmra.mxu0 %v4291
  %v4449 = vpop.f32.mrf.mxu0
  %v4450 = vadd.f32 0.0, %v4449
  %v4451 = vpop.f32.mrf.mxu0
  %v4452 = vadd.f32 0.0, %v4451
  %4453 = vmatmul.bf16.gmra.mxu0 %v4294
  %v4454 = vpop.f32.mrf.mxu0
  %v4455 = vadd.f32 0.0, %v4454
  %v4456 = vpop.f32.mrf.mxu0
  %v4457 = vadd.f32 0.0, %v4456
  %4458 = vmatmul.bf16.gmra.mxu0 %v4297
  %v4459 = vpop.f32.mrf.mxu0
  %v4460 = vadd.f32 0.0, %v4459
  %v4461 = vpop.f32.mrf.mxu0
  %v4462 = vadd.f32 0.0, %v4461
  %4463 = vmatmul.bf16.gmra.mxu0 %v4300
  %v4464 = vpop.f32.mrf.mxu0
  %v4465 = vadd.f32 0.0, %v4464
  %v4466 = vpop.f32.mrf.mxu0
  %v4467 = vadd.f32 0.0, %v4466
  %4468 = vmatmul.bf16.gmra.mxu0 %v4303
  %v4469 = vpop.f32.mrf.mxu0
  %v4470 = vadd.f32 0.0, %v4469
  %v4471 = vpop.f32.mrf.mxu0
  %v4472 = vadd.f32 0.0, %v4471
  %4473 = vmatmul.bf16.gmra.mxu0 %v4306
  %v4474 = vpop.f32.mrf.mxu0
  %v4475 = vadd.f32 0.0, %v4474
  %v4476 = vpop.f32.mrf.mxu0
  %v4477 = vadd.f32 0.0, %v4476
  %4478 = vmatmul.bf16.gmra.mxu0 %v4309
  %v4479 = vpop.f32.mrf.mxu0
  %v4480 = vadd.f32 0.0, %v4479
  %v4481 = vpop.f32.mrf.mxu0
  %v4482 = vadd.f32 0.0, %v4481
  %4483 = vmatmul.bf16.gmra.mxu0 %v4312
  %v4484 = vpop.f32.mrf.mxu0
  %v4485 = vadd.f32 0.0, %v4484
  %v4486 = vpop.f32.mrf.mxu0
  %v4487 = vadd.f32 0.0, %v4486
  %4488 = vmatmul.bf16.gmra.mxu0 %v4315
  %v4489 = vpop.f32.mrf.mxu0
  %v4490 = vadd.f32 0.0, %v4489
  %v4491 = vpop.f32.mrf.mxu0
  %v4492 = vadd.f32 0.0, %v4491
  %4493 = vmatmul.bf16.gmra.mxu0 %v4318
  %v4494 = vpop.f32.mrf.mxu0
  %v4495 = vadd.f32 0.0, %v4494
  %v4496 = vpop.f32.mrf.mxu0
  %v4497 = vadd.f32 0.0, %v4496
  %4498 = vmatmul.bf16.gmra.mxu0 %v4321
  %v4499 = vpop.f32.mrf.mxu0
  %v4500 = vadd.f32 0.0, %v4499
  %v4501 = vpop.f32.mrf.mxu0
  %v4502 = vadd.f32 0.0, %v4501
  %4503 = vmatmul.bf16.gmra.mxu0 %v4324
  %v4504 = vpop.f32.mrf.mxu0
  %v4505 = vadd.f32 0.0, %v4504
  %v4506 = vpop.f32.mrf.mxu0
  %v4507 = vadd.f32 0.0, %v4506
  %4508 = vmatmul.bf16.gmra.mxu0 %v4327
  %v4509 = vpop.f32.mrf.mxu0
  %v4510 = vadd.f32 0.0, %v4509
  %v4511 = vpop.f32.mrf.mxu0
  %v4512 = vadd.f32 0.0, %v4511
  %4513 = vmatmul.bf16.gmra.mxu0 %v4330
  %v4514 = vpop.f32.mrf.mxu0
  %v4515 = vadd.f32 0.0, %v4514
  %v4516 = vpop.f32.mrf.mxu0
  %v4517 = vadd.f32 0.0, %v4516
  %4518 = vmatmul.bf16.gmra.mxu0 %v4333
  %v4519 = vpop.f32.mrf.mxu0
  %v4520 = vadd.f32 0.0, %v4519
  %v4521 = vpop.f32.mrf.mxu0
  %v4522 = vadd.f32 0.0, %v4521
  %4523 = vmatmul.bf16.gmra.mxu0 %v4336
  %v4524 = vpop.f32.mrf.mxu0
  %v4525 = vadd.f32 0.0, %v4524
  %v4526 = vpop.f32.mrf.mxu0
  %v4527 = vadd.f32 0.0, %v4526
  %4528 = vmatmul.bf16.gmra.mxu0 %v4339
  %v4529 = vpop.f32.mrf.mxu0
  %v4530 = vadd.f32 0.0, %v4529
  %v4531 = vpop.f32.mrf.mxu0
  %v4532 = vadd.f32 0.0, %v4531
  %4533 = vmatmul.bf16.gmra.mxu0 %v4342
  %v4534 = vpop.f32.mrf.mxu0
  %v4535 = vadd.f32 0.0, %v4534
  %v4536 = vpop.f32.mrf.mxu0
  %v4537 = vadd.f32 0.0, %v4536
  %4538 = vmatmul.bf16.gmra.mxu0 %v4345
  %v4539 = vpop.f32.mrf.mxu0
  %v4540 = vadd.f32 0.0, %v4539
  %v4541 = vpop.f32.mrf.mxu0
  %v4542 = vadd.f32 0.0, %v4541
  %4543 = vmatmul.bf16.gmra.mxu0 %v4348
  %v4544 = vpop.f32.mrf.mxu0
  %v4545 = vadd.f32 0.0, %v4544
  %v4546 = vpop.f32.mrf.mxu0
  %v4547 = vadd.f32 0.0, %v4546
  %4548 = vmatmul.bf16.gmra.mxu0 %v4351
  %v4549 = vpop.f32.mrf.mxu0
  %v4550 = vadd.f32 0.0, %v4549
  %v4551 = vpop.f32.mrf.mxu0
  %v4552 = vadd.f32 0.0, %v4551
  %4553 = vmatmul.bf16.gmra.mxu0 %v4354
  %v4554 = vpop.f32.mrf.mxu0
  %v4555 = vadd.f32 0.0, %v4554
  %v4556 = vpop.f32.mrf.mxu0
  %v4557 = vadd.f32 0.0, %v4556
  %4558 = vmatmul.bf16.gmra.mxu0 %v4357
  %v4559 = vpop.f32.mrf.mxu0
  %v4560 = vadd.f32 0.0, %v4559
  %v4561 = vpop.f32.mrf.mxu0
  %v4562 = vadd.f32 0.0, %v4561
  %4563 = vmatmul.bf16.gmra.mxu0 %v4360
  %v4564 = vpop.f32.mrf.mxu0
  %v4565 = vadd.f32 0.0, %v4564
  %v4566 = vpop.f32.mrf.mxu0
  %v4567 = vadd.f32 0.0, %v4566
  %4568 = vmatmul.bf16.gmra.mxu0 %v4363
  %v4569 = vpop.f32.mrf.mxu0
  %v4570 = vadd.f32 0.0, %v4569
  %v4571 = vpop.f32.mrf.mxu0
  %v4572 = vadd.f32 0.0, %v4571
  %4573 = vmatmul.bf16.gmra.mxu0 %v4366
  %v4574 = vpop.f32.mrf.mxu0
  %v4575 = vadd.f32 0.0, %v4574
  %v4576 = vpop.f32.mrf.mxu0
  %v4577 = vadd.f32 0.0, %v4576
  %4578 = vmatmul.bf16.gmra.mxu0 %v4369
  %v4579 = vpop.f32.mrf.mxu0
  %v4580 = vadd.f32 0.0, %v4579
  %v4581 = vpop.f32.mrf.mxu0
  %v4582 = vadd.f32 0.0, %v4581
  %4583 = vmatmul.bf16.gmra.mxu0 %v4372
  %v4584 = vpop.f32.mrf.mxu0
  %v4585 = vadd.f32 0.0, %v4584
  %v4586 = vpop.f32.mrf.mxu0
  %v4587 = vadd.f32 0.0, %v4586
  %4588 = vdwg.mxu0
  %4589 = vmatpush.bf16.msra.mxu0 %v4378
  %4590 = vmatpush.bf16.msra.mxu0 %v4237
  %4591 = vmatpush.bf16.msra.mxu0 %v4235
  %4592 = vmatpush.bf16.msra.mxu0 %v4233
  %4593 = vmatpush.bf16.msra.mxu0 %v4231
  %4594 = vmatpush.bf16.msra.mxu0 %v4229
  %4595 = vmatpush.bf16.msra.mxu0 %v4227
  %4596 = vmatpush.bf16.msra.mxu0 %v4225
  %4597 = vmatmul.bf16.gmra.mxu0 %v4255
  %v4598 = vpop.f32.mrf.mxu0
  %v4599 = vadd.f32 0.0, %v4598
  %v4600 = vpop.f32.mrf.mxu0
  %v4601 = vadd.f32 0.0, %v4600
  %4602 = vmatmul.bf16.gmra.mxu0 %v4258
  %v4603 = vpop.f32.mrf.mxu0
  %v4604 = vadd.f32 0.0, %v4603
  %v4605 = vpop.f32.mrf.mxu0
  %v4606 = vadd.f32 0.0, %v4605
  %4607 = vmatmul.bf16.gmra.mxu0 %v4261
  %v4608 = vpop.f32.mrf.mxu0
  %v4609 = vadd.f32 0.0, %v4608
  %v4610 = vpop.f32.mrf.mxu0
  %v4611 = vadd.f32 0.0, %v4610
  %4612 = vmatmul.bf16.gmra.mxu0 %v4264
  %v4613 = vpop.f32.mrf.mxu0
  %v4614 = vadd.f32 0.0, %v4613
  %v4615 = vpop.f32.mrf.mxu0
  %v4616 = vadd.f32 0.0, %v4615
  %4617 = vmatmul.bf16.gmra.mxu0 %v4267
  %v4618 = vpop.f32.mrf.mxu0
  %v4619 = vadd.f32 0.0, %v4618
  %v4620 = vpop.f32.mrf.mxu0
  %v4621 = vadd.f32 0.0, %v4620
  %4622 = vmatmul.bf16.gmra.mxu0 %v4270
  %v4623 = vpop.f32.mrf.mxu0
  %v4624 = vadd.f32 0.0, %v4623
  %v4625 = vpop.f32.mrf.mxu0
  %v4626 = vadd.f32 0.0, %v4625
  %4627 = vmatmul.bf16.gmra.mxu0 %v4273
  %v4628 = vpop.f32.mrf.mxu0
  %v4629 = vadd.f32 0.0, %v4628
  %v4630 = vpop.f32.mrf.mxu0
  %v4631 = vadd.f32 0.0, %v4630
  %4632 = vmatmul.bf16.gmra.mxu0 %v4276
  %v4633 = vpop.f32.mrf.mxu0
  %v4634 = vadd.f32 0.0, %v4633
  %v4635 = vpop.f32.mrf.mxu0
  %v4636 = vadd.f32 0.0, %v4635
  %4637 = vmatmul.bf16.gmra.mxu0 %v4279
  %v4638 = vpop.f32.mrf.mxu0
  %v4639 = vadd.f32 0.0, %v4638
  %v4640 = vpop.f32.mrf.mxu0
  %v4641 = vadd.f32 0.0, %v4640
  %4642 = vmatmul.bf16.gmra.mxu0 %v4282
  %v4643 = vpop.f32.mrf.mxu0
  %v4644 = vadd.f32 0.0, %v4643
  %v4645 = vpop.f32.mrf.mxu0
  %v4646 = vadd.f32 0.0, %v4645
  %4647 = vmatmul.bf16.gmra.mxu0 %v4285
  %v4648 = vpop.f32.mrf.mxu0
  %v4649 = vadd.f32 0.0, %v4648
  %v4650 = vpop.f32.mrf.mxu0
  %v4651 = vadd.f32 0.0, %v4650
  %4652 = vmatmul.bf16.gmra.mxu0 %v4288
  %v4653 = vpop.f32.mrf.mxu0
  %v4654 = vadd.f32 0.0, %v4653
  %v4655 = vpop.f32.mrf.mxu0
  %v4656 = vadd.f32 0.0, %v4655
  %4657 = vmatmul.bf16.gmra.mxu0 %v4291
  %v4658 = vpop.f32.mrf.mxu0
  %v4659 = vadd.f32 0.0, %v4658
  %v4660 = vpop.f32.mrf.mxu0
  %v4661 = vadd.f32 0.0, %v4660
  %4662 = vmatmul.bf16.gmra.mxu0 %v4294
  %v4663 = vpop.f32.mrf.mxu0
  %v4664 = vadd.f32 0.0, %v4663
  %v4665 = vpop.f32.mrf.mxu0
  %v4666 = vadd.f32 0.0, %v4665
  %4667 = vmatmul.bf16.gmra.mxu0 %v4297
  %v4668 = vpop.f32.mrf.mxu0
  %v4669 = vadd.f32 0.0, %v4668
  %v4670 = vpop.f32.mrf.mxu0
  %v4671 = vadd.f32 0.0, %v4670
  %4672 = vmatmul.bf16.gmra.mxu0 %v4300
  %v4673 = vpop.f32.mrf.mxu0
  %v4674 = vadd.f32 0.0, %v4673
  %v4675 = vpop.f32.mrf.mxu0
  %v4676 = vadd.f32 0.0, %v4675
  %4677 = vmatmul.bf16.gmra.mxu0 %v4303
  %v4678 = vpop.f32.mrf.mxu0
  %v4679 = vadd.f32 0.0, %v4678
  %v4680 = vpop.f32.mrf.mxu0
  %v4681 = vadd.f32 0.0, %v4680
  %4682 = vmatmul.bf16.gmra.mxu0 %v4306
  %v4683 = vpop.f32.mrf.mxu0
  %v4684 = vadd.f32 0.0, %v4683
  %v4685 = vpop.f32.mrf.mxu0
  %v4686 = vadd.f32 0.0, %v4685
  %4687 = vmatmul.bf16.gmra.mxu0 %v4309
  %v4688 = vpop.f32.mrf.mxu0
  %v4689 = vadd.f32 0.0, %v4688
  %v4690 = vpop.f32.mrf.mxu0
  %v4691 = vadd.f32 0.0, %v4690
  %4692 = vmatmul.bf16.gmra.mxu0 %v4312
  %v4693 = vpop.f32.mrf.mxu0
  %v4694 = vadd.f32 0.0, %v4693
  %v4695 = vpop.f32.mrf.mxu0
  %v4696 = vadd.f32 0.0, %v4695
  %4697 = vmatmul.bf16.gmra.mxu0 %v4315
  %v4698 = vpop.f32.mrf.mxu0
  %v4699 = vadd.f32 0.0, %v4698
  %v4700 = vpop.f32.mrf.mxu0
  %v4701 = vadd.f32 0.0, %v4700
  %4702 = vmatmul.bf16.gmra.mxu0 %v4318
  %v4703 = vpop.f32.mrf.mxu0
  %v4704 = vadd.f32 0.0, %v4703
  %v4705 = vpop.f32.mrf.mxu0
  %v4706 = vadd.f32 0.0, %v4705
  %4707 = vmatmul.bf16.gmra.mxu0 %v4321
  %v4708 = vpop.f32.mrf.mxu0
  %v4709 = vadd.f32 0.0, %v4708
  %v4710 = vpop.f32.mrf.mxu0
  %v4711 = vadd.f32 0.0, %v4710
  %4712 = vmatmul.bf16.gmra.mxu0 %v4324
  %v4713 = vpop.f32.mrf.mxu0
  %v4714 = vadd.f32 0.0, %v4713
  %v4715 = vpop.f32.mrf.mxu0
  %v4716 = vadd.f32 0.0, %v4715
  %4717 = vmatmul.bf16.gmra.mxu0 %v4327
  %v4718 = vpop.f32.mrf.mxu0
  %v4719 = vadd.f32 0.0, %v4718
  %v4720 = vpop.f32.mrf.mxu0
  %v4721 = vadd.f32 0.0, %v4720
  %4722 = vmatmul.bf16.gmra.mxu0 %v4330
  %v4723 = vpop.f32.mrf.mxu0
  %v4724 = vadd.f32 0.0, %v4723
  %v4725 = vpop.f32.mrf.mxu0
  %v4726 = vadd.f32 0.0, %v4725
  %4727 = vmatmul.bf16.gmra.mxu0 %v4333
  %v4728 = vpop.f32.mrf.mxu0
  %v4729 = vadd.f32 0.0, %v4728
  %v4730 = vpop.f32.mrf.mxu0
  %v4731 = vadd.f32 0.0, %v4730
  %4732 = vmatmul.bf16.gmra.mxu0 %v4336
  %v4733 = vpop.f32.mrf.mxu0
  %v4734 = vadd.f32 0.0, %v4733
  %v4735 = vpop.f32.mrf.mxu0
  %v4736 = vadd.f32 0.0, %v4735
  %4737 = vmatmul.bf16.gmra.mxu0 %v4339
  %v4738 = vpop.f32.mrf.mxu0
  %v4739 = vadd.f32 0.0, %v4738
  %v4740 = vpop.f32.mrf.mxu0
  %v4741 = vadd.f32 0.0, %v4740
  %4742 = vmatmul.bf16.gmra.mxu0 %v4342
  %v4743 = vpop.f32.mrf.mxu0
  %v4744 = vadd.f32 0.0, %v4743
  %v4745 = vpop.f32.mrf.mxu0
  %v4746 = vadd.f32 0.0, %v4745
  %4747 = vmatmul.bf16.gmra.mxu0 %v4345
  %v4748 = vpop.f32.mrf.mxu0
  %v4749 = vadd.f32 0.0, %v4748
  %v4750 = vpop.f32.mrf.mxu0
  %v4751 = vadd.f32 0.0, %v4750
  %4752 = vmatmul.bf16.gmra.mxu0 %v4348
  %v4753 = vpop.f32.mrf.mxu0
  %v4754 = vadd.f32 0.0, %v4753
  %v4755 = vpop.f32.mrf.mxu0
  %v4756 = vadd.f32 0.0, %v4755
  %4757 = vmatmul.bf16.gmra.mxu0 %v4351
  %v4758 = vpop.f32.mrf.mxu0
  %v4759 = vadd.f32 0.0, %v4758
  %v4760 = vpop.f32.mrf.mxu0
  %v4761 = vadd.f32 0.0, %v4760
  %4762 = vmatmul.bf16.gmra.mxu0 %v4354
  %v4763 = vpop.f32.mrf.mxu0
  %v4764 = vadd.f32 0.0, %v4763
  %v4765 = vpop.f32.mrf.mxu0
  %v4766 = vadd.f32 0.0, %v4765
  %4767 = vmatmul.bf16.gmra.mxu0 %v4357
  %v4768 = vpop.f32.mrf.mxu0
  %v4769 = vadd.f32 0.0, %v4768
  %v4770 = vpop.f32.mrf.mxu0
  %v4771 = vadd.f32 0.0, %v4770
  %4772 = vmatmul.bf16.gmra.mxu0 %v4360
  %v4773 = vpop.f32.mrf.mxu0
  %v4774 = vadd.f32 0.0, %v4773
  %v4775 = vpop.f32.mrf.mxu0
  %v4776 = vadd.f32 0.0, %v4775
  %4777 = vmatmul.bf16.gmra.mxu0 %v4363
  %v4778 = vpop.f32.mrf.mxu0
  %v4779 = vadd.f32 0.0, %v4778
  %v4780 = vpop.f32.mrf.mxu0
  %v4781 = vadd.f32 0.0, %v4780
  %4782 = vmatmul.bf16.gmra.mxu0 %v4366
  %v4783 = vpop.f32.mrf.mxu0
  %v4784 = vadd.f32 0.0, %v4783
  %v4785 = vpop.f32.mrf.mxu0
  %v4786 = vadd.f32 0.0, %v4785
  %4787 = vmatmul.bf16.gmra.mxu0 %v4369
  %v4788 = vpop.f32.mrf.mxu0
  %v4789 = vadd.f32 0.0, %v4788
  %v4790 = vpop.f32.mrf.mxu0
  %v4791 = vadd.f32 0.0, %v4790
  %4792 = vmatmul.bf16.gmra.mxu0 %v4372
  %v4793 = vpop.f32.mrf.mxu0
  %v4794 = vadd.f32 0.0, %v4793
  %v4795 = vpop.f32.mrf.mxu0
  %v4796 = vadd.f32 0.0, %v4795
  %4797 = vdwg.mxu0
  %v4798 = vld [vmem:[#allocation2] sm:$0xff]
  %v4799 = vld [vmem:[#allocation2 + $0x8] sm:$0xff]
  %v4800 = vld [vmem:[#allocation2 + $0x10] sm:$0xff]
  %v4801 = vld [vmem:[#allocation2 + $0x18] sm:$0xff]
  %v4802 = vld [vmem:[#allocation2 + $0x20] sm:$0xff]
  %v4803 = vld [vmem:[#allocation2 + $0x28] sm:$0xff]
  %v4804 = vld [vmem:[#allocation2 + $0x30] sm:$0xff]
  %v4805 = vld [vmem:[#allocation2 + $0x38] sm:$0xff]
  %v4806 = vld [vmem:[#allocation2 + $0x40] sm:$0xff]
  %v4807 = vld [vmem:[#allocation2 + $0x48] sm:$0xff]
  %v4808 = vld [vmem:[#allocation2 + $0x50] sm:$0xff]
  %v4809 = vld [vmem:[#allocation2 + $0x58] sm:$0xff]
  %v4810 = vld [vmem:[#allocation2 + $0x60] sm:$0xff]
  %v4811 = vld [vmem:[#allocation2 + $0x68] sm:$0xff]
  %v4812 = vld [vmem:[#allocation2 + $0x70] sm:$0xff]
  %v4813 = vld [vmem:[#allocation2 + $0x78] sm:$0xff]
  %v4814 = vld [vmem:[#allocation2 + $0x80] sm:$0xff]
  %v4815 = vld [vmem:[#allocation2 + $0x88] sm:$0xff]
  %v4816 = vld [vmem:[#allocation2 + $0x90] sm:$0xff]
  %v4817 = vld [vmem:[#allocation2 + $0x98] sm:$0xff]
  %v4818 = vld [vmem:[#allocation2 + $0xa0] sm:$0xff]
  %v4819 = vld [vmem:[#allocation2 + $0xa8] sm:$0xff]
  %v4820 = vld [vmem:[#allocation2 + $0xb0] sm:$0xff]
  %v4821 = vld [vmem:[#allocation2 + $0xb8] sm:$0xff]
  %v4822 = vld [vmem:[#allocation2 + $0xc0] sm:$0xff]
  %v4823 = vld [vmem:[#allocation2 + $0xc8] sm:$0xff]
  %v4824 = vld [vmem:[#allocation2 + $0xd0] sm:$0xff]
  %v4825 = vld [vmem:[#allocation2 + $0xd8] sm:$0xff]
  %v4826 = vld [vmem:[#allocation2 + $0xe0] sm:$0xff]
  %v4827 = vld [vmem:[#allocation2 + $0xe8] sm:$0xff]
  %v4828 = vld [vmem:[#allocation2 + $0xf0] sm:$0xff]
  %v4829 = vld [vmem:[#allocation2 + $0xf8] sm:$0xff]
  %v4830 = vld [vmem:[#allocation2 + $0x100] sm:$0xff]
  %v4831 = vld [vmem:[#allocation2 + $0x108] sm:$0xff]
  %v4832 = vld [vmem:[#allocation2 + $0x110] sm:$0xff]
  %v4833 = vld [vmem:[#allocation2 + $0x118] sm:$0xff]
  %v4834 = vld [vmem:[#allocation2 + $0x120] sm:$0xff]
  %v4835 = vld [vmem:[#allocation2 + $0x128] sm:$0xff]
  %v4836 = vld [vmem:[#allocation2 + $0x130] sm:$0xff]
  %v4837 = vld [vmem:[#allocation2 + $0x138] sm:$0xff]
  %v4838 = vld [vmem:[#allocation2 + $0x140] sm:$0xff]
  %v4839 = vld [vmem:[#allocation2 + $0x148] sm:$0xff]
  %v4840 = vld [vmem:[#allocation2 + $0x150] sm:$0xff]
  %v4841 = vld [vmem:[#allocation2 + $0x158] sm:$0xff]
  %v4842 = vld [vmem:[#allocation2 + $0x160] sm:$0xff]
  %v4843 = vld [vmem:[#allocation2 + $0x168] sm:$0xff]
  %v4844 = vld [vmem:[#allocation2 + $0x170] sm:$0xff]
  %v4845 = vld [vmem:[#allocation2 + $0x178] sm:$0xff]
  %v4846 = vld [vmem:[#allocation2 + $0x180] sm:$0xff]
  %v4847 = vld [vmem:[#allocation2 + $0x188] sm:$0xff]
  %v4848 = vld [vmem:[#allocation2 + $0x190] sm:$0xff]
  %v4849 = vld [vmem:[#allocation2 + $0x198] sm:$0xff]
  %v4850 = vld [vmem:[#allocation2 + $0x1a0] sm:$0xff]
  %v4851 = vld [vmem:[#allocation2 + $0x1a8] sm:$0xff]
  %v4852 = vld [vmem:[#allocation2 + $0x1b0] sm:$0xff]
  %v4853 = vld [vmem:[#allocation2 + $0x1b8] sm:$0xff]
  %v4854 = vld [vmem:[#allocation2 + $0x1c0] sm:$0xff]
  %v4855 = vld [vmem:[#allocation2 + $0x1c8] sm:$0xff]
  %v4856 = vld [vmem:[#allocation2 + $0x1d0] sm:$0xff]
  %v4857 = vld [vmem:[#allocation2 + $0x1d8] sm:$0xff]
  %v4858 = vld [vmem:[#allocation2 + $0x1e0] sm:$0xff]
  %v4859 = vld [vmem:[#allocation2 + $0x1e8] sm:$0xff]
  %v4860 = vld [vmem:[#allocation2 + $0x1f0] sm:$0xff]
  %v4861 = vld [vmem:[#allocation2 + $0x1f8] sm:$0xff]
  %v4862 = vld [vmem:[#allocation2 + $0x200] sm:$0xff]
  %v4863 = vld [vmem:[#allocation2 + $0x208] sm:$0xff]
  %v4864 = vld [vmem:[#allocation2 + $0x210] sm:$0xff]
  %v4865 = vld [vmem:[#allocation2 + $0x218] sm:$0xff]
  %v4866 = vld [vmem:[#allocation2 + $0x220] sm:$0xff]
  %v4867 = vld [vmem:[#allocation2 + $0x228] sm:$0xff]
  %v4868 = vld [vmem:[#allocation2 + $0x230] sm:$0xff]
  %v4869 = vld [vmem:[#allocation2 + $0x238] sm:$0xff]
  %v4870 = vld [vmem:[#allocation2 + $0x240] sm:$0xff]
  %v4871 = vld [vmem:[#allocation2 + $0x248] sm:$0xff]
  %v4872 = vld [vmem:[#allocation2 + $0x250] sm:$0xff]
  %v4873 = vld [vmem:[#allocation2 + $0x258] sm:$0xff]
  %v4874 = vld [vmem:[#allocation2 + $0x260] sm:$0xff]
  %v4875 = vld [vmem:[#allocation2 + $0x268] sm:$0xff]
  %v4876 = vld [vmem:[#allocation2 + $0x270] sm:$0xff]
  %v4877 = vld [vmem:[#allocation2 + $0x278] sm:$0xff]
  %v4878 = vld [vmem:[#allocation2 + $0x280] sm:$0xff]
  %v4879 = vld [vmem:[#allocation2 + $0x288] sm:$0xff]
  %v4880 = vld [vmem:[#allocation2 + $0x290] sm:$0xff]
  %v4881 = vld [vmem:[#allocation2 + $0x298] sm:$0xff]
  %v4882 = vld [vmem:[#allocation2 + $0x2a0] sm:$0xff]
  %v4883 = vld [vmem:[#allocation2 + $0x2a8] sm:$0xff]
  %v4884 = vld [vmem:[#allocation2 + $0x2b0] sm:$0xff]
  %v4885 = vld [vmem:[#allocation2 + $0x2b8] sm:$0xff]
  %v4886 = vld [vmem:[#allocation2 + $0x2c0] sm:$0xff]
  %v4887 = vld [vmem:[#allocation2 + $0x2c8] sm:$0xff]
  %v4888 = vld [vmem:[#allocation2 + $0x2d0] sm:$0xff]
  %v4889 = vld [vmem:[#allocation2 + $0x2d8] sm:$0xff]
  %v4890 = vld [vmem:[#allocation2 + $0x2e0] sm:$0xff]
  %v4891 = vld [vmem:[#allocation2 + $0x2e8] sm:$0xff]
  %v4892 = vld [vmem:[#allocation2 + $0x2f0] sm:$0xff]
  %v4893 = vld [vmem:[#allocation2 + $0x2f8] sm:$0xff]
  %v4894 = vld [vmem:[#allocation2 + $0x300] sm:$0xff]
  %v4895 = vld [vmem:[#allocation2 + $0x308] sm:$0xff]
  %v4896 = vld [vmem:[#allocation2 + $0x310] sm:$0xff]
  %v4897 = vld [vmem:[#allocation2 + $0x318] sm:$0xff]
  %v4898 = vld [vmem:[#allocation2 + $0x320] sm:$0xff]
  %v4899 = vld [vmem:[#allocation2 + $0x328] sm:$0xff]
  %v4900 = vld [vmem:[#allocation2 + $0x330] sm:$0xff]
  %v4901 = vld [vmem:[#allocation2 + $0x338] sm:$0xff]
  %v4902 = vld [vmem:[#allocation2 + $0x340] sm:$0xff]
  %v4903 = vld [vmem:[#allocation2 + $0x348] sm:$0xff]
  %v4904 = vld [vmem:[#allocation2 + $0x350] sm:$0xff]
  %v4905 = vld [vmem:[#allocation2 + $0x358] sm:$0xff]
  %v4906 = vld [vmem:[#allocation2 + $0x360] sm:$0xff]
  %v4907 = vld [vmem:[#allocation2 + $0x368] sm:$0xff]
  %v4908 = vld [vmem:[#allocation2 + $0x370] sm:$0xff]
  %v4909 = vld [vmem:[#allocation2 + $0x378] sm:$0xff]
  %v4910 = vld [vmem:[#allocation2 + $0x380] sm:$0xff]
  %v4911 = vld [vmem:[#allocation2 + $0x388] sm:$0xff]
  %v4912 = vld [vmem:[#allocation2 + $0x390] sm:$0xff]
  %v4913 = vld [vmem:[#allocation2 + $0x398] sm:$0xff]
  %v4914 = vld [vmem:[#allocation2 + $0x3a0] sm:$0xff]
  %v4915 = vld [vmem:[#allocation2 + $0x3a8] sm:$0xff]
  %v4916 = vld [vmem:[#allocation2 + $0x3b0] sm:$0xff]
  %v4917 = vld [vmem:[#allocation2 + $0x3b8] sm:$0xff]
  %v4918 = vld [vmem:[#allocation2 + $0x3c0] sm:$0xff]
  %v4919 = vld [vmem:[#allocation2 + $0x3c8] sm:$0xff]
  %v4920 = vld [vmem:[#allocation2 + $0x3d0] sm:$0xff]
  %v4921 = vld [vmem:[#allocation2 + $0x3d8] sm:$0xff]
  %v4922 = vld [vmem:[#allocation2 + $0x3e0] sm:$0xff]
  %v4923 = vld [vmem:[#allocation2 + $0x3e8] sm:$0xff]
  %v4924 = vld [vmem:[#allocation2 + $0x3f0] sm:$0xff]
  %v4925 = vld [vmem:[#allocation2 + $0x3f8] sm:$0xff]
  %v4926 = vld [vmem:[#allocation2 + $0x400] sm:$0xff]
  %v4927 = vld [vmem:[#allocation2 + $0x408] sm:$0xff]
  %v4928 = vld [vmem:[#allocation2 + $0x410] sm:$0xff]
  %v4929 = vld [vmem:[#allocation2 + $0x418] sm:$0xff]
  %v4930 = vld [vmem:[#allocation2 + $0x420] sm:$0xff]
  %v4931 = vld [vmem:[#allocation2 + $0x428] sm:$0xff]
  %v4932 = vld [vmem:[#allocation2 + $0x430] sm:$0xff]
  %v4933 = vld [vmem:[#allocation2 + $0x438] sm:$0xff]
  %v4934 = vld [vmem:[#allocation2 + $0x440] sm:$0xff]
  %v4935 = vld [vmem:[#allocation2 + $0x448] sm:$0xff]
  %v4936 = vld [vmem:[#allocation2 + $0x450] sm:$0xff]
  %v4937 = vld [vmem:[#allocation2 + $0x458] sm:$0xff]
  %v4938 = vld [vmem:[#allocation2 + $0x460] sm:$0xff]
  %v4939 = vld [vmem:[#allocation2 + $0x468] sm:$0xff]
  %v4940 = vld [vmem:[#allocation2 + $0x470] sm:$0xff]
  %v4941 = vld [vmem:[#allocation2 + $0x478] sm:$0xff]
  %v4942 = vld [vmem:[#allocation2 + $0x480] sm:$0xff]
  %v4943 = vld [vmem:[#allocation2 + $0x488] sm:$0xff]
  %v4944 = vld [vmem:[#allocation2 + $0x490] sm:$0xff]
  %v4945 = vld [vmem:[#allocation2 + $0x498] sm:$0xff]
  %v4946 = vld [vmem:[#allocation2 + $0x4a0] sm:$0xff]
  %v4947 = vld [vmem:[#allocation2 + $0x4a8] sm:$0xff]
  %v4948 = vld [vmem:[#allocation2 + $0x4b0] sm:$0xff]
  %v4949 = vld [vmem:[#allocation2 + $0x4b8] sm:$0xff]
  %v4950 = vld [vmem:[#allocation2 + $0x4c0] sm:$0xff]
  %v4951 = vld [vmem:[#allocation2 + $0x4c8] sm:$0xff]
  %v4952 = vld [vmem:[#allocation2 + $0x4d0] sm:$0xff]
  %v4953 = vld [vmem:[#allocation2 + $0x4d8] sm:$0xff]
  %v4954 = vld [vmem:[#allocation2 + $0x4e0] sm:$0xff]
  %v4955 = vld [vmem:[#allocation2 + $0x4e8] sm:$0xff]
  %v4956 = vld [vmem:[#allocation2 + $0x4f0] sm:$0xff]
  %v4957 = vld [vmem:[#allocation2 + $0x4f8] sm:$0xff]
  %v4958 = vadd.f32 %v4798, %v4390
  %v4959 = vadd.f32 %v4799, %v4599
  %v4960 = vadd.f32 %v4800, %v4392
  %v4961 = vadd.f32 %v4801, %v4601
  %v4962 = vadd.f32 %v4802, %v4395
  %v4963 = vadd.f32 %v4803, %v4604
  %v4964 = vadd.f32 %v4804, %v4397
  %v4965 = vadd.f32 %v4805, %v4606
  %v4966 = vadd.f32 %v4806, %v4400
  %v4967 = vadd.f32 %v4807, %v4609
  %v4968 = vadd.f32 %v4808, %v4402
  %v4969 = vadd.f32 %v4809, %v4611
  %v4970 = vadd.f32 %v4810, %v4405
  %v4971 = vadd.f32 %v4811, %v4614
  %v4972 = vadd.f32 %v4812, %v4407
  %v4973 = vadd.f32 %v4813, %v4616
  %v4974 = vadd.f32 %v4814, %v4410
  %v4975 = vadd.f32 %v4815, %v4619
  %v4976 = vadd.f32 %v4816, %v4412
  %v4977 = vadd.f32 %v4817, %v4621
  %v4978 = vadd.f32 %v4818, %v4415
  %v4979 = vadd.f32 %v4819, %v4624
  %v4980 = vadd.f32 %v4820, %v4417
  %v4981 = vadd.f32 %v4821, %v4626
  %v4982 = vadd.f32 %v4822, %v4420
  %v4983 = vadd.f32 %v4823, %v4629
  %v4984 = vadd.f32 %v4824, %v4422
  %v4985 = vadd.f32 %v4825, %v4631
  %v4986 = vadd.f32 %v4826, %v4425
  %v4987 = vadd.f32 %v4827, %v4634
  %v4988 = vadd.f32 %v4828, %v4427
  %v4989 = vadd.f32 %v4829, %v4636
  %v4990 = vadd.f32 %v4830, %v4430
  %v4991 = vadd.f32 %v4831, %v4639
  %v4992 = vadd.f32 %v4832, %v4432
  %v4993 = vadd.f32 %v4833, %v4641
  %v4994 = vadd.f32 %v4834, %v4435
  %v4995 = vadd.f32 %v4835, %v4644
  %v4996 = vadd.f32 %v4836, %v4437
  %v4997 = vadd.f32 %v4837, %v4646
  %v4998 = vadd.f32 %v4838, %v4440
  %v4999 = vadd.f32 %v4839, %v4649
  %v5000 = vadd.f32 %v4840, %v4442
  %v5001 = vadd.f32 %v4841, %v4651
  %v5002 = vadd.f32 %v4842, %v4445
  %v5003 = vadd.f32 %v4843, %v4654
  %v5004 = vadd.f32 %v4844, %v4447
  %v5005 = vadd.f32 %v4845, %v4656
  %v5006 = vadd.f32 %v4846, %v4450
  %v5007 = vadd.f32 %v4847, %v4659
  %v5008 = vadd.f32 %v4848, %v4452
  %v5009 = vadd.f32 %v4849, %v4661
  %v5010 = vadd.f32 %v4850, %v4455
  %v5011 = vadd.f32 %v4851, %v4664
  %v5012 = vadd.f32 %v4852, %v4457
  %v5013 = vadd.f32 %v4853, %v4666
  %v5014 = vadd.f32 %v4854, %v4460
  %v5015 = vadd.f32 %v4855, %v4669
  %v5016 = vadd.f32 %v4856, %v4462
  %v5017 = vadd.f32 %v4857, %v4671
  %v5018 = vadd.f32 %v4858, %v4465
  %v5019 = vadd.f32 %v4859, %v4674
  %v5020 = vadd.f32 %v4860, %v4467
  %v5021 = vadd.f32 %v4861, %v4676
  %v5022 = vadd.f32 %v4862, %v4470
  %v5023 = vadd.f32 %v4863, %v4679
  %v5024 = vadd.f32 %v4864, %v4472
  %v5025 = vadd.f32 %v4865, %v4681
  %v5026 = vadd.f32 %v4866, %v4475
  %v5027 = vadd.f32 %v4867, %v4684
  %v5028 = vadd.f32 %v4868, %v4477
  %v5029 = vadd.f32 %v4869, %v4686
  %v5030 = vadd.f32 %v4870, %v4480
  %v5031 = vadd.f32 %v4871, %v4689
  %v5032 = vadd.f32 %v4872, %v4482
  %v5033 = vadd.f32 %v4873, %v4691
  %v5034 = vadd.f32 %v4874, %v4485
  %v5035 = vadd.f32 %v4875, %v4694
  %v5036 = vadd.f32 %v4876, %v4487
  %v5037 = vadd.f32 %v4877, %v4696
  %v5038 = vadd.f32 %v4878, %v4490
  %v5039 = vadd.f32 %v4879, %v4699
  %v5040 = vadd.f32 %v4880, %v4492
  %v5041 = vadd.f32 %v4881, %v4701
  %v5042 = vadd.f32 %v4882, %v4495
  %v5043 = vadd.f32 %v4883, %v4704
  %v5044 = vadd.f32 %v4884, %v4497
  %v5045 = vadd.f32 %v4885, %v4706
  %v5046 = vadd.f32 %v4886, %v4500
  %v5047 = vadd.f32 %v4887, %v4709
  %v5048 = vadd.f32 %v4888, %v4502
  %v5049 = vadd.f32 %v4889, %v4711
  %v5050 = vadd.f32 %v4890, %v4505
  %v5051 = vadd.f32 %v4891, %v4714
  %v5052 = vadd.f32 %v4892, %v4507
  %v5053 = vadd.f32 %v4893, %v4716
  %v5054 = vadd.f32 %v4894, %v4510
  %v5055 = vadd.f32 %v4895, %v4719
  %v5056 = vadd.f32 %v4896, %v4512
  %v5057 = vadd.f32 %v4897, %v4721
  %v5058 = vadd.f32 %v4898, %v4515
  %v5059 = vadd.f32 %v4899, %v4724
  %v5060 = vadd.f32 %v4900, %v4517
  %v5061 = vadd.f32 %v4901, %v4726
  %v5062 = vadd.f32 %v4902, %v4520
  %v5063 = vadd.f32 %v4903, %v4729
  %v5064 = vadd.f32 %v4904, %v4522
  %v5065 = vadd.f32 %v4905, %v4731
  %v5066 = vadd.f32 %v4906, %v4525
  %v5067 = vadd.f32 %v4907, %v4734
  %v5068 = vadd.f32 %v4908, %v4527
  %v5069 = vadd.f32 %v4909, %v4736
  %v5070 = vadd.f32 %v4910, %v4530
  %v5071 = vadd.f32 %v4911, %v4739
  %v5072 = vadd.f32 %v4912, %v4532
  %v5073 = vadd.f32 %v4913, %v4741
  %v5074 = vadd.f32 %v4914, %v4535
  %v5075 = vadd.f32 %v4915, %v4744
  %v5076 = vadd.f32 %v4916, %v4537
  %v5077 = vadd.f32 %v4917, %v4746
  %v5078 = vadd.f32 %v4918, %v4540
  %v5079 = vadd.f32 %v4919, %v4749
  %v5080 = vadd.f32 %v4920, %v4542
  %v5081 = vadd.f32 %v4921, %v4751
  %v5082 = vadd.f32 %v4922, %v4545
  %v5083 = vadd.f32 %v4923, %v4754
  %v5084 = vadd.f32 %v4924, %v4547
  %v5085 = vadd.f32 %v4925, %v4756
  %v5086 = vadd.f32 %v4926, %v4550
  %v5087 = vadd.f32 %v4927, %v4759
  %v5088 = vadd.f32 %v4928, %v4552
  %v5089 = vadd.f32 %v4929, %v4761
  %v5090 = vadd.f32 %v4930, %v4555
  %v5091 = vadd.f32 %v4931, %v4764
  %v5092 = vadd.f32 %v4932, %v4557
  %v5093 = vadd.f32 %v4933, %v4766
  %v5094 = vadd.f32 %v4934, %v4560
  %v5095 = vadd.f32 %v4935, %v4769
  %v5096 = vadd.f32 %v4936, %v4562
  %v5097 = vadd.f32 %v4937, %v4771
  %v5098 = vadd.f32 %v4938, %v4565
  %v5099 = vadd.f32 %v4939, %v4774
  %v5100 = vadd.f32 %v4940, %v4567
  %v5101 = vadd.f32 %v4941, %v4776
  %v5102 = vadd.f32 %v4942, %v4570
  %v5103 = vadd.f32 %v4943, %v4779
  %v5104 = vadd.f32 %v4944, %v4572
  %v5105 = vadd.f32 %v4945, %v4781
  %v5106 = vadd.f32 %v4946, %v4575
  %v5107 = vadd.f32 %v4947, %v4784
  %v5108 = vadd.f32 %v4948, %v4577
  %v5109 = vadd.f32 %v4949, %v4786
  %v5110 = vadd.f32 %v4950, %v4580
  %v5111 = vadd.f32 %v4951, %v4789
  %v5112 = vadd.f32 %v4952, %v4582
  %v5113 = vadd.f32 %v4953, %v4791
  %v5114 = vadd.f32 %v4954, %v4585
  %v5115 = vadd.f32 %v4955, %v4794
  %v5116 = vadd.f32 %v4956, %v4587
  %v5117 = vadd.f32 %v4957, %v4796
  %5118 = vst [vmem:[#allocation2] sm:$0xff] %v4958
  %5119 = vst [vmem:[#allocation2 + $0x8] sm:$0xff] %v4959
  %5120 = vst [vmem:[#allocation2 + $0x10] sm:$0xff] %v4960
  %5121 = vst [vmem:[#allocation2 + $0x18] sm:$0xff] %v4961
  %5122 = vst [vmem:[#allocation2 + $0x20] sm:$0xff] %v4962
  %5123 = vst [vmem:[#allocation2 + $0x28] sm:$0xff] %v4963
  %5124 = vst [vmem:[#allocation2 + $0x30] sm:$0xff] %v4964
  %5125 = vst [vmem:[#allocation2 + $0x38] sm:$0xff] %v4965
  %5126 = vst [vmem:[#allocation2 + $0x40] sm:$0xff] %v4966
  %5127 = vst [vmem:[#allocation2 + $0x48] sm:$0xff] %v4967
  %5128 = vst [vmem:[#allocation2 + $0x50] sm:$0xff] %v4968
  %5129 = vst [vmem:[#allocation2 + $0x58] sm:$0xff] %v4969
  %5130 = vst [vmem:[#allocation2 + $0x60] sm:$0xff] %v4970
  %5131 = vst [vmem:[#allocation2 + $0x68] sm:$0xff] %v4971
  %5132 = vst [vmem:[#allocation2 + $0x70] sm:$0xff] %v4972
  %5133 = vst [vmem:[#allocation2 + $0x78] sm:$0xff] %v4973
  %5134 = vst [vmem:[#allocation2 + $0x80] sm:$0xff] %v4974
  %5135 = vst [vmem:[#allocation2 + $0x88] sm:$0xff] %v4975
  %5136 = vst [vmem:[#allocation2 + $0x90] sm:$0xff] %v4976
  %5137 = vst [vmem:[#allocation2 + $0x98] sm:$0xff] %v4977
  %5138 = vst [vmem:[#allocation2 + $0xa0] sm:$0xff] %v4978
  %5139 = vst [vmem:[#allocation2 + $0xa8] sm:$0xff] %v4979
  %5140 = vst [vmem:[#allocation2 + $0xb0] sm:$0xff] %v4980
  %5141 = vst [vmem:[#allocation2 + $0xb8] sm:$0xff] %v4981
  %5142 = vst [vmem:[#allocation2 + $0xc0] sm:$0xff] %v4982
  %5143 = vst [vmem:[#allocation2 + $0xc8] sm:$0xff] %v4983
  %5144 = vst [vmem:[#allocation2 + $0xd0] sm:$0xff] %v4984
  %5145 = vst [vmem:[#allocation2 + $0xd8] sm:$0xff] %v4985
  %5146 = vst [vmem:[#allocation2 + $0xe0] sm:$0xff] %v4986
  %5147 = vst [vmem:[#allocation2 + $0xe8] sm:$0xff] %v4987
  %5148 = vst [vmem:[#allocation2 + $0xf0] sm:$0xff] %v4988
  %5149 = vst [vmem:[#allocation2 + $0xf8] sm:$0xff] %v4989
  %5150 = vst [vmem:[#allocation2 + $0x100] sm:$0xff] %v4990
  %5151 = vst [vmem:[#allocation2 + $0x108] sm:$0xff] %v4991
  %5152 = vst [vmem:[#allocation2 + $0x110] sm:$0xff] %v4992
  %5153 = vst [vmem:[#allocation2 + $0x118] sm:$0xff] %v4993
  %5154 = vst [vmem:[#allocation2 + $0x120] sm:$0xff] %v4994
  %5155 = vst [vmem:[#allocation2 + $0x128] sm:$0xff] %v4995
  %5156 = vst [vmem:[#allocation2 + $0x130] sm:$0xff] %v4996
  %5157 = vst [vmem:[#allocation2 + $0x138] sm:$0xff] %v4997
  %5158 = vst [vmem:[#allocation2 + $0x140] sm:$0xff] %v4998
  %5159 = vst [vmem:[#allocation2 + $0x148] sm:$0xff] %v4999
  %5160 = vst [vmem:[#allocation2 + $0x150] sm:$0xff] %v5000
  %5161 = vst [vmem:[#allocation2 + $0x158] sm:$0xff] %v5001
  %5162 = vst [vmem:[#allocation2 + $0x160] sm:$0xff] %v5002
  %5163 = vst [vmem:[#allocation2 + $0x168] sm:$0xff] %v5003
  %5164 = vst [vmem:[#allocation2 + $0x170] sm:$0xff] %v5004
  %5165 = vst [vmem:[#allocation2 + $0x178] sm:$0xff] %v5005
  %5166 = vst [vmem:[#allocation2 + $0x180] sm:$0xff] %v5006
  %5167 = vst [vmem:[#allocation2 + $0x188] sm:$0xff] %v5007
  %5168 = vst [vmem:[#allocation2 + $0x190] sm:$0xff] %v5008
  %5169 = vst [vmem:[#allocation2 + $0x198] sm:$0xff] %v5009
  %5170 = vst [vmem:[#allocation2 + $0x1a0] sm:$0xff] %v5010
  %5171 = vst [vmem:[#allocation2 + $0x1a8] sm:$0xff] %v5011
  %5172 = vst [vmem:[#allocation2 + $0x1b0] sm:$0xff] %v5012
  %5173 = vst [vmem:[#allocation2 + $0x1b8] sm:$0xff] %v5013
  %5174 = vst [vmem:[#allocation2 + $0x1c0] sm:$0xff] %v5014
  %5175 = vst [vmem:[#allocation2 + $0x1c8] sm:$0xff] %v5015
  %5176 = vst [vmem:[#allocation2 + $0x1d0] sm:$0xff] %v5016
  %5177 = vst [vmem:[#allocation2 + $0x1d8] sm:$0xff] %v5017
  %5178 = vst [vmem:[#allocation2 + $0x1e0] sm:$0xff] %v5018
  %5179 = vst [vmem:[#allocation2 + $0x1e8] sm:$0xff] %v5019
  %5180 = vst [vmem:[#allocation2 + $0x1f0] sm:$0xff] %v5020
  %5181 = vst [vmem:[#allocation2 + $0x1f8] sm:$0xff] %v5021
  %5182 = vst [vmem:[#allocation2 + $0x200] sm:$0xff] %v5022
  %5183 = vst [vmem:[#allocation2 + $0x208] sm:$0xff] %v5023
  %5184 = vst [vmem:[#allocation2 + $0x210] sm:$0xff] %v5024
  %5185 = vst [vmem:[#allocation2 + $0x218] sm:$0xff] %v5025
  %5186 = vst [vmem:[#allocation2 + $0x220] sm:$0xff] %v5026
  %5187 = vst [vmem:[#allocation2 + $0x228] sm:$0xff] %v5027
  %5188 = vst [vmem:[#allocation2 + $0x230] sm:$0xff] %v5028
  %5189 = vst [vmem:[#allocation2 + $0x238] sm:$0xff] %v5029
  %5190 = vst [vmem:[#allocation2 + $0x240] sm:$0xff] %v5030
  %5191 = vst [vmem:[#allocation2 + $0x248] sm:$0xff] %v5031
  %5192 = vst [vmem:[#allocation2 + $0x250] sm:$0xff] %v5032
  %5193 = vst [vmem:[#allocation2 + $0x258] sm:$0xff] %v5033
  %5194 = vst [vmem:[#allocation2 + $0x260] sm:$0xff] %v5034
  %5195 = vst [vmem:[#allocation2 + $0x268] sm:$0xff] %v5035
  %5196 = vst [vmem:[#allocation2 + $0x270] sm:$0xff] %v5036
  %5197 = vst [vmem:[#allocation2 + $0x278] sm:$0xff] %v5037
  %5198 = vst [vmem:[#allocation2 + $0x280] sm:$0xff] %v5038
  %5199 = vst [vmem:[#allocation2 + $0x288] sm:$0xff] %v5039
  %5200 = vst [vmem:[#allocation2 + $0x290] sm:$0xff] %v5040
  %5201 = vst [vmem:[#allocation2 + $0x298] sm:$0xff] %v5041
  %5202 = vst [vmem:[#allocation2 + $0x2a0] sm:$0xff] %v5042
  %5203 = vst [vmem:[#allocation2 + $0x2a8] sm:$0xff] %v5043
  %5204 = vst [vmem:[#allocation2 + $0x2b0] sm:$0xff] %v5044
  %5205 = vst [vmem:[#allocation2 + $0x2b8] sm:$0xff] %v5045
  %5206 = vst [vmem:[#allocation2 + $0x2c0] sm:$0xff] %v5046
  %5207 = vst [vmem:[#allocation2 + $0x2c8] sm:$0xff] %v5047
  %5208 = vst [vmem:[#allocation2 + $0x2d0] sm:$0xff] %v5048
  %5209 = vst [vmem:[#allocation2 + $0x2d8] sm:$0xff] %v5049
  %5210 = vst [vmem:[#allocation2 + $0x2e0] sm:$0xff] %v5050
  %5211 = vst [vmem:[#allocation2 + $0x2e8] sm:$0xff] %v5051
  %5212 = vst [vmem:[#allocation2 + $0x2f0] sm:$0xff] %v5052
  %5213 = vst [vmem:[#allocation2 + $0x2f8] sm:$0xff] %v5053
  %5214 = vst [vmem:[#allocation2 + $0x300] sm:$0xff] %v5054
  %5215 = vst [vmem:[#allocation2 + $0x308] sm:$0xff] %v5055
  %5216 = vst [vmem:[#allocation2 + $0x310] sm:$0xff] %v5056
  %5217 = vst [vmem:[#allocation2 + $0x318] sm:$0xff] %v5057
  %5218 = vst [vmem:[#allocation2 + $0x320] sm:$0xff] %v5058
  %5219 = vst [vmem:[#allocation2 + $0x328] sm:$0xff] %v5059
  %5220 = vst [vmem:[#allocation2 + $0x330] sm:$0xff] %v5060
  %5221 = vst [vmem:[#allocation2 + $0x338] sm:$0xff] %v5061
  %5222 = vst [vmem:[#allocation2 + $0x340] sm:$0xff] %v5062
  %5223 = vst [vmem:[#allocation2 + $0x348] sm:$0xff] %v5063
  %5224 = vst [vmem:[#allocation2 + $0x350] sm:$0xff] %v5064
  %5225 = vst [vmem:[#allocation2 + $0x358] sm:$0xff] %v5065
  %5226 = vst [vmem:[#allocation2 + $0x360] sm:$0xff] %v5066
  %5227 = vst [vmem:[#allocation2 + $0x368] sm:$0xff] %v5067
  %5228 = vst [vmem:[#allocation2 + $0x370] sm:$0xff] %v5068
  %5229 = vst [vmem:[#allocation2 + $0x378] sm:$0xff] %v5069
  %5230 = vst [vmem:[#allocation2 + $0x380] sm:$0xff] %v5070
  %5231 = vst [vmem:[#allocation2 + $0x388] sm:$0xff] %v5071
  %5232 = vst [vmem:[#allocation2 + $0x390] sm:$0xff] %v5072
  %5233 = vst [vmem:[#allocation2 + $0x398] sm:$0xff] %v5073
  %5234 = vst [vmem:[#allocation2 + $0x3a0] sm:$0xff] %v5074
  %5235 = vst [vmem:[#allocation2 + $0x3a8] sm:$0xff] %v5075
  %5236 = vst [vmem:[#allocation2 + $0x3b0] sm:$0xff] %v5076
  %5237 = vst [vmem:[#allocation2 + $0x3b8] sm:$0xff] %v5077
  %5238 = vst [vmem:[#allocation2 + $0x3c0] sm:$0xff] %v5078
  %5239 = vst [vmem:[#allocation2 + $0x3c8] sm:$0xff] %v5079
  %5240 = vst [vmem:[#allocation2 + $0x3d0] sm:$0xff] %v5080
  %5241 = vst [vmem:[#allocation2 + $0x3d8] sm:$0xff] %v5081
  %5242 = vst [vmem:[#allocation2 + $0x3e0] sm:$0xff] %v5082
  %5243 = vst [vmem:[#allocation2 + $0x3e8] sm:$0xff] %v5083
  %5244 = vst [vmem:[#allocation2 + $0x3f0] sm:$0xff] %v5084
  %5245 = vst [vmem:[#allocation2 + $0x3f8] sm:$0xff] %v5085
  %5246 = vst [vmem:[#allocation2 + $0x400] sm:$0xff] %v5086
  %5247 = vst [vmem:[#allocation2 + $0x408] sm:$0xff] %v5087
  %5248 = vst [vmem:[#allocation2 + $0x410] sm:$0xff] %v5088
  %5249 = vst [vmem:[#allocation2 + $0x418] sm:$0xff] %v5089
  %5250 = vst [vmem:[#allocation2 + $0x420] sm:$0xff] %v5090
  %5251 = vst [vmem:[#allocation2 + $0x428] sm:$0xff] %v5091
  %5252 = vst [vmem:[#allocation2 + $0x430] sm:$0xff] %v5092
  %5253 = vst [vmem:[#allocation2 + $0x438] sm:$0xff] %v5093
  %5254 = vst [vmem:[#allocation2 + $0x440] sm:$0xff] %v5094
  %5255 = vst [vmem:[#allocation2 + $0x448] sm:$0xff] %v5095
  %5256 = vst [vmem:[#allocation2 + $0x450] sm:$0xff] %v5096
  %5257 = vst [vmem:[#allocation2 + $0x458] sm:$0xff] %v5097
  %5258 = vst [vmem:[#allocation2 + $0x460] sm:$0xff] %v5098
  %5259 = vst [vmem:[#allocation2 + $0x468] sm:$0xff] %v5099
  %5260 = vst [vmem:[#allocation2 + $0x470] sm:$0xff] %v5100
  %5261 = vst [vmem:[#allocation2 + $0x478] sm:$0xff] %v5101
  %5262 = vst [vmem:[#allocation2 + $0x480] sm:$0xff] %v5102
  %5263 = vst [vmem:[#allocation2 + $0x488] sm:$0xff] %v5103
  %5264 = vst [vmem:[#allocation2 + $0x490] sm:$0xff] %v5104
  %5265 = vst [vmem:[#allocation2 + $0x498] sm:$0xff] %v5105
  %5266 = vst [vmem:[#allocation2 + $0x4a0] sm:$0xff] %v5106
  %5267 = vst [vmem:[#allocation2 + $0x4a8] sm:$0xff] %v5107
  %5268 = vst [vmem:[#allocation2 + $0x4b0] sm:$0xff] %v5108
  %5269 = vst [vmem:[#allocation2 + $0x4b8] sm:$0xff] %v5109
  %5270 = vst [vmem:[#allocation2 + $0x4c0] sm:$0xff] %v5110
  %5271 = vst [vmem:[#allocation2 + $0x4c8] sm:$0xff] %v5111
  %5272 = vst [vmem:[#allocation2 + $0x4d0] sm:$0xff] %v5112
  %5273 = vst [vmem:[#allocation2 + $0x4d8] sm:$0xff] %v5113
  %5274 = vst [vmem:[#allocation2 + $0x4e0] sm:$0xff] %v5114
  %5275 = vst [vmem:[#allocation2 + $0x4e8] sm:$0xff] %v5115
  %5276 = vst [vmem:[#allocation2 + $0x4f0] sm:$0xff] %v5116
  %5277 = vst [vmem:[#allocation2 + $0x4f8] sm:$0xff] %v5117
  %v5278 = vld [vmem:[%s2] sm:$0x1]
  %v5279 = vld [vmem:[#allocation2] sm:$0xff]
  %v5280 = vld [vmem:[#allocation2 + $0x10] sm:$0xff]
  %v5281 = vld [vmem:[#allocation2 + $0x280] sm:$0xff]
  %v5282 = vld [vmem:[#allocation2 + $0x290] sm:$0xff]
  %s5283 = scalar_lea.vmem [#allocation2], 32
  %v5284 = vld [vmem:[%s5283 + $0x8] sm:$0xff]
  %v5285 = vld [vmem:[%s5283 + $0x18] sm:$0xff]
  %v5286 = vld [vmem:[%s5283 + $0x288] sm:$0xff]
  %v5287 = vld [vmem:[%s5283 + $0x298] sm:$0xff]
  %v5288 = vadd.f32 %v5279, %v5284
  %v5289 = vadd.f32 %v5280, %v5285
  %v5290 = vadd.f32 %v5281, %v5286
  %v5291 = vadd.f32 %v5282, %v5287
  %v5293 = vperm.slane %v5278, 0
  %v5295 = vadd.f32 %v5288, %v5293
  %v5296 = vadd.f32 %v5289, %v5293
  %v5297 = vadd.f32 %v5290, %v5293
  %v5298 = vadd.f32 %v5291, %v5293
  %v5299 = vmax.f32 %v5295, 0.0
  %v5300 = vmax.f32 %v5296, 0.0
  %v5301 = vmax.f32 %v5297, 0.0
  %v5302 = vmax.f32 %v5298, 0.0
  %5303 = vst [vmem:[#allocation3] sm:$0xff] %v5299
  %5304 = vst [vmem:[#allocation3 + $0x8] sm:$0xff] %v5300
  %5305 = vst [vmem:[#allocation3 + $0x10] sm:$0xff] %v5301
  %5306 = vst [vmem:[#allocation3 + $0x18] sm:$0xff] %v5302
  %v5307 = vld [vmem:[%s5283] sm:$0xff]
  %v5308 = vld [vmem:[%s5283 + $0x10] sm:$0xff]
  %v5309 = vld [vmem:[%s5283 + $0x280] sm:$0xff]
  %v5310 = vld [vmem:[%s5283 + $0x290] sm:$0xff]
  %s5311 = scalar_lea.vmem [#allocation2], 64
  %v5312 = vld [vmem:[%s5311 + $0x8] sm:$0xff]
  %v5313 = vld [vmem:[%s5311 + $0x18] sm:$0xff]
  %v5314 = vld [vmem:[%s5311 + $0x288] sm:$0xff]
  %v5315 = vld [vmem:[%s5311 + $0x298] sm:$0xff]
  %v5316 = vadd.f32 %v5307, %v5312
  %v5317 = vadd.f32 %v5308, %v5313
  %v5318 = vadd.f32 %v5309, %v5314
  %v5319 = vadd.f32 %v5310, %v5315
  %v5320 = vadd.f32 %v5316, %v5293
  %v5321 = vadd.f32 %v5317, %v5293
  %v5322 = vadd.f32 %v5318, %v5293
  %v5323 = vadd.f32 %v5319, %v5293
  %v5324 = vmax.f32 %v5320, 0.0
  %v5325 = vmax.f32 %v5321, 0.0
  %v5326 = vmax.f32 %v5322, 0.0
  %v5327 = vmax.f32 %v5323, 0.0
  %v5328 = vld [vmem:[#allocation3] sm:$0xff]
  %v5329 = vld [vmem:[#allocation3 + $0x8] sm:$0xff]
  %v5330 = vld [vmem:[#allocation3 + $0x10] sm:$0xff]
  %v5331 = vld [vmem:[#allocation3 + $0x18] sm:$0xff]
  %v5332 = vadd.f32 %v5328, %v5324
  %v5333 = vadd.f32 %v5329, %v5325
  %v5334 = vadd.f32 %v5330, %v5326
  %v5335 = vadd.f32 %v5331, %v5327
  %5336 = vst [vmem:[#allocation3] sm:$0xff] %v5332
  %5337 = vst [vmem:[#allocation3 + $0x8] sm:$0xff] %v5333
  %5338 = vst [vmem:[#allocation3 + $0x10] sm:$0xff] %v5334
  %5339 = vst [vmem:[#allocation3 + $0x18] sm:$0xff] %v5335
  %v5340 = vld [vmem:[%s5311] sm:$0xff]
  %v5341 = vld [vmem:[%s5311 + $0x10] sm:$0xff]
  %v5342 = vld [vmem:[%s5311 + $0x280] sm:$0xff]
  %v5343 = vld [vmem:[%s5311 + $0x290] sm:$0xff]
  %s5344 = scalar_lea.vmem [#allocation2], 96
  %v5345 = vld [vmem:[%s5344 + $0x8] sm:$0xff]
  %v5346 = vld [vmem:[%s5344 + $0x18] sm:$0xff]
  %v5347 = vld [vmem:[%s5344 + $0x288] sm:$0xff]
  %v5348 = vld [vmem:[%s5344 + $0x298] sm:$0xff]
  %v5349 = vadd.f32 %v5340, %v5345
  %v5350 = vadd.f32 %v5341, %v5346
  %v5351 = vadd.f32 %v5342, %v5347
  %v5352 = vadd.f32 %v5343, %v5348
  %v5353 = vadd.f32 %v5349, %v5293
  %v5354 = vadd.f32 %v5350, %v5293
  %v5355 = vadd.f32 %v5351, %v5293
  %v5356 = vadd.f32 %v5352, %v5293
  %v5357 = vmax.f32 %v5353, 0.0
  %v5358 = vmax.f32 %v5354, 0.0
  %v5359 = vmax.f32 %v5355, 0.0
  %v5360 = vmax.f32 %v5356, 0.0
  %v5361 = vld [vmem:[#allocation3] sm:$0xff]
  %v5362 = vld [vmem:[#allocation3 + $0x8] sm:$0xff]
  %v5363 = vld [vmem:[#allocation3 + $0x10] sm:$0xff]
  %v5364 = vld [vmem:[#allocation3 + $0x18] sm:$0xff]
  %v5365 = vadd.f32 %v5361, %v5357
  %v5366 = vadd.f32 %v5362, %v5358
  %v5367 = vadd.f32 %v5363, %v5359
  %v5368 = vadd.f32 %v5364, %v5360
  %5369 = vst [vmem:[#allocation3] sm:$0xff] %v5365
  %5370 = vst [vmem:[#allocation3 + $0x8] sm:$0xff] %v5366
  %5371 = vst [vmem:[#allocation3 + $0x10] sm:$0xff] %v5367
  %5372 = vst [vmem:[#allocation3 + $0x18] sm:$0xff] %v5368
  %v5373 = vld [vmem:[%s5344] sm:$0xff]
  %v5374 = vld [vmem:[%s5344 + $0x10] sm:$0xff]
  %v5375 = vld [vmem:[%s5344 + $0x280] sm:$0xff]
  %v5376 = vld [vmem:[%s5344 + $0x290] sm:$0xff]
  %s5377 = scalar_lea.vmem [#allocation2], 128
  %v5378 = vld [vmem:[%s5377 + $0x8] sm:$0xff]
  %v5379 = vld [vmem:[%s5377 + $0x18] sm:$0xff]
  %v5380 = vld [vmem:[%s5377 + $0x288] sm:$0xff]
  %v5381 = vld [vmem:[%s5377 + $0x298] sm:$0xff]
  %v5382 = vadd.f32 %v5373, %v5378
  %v5383 = vadd.f32 %v5374, %v5379
  %v5384 = vadd.f32 %v5375, %v5380
  %v5385 = vadd.f32 %v5376, %v5381
  %v5386 = vadd.f32 %v5382, %v5293
  %v5387 = vadd.f32 %v5383, %v5293
  %v5388 = vadd.f32 %v5384, %v5293
  %v5389 = vadd.f32 %v5385, %v5293
  %v5390 = vmax.f32 %v5386, 0.0
  %v5391 = vmax.f32 %v5387, 0.0
  %v5392 = vmax.f32 %v5388, 0.0
  %v5393 = vmax.f32 %v5389, 0.0
  %v5394 = vld [vmem:[#allocation3] sm:$0xff]
  %v5395 = vld [vmem:[#allocation3 + $0x8] sm:$0xff]
  %v5396 = vld [vmem:[#allocation3 + $0x10] sm:$0xff]
  %v5397 = vld [vmem:[#allocation3 + $0x18] sm:$0xff]
  %v5398 = vadd.f32 %v5394, %v5390
  %v5399 = vadd.f32 %v5395, %v5391
  %v5400 = vadd.f32 %v5396, %v5392
  %v5401 = vadd.f32 %v5397, %v5393
  %5402 = vst [vmem:[#allocation3] sm:$0xff] %v5398
  %5403 = vst [vmem:[#allocation3 + $0x8] sm:$0xff] %v5399
  %5404 = vst [vmem:[#allocation3 + $0x10] sm:$0xff] %v5400
  %5405 = vst [vmem:[#allocation3 + $0x18] sm:$0xff] %v5401
  %v5406 = vld [vmem:[#allocation3] sm:$0x7]
  %v5407 = vld [vmem:[#allocation3 + $0x10] sm:$0x7]
  %vm5408 = vcmask 1042432
  %v5409 = vsel %vm5408, %v5406, 0.0
  %v5410 = vrot.slane %v5409, 4
  %v5411 = vadd.f32 %v5409, %v5410
  %v5412 = vrot.slane %v5411, 2
  %v5413 = vadd.f32 %v5411, %v5412
  %v5414 = vrot.slane %v5413, 1
  %v5415 = vadd.f32 %v5413, %v5414
  %v5416 = vsel %vm5408, %v5407, 0.0
  %v5417 = vrot.slane %v5416, 4
  %v5418 = vadd.f32 %v5416, %v5417
  %v5419 = vrot.slane %v5418, 2
  %v5420 = vadd.f32 %v5418, %v5419
  %v5421 = vrot.slane %v5420, 1
  %v5422 = vadd.f32 %v5420, %v5421
  %v5423 = vmul.f32 %v5415, 0.083333336
  %v5424 = vmul.f32 %v5422, 0.083333336
  %5425 = vst [vmem:[%s3] sm:$0x1] %v5423
  %5426 = vst [vmem:[%s3 + $0x28] sm:$0x1] %v5424
  %v5427 = vld [vmem:[#allocation3 + $0x2] sm:$0x7]
  %v5428 = vld [vmem:[#allocation3 + $0x12] sm:$0x7]
  %v5429 = vsel %vm5408, %v5427, 0.0
  %v5430 = vrot.slane %v5429, 4
  %v5431 = vadd.f32 %v5429, %v5430
  %v5432 = vrot.slane %v5431, 2
  %v5433 = vadd.f32 %v5431, %v5432
  %v5434 = vrot.slane %v5433, 1
  %v5435 = vadd.f32 %v5433, %v5434
  %v5436 = vsel %vm5408, %v5428, 0.0
  %v5437 = vrot.slane %v5436, 4
  %v5438 = vadd.f32 %v5436, %v5437
  %v5439 = vrot.slane %v5438, 2
  %v5440 = vadd.f32 %v5438, %v5439
  %v5441 = vrot.slane %v5440, 1
  %v5442 = vadd.f32 %v5440, %v5441
  %v5443 = vmul.f32 %v5435, 0.083333336
  %v5444 = vmul.f32 %v5442, 0.083333336
  %5445 = vst [vmem:[%s3 + $0x1] sm:$0x1] %v5443
  %5446 = vst [vmem:[%s3 + $0x29] sm:$0x1] %v5444
  %v5447 = vld [vmem:[#allocation3 + $0x4] sm:$0x7]
  %v5448 = vld [vmem:[#allocation3 + $0x14] sm:$0x7]
  %v5449 = vsel %vm5408, %v5447, 0.0
  %v5450 = vrot.slane %v5449, 4
  %v5451 = vadd.f32 %v5449, %v5450
  %v5452 = vrot.slane %v5451, 2
  %v5453 = vadd.f32 %v5451, %v5452
  %v5454 = vrot.slane %v5453, 1
  %v5455 = vadd.f32 %v5453, %v5454
  %v5456 = vsel %vm5408, %v5448, 0.0
  %v5457 = vrot.slane %v5456, 4
  %v5458 = vadd.f32 %v5456, %v5457
  %v5459 = vrot.slane %v5458, 2
  %v5460 = vadd.f32 %v5458, %v5459
  %v5461 = vrot.slane %v5460, 1
  %v5462 = vadd.f32 %v5460, %v5461
  %v5463 = vmul.f32 %v5455, 0.083333336
  %v5464 = vmul.f32 %v5462, 0.083333336
  %5465 = vst [vmem:[%s3 + $0x2] sm:$0x1] %v5463
  %5466 = vst [vmem:[%s3 + $0x2a] sm:$0x1] %v5464
  %v5467 = vld [vmem:[#allocation3 + $0x6] sm:$0x7]
  %v5468 = vld [vmem:[#allocation3 + $0x16] sm:$0x7]
  %v5469 = vsel %vm5408, %v5467, 0.0
  %v5470 = vrot.slane %v5469, 4
  %v5471 = vadd.f32 %v5469, %v5470
  %v5472 = vrot.slane %v5471, 2
  %v5473 = vadd.f32 %v5471, %v5472
  %v5474 = vrot.slane %v5473, 1
  %v5475 = vadd.f32 %v5473, %v5474
  %v5476 = vsel %vm5408, %v5468, 0.0
  %v5477 = vrot.slane %v5476, 4
  %v5478 = vadd.f32 %v5476, %v5477
  %v5479 = vrot.slane %v5478, 2
  %v5480 = vadd.f32 %v5478, %v5479
  %v5481 = vrot.slane %v5480, 1
  %v5482 = vadd.f32 %v5480, %v5481
  %v5483 = vmul.f32 %v5475, 0.083333336
  %v5484 = vmul.f32 %v5482, 0.083333336
  %5485 = vst [vmem:[%s3 + $0x3] sm:$0x1] %v5483
  %5486 = vst [vmem:[%s3 + $0x2b] sm:$0x1] %v5484
  %v5487 = vld [vmem:[#allocation3 + $0x8] sm:$0x7]
  %v5488 = vld [vmem:[#allocation3 + $0x18] sm:$0x7]
  %v5489 = vsel %vm5408, %v5487, 0.0
  %v5490 = vrot.slane %v5489, 4
  %v5491 = vadd.f32 %v5489, %v5490
  %v5492 = vrot.slane %v5491, 2
  %v5493 = vadd.f32 %v5491, %v5492
  %v5494 = vrot.slane %v5493, 1
  %v5495 = vadd.f32 %v5493, %v5494
  %v5496 = vsel %vm5408, %v5488, 0.0
  %v5497 = vrot.slane %v5496, 4
  %v5498 = vadd.f32 %v5496, %v5497
  %v5499 = vrot.slane %v5498, 2
  %v5500 = vadd.f32 %v5498, %v5499
  %v5501 = vrot.slane %v5500, 1
  %v5502 = vadd.f32 %v5500, %v5501
  %v5503 = vmul.f32 %v5495, 0.083333336
  %v5504 = vmul.f32 %v5502, 0.083333336
  %5505 = vst [vmem:[%s3 + $0x4] sm:$0x1] %v5503
  %5506 = vst [vmem:[%s3 + $0x2c] sm:$0x1] %v5504
  %v5507 = vld [vmem:[%s5344] sm:$0xff]
  %v5508 = vld [vmem:[%s5344 + $0x10] sm:$0xff]
  %v5509 = vld [vmem:[%s5344 + $0x280] sm:$0xff]
  %v5510 = vld [vmem:[%s5344 + $0x290] sm:$0xff]
  %v5511 = vld [vmem:[%s5377 + $0x8] sm:$0xff]
  %v5512 = vld [vmem:[%s5377 + $0x18] sm:$0xff]
  %v5513 = vld [vmem:[%s5377 + $0x288] sm:$0xff]
  %v5514 = vld [vmem:[%s5377 + $0x298] sm:$0xff]
  %v5515 = vadd.f32 %v5507, %v5511
  %v5516 = vadd.f32 %v5508, %v5512
  %v5517 = vadd.f32 %v5509, %v5513
  %v5518 = vadd.f32 %v5510, %v5514
  %v5519 = vadd.f32 %v5515, %v5293
  %v5520 = vadd.f32 %v5516, %v5293
  %v5521 = vadd.f32 %v5517, %v5293
  %v5522 = vadd.f32 %v5518, %v5293
  %v5523 = vmax.f32 %v5519, 0.0
  %v5524 = vmax.f32 %v5520, 0.0
  %v5525 = vmax.f32 %v5521, 0.0
  %v5526 = vmax.f32 %v5522, 0.0
  %5527 = vst [vmem:[#allocation3] sm:$0xff] %v5523
  %5528 = vst [vmem:[#allocation3 + $0x8] sm:$0xff] %v5524
  %5529 = vst [vmem:[#allocation3 + $0x10] sm:$0xff] %v5525
  %5530 = vst [vmem:[#allocation3 + $0x18] sm:$0xff] %v5526
  %v5531 = vld [vmem:[%s5377] sm:$0xff]
  %v5532 = vld [vmem:[%s5377 + $0x10] sm:$0xff]
  %v5533 = vld [vmem:[%s5377 + $0x280] sm:$0xff]
  %v5534 = vld [vmem:[%s5377 + $0x290] sm:$0xff]
  %s5535 = scalar_lea.vmem [#allocation2], 160
  %v5536 = vld [vmem:[%s5535 + $0x8] sm:$0xff]
  %v5537 = vld [vmem:[%s5535 + $0x18] sm:$0xff]
  %v5538 = vld [vmem:[%s5535 + $0x288] sm:$0xff]
  %v5539 = vld [vmem:[%s5535 + $0x298] sm:$0xff]
  %v5540 = vadd.f32 %v5531, %v5536
  %v5541 = vadd.f32 %v5532, %v5537
  %v5542 = vadd.f32 %v5533, %v5538
  %v5543 = vadd.f32 %v5534, %v5539
  %v5544 = vadd.f32 %v5540, %v5293
  %v5545 = vadd.f32 %v5541, %v5293
  %v5546 = vadd.f32 %v5542, %v5293
  %v5547 = vadd.f32 %v5543, %v5293
  %v5548 = vmax.f32 %v5544, 0.0
  %v5549 = vmax.f32 %v5545, 0.0
  %v5550 = vmax.f32 %v5546, 0.0
  %v5551 = vmax.f32 %v5547, 0.0
  %v5552 = vld [vmem:[#allocation3] sm:$0xff]
  %v5553 = vld [vmem:[#allocation3 + $0x8] sm:$0xff]
  %v5554 = vld [vmem:[#allocation3 + $0x10] sm:$0xff]
  %v5555 = vld [vmem:[#allocation3 + $0x18] sm:$0xff]
  %v5556 = vadd.f32 %v5552, %v5548
  %v5557 = vadd.f32 %v5553, %v5549
  %v5558 = vadd.f32 %v5554, %v5550
  %v5559 = vadd.f32 %v5555, %v5551
  %5560 = vst [vmem:[#allocation3] sm:$0xff] %v5556
  %5561 = vst [vmem:[#allocation3 + $0x8] sm:$0xff] %v5557
  %5562 = vst [vmem:[#allocation3 + $0x10] sm:$0xff] %v5558
  %5563 = vst [vmem:[#allocation3 + $0x18] sm:$0xff] %v5559
  %v5564 = vld [vmem:[%s5535] sm:$0xff]
  %v5565 = vld [vmem:[%s5535 + $0x10] sm:$0xff]
  %v5566 = vld [vmem:[%s5535 + $0x280] sm:$0xff]
  %v5567 = vld [vmem:[%s5535 + $0x290] sm:$0xff]
  %s5568 = scalar_lea.vmem [#allocation2], 192
  %v5569 = vld [vmem:[%s5568 + $0x8] sm:$0xff]
  %v5570 = vld [vmem:[%s5568 + $0x18] sm:$0xff]
  %v5571 = vld [vmem:[%s5568 + $0x288] sm:$0xff]
  %v5572 = vld [vmem:[%s5568 + $0x298] sm:$0xff]
  %v5573 = vadd.f32 %v5564, %v5569
  %v5574 = vadd.f32 %v5565, %v5570
  %v5575 = vadd.f32 %v5566, %v5571
  %v5576 = vadd.f32 %v5567, %v5572
  %v5577 = vadd.f32 %v5573, %v5293
  %v5578 = vadd.f32 %v5574, %v5293
  %v5579 = vadd.f32 %v5575, %v5293
  %v5580 = vadd.f32 %v5576, %v5293
  %v5581 = vmax.f32 %v5577, 0.0
  %v5582 = vmax.f32 %v5578, 0.0
  %v5583 = vmax.f32 %v5579, 0.0
  %v5584 = vmax.f32 %v5580, 0.0
  %v5585 = vld [vmem:[#allocation3] sm:$0xff]
  %v5586 = vld [vmem:[#allocation3 + $0x8] sm:$0xff]
  %v5587 = vld [vmem:[#allocation3 + $0x10] sm:$0xff]
  %v5588 = vld [vmem:[#allocation3 + $0x18] sm:$0xff]
  %v5589 = vadd.f32 %v5585, %v5581
  %v5590 = vadd.f32 %v5586, %v5582
  %v5591 = vadd.f32 %v5587, %v5583
  %v5592 = vadd.f32 %v5588, %v5584
  %5593 = vst [vmem:[#allocation3] sm:$0xff] %v5589
  %5594 = vst [vmem:[#allocation3 + $0x8] sm:$0xff] %v5590
  %5595 = vst [vmem:[#allocation3 + $0x10] sm:$0xff] %v5591
  %5596 = vst [vmem:[#allocation3 + $0x18] sm:$0xff] %v5592
  %v5597 = vld [vmem:[%s5568] sm:$0xff]
  %v5598 = vld [vmem:[%s5568 + $0x10] sm:$0xff]
  %v5599 = vld [vmem:[%s5568 + $0x280] sm:$0xff]
  %v5600 = vld [vmem:[%s5568 + $0x290] sm:$0xff]
  %s5601 = scalar_lea.vmem [#allocation2], 224
  %v5602 = vld [vmem:[%s5601 + $0x8] sm:$0xff]
  %v5603 = vld [vmem:[%s5601 + $0x18] sm:$0xff]
  %v5604 = vld [vmem:[%s5601 + $0x288] sm:$0xff]
  %v5605 = vld [vmem:[%s5601 + $0x298] sm:$0xff]
  %v5606 = vadd.f32 %v5597, %v5602
  %v5607 = vadd.f32 %v5598, %v5603
  %v5608 = vadd.f32 %v5599, %v5604
  %v5609 = vadd.f32 %v5600, %v5605
  %v5610 = vadd.f32 %v5606, %v5293
  %v5611 = vadd.f32 %v5607, %v5293
  %v5612 = vadd.f32 %v5608, %v5293
  %v5613 = vadd.f32 %v5609, %v5293
  %v5614 = vmax.f32 %v5610, 0.0
  %v5615 = vmax.f32 %v5611, 0.0
  %v5616 = vmax.f32 %v5612, 0.0
  %v5617 = vmax.f32 %v5613, 0.0
  %v5618 = vld [vmem:[#allocation3] sm:$0xff]
  %v5619 = vld [vmem:[#allocation3 + $0x8] sm:$0xff]
  %v5620 = vld [vmem:[#allocation3 + $0x10] sm:$0xff]
  %v5621 = vld [vmem:[#allocation3 + $0x18] sm:$0xff]
  %v5622 = vadd.f32 %v5618, %v5614
  %v5623 = vadd.f32 %v5619, %v5615
  %v5624 = vadd.f32 %v5620, %v5616
  %v5625 = vadd.f32 %v5621, %v5617
  %5626 = vst [vmem:[#allocation3] sm:$0xff] %v5622
  %5627 = vst [vmem:[#allocation3 + $0x8] sm:$0xff] %v5623
  %5628 = vst [vmem:[#allocation3 + $0x10] sm:$0xff] %v5624
  %5629 = vst [vmem:[#allocation3 + $0x18] sm:$0xff] %v5625
  %v5630 = vld [vmem:[%s5601] sm:$0xff]
  %v5631 = vld [vmem:[%s5601 + $0x10] sm:$0xff]
  %v5632 = vld [vmem:[%s5601 + $0x280] sm:$0xff]
  %v5633 = vld [vmem:[%s5601 + $0x290] sm:$0xff]
  %s5634 = scalar_lea.vmem [#allocation2], 256
  %v5635 = vld [vmem:[%s5634 + $0x8] sm:$0xff]
  %v5636 = vld [vmem:[%s5634 + $0x18] sm:$0xff]
  %v5637 = vld [vmem:[%s5634 + $0x288] sm:$0xff]
  %v5638 = vld [vmem:[%s5634 + $0x298] sm:$0xff]
  %v5639 = vadd.f32 %v5630, %v5635
  %v5640 = vadd.f32 %v5631, %v5636
  %v5641 = vadd.f32 %v5632, %v5637
  %v5642 = vadd.f32 %v5633, %v5638
  %v5643 = vadd.f32 %v5639, %v5293
  %v5644 = vadd.f32 %v5640, %v5293
  %v5645 = vadd.f32 %v5641, %v5293
  %v5646 = vadd.f32 %v5642, %v5293
  %v5647 = vmax.f32 %v5643, 0.0
  %v5648 = vmax.f32 %v5644, 0.0
  %v5649 = vmax.f32 %v5645, 0.0
  %v5650 = vmax.f32 %v5646, 0.0
  %v5651 = vld [vmem:[#allocation3] sm:$0xff]
  %v5652 = vld [vmem:[#allocation3 + $0x8] sm:$0xff]
  %v5653 = vld [vmem:[#allocation3 + $0x10] sm:$0xff]
  %v5654 = vld [vmem:[#allocation3 + $0x18] sm:$0xff]
  %v5655 = vadd.f32 %v5651, %v5647
  %v5656 = vadd.f32 %v5652, %v5648
  %v5657 = vadd.f32 %v5653, %v5649
  %v5658 = vadd.f32 %v5654, %v5650
  %5659 = vst [vmem:[#allocation3] sm:$0xff] %v5655
  %5660 = vst [vmem:[#allocation3 + $0x8] sm:$0xff] %v5656
  %5661 = vst [vmem:[#allocation3 + $0x10] sm:$0xff] %v5657
  %5662 = vst [vmem:[#allocation3 + $0x18] sm:$0xff] %v5658
  %v5663 = vld [vmem:[#allocation3] sm:$0x7]
  %v5664 = vld [vmem:[#allocation3 + $0x10] sm:$0x7]
  %v5665 = vsel %vm5408, %v5663, 0.0
  %v5666 = vrot.slane %v5665, 4
  %v5667 = vadd.f32 %v5665, %v5666
  %v5668 = vrot.slane %v5667, 2
  %v5669 = vadd.f32 %v5667, %v5668
  %v5670 = vrot.slane %v5669, 1
  %v5671 = vadd.f32 %v5669, %v5670
  %v5672 = vsel %vm5408, %v5664, 0.0
  %v5673 = vrot.slane %v5672, 4
  %v5674 = vadd.f32 %v5672, %v5673
  %v5675 = vrot.slane %v5674, 2
  %v5676 = vadd.f32 %v5674, %v5675
  %v5677 = vrot.slane %v5676, 1
  %v5678 = vadd.f32 %v5676, %v5677
  %v5679 = vmul.f32 %v5671, 0.06666667
  %v5680 = vmul.f32 %v5678, 0.06666667
  %s5681 = scalar_lea.vmem %s3, 8
  %5682 = vst [vmem:[%s5681] sm:$0x1] %v5679
  %5683 = vst [vmem:[%s5681 + $0x28] sm:$0x1] %v5680
  %v5684 = vld [vmem:[#allocation3 + $0x2] sm:$0x7]
  %v5685 = vld [vmem:[#allocation3 + $0x12] sm:$0x7]
  %v5686 = vsel %vm5408, %v5684, 0.0
  %v5687 = vrot.slane %v5686, 4
  %v5688 = vadd.f32 %v5686, %v5687
  %v5689 = vrot.slane %v5688, 2
  %v5690 = vadd.f32 %v5688, %v5689
  %v5691 = vrot.slane %v5690, 1
  %v5692 = vadd.f32 %v5690, %v5691
  %v5693 = vsel %vm5408, %v5685, 0.0
  %v5694 = vrot.slane %v5693, 4
  %v5695 = vadd.f32 %v5693, %v5694
  %v5696 = vrot.slane %v5695, 2
  %v5697 = vadd.f32 %v5695, %v5696
  %v5698 = vrot.slane %v5697, 1
  %v5699 = vadd.f32 %v5697, %v5698
  %v5700 = vmul.f32 %v5692, 0.06666667
  %v5701 = vmul.f32 %v5699, 0.06666667
  %5702 = vst [vmem:[%s5681 + $0x1] sm:$0x1] %v5700
  %5703 = vst [vmem:[%s5681 + $0x29] sm:$0x1] %v5701
  %v5704 = vld [vmem:[#allocation3 + $0x4] sm:$0x7]
  %v5705 = vld [vmem:[#allocation3 + $0x14] sm:$0x7]
  %v5706 = vsel %vm5408, %v5704, 0.0
  %v5707 = vrot.slane %v5706, 4
  %v5708 = vadd.f32 %v5706, %v5707
  %v5709 = vrot.slane %v5708, 2
  %v5710 = vadd.f32 %v5708, %v5709
  %v5711 = vrot.slane %v5710, 1
  %v5712 = vadd.f32 %v5710, %v5711
  %v5713 = vsel %vm5408, %v5705, 0.0
  %v5714 = vrot.slane %v5713, 4
  %v5715 = vadd.f32 %v5713, %v5714
  %v5716 = vrot.slane %v5715, 2
  %v5717 = vadd.f32 %v5715, %v5716
  %v5718 = vrot.slane %v5717, 1
  %v5719 = vadd.f32 %v5717, %v5718
  %v5720 = vmul.f32 %v5712, 0.06666667
  %v5721 = vmul.f32 %v5719, 0.06666667
  %5722 = vst [vmem:[%s5681 + $0x2] sm:$0x1] %v5720
  %5723 = vst [vmem:[%s5681 + $0x2a] sm:$0x1] %v5721
  %v5724 = vld [vmem:[#allocation3 + $0x6] sm:$0x7]
  %v5725 = vld [vmem:[#allocation3 + $0x16] sm:$0x7]
  %v5726 = vsel %vm5408, %v5724, 0.0
  %v5727 = vrot.slane %v5726, 4
  %v5728 = vadd.f32 %v5726, %v5727
  %v5729 = vrot.slane %v5728, 2
  %v5730 = vadd.f32 %v5728, %v5729
  %v5731 = vrot.slane %v5730, 1
  %v5732 = vadd.f32 %v5730, %v5731
  %v5733 = vsel %vm5408, %v5725, 0.0
  %v5734 = vrot.slane %v5733, 4
  %v5735 = vadd.f32 %v5733, %v5734
  %v5736 = vrot.slane %v5735, 2
  %v5737 = vadd.f32 %v5735, %v5736
  %v5738 = vrot.slane %v5737, 1
  %v5739 = vadd.f32 %v5737, %v5738
  %v5740 = vmul.f32 %v5732, 0.06666667
  %v5741 = vmul.f32 %v5739, 0.06666667
  %5742 = vst [vmem:[%s5681 + $0x3] sm:$0x1] %v5740
  %5743 = vst [vmem:[%s5681 + $0x2b] sm:$0x1] %v5741
  %v5744 = vld [vmem:[#allocation3 + $0x8] sm:$0x7]
  %v5745 = vld [vmem:[#allocation3 + $0x18] sm:$0x7]
  %v5746 = vsel %vm5408, %v5744, 0.0
  %v5747 = vrot.slane %v5746, 4
  %v5748 = vadd.f32 %v5746, %v5747
  %v5749 = vrot.slane %v5748, 2
  %v5750 = vadd.f32 %v5748, %v5749
  %v5751 = vrot.slane %v5750, 1
  %v5752 = vadd.f32 %v5750, %v5751
  %v5753 = vsel %vm5408, %v5745, 0.0
  %v5754 = vrot.slane %v5753, 4
  %v5755 = vadd.f32 %v5753, %v5754
  %v5756 = vrot.slane %v5755, 2
  %v5757 = vadd.f32 %v5755, %v5756
  %v5758 = vrot.slane %v5757, 1
  %v5759 = vadd.f32 %v5757, %v5758
  %v5760 = vmul.f32 %v5752, 0.06666667
  %v5761 = vmul.f32 %v5759, 0.06666667
  %5762 = vst [vmem:[%s5681 + $0x4] sm:$0x1] %v5760
  %5763 = vst [vmem:[%s5681 + $0x2c] sm:$0x1] %v5761
  %v5764 = vld [vmem:[%s5601] sm:$0xff]
  %v5765 = vld [vmem:[%s5601 + $0x10] sm:$0xff]
  %v5766 = vld [vmem:[%s5601 + $0x280] sm:$0xff]
  %v5767 = vld [vmem:[%s5601 + $0x290] sm:$0xff]
  %v5768 = vld [vmem:[%s5634 + $0x8] sm:$0xff]
  %v5769 = vld [vmem:[%s5634 + $0x18] sm:$0xff]
  %v5770 = vld [vmem:[%s5634 + $0x288] sm:$0xff]
  %v5771 = vld [vmem:[%s5634 + $0x298] sm:$0xff]
  %v5772 = vadd.f32 %v5764, %v5768
  %v5773 = vadd.f32 %v5765, %v5769
  %v5774 = vadd.f32 %v5766, %v5770
  %v5775 = vadd.f32 %v5767, %v5771
  %v5776 = vadd.f32 %v5772, %v5293
  %v5777 = vadd.f32 %v5773, %v5293
  %v5778 = vadd.f32 %v5774, %v5293
  %v5779 = vadd.f32 %v5775, %v5293
  %v5780 = vmax.f32 %v5776, 0.0
  %v5781 = vmax.f32 %v5777, 0.0
  %v5782 = vmax.f32 %v5778, 0.0
  %v5783 = vmax.f32 %v5779, 0.0
  %5784 = vst [vmem:[#allocation3] sm:$0xff] %v5780
  %5785 = vst [vmem:[#allocation3 + $0x8] sm:$0xff] %v5781
  %5786 = vst [vmem:[#allocation3 + $0x10] sm:$0xff] %v5782
  %5787 = vst [vmem:[#allocation3 + $0x18] sm:$0xff] %v5783
  %v5788 = vld [vmem:[%s5634] sm:$0xff]
  %v5789 = vld [vmem:[%s5634 + $0x10] sm:$0xff]
  %v5790 = vld [vmem:[%s5634 + $0x280] sm:$0xff]
  %v5791 = vld [vmem:[%s5634 + $0x290] sm:$0xff]
  %s5792 = scalar_lea.vmem [#allocation2], 288
  %v5793 = vld [vmem:[%s5792 + $0x8] sm:$0xff]
  %v5794 = vld [vmem:[%s5792 + $0x18] sm:$0xff]
  %v5795 = vld [vmem:[%s5792 + $0x288] sm:$0xff]
  %v5796 = vld [vmem:[%s5792 + $0x298] sm:$0xff]
  %v5797 = vadd.f32 %v5788, %v5793
  %v5798 = vadd.f32 %v5789, %v5794
  %v5799 = vadd.f32 %v5790, %v5795
  %v5800 = vadd.f32 %v5791, %v5796
  %v5801 = vadd.f32 %v5797, %v5293
  %v5802 = vadd.f32 %v5798, %v5293
  %v5803 = vadd.f32 %v5799, %v5293
  %v5804 = vadd.f32 %v5800, %v5293
  %v5805 = vmax.f32 %v5801, 0.0
  %v5806 = vmax.f32 %v5802, 0.0
  %v5807 = vmax.f32 %v5803, 0.0
  %v5808 = vmax.f32 %v5804, 0.0
  %v5809 = vld [vmem:[#allocation3] sm:$0xff]
  %v5810 = vld [vmem:[#allocation3 + $0x8] sm:$0xff]
  %v5811 = vld [vmem:[#allocation3 + $0x10] sm:$0xff]
  %v5812 = vld [vmem:[#allocation3 + $0x18] sm:$0xff]
  %v5813 = vadd.f32 %v5809, %v5805
  %v5814 = vadd.f32 %v5810, %v5806
  %v5815 = vadd.f32 %v5811, %v5807
  %v5816 = vadd.f32 %v5812, %v5808
  %5817 = vst [vmem:[#allocation3] sm:$0xff] %v5813
  %5818 = vst [vmem:[#allocation3 + $0x8] sm:$0xff] %v5814
  %5819 = vst [vmem:[#allocation3 + $0x10] sm:$0xff] %v5815
  %5820 = vst [vmem:[#allocation3 + $0x18] sm:$0xff] %v5816
  %v5821 = vld [vmem:[%s5792] sm:$0xff]
  %v5822 = vld [vmem:[%s5792 + $0x10] sm:$0xff]
  %v5823 = vld [vmem:[%s5792 + $0x280] sm:$0xff]
  %v5824 = vld [vmem:[%s5792 + $0x290] sm:$0xff]
  %s5825 = scalar_lea.vmem [#allocation2], 320
  %v5826 = vld [vmem:[%s5825 + $0x8] sm:$0xff]
  %v5827 = vld [vmem:[%s5825 + $0x18] sm:$0xff]
  %v5828 = vld [vmem:[%s5825 + $0x288] sm:$0xff]
  %v5829 = vld [vmem:[%s5825 + $0x298] sm:$0xff]
  %v5830 = vadd.f32 %v5821, %v5826
  %v5831 = vadd.f32 %v5822, %v5827
  %v5832 = vadd.f32 %v5823, %v5828
  %v5833 = vadd.f32 %v5824, %v5829
  %v5834 = vadd.f32 %v5830, %v5293
  %v5835 = vadd.f32 %v5831, %v5293
  %v5836 = vadd.f32 %v5832, %v5293
  %v5837 = vadd.f32 %v5833, %v5293
  %v5838 = vmax.f32 %v5834, 0.0
  %v5839 = vmax.f32 %v5835, 0.0
  %v5840 = vmax.f32 %v5836, 0.0
  %v5841 = vmax.f32 %v5837, 0.0
  %v5842 = vld [vmem:[#allocation3] sm:$0xff]
  %v5843 = vld [vmem:[#allocation3 + $0x8] sm:$0xff]
  %v5844 = vld [vmem:[#allocation3 + $0x10] sm:$0xff]
  %v5845 = vld [vmem:[#allocation3 + $0x18] sm:$0xff]
  %v5846 = vadd.f32 %v5842, %v5838
  %v5847 = vadd.f32 %v5843, %v5839
  %v5848 = vadd.f32 %v5844, %v5840
  %v5849 = vadd.f32 %v5845, %v5841
  %5850 = vst [vmem:[#allocation3] sm:$0xff] %v5846
  %5851 = vst [vmem:[#allocation3 + $0x8] sm:$0xff] %v5847
  %5852 = vst [vmem:[#allocation3 + $0x10] sm:$0xff] %v5848
  %5853 = vst [vmem:[#allocation3 + $0x18] sm:$0xff] %v5849
  %v5854 = vld [vmem:[%s5825] sm:$0xff]
  %v5855 = vld [vmem:[%s5825 + $0x10] sm:$0xff]
  %v5856 = vld [vmem:[%s5825 + $0x280] sm:$0xff]
  %v5857 = vld [vmem:[%s5825 + $0x290] sm:$0xff]
  %s5858 = scalar_lea.vmem [#allocation2], 352
  %v5859 = vld [vmem:[%s5858 + $0x8] sm:$0xff]
  %v5860 = vld [vmem:[%s5858 + $0x18] sm:$0xff]
  %v5861 = vld [vmem:[%s5858 + $0x288] sm:$0xff]
  %v5862 = vld [vmem:[%s5858 + $0x298] sm:$0xff]
  %v5863 = vadd.f32 %v5854, %v5859
  %v5864 = vadd.f32 %v5855, %v5860
  %v5865 = vadd.f32 %v5856, %v5861
  %v5866 = vadd.f32 %v5857, %v5862
  %v5867 = vadd.f32 %v5863, %v5293
  %v5868 = vadd.f32 %v5864, %v5293
  %v5869 = vadd.f32 %v5865, %v5293
  %v5870 = vadd.f32 %v5866, %v5293
  %v5871 = vmax.f32 %v5867, 0.0
  %v5872 = vmax.f32 %v5868, 0.0
  %v5873 = vmax.f32 %v5869, 0.0
  %v5874 = vmax.f32 %v5870, 0.0
  %v5875 = vld [vmem:[#allocation3] sm:$0xff]
  %v5876 = vld [vmem:[#allocation3 + $0x8] sm:$0xff]
  %v5877 = vld [vmem:[#allocation3 + $0x10] sm:$0xff]
  %v5878 = vld [vmem:[#allocation3 + $0x18] sm:$0xff]
  %v5879 = vadd.f32 %v5875, %v5871
  %v5880 = vadd.f32 %v5876, %v5872
  %v5881 = vadd.f32 %v5877, %v5873
  %v5882 = vadd.f32 %v5878, %v5874
  %5883 = vst [vmem:[#allocation3] sm:$0xff] %v5879
  %5884 = vst [vmem:[#allocation3 + $0x8] sm:$0xff] %v5880
  %5885 = vst [vmem:[#allocation3 + $0x10] sm:$0xff] %v5881
  %5886 = vst [vmem:[#allocation3 + $0x18] sm:$0xff] %v5882
  %v5887 = vld [vmem:[%s5858] sm:$0xff]
  %v5888 = vld [vmem:[%s5858 + $0x10] sm:$0xff]
  %v5889 = vld [vmem:[%s5858 + $0x280] sm:$0xff]
  %v5890 = vld [vmem:[%s5858 + $0x290] sm:$0xff]
  %s5891 = scalar_lea.vmem [#allocation2], 384
  %v5892 = vld [vmem:[%s5891 + $0x8] sm:$0xff]
  %v5893 = vld [vmem:[%s5891 + $0x18] sm:$0xff]
  %v5894 = vld [vmem:[%s5891 + $0x288] sm:$0xff]
  %v5895 = vld [vmem:[%s5891 + $0x298] sm:$0xff]
  %v5896 = vadd.f32 %v5887, %v5892
  %v5897 = vadd.f32 %v5888, %v5893
  %v5898 = vadd.f32 %v5889, %v5894
  %v5899 = vadd.f32 %v5890, %v5895
  %v5900 = vadd.f32 %v5896, %v5293
  %v5901 = vadd.f32 %v5897, %v5293
  %v5902 = vadd.f32 %v5898, %v5293
  %v5903 = vadd.f32 %v5899, %v5293
  %v5904 = vmax.f32 %v5900, 0.0
  %v5905 = vmax.f32 %v5901, 0.0
  %v5906 = vmax.f32 %v5902, 0.0
  %v5907 = vmax.f32 %v5903, 0.0
  %v5908 = vld [vmem:[#allocation3] sm:$0xff]
  %v5909 = vld [vmem:[#allocation3 + $0x8] sm:$0xff]
  %v5910 = vld [vmem:[#allocation3 + $0x10] sm:$0xff]
  %v5911 = vld [vmem:[#allocation3 + $0x18] sm:$0xff]
  %v5912 = vadd.f32 %v5908, %v5904
  %v5913 = vadd.f32 %v5909, %v5905
  %v5914 = vadd.f32 %v5910, %v5906
  %v5915 = vadd.f32 %v5911, %v5907
  %5916 = vst [vmem:[#allocation3] sm:$0xff] %v5912
  %5917 = vst [vmem:[#allocation3 + $0x8] sm:$0xff] %v5913
  %5918 = vst [vmem:[#allocation3 + $0x10] sm:$0xff] %v5914
  %5919 = vst [vmem:[#allocation3 + $0x18] sm:$0xff] %v5915
  %v5920 = vld [vmem:[#allocation3] sm:$0x7]
  %v5921 = vld [vmem:[#allocation3 + $0x10] sm:$0x7]
  %v5922 = vsel %vm5408, %v5920, 0.0
  %v5923 = vrot.slane %v5922, 4
  %v5924 = vadd.f32 %v5922, %v5923
  %v5925 = vrot.slane %v5924, 2
  %v5926 = vadd.f32 %v5924, %v5925
  %v5927 = vrot.slane %v5926, 1
  %v5928 = vadd.f32 %v5926, %v5927
  %v5929 = vsel %vm5408, %v5921, 0.0
  %v5930 = vrot.slane %v5929, 4
  %v5931 = vadd.f32 %v5929, %v5930
  %v5932 = vrot.slane %v5931, 2
  %v5933 = vadd.f32 %v5931, %v5932
  %v5934 = vrot.slane %v5933, 1
  %v5935 = vadd.f32 %v5933, %v5934
  %v5936 = vmul.f32 %v5928, 0.06666667
  %v5937 = vmul.f32 %v5935, 0.06666667
  %s5938 = scalar_lea.vmem %s3, 16
  %5939 = vst [vmem:[%s5938] sm:$0x1] %v5936
  %5940 = vst [vmem:[%s5938 + $0x28] sm:$0x1] %v5937
  %v5941 = vld [vmem:[#allocation3 + $0x2] sm:$0x7]
  %v5942 = vld [vmem:[#allocation3 + $0x12] sm:$0x7]
  %v5943 = vsel %vm5408, %v5941, 0.0
  %v5944 = vrot.slane %v5943, 4
  %v5945 = vadd.f32 %v5943, %v5944
  %v5946 = vrot.slane %v5945, 2
  %v5947 = vadd.f32 %v5945, %v5946
  %v5948 = vrot.slane %v5947, 1
  %v5949 = vadd.f32 %v5947, %v5948
  %v5950 = vsel %vm5408, %v5942, 0.0
  %v5951 = vrot.slane %v5950, 4
  %v5952 = vadd.f32 %v5950, %v5951
  %v5953 = vrot.slane %v5952, 2
  %v5954 = vadd.f32 %v5952, %v5953
  %v5955 = vrot.slane %v5954, 1
  %v5956 = vadd.f32 %v5954, %v5955
  %v5957 = vmul.f32 %v5949, 0.06666667
  %v5958 = vmul.f32 %v5956, 0.06666667
  %5959 = vst [vmem:[%s5938 + $0x1] sm:$0x1] %v5957
  %5960 = vst [vmem:[%s5938 + $0x29] sm:$0x1] %v5958
  %v5961 = vld [vmem:[#allocation3 + $0x4] sm:$0x7]
  %v5962 = vld [vmem:[#allocation3 + $0x14] sm:$0x7]
  %v5963 = vsel %vm5408, %v5961, 0.0
  %v5964 = vrot.slane %v5963, 4
  %v5965 = vadd.f32 %v5963, %v5964
  %v5966 = vrot.slane %v5965, 2
  %v5967 = vadd.f32 %v5965, %v5966
  %v5968 = vrot.slane %v5967, 1
  %v5969 = vadd.f32 %v5967, %v5968
  %v5970 = vsel %vm5408, %v5962, 0.0
  %v5971 = vrot.slane %v5970, 4
  %v5972 = vadd.f32 %v5970, %v5971
  %v5973 = vrot.slane %v5972, 2
  %v5974 = vadd.f32 %v5972, %v5973
  %v5975 = vrot.slane %v5974, 1
  %v5976 = vadd.f32 %v5974, %v5975
  %v5977 = vmul.f32 %v5969, 0.06666667
  %v5978 = vmul.f32 %v5976, 0.06666667
  %5979 = vst [vmem:[%s5938 + $0x2] sm:$0x1] %v5977
  %5980 = vst [vmem:[%s5938 + $0x2a] sm:$0x1] %v5978
  %v5981 = vld [vmem:[#allocation3 + $0x6] sm:$0x7]
  %v5982 = vld [vmem:[#allocation3 + $0x16] sm:$0x7]
  %v5983 = vsel %vm5408, %v5981, 0.0
  %v5984 = vrot.slane %v5983, 4
  %v5985 = vadd.f32 %v5983, %v5984
  %v5986 = vrot.slane %v5985, 2
  %v5987 = vadd.f32 %v5985, %v5986
  %v5988 = vrot.slane %v5987, 1
  %v5989 = vadd.f32 %v5987, %v5988
  %v5990 = vsel %vm5408, %v5982, 0.0
  %v5991 = vrot.slane %v5990, 4
  %v5992 = vadd.f32 %v5990, %v5991
  %v5993 = vrot.slane %v5992, 2
  %v5994 = vadd.f32 %v5992, %v5993
  %v5995 = vrot.slane %v5994, 1
  %v5996 = vadd.f32 %v5994, %v5995
  %v5997 = vmul.f32 %v5989, 0.06666667
  %v5998 = vmul.f32 %v5996, 0.06666667
  %5999 = vst [vmem:[%s5938 + $0x3] sm:$0x1] %v5997
  %6000 = vst [vmem:[%s5938 + $0x2b] sm:$0x1] %v5998
  %v6001 = vld [vmem:[#allocation3 + $0x8] sm:$0x7]
  %v6002 = vld [vmem:[#allocation3 + $0x18] sm:$0x7]
  %v6003 = vsel %vm5408, %v6001, 0.0
  %v6004 = vrot.slane %v6003, 4
  %v6005 = vadd.f32 %v6003, %v6004
  %v6006 = vrot.slane %v6005, 2
  %v6007 = vadd.f32 %v6005, %v6006
  %v6008 = vrot.slane %v6007, 1
  %v6009 = vadd.f32 %v6007, %v6008
  %v6010 = vsel %vm5408, %v6002, 0.0
  %v6011 = vrot.slane %v6010, 4
  %v6012 = vadd.f32 %v6010, %v6011
  %v6013 = vrot.slane %v6012, 2
  %v6014 = vadd.f32 %v6012, %v6013
  %v6015 = vrot.slane %v6014, 1
  %v6016 = vadd.f32 %v6014, %v6015
  %v6017 = vmul.f32 %v6009, 0.06666667
  %v6018 = vmul.f32 %v6016, 0.06666667
  %6019 = vst [vmem:[%s5938 + $0x4] sm:$0x1] %v6017
  %6020 = vst [vmem:[%s5938 + $0x2c] sm:$0x1] %v6018
  %v6021 = vld [vmem:[%s5858] sm:$0xff]
  %v6022 = vld [vmem:[%s5858 + $0x10] sm:$0xff]
  %v6023 = vld [vmem:[%s5858 + $0x280] sm:$0xff]
  %v6024 = vld [vmem:[%s5858 + $0x290] sm:$0xff]
  %v6025 = vld [vmem:[%s5891 + $0x8] sm:$0xff]
  %v6026 = vld [vmem:[%s5891 + $0x18] sm:$0xff]
  %v6027 = vld [vmem:[%s5891 + $0x288] sm:$0xff]
  %v6028 = vld [vmem:[%s5891 + $0x298] sm:$0xff]
  %v6029 = vadd.f32 %v6021, %v6025
  %v6030 = vadd.f32 %v6022, %v6026
  %v6031 = vadd.f32 %v6023, %v6027
  %v6032 = vadd.f32 %v6024, %v6028
  %v6033 = vadd.f32 %v6029, %v5293
  %v6034 = vadd.f32 %v6030, %v5293
  %v6035 = vadd.f32 %v6031, %v5293
  %v6036 = vadd.f32 %v6032, %v5293
  %v6037 = vmax.f32 %v6033, 0.0
  %v6038 = vmax.f32 %v6034, 0.0
  %v6039 = vmax.f32 %v6035, 0.0
  %v6040 = vmax.f32 %v6036, 0.0
  %6041 = vst [vmem:[#allocation3] sm:$0xff] %v6037
  %6042 = vst [vmem:[#allocation3 + $0x8] sm:$0xff] %v6038
  %6043 = vst [vmem:[#allocation3 + $0x10] sm:$0xff] %v6039
  %6044 = vst [vmem:[#allocation3 + $0x18] sm:$0xff] %v6040
  %v6045 = vld [vmem:[%s5891] sm:$0xff]
  %v6046 = vld [vmem:[%s5891 + $0x10] sm:$0xff]
  %v6047 = vld [vmem:[%s5891 + $0x280] sm:$0xff]
  %v6048 = vld [vmem:[%s5891 + $0x290] sm:$0xff]
  %s6049 = scalar_lea.vmem [#allocation2], 416
  %v6050 = vld [vmem:[%s6049 + $0x8] sm:$0xff]
  %v6051 = vld [vmem:[%s6049 + $0x18] sm:$0xff]
  %v6052 = vld [vmem:[%s6049 + $0x288] sm:$0xff]
  %v6053 = vld [vmem:[%s6049 + $0x298] sm:$0xff]
  %v6054 = vadd.f32 %v6045, %v6050
  %v6055 = vadd.f32 %v6046, %v6051
  %v6056 = vadd.f32 %v6047, %v6052
  %v6057 = vadd.f32 %v6048, %v6053
  %v6058 = vadd.f32 %v6054, %v5293
  %v6059 = vadd.f32 %v6055, %v5293
  %v6060 = vadd.f32 %v6056, %v5293
  %v6061 = vadd.f32 %v6057, %v5293
  %v6062 = vmax.f32 %v6058, 0.0
  %v6063 = vmax.f32 %v6059, 0.0
  %v6064 = vmax.f32 %v6060, 0.0
  %v6065 = vmax.f32 %v6061, 0.0
  %v6066 = vld [vmem:[#allocation3] sm:$0xff]
  %v6067 = vld [vmem:[#allocation3 + $0x8] sm:$0xff]
  %v6068 = vld [vmem:[#allocation3 + $0x10] sm:$0xff]
  %v6069 = vld [vmem:[#allocation3 + $0x18] sm:$0xff]
  %v6070 = vadd.f32 %v6066, %v6062
  %v6071 = vadd.f32 %v6067, %v6063
  %v6072 = vadd.f32 %v6068, %v6064
  %v6073 = vadd.f32 %v6069, %v6065
  %6074 = vst [vmem:[#allocation3] sm:$0xff] %v6070
  %6075 = vst [vmem:[#allocation3 + $0x8] sm:$0xff] %v6071
  %6076 = vst [vmem:[#allocation3 + $0x10] sm:$0xff] %v6072
  %6077 = vst [vmem:[#allocation3 + $0x18] sm:$0xff] %v6073
  %v6078 = vld [vmem:[%s6049] sm:$0xff]
  %v6079 = vld [vmem:[%s6049 + $0x10] sm:$0xff]
  %v6080 = vld [vmem:[%s6049 + $0x280] sm:$0xff]
  %v6081 = vld [vmem:[%s6049 + $0x290] sm:$0xff]
  %s6082 = scalar_lea.vmem [#allocation2], 448
  %v6083 = vld [vmem:[%s6082 + $0x8] sm:$0xff]
  %v6084 = vld [vmem:[%s6082 + $0x18] sm:$0xff]
  %v6085 = vld [vmem:[%s6082 + $0x288] sm:$0xff]
  %v6086 = vld [vmem:[%s6082 + $0x298] sm:$0xff]
  %v6087 = vadd.f32 %v6078, %v6083
  %v6088 = vadd.f32 %v6079, %v6084
  %v6089 = vadd.f32 %v6080, %v6085
  %v6090 = vadd.f32 %v6081, %v6086
  %v6091 = vadd.f32 %v6087, %v5293
  %v6092 = vadd.f32 %v6088, %v5293
  %v6093 = vadd.f32 %v6089, %v5293
  %v6094 = vadd.f32 %v6090, %v5293
  %v6095 = vmax.f32 %v6091, 0.0
  %v6096 = vmax.f32 %v6092, 0.0
  %v6097 = vmax.f32 %v6093, 0.0
  %v6098 = vmax.f32 %v6094, 0.0
  %v6099 = vld [vmem:[#allocation3] sm:$0xff]
  %v6100 = vld [vmem:[#allocation3 + $0x8] sm:$0xff]
  %v6101 = vld [vmem:[#allocation3 + $0x10] sm:$0xff]
  %v6102 = vld [vmem:[#allocation3 + $0x18] sm:$0xff]
  %v6103 = vadd.f32 %v6099, %v6095
  %v6104 = vadd.f32 %v6100, %v6096
  %v6105 = vadd.f32 %v6101, %v6097
  %v6106 = vadd.f32 %v6102, %v6098
  %6107 = vst [vmem:[#allocation3] sm:$0xff] %v6103
  %6108 = vst [vmem:[#allocation3 + $0x8] sm:$0xff] %v6104
  %6109 = vst [vmem:[#allocation3 + $0x10] sm:$0xff] %v6105
  %6110 = vst [vmem:[#allocation3 + $0x18] sm:$0xff] %v6106
  %v6111 = vld [vmem:[%s6082] sm:$0xff]
  %v6112 = vld [vmem:[%s6082 + $0x10] sm:$0xff]
  %v6113 = vld [vmem:[%s6082 + $0x280] sm:$0xff]
  %v6114 = vld [vmem:[%s6082 + $0x290] sm:$0xff]
  %s6115 = scalar_lea.vmem [#allocation2], 480
  %v6116 = vld [vmem:[%s6115 + $0x8] sm:$0xff]
  %v6117 = vld [vmem:[%s6115 + $0x18] sm:$0xff]
  %v6118 = vld [vmem:[%s6115 + $0x288] sm:$0xff]
  %v6119 = vld [vmem:[%s6115 + $0x298] sm:$0xff]
  %v6120 = vadd.f32 %v6111, %v6116
  %v6121 = vadd.f32 %v6112, %v6117
  %v6122 = vadd.f32 %v6113, %v6118
  %v6123 = vadd.f32 %v6114, %v6119
  %v6124 = vadd.f32 %v6120, %v5293
  %v6125 = vadd.f32 %v6121, %v5293
  %v6126 = vadd.f32 %v6122, %v5293
  %v6127 = vadd.f32 %v6123, %v5293
  %v6128 = vmax.f32 %v6124, 0.0
  %v6129 = vmax.f32 %v6125, 0.0
  %v6130 = vmax.f32 %v6126, 0.0
  %v6131 = vmax.f32 %v6127, 0.0
  %v6132 = vld [vmem:[#allocation3] sm:$0xff]
  %v6133 = vld [vmem:[#allocation3 + $0x8] sm:$0xff]
  %v6134 = vld [vmem:[#allocation3 + $0x10] sm:$0xff]
  %v6135 = vld [vmem:[#allocation3 + $0x18] sm:$0xff]
  %v6136 = vadd.f32 %v6132, %v6128
  %v6137 = vadd.f32 %v6133, %v6129
  %v6138 = vadd.f32 %v6134, %v6130
  %v6139 = vadd.f32 %v6135, %v6131
  %6140 = vst [vmem:[#allocation3] sm:$0xff] %v6136
  %6141 = vst [vmem:[#allocation3 + $0x8] sm:$0xff] %v6137
  %6142 = vst [vmem:[#allocation3 + $0x10] sm:$0xff] %v6138
  %6143 = vst [vmem:[#allocation3 + $0x18] sm:$0xff] %v6139
  %v6144 = vld [vmem:[%s6115] sm:$0xff]
  %v6145 = vld [vmem:[%s6115 + $0x10] sm:$0xff]
  %v6146 = vld [vmem:[%s6115 + $0x280] sm:$0xff]
  %v6147 = vld [vmem:[%s6115 + $0x290] sm:$0xff]
  %s6148 = scalar_lea.vmem [#allocation2], 512
  %v6149 = vld [vmem:[%s6148 + $0x8] sm:$0xff]
  %v6150 = vld [vmem:[%s6148 + $0x18] sm:$0xff]
  %v6151 = vld [vmem:[%s6148 + $0x288] sm:$0xff]
  %v6152 = vld [vmem:[%s6148 + $0x298] sm:$0xff]
  %v6153 = vadd.f32 %v6144, %v6149
  %v6154 = vadd.f32 %v6145, %v6150
  %v6155 = vadd.f32 %v6146, %v6151
  %v6156 = vadd.f32 %v6147, %v6152
  %v6157 = vadd.f32 %v6153, %v5293
  %v6158 = vadd.f32 %v6154, %v5293
  %v6159 = vadd.f32 %v6155, %v5293
  %v6160 = vadd.f32 %v6156, %v5293
  %v6161 = vmax.f32 %v6157, 0.0
  %v6162 = vmax.f32 %v6158, 0.0
  %v6163 = vmax.f32 %v6159, 0.0
  %v6164 = vmax.f32 %v6160, 0.0
  %v6165 = vld [vmem:[#allocation3] sm:$0xff]
  %v6166 = vld [vmem:[#allocation3 + $0x8] sm:$0xff]
  %v6167 = vld [vmem:[#allocation3 + $0x10] sm:$0xff]
  %v6168 = vld [vmem:[#allocation3 + $0x18] sm:$0xff]
  %v6169 = vadd.f32 %v6165, %v6161
  %v6170 = vadd.f32 %v6166, %v6162
  %v6171 = vadd.f32 %v6167, %v6163
  %v6172 = vadd.f32 %v6168, %v6164
  %6173 = vst [vmem:[#allocation3] sm:$0xff] %v6169
  %6174 = vst [vmem:[#allocation3 + $0x8] sm:$0xff] %v6170
  %6175 = vst [vmem:[#allocation3 + $0x10] sm:$0xff] %v6171
  %6176 = vst [vmem:[#allocation3 + $0x18] sm:$0xff] %v6172
  %v6177 = vld [vmem:[#allocation3] sm:$0x7]
  %v6178 = vld [vmem:[#allocation3 + $0x10] sm:$0x7]
  %v6179 = vsel %vm5408, %v6177, 0.0
  %v6180 = vrot.slane %v6179, 4
  %v6181 = vadd.f32 %v6179, %v6180
  %v6182 = vrot.slane %v6181, 2
  %v6183 = vadd.f32 %v6181, %v6182
  %v6184 = vrot.slane %v6183, 1
  %v6185 = vadd.f32 %v6183, %v6184
  %v6186 = vsel %vm5408, %v6178, 0.0
  %v6187 = vrot.slane %v6186, 4
  %v6188 = vadd.f32 %v6186, %v6187
  %v6189 = vrot.slane %v6188, 2
  %v6190 = vadd.f32 %v6188, %v6189
  %v6191 = vrot.slane %v6190, 1
  %v6192 = vadd.f32 %v6190, %v6191
  %v6193 = vmul.f32 %v6185, 0.06666667
  %v6194 = vmul.f32 %v6192, 0.06666667
  %s6195 = scalar_lea.vmem %s3, 24
  %6196 = vst [vmem:[%s6195] sm:$0x1] %v6193
  %6197 = vst [vmem:[%s6195 + $0x28] sm:$0x1] %v6194
  %v6198 = vld [vmem:[#allocation3 + $0x2] sm:$0x7]
  %v6199 = vld [vmem:[#allocation3 + $0x12] sm:$0x7]
  %v6200 = vsel %vm5408, %v6198, 0.0
  %v6201 = vrot.slane %v6200, 4
  %v6202 = vadd.f32 %v6200, %v6201
  %v6203 = vrot.slane %v6202, 2
  %v6204 = vadd.f32 %v6202, %v6203
  %v6205 = vrot.slane %v6204, 1
  %v6206 = vadd.f32 %v6204, %v6205
  %v6207 = vsel %vm5408, %v6199, 0.0
  %v6208 = vrot.slane %v6207, 4
  %v6209 = vadd.f32 %v6207, %v6208
  %v6210 = vrot.slane %v6209, 2
  %v6211 = vadd.f32 %v6209, %v6210
  %v6212 = vrot.slane %v6211, 1
  %v6213 = vadd.f32 %v6211, %v6212
  %v6214 = vmul.f32 %v6206, 0.06666667
  %v6215 = vmul.f32 %v6213, 0.06666667
  %6216 = vst [vmem:[%s6195 + $0x1] sm:$0x1] %v6214
  %6217 = vst [vmem:[%s6195 + $0x29] sm:$0x1] %v6215
  %v6218 = vld [vmem:[#allocation3 + $0x4] sm:$0x7]
  %v6219 = vld [vmem:[#allocation3 + $0x14] sm:$0x7]
  %v6220 = vsel %vm5408, %v6218, 0.0
  %v6221 = vrot.slane %v6220, 4
  %v6222 = vadd.f32 %v6220, %v6221
  %v6223 = vrot.slane %v6222, 2
  %v6224 = vadd.f32 %v6222, %v6223
  %v6225 = vrot.slane %v6224, 1
  %v6226 = vadd.f32 %v6224, %v6225
  %v6227 = vsel %vm5408, %v6219, 0.0
  %v6228 = vrot.slane %v6227, 4
  %v6229 = vadd.f32 %v6227, %v6228
  %v6230 = vrot.slane %v6229, 2
  %v6231 = vadd.f32 %v6229, %v6230
  %v6232 = vrot.slane %v6231, 1
  %v6233 = vadd.f32 %v6231, %v6232
  %v6234 = vmul.f32 %v6226, 0.06666667
  %v6235 = vmul.f32 %v6233, 0.06666667
  %6236 = vst [vmem:[%s6195 + $0x2] sm:$0x1] %v6234
  %6237 = vst [vmem:[%s6195 + $0x2a] sm:$0x1] %v6235
  %v6238 = vld [vmem:[#allocation3 + $0x6] sm:$0x7]
  %v6239 = vld [vmem:[#allocation3 + $0x16] sm:$0x7]
  %v6240 = vsel %vm5408, %v6238, 0.0
  %v6241 = vrot.slane %v6240, 4
  %v6242 = vadd.f32 %v6240, %v6241
  %v6243 = vrot.slane %v6242, 2
  %v6244 = vadd.f32 %v6242, %v6243
  %v6245 = vrot.slane %v6244, 1
  %v6246 = vadd.f32 %v6244, %v6245
  %v6247 = vsel %vm5408, %v6239, 0.0
  %v6248 = vrot.slane %v6247, 4
  %v6249 = vadd.f32 %v6247, %v6248
  %v6250 = vrot.slane %v6249, 2
  %v6251 = vadd.f32 %v6249, %v6250
  %v6252 = vrot.slane %v6251, 1
  %v6253 = vadd.f32 %v6251, %v6252
  %v6254 = vmul.f32 %v6246, 0.06666667
  %v6255 = vmul.f32 %v6253, 0.06666667
  %6256 = vst [vmem:[%s6195 + $0x3] sm:$0x1] %v6254
  %6257 = vst [vmem:[%s6195 + $0x2b] sm:$0x1] %v6255
  %v6258 = vld [vmem:[#allocation3 + $0x8] sm:$0x7]
  %v6259 = vld [vmem:[#allocation3 + $0x18] sm:$0x7]
  %v6260 = vsel %vm5408, %v6258, 0.0
  %v6261 = vrot.slane %v6260, 4
  %v6262 = vadd.f32 %v6260, %v6261
  %v6263 = vrot.slane %v6262, 2
  %v6264 = vadd.f32 %v6262, %v6263
  %v6265 = vrot.slane %v6264, 1
  %v6266 = vadd.f32 %v6264, %v6265
  %v6267 = vsel %vm5408, %v6259, 0.0
  %v6268 = vrot.slane %v6267, 4
  %v6269 = vadd.f32 %v6267, %v6268
  %v6270 = vrot.slane %v6269, 2
  %v6271 = vadd.f32 %v6269, %v6270
  %v6272 = vrot.slane %v6271, 1
  %v6273 = vadd.f32 %v6271, %v6272
  %v6274 = vmul.f32 %v6266, 0.06666667
  %v6275 = vmul.f32 %v6273, 0.06666667
  %6276 = vst [vmem:[%s6195 + $0x4] sm:$0x1] %v6274
  %6277 = vst [vmem:[%s6195 + $0x2c] sm:$0x1] %v6275
  %v6278 = vld [vmem:[%s6115] sm:$0xff]
  %v6279 = vld [vmem:[%s6115 + $0x10] sm:$0xff]
  %v6280 = vld [vmem:[%s6115 + $0x280] sm:$0xff]
  %v6281 = vld [vmem:[%s6115 + $0x290] sm:$0xff]
  %v6282 = vld [vmem:[%s6148 + $0x8] sm:$0xff]
  %v6283 = vld [vmem:[%s6148 + $0x18] sm:$0xff]
  %v6284 = vld [vmem:[%s6148 + $0x288] sm:$0xff]
  %v6285 = vld [vmem:[%s6148 + $0x298] sm:$0xff]
  %v6286 = vadd.f32 %v6278, %v6282
  %v6287 = vadd.f32 %v6279, %v6283
  %v6288 = vadd.f32 %v6280, %v6284
  %v6289 = vadd.f32 %v6281, %v6285
  %v6290 = vadd.f32 %v6286, %v5293
  %v6291 = vadd.f32 %v6287, %v5293
  %v6292 = vadd.f32 %v6288, %v5293
  %v6293 = vadd.f32 %v6289, %v5293
  %v6294 = vmax.f32 %v6290, 0.0
  %v6295 = vmax.f32 %v6291, 0.0
  %v6296 = vmax.f32 %v6292, 0.0
  %v6297 = vmax.f32 %v6293, 0.0
  %6298 = vst [vmem:[#allocation3] sm:$0xff] %v6294
  %6299 = vst [vmem:[#allocation3 + $0x8] sm:$0xff] %v6295
  %6300 = vst [vmem:[#allocation3 + $0x10] sm:$0xff] %v6296
  %6301 = vst [vmem:[#allocation3 + $0x18] sm:$0xff] %v6297
  %v6302 = vld [vmem:[%s6148] sm:$0xff]
  %v6303 = vld [vmem:[%s6148 + $0x10] sm:$0xff]
  %v6304 = vld [vmem:[%s6148 + $0x280] sm:$0xff]
  %v6305 = vld [vmem:[%s6148 + $0x290] sm:$0xff]
  %s6306 = scalar_lea.vmem [#allocation2], 544
  %v6307 = vld [vmem:[%s6306 + $0x8] sm:$0xff]
  %v6308 = vld [vmem:[%s6306 + $0x18] sm:$0xff]
  %v6309 = vld [vmem:[%s6306 + $0x288] sm:$0xff]
  %v6310 = vld [vmem:[%s6306 + $0x298] sm:$0xff]
  %v6311 = vadd.f32 %v6302, %v6307
  %v6312 = vadd.f32 %v6303, %v6308
  %v6313 = vadd.f32 %v6304, %v6309
  %v6314 = vadd.f32 %v6305, %v6310
  %v6315 = vadd.f32 %v6311, %v5293
  %v6316 = vadd.f32 %v6312, %v5293
  %v6317 = vadd.f32 %v6313, %v5293
  %v6318 = vadd.f32 %v6314, %v5293
  %v6319 = vmax.f32 %v6315, 0.0
  %v6320 = vmax.f32 %v6316, 0.0
  %v6321 = vmax.f32 %v6317, 0.0
  %v6322 = vmax.f32 %v6318, 0.0
  %v6323 = vld [vmem:[#allocation3] sm:$0xff]
  %v6324 = vld [vmem:[#allocation3 + $0x8] sm:$0xff]
  %v6325 = vld [vmem:[#allocation3 + $0x10] sm:$0xff]
  %v6326 = vld [vmem:[#allocation3 + $0x18] sm:$0xff]
  %v6327 = vadd.f32 %v6323, %v6319
  %v6328 = vadd.f32 %v6324, %v6320
  %v6329 = vadd.f32 %v6325, %v6321
  %v6330 = vadd.f32 %v6326, %v6322
  %6331 = vst [vmem:[#allocation3] sm:$0xff] %v6327
  %6332 = vst [vmem:[#allocation3 + $0x8] sm:$0xff] %v6328
  %6333 = vst [vmem:[#allocation3 + $0x10] sm:$0xff] %v6329
  %6334 = vst [vmem:[#allocation3 + $0x18] sm:$0xff] %v6330
  %v6335 = vld [vmem:[%s6306] sm:$0xff]
  %v6336 = vld [vmem:[%s6306 + $0x10] sm:$0xff]
  %v6337 = vld [vmem:[%s6306 + $0x280] sm:$0xff]
  %v6338 = vld [vmem:[%s6306 + $0x290] sm:$0xff]
  %s6339 = scalar_lea.vmem [#allocation2], 576
  %v6340 = vld [vmem:[%s6339 + $0x8] sm:$0xff]
  %v6341 = vld [vmem:[%s6339 + $0x18] sm:$0xff]
  %v6342 = vld [vmem:[%s6339 + $0x288] sm:$0xff]
  %v6343 = vld [vmem:[%s6339 + $0x298] sm:$0xff]
  %v6344 = vadd.f32 %v6335, %v6340
  %v6345 = vadd.f32 %v6336, %v6341
  %v6346 = vadd.f32 %v6337, %v6342
  %v6347 = vadd.f32 %v6338, %v6343
  %v6348 = vadd.f32 %v6344, %v5293
  %v6349 = vadd.f32 %v6345, %v5293
  %v6350 = vadd.f32 %v6346, %v5293
  %v6351 = vadd.f32 %v6347, %v5293
  %v6352 = vmax.f32 %v6348, 0.0
  %v6353 = vmax.f32 %v6349, 0.0
  %v6354 = vmax.f32 %v6350, 0.0
  %v6355 = vmax.f32 %v6351, 0.0
  %v6356 = vld [vmem:[#allocation3] sm:$0xff]
  %v6357 = vld [vmem:[#allocation3 + $0x8] sm:$0xff]
  %v6358 = vld [vmem:[#allocation3 + $0x10] sm:$0xff]
  %v6359 = vld [vmem:[#allocation3 + $0x18] sm:$0xff]
  %v6360 = vadd.f32 %v6356, %v6352
  %v6361 = vadd.f32 %v6357, %v6353
  %v6362 = vadd.f32 %v6358, %v6354
  %v6363 = vadd.f32 %v6359, %v6355
  %6364 = vst [vmem:[#allocation3] sm:$0xff] %v6360
  %6365 = vst [vmem:[#allocation3 + $0x8] sm:$0xff] %v6361
  %6366 = vst [vmem:[#allocation3 + $0x10] sm:$0xff] %v6362
  %6367 = vst [vmem:[#allocation3 + $0x18] sm:$0xff] %v6363
  %v6368 = vld [vmem:[%s6339] sm:$0xff]
  %v6369 = vld [vmem:[%s6339 + $0x10] sm:$0xff]
  %v6370 = vld [vmem:[%s6339 + $0x280] sm:$0xff]
  %v6371 = vld [vmem:[%s6339 + $0x290] sm:$0xff]
  %s6372 = scalar_lea.vmem [#allocation2], 608
  %v6373 = vld [vmem:[%s6372 + $0x8] sm:$0xff]
  %v6374 = vld [vmem:[%s6372 + $0x18] sm:$0xff]
  %v6375 = vld [vmem:[%s6372 + $0x288] sm:$0xff]
  %v6376 = vld [vmem:[%s6372 + $0x298] sm:$0xff]
  %v6377 = vadd.f32 %v6368, %v6373
  %v6378 = vadd.f32 %v6369, %v6374
  %v6379 = vadd.f32 %v6370, %v6375
  %v6380 = vadd.f32 %v6371, %v6376
  %v6381 = vadd.f32 %v6377, %v5293
  %v6382 = vadd.f32 %v6378, %v5293
  %v6383 = vadd.f32 %v6379, %v5293
  %v6384 = vadd.f32 %v6380, %v5293
  %v6385 = vmax.f32 %v6381, 0.0
  %v6386 = vmax.f32 %v6382, 0.0
  %v6387 = vmax.f32 %v6383, 0.0
  %v6388 = vmax.f32 %v6384, 0.0
  %v6389 = vld [vmem:[#allocation3] sm:$0xff]
  %v6390 = vld [vmem:[#allocation3 + $0x8] sm:$0xff]
  %v6391 = vld [vmem:[#allocation3 + $0x10] sm:$0xff]
  %v6392 = vld [vmem:[#allocation3 + $0x18] sm:$0xff]
  %v6393 = vadd.f32 %v6389, %v6385
  %v6394 = vadd.f32 %v6390, %v6386
  %v6395 = vadd.f32 %v6391, %v6387
  %v6396 = vadd.f32 %v6392, %v6388
  %6397 = vst [vmem:[#allocation3] sm:$0xff] %v6393
  %6398 = vst [vmem:[#allocation3 + $0x8] sm:$0xff] %v6394
  %6399 = vst [vmem:[#allocation3 + $0x10] sm:$0xff] %v6395
  %6400 = vst [vmem:[#allocation3 + $0x18] sm:$0xff] %v6396
  %v6401 = vld [vmem:[#allocation3] sm:$0x7]
  %v6402 = vld [vmem:[#allocation3 + $0x10] sm:$0x7]
  %v6403 = vsel %vm5408, %v6401, 0.0
  %v6404 = vrot.slane %v6403, 4
  %v6405 = vadd.f32 %v6403, %v6404
  %v6406 = vrot.slane %v6405, 2
  %v6407 = vadd.f32 %v6405, %v6406
  %v6408 = vrot.slane %v6407, 1
  %v6409 = vadd.f32 %v6407, %v6408
  %v6410 = vsel %vm5408, %v6402, 0.0
  %v6411 = vrot.slane %v6410, 4
  %v6412 = vadd.f32 %v6410, %v6411
  %v6413 = vrot.slane %v6412, 2
  %v6414 = vadd.f32 %v6412, %v6413
  %v6415 = vrot.slane %v6414, 1
  %v6416 = vadd.f32 %v6414, %v6415
  %v6417 = vmul.f32 %v6409, 0.083333336
  %v6418 = vmul.f32 %v6416, 0.083333336
  %s6419 = scalar_lea.vmem %s3, 32
  %6420 = vst [vmem:[%s6419] sm:$0x1] %v6417
  %6421 = vst [vmem:[%s6419 + $0x28] sm:$0x1] %v6418
  %v6422 = vld [vmem:[#allocation3 + $0x2] sm:$0x7]
  %v6423 = vld [vmem:[#allocation3 + $0x12] sm:$0x7]
  %v6424 = vsel %vm5408, %v6422, 0.0
  %v6425 = vrot.slane %v6424, 4
  %v6426 = vadd.f32 %v6424, %v6425
  %v6427 = vrot.slane %v6426, 2
  %v6428 = vadd.f32 %v6426, %v6427
  %v6429 = vrot.slane %v6428, 1
  %v6430 = vadd.f32 %v6428, %v6429
  %v6431 = vsel %vm5408, %v6423, 0.0
  %v6432 = vrot.slane %v6431, 4
  %v6433 = vadd.f32 %v6431, %v6432
  %v6434 = vrot.slane %v6433, 2
  %v6435 = vadd.f32 %v6433, %v6434
  %v6436 = vrot.slane %v6435, 1
  %v6437 = vadd.f32 %v6435, %v6436
  %v6438 = vmul.f32 %v6430, 0.083333336
  %v6439 = vmul.f32 %v6437, 0.083333336
  %6440 = vst [vmem:[%s6419 + $0x1] sm:$0x1] %v6438
  %6441 = vst [vmem:[%s6419 + $0x29] sm:$0x1] %v6439
  %v6442 = vld [vmem:[#allocation3 + $0x4] sm:$0x7]
  %v6443 = vld [vmem:[#allocation3 + $0x14] sm:$0x7]
  %v6444 = vsel %vm5408, %v6442, 0.0
  %v6445 = vrot.slane %v6444, 4
  %v6446 = vadd.f32 %v6444, %v6445
  %v6447 = vrot.slane %v6446, 2
  %v6448 = vadd.f32 %v6446, %v6447
  %v6449 = vrot.slane %v6448, 1
  %v6450 = vadd.f32 %v6448, %v6449
  %v6451 = vsel %vm5408, %v6443, 0.0
  %v6452 = vrot.slane %v6451, 4
  %v6453 = vadd.f32 %v6451, %v6452
  %v6454 = vrot.slane %v6453, 2
  %v6455 = vadd.f32 %v6453, %v6454
  %v6456 = vrot.slane %v6455, 1
  %v6457 = vadd.f32 %v6455, %v6456
  %v6458 = vmul.f32 %v6450, 0.083333336
  %v6459 = vmul.f32 %v6457, 0.083333336
  %6460 = vst [vmem:[%s6419 + $0x2] sm:$0x1] %v6458
  %6461 = vst [vmem:[%s6419 + $0x2a] sm:$0x1] %v6459
  %v6462 = vld [vmem:[#allocation3 + $0x6] sm:$0x7]
  %v6463 = vld [vmem:[#allocation3 + $0x16] sm:$0x7]
  %v6464 = vsel %vm5408, %v6462, 0.0
  %v6465 = vrot.slane %v6464, 4
  %v6466 = vadd.f32 %v6464, %v6465
  %v6467 = vrot.slane %v6466, 2
  %v6468 = vadd.f32 %v6466, %v6467
  %v6469 = vrot.slane %v6468, 1
  %v6470 = vadd.f32 %v6468, %v6469
  %v6471 = vsel %vm5408, %v6463, 0.0
  %v6472 = vrot.slane %v6471, 4
  %v6473 = vadd.f32 %v6471, %v6472
  %v6474 = vrot.slane %v6473, 2
  %v6475 = vadd.f32 %v6473, %v6474
  %v6476 = vrot.slane %v6475, 1
  %v6477 = vadd.f32 %v6475, %v6476
  %v6478 = vmul.f32 %v6470, 0.083333336
  %v6479 = vmul.f32 %v6477, 0.083333336
  %6480 = vst [vmem:[%s6419 + $0x3] sm:$0x1] %v6478
  %6481 = vst [vmem:[%s6419 + $0x2b] sm:$0x1] %v6479
  %v6482 = vld [vmem:[#allocation3 + $0x8] sm:$0x7]
  %v6483 = vld [vmem:[#allocation3 + $0x18] sm:$0x7]
  %v6484 = vsel %vm5408, %v6482, 0.0
  %v6485 = vrot.slane %v6484, 4
  %v6486 = vadd.f32 %v6484, %v6485
  %v6487 = vrot.slane %v6486, 2
  %v6488 = vadd.f32 %v6486, %v6487
  %v6489 = vrot.slane %v6488, 1
  %v6490 = vadd.f32 %v6488, %v6489
  %v6491 = vsel %vm5408, %v6483, 0.0
  %v6492 = vrot.slane %v6491, 4
  %v6493 = vadd.f32 %v6491, %v6492
  %v6494 = vrot.slane %v6493, 2
  %v6495 = vadd.f32 %v6493, %v6494
  %v6496 = vrot.slane %v6495, 1
  %v6497 = vadd.f32 %v6495, %v6496
  %v6498 = vmul.f32 %v6490, 0.083333336
  %v6499 = vmul.f32 %v6497, 0.083333336
  %6500 = vst [vmem:[%s6419 + $0x4] sm:$0x1] %v6498
  %6501 = vst [vmem:[%s6419 + $0x2c] sm:$0x1] %v6499
  // Predicated region
  $region14: #{my_model_forward.1} parent=0 // pred_check
    _
  $region15: #{my_model_forward.1} parent=0 // pred_check_branch
    %6503 = sbr.rel (0) target = $region17
  $region16: #{my_model_forward.1} parent=0 // pred_region
    _
  $region17: #{my_model_forward.1} parent=0 // pred_fallthru
    _
  // Predicated region
  $region18: #{my_model_forward.1} parent=0 // pred_check
    _
  $region19: #{my_model_forward.1} parent=0 // pred_check_branch
    %6505 = sbr.rel (0) target = $region21
  $region20: #{my_model_forward.1} parent=0 // pred_region
    _
  $region21: #{my_model_forward.1} parent=0 // pred_fallthru
    _

</llo_original>
